<compile_context>
chip_gen: v6e
topology: v6e:2x2x1
jax: 0.10.0
libtpu: 0.0.40
codegen_flags: <defaults>
</compile_context>

<pallas_src>
import functools

import jax
import jax.numpy as jnp
import numpy as np
from jax.experimental import pallas as pl
from jax.experimental.pallas import tpu as pltpu

_K = 4
_KK = _K * _K                    # 16 conv taps

# stride-2 conv2: per-axis tap index -> (parity of the h1 sub-image, offset
# inside that sub-image).  hi = 2*ho + i - 1 = 2*(ho + OFF2[i]) + PAR2[i].
_PAR2 = (1, 0, 1, 0)
_OFF2 = (-1, 0, 0, 1)
# stride-1 conv3 (after ZeroPad2d((1,2,1,2))): per-axis tap offset i-1.
_OFF3 = (-1, 0, 1, 2)


# ---------------------------------------------------------------------------
# Fused Pallas kernel: one batch block per grid step.
# ---------------------------------------------------------------------------
def _encoder_kernel(a1_ref, w1_ref, sh1_ref,
                    w2_ref, sh2_ref, m2_ref,
                    w3_ref, sh3_ref, m3_ref,
                    wfc_ref, fcb_ref, o_ref,
                    *, bblk, s4, normalize):
    f32 = jnp.float32
    cdt = w1_ref.dtype                      # MXU compute dtype (bf16 or f32)
    nf = w1_ref.shape[0]
    sp = s4 * s4                            # conv2/3 spatial positions / image
    mb = sp * bblk                          # lanes per batch block (conv2/3)

    # ---- conv1 + BN + ReLU: single matmul on the pre-built im2col patch ----
    # a1 columns are ordered (parity_h, parity_w, h', w', n) inside the block.
    h1 = jnp.dot(w1_ref[...], a1_ref[...], preferred_element_type=f32)
    h1 = jnp.maximum(h1 + sh1_ref[...], 0.0)            # (nf, 4*mb) f32
    h1c = h1.astype(cdt)

    def shift_cols(x, d):
        # out[:, c] = x[:, c + d] if in range else 0   (d is a static int)
        w = x.shape[1]
        if d == 0:
            return x
        if d > 0:
            return jnp.concatenate(
                [x[:, d:], jnp.zeros((x.shape[0], d), x.dtype)], axis=1)
        return jnp.concatenate(
            [jnp.zeros((x.shape[0], -d), x.dtype), x[:, :w + d]], axis=1)

    # ---- conv2 + BN + ReLU: parity-slice + shift + mask -> one K=16*nf dot --
    blocks = []
    for i in range(_K):
        for j in range(_K):
            t = i * _K + j
            pb = _PAR2[i] * 2 + _PAR2[j]                 # parity sub-image
            sub = h1c[:, pb * mb:(pb + 1) * mb]          # (nf, mb) lane slice
            d = (_OFF2[i] * s4 + _OFF2[j]) * bblk
            blocks.append(shift_cols(sub, d) * m2_ref[t])
    patch2 = jnp.concatenate(blocks, axis=0)             # (KK*nf, mb)
    h2 = jnp.dot(w2_ref[...], patch2, preferred_element_type=f32)
    h2 = jnp.maximum(h2 + sh2_ref[...], 0.0)             # (nf, mb) f32
    h2c = h2.astype(cdt)

    # ---- ZeroPad2d((1,2,1,2)) + conv3 + BN + ReLU: shift + mask ------------
    blocks = []
    for i in range(_K):
        for j in range(_K):
            t = i * _K + j
            d = (_OFF3[i] * s4 + _OFF3[j]) * bblk
            blocks.append(shift_cols(h2c, d) * m3_ref[t])
    patch3 = jnp.concatenate(blocks, axis=0)             # (KK*nf, mb)
    h3 = jnp.dot(w3_ref[...], patch3, preferred_element_type=f32)
    h3 = jnp.maximum(h3 + sh3_ref[...], 0.0)             # (nf, mb) f32
    h3c = h3.astype(cdt)

    # ---- FC: NCHW flatten folded into wfc, single K = sp*nf matmul ----------
    fcin = jnp.concatenate(
        [h3c[:, m * bblk:(m + 1) * bblk] for m in range(sp)], axis=0)
    z = jnp.dot(wfc_ref[...], fcin, preferred_element_type=f32) + fcb_ref[...]

    if normalize:                          # F.normalize(p=2, eps=1e-12)
        ssq = jnp.sum(z * z, axis=0, keepdims=True)
        z = z * jax.lax.rsqrt(jnp.maximum(ssq, 1e-24))
    o_ref[...] = z[None].astype(o_ref.dtype)             # (1, zd, bblk)


# ---------------------------------------------------------------------------
# Host-side, one-time parameter preparation (all static / offline work)
# ---------------------------------------------------------------------------
def prepare_encoder(p, batch, c_dim, img_size, num_filters, z_dim,
                    batch_block=None, eps=1e-5, mxu_dtype=jnp.bfloat16):
    assert img_size % 4 == 0, "generic branch assumes img_size % 4 == 0"
    nf, zd = num_filters, z_dim
    s4 = img_size // 4
    sp = s4 * s4
    bblk = batch if batch_block is None else batch_block
    assert batch % bblk == 0
    nblk = batch // bblk
    if nblk > 1:
        # keep every tiled lane dimension a multiple of 128 (8,128 rule)
        assert (4 * sp * bblk) % 128 == 0, "pick batch_block so 4*sp*bblk%128==0"

    def fold(w, b, g, be, rm, rv):
        scale = g / jnp.sqrt(rv + eps)
        wt = (w * scale[:, None, None, None]).transpose(0, 2, 3, 1)
        wt = wt.reshape(w.shape[0], -1)           # cols ordered (i*4+j)*cin+c
        shift = (b - rm) * scale + be
        return wt, shift[:, None]

    w1t, sh1 = fold(p['w1'], p['b1'], p['g1'], p['be1'], p['rm1'], p['rv1'])
    w2t, sh2 = fold(p['w2'], p['b2'], p['g2'], p['be2'], p['rm2'], p['rv2'])
    w3t, sh3 = fold(p['w3'], p['b3'], p['g3'], p['be3'], p['rm3'], p['rv3'])

    # FC weight: fold PyTorch NCHW flatten (col = c*sp + m) into row order
    # m*nf + c so the kernel can use a single matmul on the (sp*nf, bblk) slab.
    wfct = p['fcw'].reshape(zd, nf, sp).transpose(0, 2, 1).reshape(zd, sp * nf)

    def masks(offs):
        m = np.zeros((_KK, 1, sp * bblk), np.float32)
        for i in range(_K):
            for j in range(_K):
                t = i * _K + j
                for ho in range(s4):
                    if not (0 <= ho + offs[i] < s4):
                        continue
                    for wo in range(s4):
                        if 0 <= wo + offs[j] < s4:
                            b0 = (ho * s4 + wo) * bblk
                            m[t, 0, b0:b0 + bblk] = 1.0
        return m

    return {
        'bblk': bblk, 'img_size': img_size, 'nf': nf, 'zd': zd,
        'w1t': w1t.astype(mxu_dtype), 'sh1': sh1.astype(jnp.float32),
        'w2t': w2t.astype(mxu_dtype), 'sh2': sh2.astype(jnp.float32),
        'mask2': jnp.asarray(masks(_OFF2), mxu_dtype),
        'w3t': w3t.astype(mxu_dtype), 'sh3': sh3.astype(jnp.float32),
        'mask3': jnp.asarray(masks(_OFF3), mxu_dtype),
        'wfct': wfct.astype(mxu_dtype),
        'fcb': p['fcb'][:, None].astype(jnp.float32),
    }


# ---------------------------------------------------------------------------
# Forward: host builds only the (tiny) conv1 im2col, then one pallas_call
# ---------------------------------------------------------------------------
def conv_encoder_forward(x_nchw, prep, norm_ae_flag=1):
    nb, c, h, w = x_nchw.shape
    img = prep['img_size']
    assert h == img and w == img
    bblk = prep['bblk']
    nblk = nb // bblk
    nf, zd = prep['nf'], prep['zd']
    s2, s4 = img // 2, img // 4
    sp = s4 * s4
    mb = sp * bblk
    cdt = prep['w1t'].dtype

    # conv1 im2col on the raw input; columns ordered
    # (batch_block, parity_h, parity_w, h', w', n_in_block), rows (i, j, cin).
    # TODO(synk): move this im2col into the kernel to drop the 16x-expanded
    # patch transfer (low priority at these channel counts).
    xp = jnp.pad(x_nchw, ((0, 0), (0, 0), (1, 1), (1, 1)))
    pieces = [xp[:, :, i:i + 2 * s2:2, j:j + 2 * s2:2]
              for i in range(_K) for j in range(_K)]
    cols = jnp.stack(pieces, axis=0)                     # (KK, nb, c, s2, s2)
    cols = cols.reshape(_KK, nblk, bblk, c, s4, 2, s4, 2)
    a1t = cols.transpose(0, 3, 1, 5, 7, 4, 6, 2).reshape(_KK * c,
                                                         nblk * 4 * mb)
    a1t = a1t.astype(cdt)

    kernel = functools.partial(_encoder_kernel, bblk=bblk, s4=s4,
                               normalize=(norm_ae_flag == 1))

    full2 = lambda arr: pl.BlockSpec(arr.shape, lambda b: (0, 0))
    full3 = lambda arr: pl.BlockSpec(arr.shape, lambda b: (0, 0, 0))

    in_specs = [
        pl.BlockSpec((_KK * c, 4 * mb), lambda b: (0, b)),          # a1t
        full2(prep['w1t']), full2(prep['sh1']),
        full2(prep['w2t']), full2(prep['sh2']), full3(prep['mask2']),
        full2(prep['w3t']), full2(prep['sh3']), full3(prep['mask3']),
        full2(prep['wfct']), full2(prep['fcb']),
    ]
    out_specs = pl.BlockSpec((1, zd, bblk), lambda b: (b, 0, 0))

    operands = (a1t, prep['w1t'], prep['sh1'], prep['w2t'], prep['sh2'],
                prep['mask2'], prep['w3t'], prep['sh3'], prep['mask3'],
                prep['wfct'], prep['fcb'])

    flops_blk = 2 * (nf * (_KK * c) * (4 * mb)
                     + 2 * nf * (_KK * nf) * mb
                     + zd * (sp * nf) * bblk)
    cost = pl.CostEstimate(
        flops=int(flops_blk * nblk),
        transcendentals=int(nb),
        bytes_accessed=int(sum(int(np.prod(a.shape)) * a.dtype.itemsize
                               for a in operands) + nb * zd * 4))

    out = pl.pallas_call(
        kernel,
        out_shape=jax.ShapeDtypeStruct((nblk, zd, bblk), jnp.float32),
        grid=(nblk,),
        in_specs=in_specs,
        out_specs=out_specs,
        compiler_params=pltpu.CompilerParams(
            dimension_semantics=("parallel",),
            vmem_limit_bytes=32 * 1024 * 1024),
        cost_estimate=cost,
    )(*operands)

    # (nblk, zd, bblk) -> (batch, zd); tiny host-side relayout.
    return out.transpose(0, 2, 1).reshape(nb, zd)


# ---------------------------------------------------------------------------
# Pure-JAX reference (lax.conv, highest precision) for correctness check
# ---------------------------------------------------------------------------
def reference_forward(x_nchw, p, norm_ae_flag=1, eps=1e-5):
    hp = jax.lax.Precision.HIGHEST

    def conv(x, w, b, stride, pad):
        y = jax.lax.conv_general_dilated(
            x, w, (stride, stride), pad,
            dimension_numbers=('NCHW', 'OIHW', 'NCHW'), precision=hp)
        return y + b[None, :, None, None]

    def bn(x, g, be, rm, rv):
        return ((x - rm[None, :, None, None]) /
                jnp.sqrt(rv[None, :, None, None] + eps)) * g[None, :, None, None] \
               + be[None, :, None, None]

    x = jnp.maximum(bn(conv(x_nchw, p['w1'], p['b1'], 2, ((1, 1), (1, 1))),
                       p['g1'], p['be1'], p['rm1'], p['rv1']), 0.0)
    x = jnp.maximum(bn(conv(x, p['w2'], p['b2'], 2, ((1, 1), (1, 1))),
                       p['g2'], p['be2'], p['rm2'], p['rv2']), 0.0)
    x = jnp.pad(x, ((0, 0), (0, 0), (1, 2), (1, 2)))     # ZeroPad2d((1,2,1,2))
    x = jnp.maximum(bn(conv(x, p['w3'], p['b3'], 1, ((0, 0), (0, 0))),
                       p['g3'], p['be3'], p['rm3'], p['rv3']), 0.0)
    z = jnp.dot(x.reshape(x.shape[0], -1), p['fcw'].T, precision=hp) + p['fcb']
    if norm_ae_flag == 1:
        z = z / jnp.maximum(jnp.linalg.norm(z, axis=1, keepdims=True), 1e-12)
    return z


# ---------------------------------------------------------------------------
if __name__ == "__main__":
    jax.config.update("jax_default_matmul_precision", "highest")

    batch, c_dim, img_size = 16, 4, 16
    num_filters, z_dim = 32, 32
    norm_ae_flag = 1
    batch_block = 8          # grid = (2,), "parallel" -> dual-TC / DMA overlap

    key = jax.random.PRNGKey(0)
    ks = jax.random.split(key, 24)

    def rnd(k, shape, scale=0.1):
        return jax.random.normal(k, shape, jnp.float32) * scale

    p = {
        'w1': rnd(ks[0], (num_filters, c_dim, 4, 4)),
        'b1': rnd(ks[1], (num_filters,)),
        'g1': 1.0 + rnd(ks[2], (num_filters,)),
        'be1': rnd(ks[3], (num_filters,)),
        'rm1': rnd(ks[4], (num_filters,)),
        'rv1': 1.0 + jnp.abs(rnd(ks[5], (num_filters,))),
        'w2': rnd(ks[6], (num_filters, num_filters, 4, 4)),
        'b2': rnd(ks[7], (num_filters,)),
        'g2': 1.0 + rnd(ks[8], (num_filters,)),
        'be2': rnd(ks[9], (num_filters,)),
        'rm2': rnd(ks[10], (num_filters,)),
        'rv2': 1.0 + jnp.abs(rnd(ks[11], (num_filters,))),
        'w3': rnd(ks[12], (num_filters, num_filters, 4, 4)),
        'b3': rnd(ks[13], (num_filters,)),
        'g3': 1.0 + rnd(ks[14], (num_filters,)),
        'be3': rnd(ks[15], (num_filters,)),
        'rm3': rnd(ks[16], (num_filters,)),
        'rv3': 1.0 + jnp.abs(rnd(ks[17], (num_filters,))),
        'fcw': rnd(ks[18], (z_dim, num_filters * img_size * img_size // 16)),
        'fcb': rnd(ks[19], (z_dim,)),
    }

    x = jax.random.normal(ks[20], (batch, c_dim, img_size, img_size),
                          jnp.float32)

    z_ref = jax.block_until_ready(reference_forward(x, p, norm_ae_flag))

    # f32 MXU path: checks the shift/mask/permutation logic strictly.
    prep32 = prepare_encoder(p, batch, c_dim, img_size, num_filters, z_dim,
                             batch_block=batch_block, mxu_dtype=jnp.float32)
    z32 = jax.block_until_ready(conv_encoder_forward(x, prep32, norm_ae_flag))
    np.testing.assert_allclose(np.asarray(z32), np.asarray(z_ref),
                               rtol=1e-2, atol=1e-2)

    # bf16 MXU path (default / fast): loose check (bf16 operand rounding).
    prep16 = prepare_encoder(p, batch, c_dim, img_size, num_filters, z_dim,
                             batch_block=batch_block, mxu_dtype=jnp.bfloat16)
    z16 = jax.block_until_ready(conv_encoder_forward(x, prep16, norm_ae_flag))
    np.testing.assert_allclose(np.asarray(z16), np.asarray(z_ref),
                               rtol=5e-2, atol=5e-2)

    assert z16.shape == (batch, z_dim)
    print("KERNEL_OK")
</pallas_src>

<mosaic_0001>
module attributes {stable_mosaic.version = 11 : i64} {
  func.func @_encoder_kernel(%arg0: i32, %arg1: memref<64x512xf32, #tpu.memory_space<vmem>>, %arg2: memref<32x64xf32, #tpu.memory_space<vmem>>, %arg3: memref<32x1xf32, #tpu.memory_space<vmem>>, %arg4: memref<32x512xf32, #tpu.memory_space<vmem>>, %arg5: memref<32x1xf32, #tpu.memory_space<vmem>>, %arg6: memref<16x1x128xf32, #tpu.memory_space<vmem>>, %arg7: memref<32x512xf32, #tpu.memory_space<vmem>>, %arg8: memref<32x1xf32, #tpu.memory_space<vmem>>, %arg9: memref<16x1x128xf32, #tpu.memory_space<vmem>>, %arg10: memref<32x512xf32, #tpu.memory_space<vmem>>, %arg11: memref<32x1xf32, #tpu.memory_space<vmem>>, %arg12: memref<1x32x8xf32, #tpu.memory_space<vmem>>) attributes {dimension_semantics = [#tpu.dimension_semantics<parallel>], iteration_bounds = array<i64: 2>, scalar_prefetch = 0 : i64, scratch_operands = 0 : i64, tpu.core_type = #tpu.core_type<tc>, window_params = [{transform_indices = @transform_0, window_bounds = array<i64: 64, 512>}, {pipeline_mode = #tpu.pipeline_mode<synchronous>, transform_indices = @transform_1, window_bounds = array<i64: 32, 64>}, {pipeline_mode = #tpu.pipeline_mode<synchronous>, transform_indices = @transform_2, window_bounds = array<i64: 32, 1>}, {pipeline_mode = #tpu.pipeline_mode<synchronous>, transform_indices = @transform_3, window_bounds = array<i64: 32, 512>}, {pipeline_mode = #tpu.pipeline_mode<synchronous>, transform_indices = @transform_4, window_bounds = array<i64: 32, 1>}, {pipeline_mode = #tpu.pipeline_mode<synchronous>, transform_indices = @transform_5, window_bounds = array<i64: 16, 1, 128>}, {pipeline_mode = #tpu.pipeline_mode<synchronous>, transform_indices = @transform_6, window_bounds = array<i64: 32, 512>}, {pipeline_mode = #tpu.pipeline_mode<synchronous>, transform_indices = @transform_7, window_bounds = array<i64: 32, 1>}, {pipeline_mode = #tpu.pipeline_mode<synchronous>, transform_indices = @transform_8, window_bounds = array<i64: 16, 1, 128>}, {pipeline_mode = #tpu.pipeline_mode<synchronous>, transform_indices = @transform_9, window_bounds = array<i64: 32, 512>}, {pipeline_mode = #tpu.pipeline_mode<synchronous>, transform_indices = @transform_10, window_bounds = array<i64: 32, 1>}, {transform_indices = @transform_11, window_bounds = array<i64: 1, 32, 8>}]} {
    %c0 = arith.constant 0 : index
    %c0_0 = arith.constant 0 : index
    %0 = vector.load %arg2[%c0, %c0_0] : memref<32x64xf32, #tpu.memory_space<vmem>>, vector<32x64xf32>
    %c0_1 = arith.constant 0 : index
    %c0_2 = arith.constant 0 : index
    %1 = vector.load %arg1[%c0_1, %c0_2] : memref<64x512xf32, #tpu.memory_space<vmem>>, vector<64x512xf32>
    %cst = arith.constant dense<0.000000e+00> : vector<32x512xf32>
    %2 = tpu.matmul %0, %1, %cst {dimension_numbers = #tpu.dot_dimension_numbers<[1], [0], [0], [1], [0, 0, 1, 1], [], []>, precision = #tpu.contract_precision<fp32>} : vector<32x64xf32>, vector<64x512xf32>, vector<32x512xf32> -> vector<32x512xf32>
    %c0_3 = arith.constant 0 : index
    %c0_4 = arith.constant 0 : index
    %3 = vector.load %arg3[%c0_3, %c0_4] : memref<32x1xf32, #tpu.memory_space<vmem>>, vector<32x1xf32>
    %4 = vector.broadcast %3 : vector<32x1xf32> to vector<32x512xf32>
    %5 = arith.addf %2, %4 : vector<32x512xf32>
    %cst_5 = arith.constant 0.000000e+00 : f32
    %6 = vector.broadcast %cst_5 : f32 to vector<32x512xf32>
    %7 = arith.maximumf %5, %6 : vector<32x512xf32>
    %8 = vector.extract_strided_slice %7 {offsets = [0, 384], sizes = [32, 128], strides = [1, 1]} : vector<32x512xf32> to vector<32x128xf32>
    %cst_6 = arith.constant 0.000000e+00 : f32
    %9 = vector.broadcast %cst_6 : f32 to vector<32x40xf32>
    %10 = vector.extract_strided_slice %8 {offsets = [0, 0], sizes = [32, 88], strides = [1, 1]} : vector<32x128xf32> to vector<32x88xf32>
    %11 = tpu.concatenate %9, %10 in 1 : vector<32x40xf32>, vector<32x88xf32> -> vector<32x128xf32>
    %c0_7 = arith.constant 0 : index
    %c0_8 = arith.constant 0 : index
    %c0_9 = arith.constant 0 : index
    %12 = vector.load %arg6[%c0_7, %c0_8, %c0_9] : memref<16x1x128xf32, #tpu.memory_space<vmem>>, vector<1x1x128xf32>
    %13 = vector.shape_cast %12 : vector<1x1x128xf32> to vector<1x128xf32>
    %14 = vector.broadcast %13 : vector<1x128xf32> to vector<32x128xf32>
    %15 = arith.mulf %11, %14 : vector<32x128xf32>
    %16 = vector.extract_strided_slice %7 {offsets = [0, 256], sizes = [32, 128], strides = [1, 1]} : vector<32x512xf32> to vector<32x128xf32>
    %cst_10 = arith.constant 0.000000e+00 : f32
    %17 = vector.broadcast %cst_10 : f32 to vector<32x32xf32>
    %18 = vector.extract_strided_slice %16 {offsets = [0, 0], sizes = [32, 96], strides = [1, 1]} : vector<32x128xf32> to vector<32x96xf32>
    %19 = tpu.concatenate %17, %18 in 1 : vector<32x32xf32>, vector<32x96xf32> -> vector<32x128xf32>
    %c1 = arith.constant 1 : index
    %c0_11 = arith.constant 0 : index
    %c0_12 = arith.constant 0 : index
    %20 = vector.load %arg6[%c1, %c0_11, %c0_12] : memref<16x1x128xf32, #tpu.memory_space<vmem>>, vector<1x1x128xf32>
    %21 = vector.shape_cast %20 : vector<1x1x128xf32> to vector<1x128xf32>
    %22 = vector.broadcast %21 : vector<1x128xf32> to vector<32x128xf32>
    %23 = arith.mulf %19, %22 : vector<32x128xf32>
    %24 = vector.extract_strided_slice %7 {offsets = [0, 384], sizes = [32, 128], strides = [1, 1]} : vector<32x512xf32> to vector<32x128xf32>
    %cst_13 = arith.constant 0.000000e+00 : f32
    %25 = vector.broadcast %cst_13 : f32 to vector<32x32xf32>
    %26 = vector.extract_strided_slice %24 {offsets = [0, 0], sizes = [32, 96], strides = [1, 1]} : vector<32x128xf32> to vector<32x96xf32>
    %27 = tpu.concatenate %25, %26 in 1 : vector<32x32xf32>, vector<32x96xf32> -> vector<32x128xf32>
    %c2 = arith.constant 2 : index
    %c0_14 = arith.constant 0 : index
    %c0_15 = arith.constant 0 : index
    %28 = vector.load %arg6[%c2, %c0_14, %c0_15] : memref<16x1x128xf32, #tpu.memory_space<vmem>>, vector<1x1x128xf32>
    %29 = vector.shape_cast %28 : vector<1x1x128xf32> to vector<1x128xf32>
    %30 = vector.broadcast %29 : vector<1x128xf32> to vector<32x128xf32>
    %31 = arith.mulf %27, %30 : vector<32x128xf32>
    %32 = vector.extract_strided_slice %7 {offsets = [0, 256], sizes = [32, 128], strides = [1, 1]} : vector<32x512xf32> to vector<32x128xf32>
    %cst_16 = arith.constant 0.000000e+00 : f32
    %33 = vector.broadcast %cst_16 : f32 to vector<32x24xf32>
    %34 = vector.extract_strided_slice %32 {offsets = [0, 0], sizes = [32, 104], strides = [1, 1]} : vector<32x128xf32> to vector<32x104xf32>
    %35 = tpu.concatenate %33, %34 in 1 : vector<32x24xf32>, vector<32x104xf32> -> vector<32x128xf32>
    %c3 = arith.constant 3 : index
    %c0_17 = arith.constant 0 : index
    %c0_18 = arith.constant 0 : index
    %36 = vector.load %arg6[%c3, %c0_17, %c0_18] : memref<16x1x128xf32, #tpu.memory_space<vmem>>, vector<1x1x128xf32>
    %37 = vector.shape_cast %36 : vector<1x1x128xf32> to vector<1x128xf32>
    %38 = vector.broadcast %37 : vector<1x128xf32> to vector<32x128xf32>
    %39 = arith.mulf %35, %38 : vector<32x128xf32>
    %40 = vector.extract_strided_slice %7 {offsets = [0, 128], sizes = [32, 128], strides = [1, 1]} : vector<32x512xf32> to vector<32x128xf32>
    %cst_19 = arith.constant 0.000000e+00 : f32
    %41 = vector.broadcast %cst_19 : f32 to vector<32x8xf32>
    %42 = vector.extract_strided_slice %40 {offsets = [0, 0], sizes = [32, 120], strides = [1, 1]} : vector<32x128xf32> to vector<32x120xf32>
    %43 = tpu.concatenate %41, %42 in 1 : vector<32x8xf32>, vector<32x120xf32> -> vector<32x128xf32>
    %c4 = arith.constant 4 : index
    %c0_20 = arith.constant 0 : index
    %c0_21 = arith.constant 0 : index
    %44 = vector.load %arg6[%c4, %c0_20, %c0_21] : memref<16x1x128xf32, #tpu.memory_space<vmem>>, vector<1x1x128xf32>
    %45 = vector.shape_cast %44 : vector<1x1x128xf32> to vector<1x128xf32>
    %46 = vector.broadcast %45 : vector<1x128xf32> to vector<32x128xf32>
    %47 = arith.mulf %43, %46 : vector<32x128xf32>
    %48 = vector.extract_strided_slice %7 {offsets = [0, 0], sizes = [32, 128], strides = [1, 1]} : vector<32x512xf32> to vector<32x128xf32>
    %c5 = arith.constant 5 : index
    %c0_22 = arith.constant 0 : index
    %c0_23 = arith.constant 0 : index
    %49 = vector.load %arg6[%c5, %c0_22, %c0_23] : memref<16x1x128xf32, #tpu.memory_space<vmem>>, vector<1x1x128xf32>
    %50 = vector.shape_cast %49 : vector<1x1x128xf32> to vector<1x128xf32>
    %51 = vector.broadcast %50 : vector<1x128xf32> to vector<32x128xf32>
    %52 = arith.mulf %48, %51 : vector<32x128xf32>
    %53 = vector.extract_strided_slice %7 {offsets = [0, 128], sizes = [32, 128], strides = [1, 1]} : vector<32x512xf32> to vector<32x128xf32>
    %c6 = arith.constant 6 : index
    %c0_24 = arith.constant 0 : index
    %c0_25 = arith.constant 0 : index
    %54 = vector.load %arg6[%c6, %c0_24, %c0_25] : memref<16x1x128xf32, #tpu.memory_space<vmem>>, vector<1x1x128xf32>
    %55 = vector.shape_cast %54 : vector<1x1x128xf32> to vector<1x128xf32>
    %56 = vector.broadcast %55 : vector<1x128xf32> to vector<32x128xf32>
    %57 = arith.mulf %53, %56 : vector<32x128xf32>
    %58 = vector.extract_strided_slice %7 {offsets = [0, 0], sizes = [32, 128], strides = [1, 1]} : vector<32x512xf32> to vector<32x128xf32>
    %59 = vector.extract_strided_slice %58 {offsets = [0, 8], sizes = [32, 120], strides = [1, 1]} : vector<32x128xf32> to vector<32x120xf32>
    %cst_26 = arith.constant 0.000000e+00 : f32
    %60 = vector.broadcast %cst_26 : f32 to vector<32x8xf32>
    %61 = tpu.concatenate %59, %60 in 1 : vector<32x120xf32>, vector<32x8xf32> -> vector<32x128xf32>
    %c7 = arith.constant 7 : index
    %c0_27 = arith.constant 0 : index
    %c0_28 = arith.constant 0 : index
    %62 = vector.load %arg6[%c7, %c0_27, %c0_28] : memref<16x1x128xf32, #tpu.memory_space<vmem>>, vector<1x1x128xf32>
    %63 = vector.shape_cast %62 : vector<1x1x128xf32> to vector<1x128xf32>
    %64 = vector.broadcast %63 : vector<1x128xf32> to vector<32x128xf32>
    %65 = arith.mulf %61, %64 : vector<32x128xf32>
    %66 = vector.extract_strided_slice %7 {offsets = [0, 384], sizes = [32, 128], strides = [1, 1]} : vector<32x512xf32> to vector<32x128xf32>
    %cst_29 = arith.constant 0.000000e+00 : f32
    %67 = vector.broadcast %cst_29 : f32 to vector<32x8xf32>
    %68 = vector.extract_strided_slice %66 {offsets = [0, 0], sizes = [32, 120], strides = [1, 1]} : vector<32x128xf32> to vector<32x120xf32>
    %69 = tpu.concatenate %67, %68 in 1 : vector<32x8xf32>, vector<32x120xf32> -> vector<32x128xf32>
    %c8 = arith.constant 8 : index
    %c0_30 = arith.constant 0 : index
    %c0_31 = arith.constant 0 : index
    %70 = vector.load %arg6[%c8, %c0_30, %c0_31] : memref<16x1x128xf32, #tpu.memory_space<vmem>>, vector<1x1x128xf32>
    %71 = vector.shape_cast %70 : vector<1x1x128xf32> to vector<1x128xf32>
    %72 = vector.broadcast %71 : vector<1x128xf32> to vector<32x128xf32>
    %73 = arith.mulf %69, %72 : vector<32x128xf32>
    %74 = vector.extract_strided_slice %7 {offsets = [0, 256], sizes = [32, 128], strides = [1, 1]} : vector<32x512xf32> to vector<32x128xf32>
    %c9 = arith.constant 9 : index
    %c0_32 = arith.constant 0 : index
    %c0_33 = arith.constant 0 : index
    %75 = vector.load %arg6[%c9, %c0_32, %c0_33] : memref<16x1x128xf32, #tpu.memory_space<vmem>>, vector<1x1x128xf32>
    %76 = vector.shape_cast %75 : vector<1x1x128xf32> to vector<1x128xf32>
    %77 = vector.broadcast %76 : vector<1x128xf32> to vector<32x128xf32>
    %78 = arith.mulf %74, %77 : vector<32x128xf32>
    %79 = vector.extract_strided_slice %7 {offsets = [0, 384], sizes = [32, 128], strides = [1, 1]} : vector<32x512xf32> to vector<32x128xf32>
    %c10 = arith.constant 10 : index
    %c0_34 = arith.constant 0 : index
    %c0_35 = arith.constant 0 : index
    %80 = vector.load %arg6[%c10, %c0_34, %c0_35] : memref<16x1x128xf32, #tpu.memory_space<vmem>>, vector<1x1x128xf32>
    %81 = vector.shape_cast %80 : vector<1x1x128xf32> to vector<1x128xf32>
    %82 = vector.broadcast %81 : vector<1x128xf32> to vector<32x128xf32>
    %83 = arith.mulf %79, %82 : vector<32x128xf32>
    %84 = vector.extract_strided_slice %7 {offsets = [0, 256], sizes = [32, 128], strides = [1, 1]} : vector<32x512xf32> to vector<32x128xf32>
    %85 = vector.extract_strided_slice %84 {offsets = [0, 8], sizes = [32, 120], strides = [1, 1]} : vector<32x128xf32> to vector<32x120xf32>
    %cst_36 = arith.constant 0.000000e+00 : f32
    %86 = vector.broadcast %cst_36 : f32 to vector<32x8xf32>
    %87 = tpu.concatenate %85, %86 in 1 : vector<32x120xf32>, vector<32x8xf32> -> vector<32x128xf32>
    %c11 = arith.constant 11 : index
    %c0_37 = arith.constant 0 : index
    %c0_38 = arith.constant 0 : index
    %88 = vector.load %arg6[%c11, %c0_37, %c0_38] : memref<16x1x128xf32, #tpu.memory_space<vmem>>, vector<1x1x128xf32>
    %89 = vector.shape_cast %88 : vector<1x1x128xf32> to vector<1x128xf32>
    %90 = vector.broadcast %89 : vector<1x128xf32> to vector<32x128xf32>
    %91 = arith.mulf %87, %90 : vector<32x128xf32>
    %92 = vector.extract_strided_slice %7 {offsets = [0, 128], sizes = [32, 128], strides = [1, 1]} : vector<32x512xf32> to vector<32x128xf32>
    %93 = vector.extract_strided_slice %92 {offsets = [0, 24], sizes = [32, 104], strides = [1, 1]} : vector<32x128xf32> to vector<32x104xf32>
    %cst_39 = arith.constant 0.000000e+00 : f32
    %94 = vector.broadcast %cst_39 : f32 to vector<32x24xf32>
    %95 = tpu.concatenate %93, %94 in 1 : vector<32x104xf32>, vector<32x24xf32> -> vector<32x128xf32>
    %c12 = arith.constant 12 : index
    %c0_40 = arith.constant 0 : index
    %c0_41 = arith.constant 0 : index
    %96 = vector.load %arg6[%c12, %c0_40, %c0_41] : memref<16x1x128xf32, #tpu.memory_space<vmem>>, vector<1x1x128xf32>
    %97 = vector.shape_cast %96 : vector<1x1x128xf32> to vector<1x128xf32>
    %98 = vector.broadcast %97 : vector<1x128xf32> to vector<32x128xf32>
    %99 = arith.mulf %95, %98 : vector<32x128xf32>
    %100 = vector.extract_strided_slice %7 {offsets = [0, 0], sizes = [32, 128], strides = [1, 1]} : vector<32x512xf32> to vector<32x128xf32>
    %101 = vector.extract_strided_slice %100 {offsets = [0, 32], sizes = [32, 96], strides = [1, 1]} : vector<32x128xf32> to vector<32x96xf32>
    %cst_42 = arith.constant 0.000000e+00 : f32
    %102 = vector.broadcast %cst_42 : f32 to vector<32x32xf32>
    %103 = tpu.concatenate %101, %102 in 1 : vector<32x96xf32>, vector<32x32xf32> -> vector<32x128xf32>
    %c13 = arith.constant 13 : index
    %c0_43 = arith.constant 0 : index
    %c0_44 = arith.constant 0 : index
    %104 = vector.load %arg6[%c13, %c0_43, %c0_44] : memref<16x1x128xf32, #tpu.memory_space<vmem>>, vector<1x1x128xf32>
    %105 = vector.shape_cast %104 : vector<1x1x128xf32> to vector<1x128xf32>
    %106 = vector.broadcast %105 : vector<1x128xf32> to vector<32x128xf32>
    %107 = arith.mulf %103, %106 : vector<32x128xf32>
    %108 = vector.extract_strided_slice %7 {offsets = [0, 128], sizes = [32, 128], strides = [1, 1]} : vector<32x512xf32> to vector<32x128xf32>
    %109 = vector.extract_strided_slice %108 {offsets = [0, 32], sizes = [32, 96], strides = [1, 1]} : vector<32x128xf32> to vector<32x96xf32>
    %cst_45 = arith.constant 0.000000e+00 : f32
    %110 = vector.broadcast %cst_45 : f32 to vector<32x32xf32>
    %111 = tpu.concatenate %109, %110 in 1 : vector<32x96xf32>, vector<32x32xf32> -> vector<32x128xf32>
    %c14 = arith.constant 14 : index
    %c0_46 = arith.constant 0 : index
    %c0_47 = arith.constant 0 : index
    %112 = vector.load %arg6[%c14, %c0_46, %c0_47] : memref<16x1x128xf32, #tpu.memory_space<vmem>>, vector<1x1x128xf32>
    %113 = vector.shape_cast %112 : vector<1x1x128xf32> to vector<1x128xf32>
    %114 = vector.broadcast %113 : vector<1x128xf32> to vector<32x128xf32>
    %115 = arith.mulf %111, %114 : vector<32x128xf32>
    %116 = vector.extract_strided_slice %7 {offsets = [0, 0], sizes = [32, 128], strides = [1, 1]} : vector<32x512xf32> to vector<32x128xf32>
    %117 = vector.extract_strided_slice %116 {offsets = [0, 40], sizes = [32, 88], strides = [1, 1]} : vector<32x128xf32> to vector<32x88xf32>
    %cst_48 = arith.constant 0.000000e+00 : f32
    %118 = vector.broadcast %cst_48 : f32 to vector<32x40xf32>
    %119 = tpu.concatenate %117, %118 in 1 : vector<32x88xf32>, vector<32x40xf32> -> vector<32x128xf32>
    %c15 = arith.constant 15 : index
    %c0_49 = arith.constant 0 : index
    %c0_50 = arith.constant 0 : index
    %120 = vector.load %arg6[%c15, %c0_49, %c0_50] : memref<16x1x128xf32, #tpu.memory_space<vmem>>, vector<1x1x128xf32>
    %121 = vector.shape_cast %120 : vector<1x1x128xf32> to vector<1x128xf32>
    %122 = vector.broadcast %121 : vector<1x128xf32> to vector<32x128xf32>
    %123 = arith.mulf %119, %122 : vector<32x128xf32>
    %124 = tpu.concatenate %15, %23, %31, %39, %47, %52, %57, %65, %73, %78, %83, %91, %99, %107, %115, %123 in 0 : vector<32x128xf32>, vector<32x128xf32>, vector<32x128xf32>, vector<32x128xf32>, vector<32x128xf32>, vector<32x128xf32>, vector<32x128xf32>, vector<32x128xf32>, vector<32x128xf32>, vector<32x128xf32>, vector<32x128xf32>, vector<32x128xf32>, vector<32x128xf32>, vector<32x128xf32>, vector<32x128xf32>, vector<32x128xf32> -> vector<512x128xf32>
    %c0_51 = arith.constant 0 : index
    %c0_52 = arith.constant 0 : index
    %125 = vector.load %arg4[%c0_51, %c0_52] : memref<32x512xf32, #tpu.memory_space<vmem>>, vector<32x512xf32>
    %cst_53 = arith.constant dense<0.000000e+00> : vector<32x128xf32>
    %126 = tpu.matmul %125, %124, %cst_53 {dimension_numbers = #tpu.dot_dimension_numbers<[1], [0], [0], [1], [0, 0, 1, 1], [], []>, precision = #tpu.contract_precision<fp32>} : vector<32x512xf32>, vector<512x128xf32>, vector<32x128xf32> -> vector<32x128xf32>
    %c0_54 = arith.constant 0 : index
    %c0_55 = arith.constant 0 : index
    %127 = vector.load %arg5[%c0_54, %c0_55] : memref<32x1xf32, #tpu.memory_space<vmem>>, vector<32x1xf32>
    %128 = vector.broadcast %127 : vector<32x1xf32> to vector<32x128xf32>
    %129 = arith.addf %126, %128 : vector<32x128xf32>
    %cst_56 = arith.constant 0.000000e+00 : f32
    %130 = vector.broadcast %cst_56 : f32 to vector<32x128xf32>
    %131 = arith.maximumf %129, %130 : vector<32x128xf32>
    %cst_57 = arith.constant 0.000000e+00 : f32
    %132 = vector.broadcast %cst_57 : f32 to vector<32x40xf32>
    %133 = vector.extract_strided_slice %131 {offsets = [0, 0], sizes = [32, 88], strides = [1, 1]} : vector<32x128xf32> to vector<32x88xf32>
    %134 = tpu.concatenate %132, %133 in 1 : vector<32x40xf32>, vector<32x88xf32> -> vector<32x128xf32>
    %c0_58 = arith.constant 0 : index
    %c0_59 = arith.constant 0 : index
    %c0_60 = arith.constant 0 : index
    %135 = vector.load %arg9[%c0_58, %c0_59, %c0_60] : memref<16x1x128xf32, #tpu.memory_space<vmem>>, vector<1x1x128xf32>
    %136 = vector.shape_cast %135 : vector<1x1x128xf32> to vector<1x128xf32>
    %137 = vector.broadcast %136 : vector<1x128xf32> to vector<32x128xf32>
    %138 = arith.mulf %134, %137 : vector<32x128xf32>
    %cst_61 = arith.constant 0.000000e+00 : f32
    %139 = vector.broadcast %cst_61 : f32 to vector<32x32xf32>
    %140 = vector.extract_strided_slice %131 {offsets = [0, 0], sizes = [32, 96], strides = [1, 1]} : vector<32x128xf32> to vector<32x96xf32>
    %141 = tpu.concatenate %139, %140 in 1 : vector<32x32xf32>, vector<32x96xf32> -> vector<32x128xf32>
    %c1_62 = arith.constant 1 : index
    %c0_63 = arith.constant 0 : index
    %c0_64 = arith.constant 0 : index
    %142 = vector.load %arg9[%c1_62, %c0_63, %c0_64] : memref<16x1x128xf32, #tpu.memory_space<vmem>>, vector<1x1x128xf32>
    %143 = vector.shape_cast %142 : vector<1x1x128xf32> to vector<1x128xf32>
    %144 = vector.broadcast %143 : vector<1x128xf32> to vector<32x128xf32>
    %145 = arith.mulf %141, %144 : vector<32x128xf32>
    %cst_65 = arith.constant 0.000000e+00 : f32
    %146 = vector.broadcast %cst_65 : f32 to vector<32x24xf32>
    %147 = vector.extract_strided_slice %131 {offsets = [0, 0], sizes = [32, 104], strides = [1, 1]} : vector<32x128xf32> to vector<32x104xf32>
    %148 = tpu.concatenate %146, %147 in 1 : vector<32x24xf32>, vector<32x104xf32> -> vector<32x128xf32>
    %c2_66 = arith.constant 2 : index
    %c0_67 = arith.constant 0 : index
    %c0_68 = arith.constant 0 : index
    %149 = vector.load %arg9[%c2_66, %c0_67, %c0_68] : memref<16x1x128xf32, #tpu.memory_space<vmem>>, vector<1x1x128xf32>
    %150 = vector.shape_cast %149 : vector<1x1x128xf32> to vector<1x128xf32>
    %151 = vector.broadcast %150 : vector<1x128xf32> to vector<32x128xf32>
    %152 = arith.mulf %148, %151 : vector<32x128xf32>
    %cst_69 = arith.constant 0.000000e+00 : f32
    %153 = vector.broadcast %cst_69 : f32 to vector<32x16xf32>
    %154 = vector.extract_strided_slice %131 {offsets = [0, 0], sizes = [32, 112], strides = [1, 1]} : vector<32x128xf32> to vector<32x112xf32>
    %155 = tpu.concatenate %153, %154 in 1 : vector<32x16xf32>, vector<32x112xf32> -> vector<32x128xf32>
    %c3_70 = arith.constant 3 : index
    %c0_71 = arith.constant 0 : index
    %c0_72 = arith.constant 0 : index
    %156 = vector.load %arg9[%c3_70, %c0_71, %c0_72] : memref<16x1x128xf32, #tpu.memory_space<vmem>>, vector<1x1x128xf32>
    %157 = vector.shape_cast %156 : vector<1x1x128xf32> to vector<1x128xf32>
    %158 = vector.broadcast %157 : vector<1x128xf32> to vector<32x128xf32>
    %159 = arith.mulf %155, %158 : vector<32x128xf32>
    %cst_73 = arith.constant 0.000000e+00 : f32
    %160 = vector.broadcast %cst_73 : f32 to vector<32x8xf32>
    %161 = vector.extract_strided_slice %131 {offsets = [0, 0], sizes = [32, 120], strides = [1, 1]} : vector<32x128xf32> to vector<32x120xf32>
    %162 = tpu.concatenate %160, %161 in 1 : vector<32x8xf32>, vector<32x120xf32> -> vector<32x128xf32>
    %c4_74 = arith.constant 4 : index
    %c0_75 = arith.constant 0 : index
    %c0_76 = arith.constant 0 : index
    %163 = vector.load %arg9[%c4_74, %c0_75, %c0_76] : memref<16x1x128xf32, #tpu.memory_space<vmem>>, vector<1x1x128xf32>
    %164 = vector.shape_cast %163 : vector<1x1x128xf32> to vector<1x128xf32>
    %165 = vector.broadcast %164 : vector<1x128xf32> to vector<32x128xf32>
    %166 = arith.mulf %162, %165 : vector<32x128xf32>
    %c5_77 = arith.constant 5 : index
    %c0_78 = arith.constant 0 : index
    %c0_79 = arith.constant 0 : index
    %167 = vector.load %arg9[%c5_77, %c0_78, %c0_79] : memref<16x1x128xf32, #tpu.memory_space<vmem>>, vector<1x1x128xf32>
    %168 = vector.shape_cast %167 : vector<1x1x128xf32> to vector<1x128xf32>
    %169 = vector.broadcast %168 : vector<1x128xf32> to vector<32x128xf32>
    %170 = arith.mulf %131, %169 : vector<32x128xf32>
    %171 = vector.extract_strided_slice %131 {offsets = [0, 8], sizes = [32, 120], strides = [1, 1]} : vector<32x128xf32> to vector<32x120xf32>
    %cst_80 = arith.constant 0.000000e+00 : f32
    %172 = vector.broadcast %cst_80 : f32 to vector<32x8xf32>
    %173 = tpu.concatenate %171, %172 in 1 : vector<32x120xf32>, vector<32x8xf32> -> vector<32x128xf32>
    %c6_81 = arith.constant 6 : index
    %c0_82 = arith.constant 0 : index
    %c0_83 = arith.constant 0 : index
    %174 = vector.load %arg9[%c6_81, %c0_82, %c0_83] : memref<16x1x128xf32, #tpu.memory_space<vmem>>, vector<1x1x128xf32>
    %175 = vector.shape_cast %174 : vector<1x1x128xf32> to vector<1x128xf32>
    %176 = vector.broadcast %175 : vector<1x128xf32> to vector<32x128xf32>
    %177 = arith.mulf %173, %176 : vector<32x128xf32>
    %178 = vector.extract_strided_slice %131 {offsets = [0, 16], sizes = [32, 112], strides = [1, 1]} : vector<32x128xf32> to vector<32x112xf32>
    %cst_84 = arith.constant 0.000000e+00 : f32
    %179 = vector.broadcast %cst_84 : f32 to vector<32x16xf32>
    %180 = tpu.concatenate %178, %179 in 1 : vector<32x112xf32>, vector<32x16xf32> -> vector<32x128xf32>
    %c7_85 = arith.constant 7 : index
    %c0_86 = arith.constant 0 : index
    %c0_87 = arith.constant 0 : index
    %181 = vector.load %arg9[%c7_85, %c0_86, %c0_87] : memref<16x1x128xf32, #tpu.memory_space<vmem>>, vector<1x1x128xf32>
    %182 = vector.shape_cast %181 : vector<1x1x128xf32> to vector<1x128xf32>
    %183 = vector.broadcast %182 : vector<1x128xf32> to vector<32x128xf32>
    %184 = arith.mulf %180, %183 : vector<32x128xf32>
    %185 = vector.extract_strided_slice %131 {offsets = [0, 24], sizes = [32, 104], strides = [1, 1]} : vector<32x128xf32> to vector<32x104xf32>
    %cst_88 = arith.constant 0.000000e+00 : f32
    %186 = vector.broadcast %cst_88 : f32 to vector<32x24xf32>
    %187 = tpu.concatenate %185, %186 in 1 : vector<32x104xf32>, vector<32x24xf32> -> vector<32x128xf32>
    %c8_89 = arith.constant 8 : index
    %c0_90 = arith.constant 0 : index
    %c0_91 = arith.constant 0 : index
    %188 = vector.load %arg9[%c8_89, %c0_90, %c0_91] : memref<16x1x128xf32, #tpu.memory_space<vmem>>, vector<1x1x128xf32>
    %189 = vector.shape_cast %188 : vector<1x1x128xf32> to vector<1x128xf32>
    %190 = vector.broadcast %189 : vector<1x128xf32> to vector<32x128xf32>
    %191 = arith.mulf %187, %190 : vector<32x128xf32>
    %192 = vector.extract_strided_slice %131 {offsets = [0, 32], sizes = [32, 96], strides = [1, 1]} : vector<32x128xf32> to vector<32x96xf32>
    %cst_92 = arith.constant 0.000000e+00 : f32
    %193 = vector.broadcast %cst_92 : f32 to vector<32x32xf32>
    %194 = tpu.concatenate %192, %193 in 1 : vector<32x96xf32>, vector<32x32xf32> -> vector<32x128xf32>
    %c9_93 = arith.constant 9 : index
    %c0_94 = arith.constant 0 : index
    %c0_95 = arith.constant 0 : index
    %195 = vector.load %arg9[%c9_93, %c0_94, %c0_95] : memref<16x1x128xf32, #tpu.memory_space<vmem>>, vector<1x1x128xf32>
    %196 = vector.shape_cast %195 : vector<1x1x128xf32> to vector<1x128xf32>
    %197 = vector.broadcast %196 : vector<1x128xf32> to vector<32x128xf32>
    %198 = arith.mulf %194, %197 : vector<32x128xf32>
    %199 = vector.extract_strided_slice %131 {offsets = [0, 40], sizes = [32, 88], strides = [1, 1]} : vector<32x128xf32> to vector<32x88xf32>
    %cst_96 = arith.constant 0.000000e+00 : f32
    %200 = vector.broadcast %cst_96 : f32 to vector<32x40xf32>
    %201 = tpu.concatenate %199, %200 in 1 : vector<32x88xf32>, vector<32x40xf32> -> vector<32x128xf32>
    %c10_97 = arith.constant 10 : index
    %c0_98 = arith.constant 0 : index
    %c0_99 = arith.constant 0 : index
    %202 = vector.load %arg9[%c10_97, %c0_98, %c0_99] : memref<16x1x128xf32, #tpu.memory_space<vmem>>, vector<1x1x128xf32>
    %203 = vector.shape_cast %202 : vector<1x1x128xf32> to vector<1x128xf32>
    %204 = vector.broadcast %203 : vector<1x128xf32> to vector<32x128xf32>
    %205 = arith.mulf %201, %204 : vector<32x128xf32>
    %206 = vector.extract_strided_slice %131 {offsets = [0, 48], sizes = [32, 80], strides = [1, 1]} : vector<32x128xf32> to vector<32x80xf32>
    %cst_100 = arith.constant 0.000000e+00 : f32
    %207 = vector.broadcast %cst_100 : f32 to vector<32x48xf32>
    %208 = tpu.concatenate %206, %207 in 1 : vector<32x80xf32>, vector<32x48xf32> -> vector<32x128xf32>
    %c11_101 = arith.constant 11 : index
    %c0_102 = arith.constant 0 : index
    %c0_103 = arith.constant 0 : index
    %209 = vector.load %arg9[%c11_101, %c0_102, %c0_103] : memref<16x1x128xf32, #tpu.memory_space<vmem>>, vector<1x1x128xf32>
    %210 = vector.shape_cast %209 : vector<1x1x128xf32> to vector<1x128xf32>
    %211 = vector.broadcast %210 : vector<1x128xf32> to vector<32x128xf32>
    %212 = arith.mulf %208, %211 : vector<32x128xf32>
    %213 = vector.extract_strided_slice %131 {offsets = [0, 56], sizes = [32, 72], strides = [1, 1]} : vector<32x128xf32> to vector<32x72xf32>
    %cst_104 = arith.constant 0.000000e+00 : f32
    %214 = vector.broadcast %cst_104 : f32 to vector<32x56xf32>
    %215 = tpu.concatenate %213, %214 in 1 : vector<32x72xf32>, vector<32x56xf32> -> vector<32x128xf32>
    %c12_105 = arith.constant 12 : index
    %c0_106 = arith.constant 0 : index
    %c0_107 = arith.constant 0 : index
    %216 = vector.load %arg9[%c12_105, %c0_106, %c0_107] : memref<16x1x128xf32, #tpu.memory_space<vmem>>, vector<1x1x128xf32>
    %217 = vector.shape_cast %216 : vector<1x1x128xf32> to vector<1x128xf32>
    %218 = vector.broadcast %217 : vector<1x128xf32> to vector<32x128xf32>
    %219 = arith.mulf %215, %218 : vector<32x128xf32>
    %220 = vector.extract_strided_slice %131 {offsets = [0, 64], sizes = [32, 64], strides = [1, 1]} : vector<32x128xf32> to vector<32x64xf32>
    %cst_108 = arith.constant 0.000000e+00 : f32
    %221 = vector.broadcast %cst_108 : f32 to vector<32x64xf32>
    %222 = tpu.concatenate %220, %221 in 1 : vector<32x64xf32>, vector<32x64xf32> -> vector<32x128xf32>
    %c13_109 = arith.constant 13 : index
    %c0_110 = arith.constant 0 : index
    %c0_111 = arith.constant 0 : index
    %223 = vector.load %arg9[%c13_109, %c0_110, %c0_111] : memref<16x1x128xf32, #tpu.memory_space<vmem>>, vector<1x1x128xf32>
    %224 = vector.shape_cast %223 : vector<1x1x128xf32> to vector<1x128xf32>
    %225 = vector.broadcast %224 : vector<1x128xf32> to vector<32x128xf32>
    %226 = arith.mulf %222, %225 : vector<32x128xf32>
    %227 = vector.extract_strided_slice %131 {offsets = [0, 72], sizes = [32, 56], strides = [1, 1]} : vector<32x128xf32> to vector<32x56xf32>
    %cst_112 = arith.constant 0.000000e+00 : f32
    %228 = vector.broadcast %cst_112 : f32 to vector<32x72xf32>
    %229 = tpu.concatenate %227, %228 in 1 : vector<32x56xf32>, vector<32x72xf32> -> vector<32x128xf32>
    %c14_113 = arith.constant 14 : index
    %c0_114 = arith.constant 0 : index
    %c0_115 = arith.constant 0 : index
    %230 = vector.load %arg9[%c14_113, %c0_114, %c0_115] : memref<16x1x128xf32, #tpu.memory_space<vmem>>, vector<1x1x128xf32>
    %231 = vector.shape_cast %230 : vector<1x1x128xf32> to vector<1x128xf32>
    %232 = vector.broadcast %231 : vector<1x128xf32> to vector<32x128xf32>
    %233 = arith.mulf %229, %232 : vector<32x128xf32>
    %234 = vector.extract_strided_slice %131 {offsets = [0, 80], sizes = [32, 48], strides = [1, 1]} : vector<32x128xf32> to vector<32x48xf32>
    %cst_116 = arith.constant 0.000000e+00 : f32
    %235 = vector.broadcast %cst_116 : f32 to vector<32x80xf32>
    %236 = tpu.concatenate %234, %235 in 1 : vector<32x48xf32>, vector<32x80xf32> -> vector<32x128xf32>
    %c15_117 = arith.constant 15 : index
    %c0_118 = arith.constant 0 : index
    %c0_119 = arith.constant 0 : index
    %237 = vector.load %arg9[%c15_117, %c0_118, %c0_119] : memref<16x1x128xf32, #tpu.memory_space<vmem>>, vector<1x1x128xf32>
    %238 = vector.shape_cast %237 : vector<1x1x128xf32> to vector<1x128xf32>
    %239 = vector.broadcast %238 : vector<1x128xf32> to vector<32x128xf32>
    %240 = arith.mulf %236, %239 : vector<32x128xf32>
    %241 = tpu.concatenate %138, %145, %152, %159, %166, %170, %177, %184, %191, %198, %205, %212, %219, %226, %233, %240 in 0 : vector<32x128xf32>, vector<32x128xf32>, vector<32x128xf32>, vector<32x128xf32>, vector<32x128xf32>, vector<32x128xf32>, vector<32x128xf32>, vector<32x128xf32>, vector<32x128xf32>, vector<32x128xf32>, vector<32x128xf32>, vector<32x128xf32>, vector<32x128xf32>, vector<32x128xf32>, vector<32x128xf32>, vector<32x128xf32> -> vector<512x128xf32>
    %c0_120 = arith.constant 0 : index
    %c0_121 = arith.constant 0 : index
    %242 = vector.load %arg7[%c0_120, %c0_121] : memref<32x512xf32, #tpu.memory_space<vmem>>, vector<32x512xf32>
    %cst_122 = arith.constant dense<0.000000e+00> : vector<32x128xf32>
    %243 = tpu.matmul %242, %241, %cst_122 {dimension_numbers = #tpu.dot_dimension_numbers<[1], [0], [0], [1], [0, 0, 1, 1], [], []>, precision = #tpu.contract_precision<fp32>} : vector<32x512xf32>, vector<512x128xf32>, vector<32x128xf32> -> vector<32x128xf32>
    %c0_123 = arith.constant 0 : index
    %c0_124 = arith.constant 0 : index
    %244 = vector.load %arg8[%c0_123, %c0_124] : memref<32x1xf32, #tpu.memory_space<vmem>>, vector<32x1xf32>
    %245 = vector.broadcast %244 : vector<32x1xf32> to vector<32x128xf32>
    %246 = arith.addf %243, %245 : vector<32x128xf32>
    %cst_125 = arith.constant 0.000000e+00 : f32
    %247 = vector.broadcast %cst_125 : f32 to vector<32x128xf32>
    %248 = arith.maximumf %246, %247 : vector<32x128xf32>
    %249 = vector.extract_strided_slice %248 {offsets = [0, 0], sizes = [32, 8], strides = [1, 1]} : vector<32x128xf32> to vector<32x8xf32>
    %250 = vector.extract_strided_slice %248 {offsets = [0, 8], sizes = [32, 8], strides = [1, 1]} : vector<32x128xf32> to vector<32x8xf32>
    %251 = vector.extract_strided_slice %248 {offsets = [0, 16], sizes = [32, 8], strides = [1, 1]} : vector<32x128xf32> to vector<32x8xf32>
    %252 = vector.extract_strided_slice %248 {offsets = [0, 24], sizes = [32, 8], strides = [1, 1]} : vector<32x128xf32> to vector<32x8xf32>
    %253 = vector.extract_strided_slice %248 {offsets = [0, 32], sizes = [32, 8], strides = [1, 1]} : vector<32x128xf32> to vector<32x8xf32>
    %254 = vector.extract_strided_slice %248 {offsets = [0, 40], sizes = [32, 8], strides = [1, 1]} : vector<32x128xf32> to vector<32x8xf32>
    %255 = vector.extract_strided_slice %248 {offsets = [0, 48], sizes = [32, 8], strides = [1, 1]} : vector<32x128xf32> to vector<32x8xf32>
    %256 = vector.extract_strided_slice %248 {offsets = [0, 56], sizes = [32, 8], strides = [1, 1]} : vector<32x128xf32> to vector<32x8xf32>
    %257 = vector.extract_strided_slice %248 {offsets = [0, 64], sizes = [32, 8], strides = [1, 1]} : vector<32x128xf32> to vector<32x8xf32>
    %258 = vector.extract_strided_slice %248 {offsets = [0, 72], sizes = [32, 8], strides = [1, 1]} : vector<32x128xf32> to vector<32x8xf32>
    %259 = vector.extract_strided_slice %248 {offsets = [0, 80], sizes = [32, 8], strides = [1, 1]} : vector<32x128xf32> to vector<32x8xf32>
    %260 = vector.extract_strided_slice %248 {offsets = [0, 88], sizes = [32, 8], strides = [1, 1]} : vector<32x128xf32> to vector<32x8xf32>
    %261 = vector.extract_strided_slice %248 {offsets = [0, 96], sizes = [32, 8], strides = [1, 1]} : vector<32x128xf32> to vector<32x8xf32>
    %262 = vector.extract_strided_slice %248 {offsets = [0, 104], sizes = [32, 8], strides = [1, 1]} : vector<32x128xf32> to vector<32x8xf32>
    %263 = vector.extract_strided_slice %248 {offsets = [0, 112], sizes = [32, 8], strides = [1, 1]} : vector<32x128xf32> to vector<32x8xf32>
    %264 = vector.extract_strided_slice %248 {offsets = [0, 120], sizes = [32, 8], strides = [1, 1]} : vector<32x128xf32> to vector<32x8xf32>
    %265 = tpu.concatenate %249, %250, %251, %252, %253, %254, %255, %256, %257, %258, %259, %260, %261, %262, %263, %264 in 0 : vector<32x8xf32>, vector<32x8xf32>, vector<32x8xf32>, vector<32x8xf32>, vector<32x8xf32>, vector<32x8xf32>, vector<32x8xf32>, vector<32x8xf32>, vector<32x8xf32>, vector<32x8xf32>, vector<32x8xf32>, vector<32x8xf32>, vector<32x8xf32>, vector<32x8xf32>, vector<32x8xf32>, vector<32x8xf32> -> vector<512x8xf32>
    %c0_126 = arith.constant 0 : index
    %c0_127 = arith.constant 0 : index
    %266 = vector.load %arg10[%c0_126, %c0_127] : memref<32x512xf32, #tpu.memory_space<vmem>>, vector<32x512xf32>
    %cst_128 = arith.constant dense<0.000000e+00> : vector<32x8xf32>
    %267 = tpu.matmul %266, %265, %cst_128 {dimension_numbers = #tpu.dot_dimension_numbers<[1], [0], [0], [1], [0, 0, 1, 1], [], []>, precision = #tpu.contract_precision<fp32>} : vector<32x512xf32>, vector<512x8xf32>, vector<32x8xf32> -> vector<32x8xf32>
    %c0_129 = arith.constant 0 : index
    %c0_130 = arith.constant 0 : index
    %268 = vector.load %arg11[%c0_129, %c0_130] : memref<32x1xf32, #tpu.memory_space<vmem>>, vector<32x1xf32>
    %269 = vector.broadcast %268 : vector<32x1xf32> to vector<32x8xf32>
    %270 = arith.addf %267, %269 : vector<32x8xf32>
    %271 = arith.mulf %270, %270 : vector<32x8xf32>
    %cst_131 = arith.constant dense<0.000000e+00> : vector<8xf32>
    %272 = vector.multi_reduction <add>, %271, %cst_131 [0] : vector<32x8xf32> to vector<8xf32>
    %273 = vector.shape_cast %272 : vector<8xf32> to vector<1x8xf32>
    %cst_132 = arith.constant 1.000000e-24 : f32
    %274 = vector.broadcast %cst_132 : f32 to vector<1x8xf32>
    %275 = arith.maximumf %273, %274 : vector<1x8xf32>
    %276 = math.rsqrt %275 : vector<1x8xf32>
    %277 = vector.broadcast %276 : vector<1x8xf32> to vector<32x8xf32>
    %278 = arith.mulf %270, %277 : vector<32x8xf32>
    %279 = vector.shape_cast %278 : vector<32x8xf32> to vector<1x32x8xf32>
    %c0_133 = arith.constant 0 : index
    %c0_134 = arith.constant 0 : index
    %c0_135 = arith.constant 0 : index
    %280 = vector.load %arg12[%c0_133, %c0_134, %c0_135] : memref<1x32x8xf32, #tpu.memory_space<vmem>>, vector<1x32x8xf32>
    tpu.vector_store %arg12[%c0_133, %c0_134, %c0_135], %279 {strides = array<i32>} : memref<1x32x8xf32, #tpu.memory_space<vmem>>, vector<1x32x8xf32>,
    return
  }
  func.func @transform_0(%arg0: i32) -> (i32, i32) {
    %c0_i32 = arith.constant 0 : i32
    %c0_i32_0 = arith.constant 0 : i32
    return %c0_i32, %arg0 : i32, i32
  }
  func.func @transform_1(%arg0: i32) -> (i32, i32) {
    %c0_i32 = arith.constant 0 : i32
    %c0_i32_0 = arith.constant 0 : i32
    %c0_i32_1 = arith.constant 0 : i32
    return %c0_i32, %c0_i32_0 : i32, i32
  }
  func.func @transform_2(%arg0: i32) -> (i32, i32) {
    %c0_i32 = arith.constant 0 : i32
    %c0_i32_0 = arith.constant 0 : i32
    %c0_i32_1 = arith.constant 0 : i32
    return %c0_i32, %c0_i32_0 : i32, i32
  }
  func.func @transform_3(%arg0: i32) -> (i32, i32) {
    %c0_i32 = arith.constant 0 : i32
    %c0_i32_0 = arith.constant 0 : i32
    %c0_i32_1 = arith.constant 0 : i32
    return %c0_i32, %c0_i32_0 : i32, i32
  }
  func.func @transform_4(%arg0: i32) -> (i32, i32) {
    %c0_i32 = arith.constant 0 : i32
    %c0_i32_0 = arith.constant 0 : i32
    %c0_i32_1 = arith.constant 0 : i32
    return %c0_i32, %c0_i32_0 : i32, i32
  }
  func.func @transform_5(%arg0: i32) -> (i32, i32, i32) {
    %c0_i32 = arith.constant 0 : i32
    %c0_i32_0 = arith.constant 0 : i32
    %c0_i32_1 = arith.constant 0 : i32
    %c0_i32_2 = arith.constant 0 : i32
    return %c0_i32, %c0_i32_0, %c0_i32_1 : i32, i32, i32
  }
  func.func @transform_6(%arg0: i32) -> (i32, i32) {
    %c0_i32 = arith.constant 0 : i32
    %c0_i32_0 = arith.constant 0 : i32
    %c0_i32_1 = arith.constant 0 : i32
    return %c0_i32, %c0_i32_0 : i32, i32
  }
  func.func @transform_7(%arg0: i32) -> (i32, i32) {
    %c0_i32 = arith.constant 0 : i32
    %c0_i32_0 = arith.constant 0 : i32
    %c0_i32_1 = arith.constant 0 : i32
    return %c0_i32, %c0_i32_0 : i32, i32
  }
  func.func @transform_8(%arg0: i32) -> (i32, i32, i32) {
    %c0_i32 = arith.constant 0 : i32
    %c0_i32_0 = arith.constant 0 : i32
    %c0_i32_1 = arith.constant 0 : i32
    %c0_i32_2 = arith.constant 0 : i32
    return %c0_i32, %c0_i32_0, %c0_i32_1 : i32, i32, i32
  }
  func.func @transform_9(%arg0: i32) -> (i32, i32) {
    %c0_i32 = arith.constant 0 : i32
    %c0_i32_0 = arith.constant 0 : i32
    %c0_i32_1 = arith.constant 0 : i32
    return %c0_i32, %c0_i32_0 : i32, i32
  }
  func.func @transform_10(%arg0: i32) -> (i32, i32) {
    %c0_i32 = arith.constant 0 : i32
    %c0_i32_0 = arith.constant 0 : i32
    %c0_i32_1 = arith.constant 0 : i32
    return %c0_i32, %c0_i32_0 : i32, i32
  }
  func.func @transform_11(%arg0: i32) -> (i32, i32, i32) {
    %c0_i32 = arith.constant 0 : i32
    %c0_i32_0 = arith.constant 0 : i32
    %c0_i32_1 = arith.constant 0 : i32
    return %arg0, %c0_i32, %c0_i32_0 : i32, i32, i32
  }
}

</mosaic_0001>

<llo_original>
// kernel: tpu_custom_call.1
$region0: #{tpu_custom_call.1}
  #allocation0 [shape = 'u32[]', space=smem, size = 0x4, offset = 0x4, fixed_abs, tag = 'smem constant byte address 0x4 - core index']
  #allocation1 [shape = 'u32[144,128]{1,0:T(1,128)}', space=vmem, size = 0x12000, scoped, tag = 'internal scratch']
  %s0 = inlined_call_operand.hbm [shape: f32[64,1024], index: 0, kind: input, shape index: {}]
  %s1 = inlined_call_operand.hbm [shape: f32[32,64], index: 1, kind: input, shape index: {}]
  %s2 = inlined_call_operand.vmem [shape: f32[32,1], index: 2, kind: input, shape index: {}]
  %s3 = inlined_call_operand.vmem [shape: f32[32,512], index: 3, kind: input, shape index: {}]
  %s4 = inlined_call_operand.vmem [shape: f32[32,1], index: 4, kind: input, shape index: {}]
  %s5 = inlined_call_operand.hbm [shape: f32[16,1,128], index: 5, kind: input, shape index: {}]
  %s6 = inlined_call_operand.hbm [shape: f32[32,512], index: 6, kind: input, shape index: {}]
  %s7 = inlined_call_operand.vmem [shape: f32[32,1], index: 7, kind: input, shape index: {}]
  %s8 = inlined_call_operand.vmem [shape: f32[16,1,128], index: 8, kind: input, shape index: {}]
  %s9 = inlined_call_operand.hbm [shape: f32[32,512], index: 9, kind: input, shape index: {}]
  %s10 = inlined_call_operand.vmem [shape: f32[32,1], index: 10, kind: input, shape index: {}]
  %s11 = inlined_call_operand.vmem [shape: f32[2,32,8], index: 11, kind: output, shape index: {}]
  %s12 = sld [smem:[#allocation0]]
  $region97: #{tpu_custom_call.1} parent=0
    _
  %s14 = ssub.s32 1, %s12
  %s15 = scalar_select 0, %s14, %s12
  $region1: #{tpu_custom_call.1} parent=0
    #allocation2 [shape = 'u8[262144]{0}', space=vmem, size = 0x40000, scoped, tag = 'input window, operand 0']
    #allocation3 [shape = 's32[2]{0}', space=sflag, size = 0x8, scoped, tag = 'scoped memory for tpu_custom_call.1']
    #allocation4 [shape = 'u8[16384]{0}', space=vmem, size = 0x4000, scoped, tag = 'input window, operand 1, single buffered']
    #allocation5 [shape = 's32[1]{0}', space=sflag, size = 0x4, scoped, tag = 'scoped memory for tpu_custom_call.1']
    #allocation6 [shape = 'u8[8192]{0}', space=vmem, size = 0x2000, scoped, tag = 'input window, operand 5, single buffered']
    #allocation7 [shape = 'u8[65536]{0}', space=vmem, size = 0x10000, scoped, tag = 'input window, operand 6, single buffered']
    #allocation8 [shape = 's32[1]{0}', space=sflag, size = 0x4, scoped, tag = 'scoped memory for tpu_custom_call.1']
    #allocation9 [shape = 'u8[65536]{0}', space=vmem, size = 0x10000, scoped, tag = 'input window, operand 9, single buffered']
    %16 = vsyncpa [#allocation3], 0
    %s17 = scalar_lea.sflag [#allocation3], 1
    %18 = vsyncpa %s17, 0
    %19 = vsyncpa [#allocation5], 0
    %20 = vsyncpa [#allocation8], 0
    loop: start=0, step=1, limit=4
    $region2: #{tpu_custom_call.1} parent=1 // loop_pre_header
      _
    $region3: #{tpu_custom_call.1} parent=1 // loop_header
      %s22 = sphi 0, %s26
      %p23 = scmp.ge.s32.totalorder %s22, 4
      %s32 = sphi 0, %s34
      %s35 = sphi 0, %s32
      %s36 = sphi 0, %s35
      %s52 = sphi 0, %s36
      %s56 = sphi 0, %s56
      %s58 = sphi 0, %s56
      %s59 = sphi 0, %s58
      %s73 = sphi 0, %s59
      %s77 = sphi 0, %s77
      %s79 = sphi 0, %s77
      %s80 = sphi 0, %s79
      %s94 = sphi 0, %s80
      %s98 = sphi 0, %s98
      %s100 = sphi 0, %s98
      %s101 = sphi 0, %s100
      %s115 = sphi 0, %s101
      %s119 = sphi 0, %s119
      %s121 = sphi 0, %s119
      %s122 = sphi 0, %s121
      %s136 = sphi 0, %s122
      %s140 = sphi 0, %s140
      %s142 = sphi 0, %s140
      %s143 = sphi 0, %s142
      %s157 = sphi 0, %s143
      %s161 = sphi 0, %s161
      %s163 = sphi 0, %s161
      %s164 = sphi 0, %s163
      %s178 = sphi 0, %s164
      %s182 = sphi 0, %s182
      %s184 = sphi 0, %s182
      %s185 = sphi 0, %s184
      %s199 = sphi 0, %s185
      %s203 = sphi 0, %s203
      %s205 = sphi 0, %s203
      %s206 = sphi 0, %s205
      %s220 = sphi 0, %s206
      %s224 = sphi 0, %s224
      %s226 = sphi 0, %s224
      %s227 = sphi 0, %s226
      %s241 = sphi 0, %s227
      %s245 = sphi 0, %s245
      %s247 = sphi 0, %s245
      %s248 = sphi 0, %s247
      %s262 = sphi 0, %s248
      %s268 = sphi 0, %s270
      %s271 = sphi 0, %s268
      %s272 = sphi 0, %s271
      %s288 = sphi 0, %s272
    $region4: #{tpu_custom_call.1} parent=1 // loop_header_branch
      %25 = sbr.rel (%p23) target = $region8
    $region5: #{tpu_custom_call.1} parent=1 // loop_body
      %s27 = ssub.s32 %s22, 1
      %s28 = ssub.s32 %s22, 2
      %s29 = sadd.s32 %s22, 1
      %s30 = ssub.s32 %s22, %s29
      %p31 = scmp.eq.s32.totalorder %s30, 0
      %s33 = sadd.s32 %s32, 1
      %s34 = scalar_select %p31, %s32, %s33
      %p37 = pneg %p31
      %p38 = scmp.eq.s32.totalorder %s22, 1
      %p39 = por %p37, %p38
      %p40 = scmp.ne.s32.totalorder %s32, %s35
      %p41 = scmp.eq.s32.totalorder %s22, 0
      %p42 = por %p40, %p41
      %p43 = scmp.ne.s32.totalorder %s32, %s35
      %p44 = scmp.eq.s32.totalorder %s27, 1
      %p45 = por %p43, %p44
      %p46 = scmp.ne.s32.totalorder %s35, %s36
      %p47 = scmp.eq.s32.totalorder %s27, 0
      %p48 = por %p46, %p47
      %p49 = scmp.ne.s32.totalorder %s35, %s36
      %p50 = scmp.eq.s32.totalorder %s28, 1
      %p51 = por %p49, %p50
      %p53 = scmp.ne.s32.totalorder %s36, %s52
      %p54 = scmp.eq.s32.totalorder %s28, 0
      %p55 = por %p53, %p54
      %s57 = sadd.s32 %s56, 1
      %p60 = scmp.eq.s32.totalorder %s22, 1
      %p61 = scmp.ne.s32.totalorder %s56, %s58
      %p62 = scmp.eq.s32.totalorder %s22, 0
      %p63 = por %p61, %p62
      %p64 = scmp.ne.s32.totalorder %s56, %s58
      %p65 = scmp.eq.s32.totalorder %s27, 1
      %p66 = por %p64, %p65
      %p67 = scmp.ne.s32.totalorder %s58, %s59
      %p68 = scmp.eq.s32.totalorder %s27, 0
      %p69 = por %p67, %p68
      %p70 = scmp.ne.s32.totalorder %s58, %s59
      %p71 = scmp.eq.s32.totalorder %s28, 1
      %p72 = por %p70, %p71
      %p74 = scmp.ne.s32.totalorder %s59, %s73
      %p75 = scmp.eq.s32.totalorder %s28, 0
      %p76 = por %p74, %p75
      %s78 = sadd.s32 %s77, 1
      %p81 = scmp.eq.s32.totalorder %s22, 1
      %p82 = scmp.ne.s32.totalorder %s77, %s79
      %p83 = scmp.eq.s32.totalorder %s22, 0
      %p84 = por %p82, %p83
      %p85 = scmp.ne.s32.totalorder %s77, %s79
      %p86 = scmp.eq.s32.totalorder %s27, 1
      %p87 = por %p85, %p86
      %p88 = scmp.ne.s32.totalorder %s79, %s80
      %p89 = scmp.eq.s32.totalorder %s27, 0
      %p90 = por %p88, %p89
      %p91 = scmp.ne.s32.totalorder %s79, %s80
      %p92 = scmp.eq.s32.totalorder %s28, 1
      %p93 = por %p91, %p92
      %p95 = scmp.ne.s32.totalorder %s80, %s94
      %p96 = scmp.eq.s32.totalorder %s28, 0
      %p97 = por %p95, %p96
      %s99 = sadd.s32 %s98, 1
      %p102 = scmp.eq.s32.totalorder %s22, 1
      %p103 = scmp.ne.s32.totalorder %s98, %s100
      %p104 = scmp.eq.s32.totalorder %s22, 0
      %p105 = por %p103, %p104
      %p106 = scmp.ne.s32.totalorder %s98, %s100
      %p107 = scmp.eq.s32.totalorder %s27, 1
      %p108 = por %p106, %p107
      %p109 = scmp.ne.s32.totalorder %s100, %s101
      %p110 = scmp.eq.s32.totalorder %s27, 0
      %p111 = por %p109, %p110
      %p112 = scmp.ne.s32.totalorder %s100, %s101
      %p113 = scmp.eq.s32.totalorder %s28, 1
      %p114 = por %p112, %p113
      %p116 = scmp.ne.s32.totalorder %s101, %s115
      %p117 = scmp.eq.s32.totalorder %s28, 0
      %p118 = por %p116, %p117
      %s120 = sadd.s32 %s119, 1
      %p123 = scmp.eq.s32.totalorder %s22, 1
      %p124 = scmp.ne.s32.totalorder %s119, %s121
      %p125 = scmp.eq.s32.totalorder %s22, 0
      %p126 = por %p124, %p125
      %p127 = scmp.ne.s32.totalorder %s119, %s121
      %p128 = scmp.eq.s32.totalorder %s27, 1
      %p129 = por %p127, %p128
      %p130 = scmp.ne.s32.totalorder %s121, %s122
      %p131 = scmp.eq.s32.totalorder %s27, 0
      %p132 = por %p130, %p131
      %p133 = scmp.ne.s32.totalorder %s121, %s122
      %p134 = scmp.eq.s32.totalorder %s28, 1
      %p135 = por %p133, %p134
      %p137 = scmp.ne.s32.totalorder %s122, %s136
      %p138 = scmp.eq.s32.totalorder %s28, 0
      %p139 = por %p137, %p138
      %s141 = sadd.s32 %s140, 1
      %p144 = scmp.eq.s32.totalorder %s22, 1
      %p145 = scmp.ne.s32.totalorder %s140, %s142
      %p146 = scmp.eq.s32.totalorder %s22, 0
      %p147 = por %p145, %p146
      %p148 = scmp.ne.s32.totalorder %s140, %s142
      %p149 = scmp.eq.s32.totalorder %s27, 1
      %p150 = por %p148, %p149
      %p151 = scmp.ne.s32.totalorder %s142, %s143
      %p152 = scmp.eq.s32.totalorder %s27, 0
      %p153 = por %p151, %p152
      %p154 = scmp.ne.s32.totalorder %s142, %s143
      %p155 = scmp.eq.s32.totalorder %s28, 1
      %p156 = por %p154, %p155
      %p158 = scmp.ne.s32.totalorder %s143, %s157
      %p159 = scmp.eq.s32.totalorder %s28, 0
      %p160 = por %p158, %p159
      %s162 = sadd.s32 %s161, 1
      %p165 = scmp.eq.s32.totalorder %s22, 1
      %p166 = scmp.ne.s32.totalorder %s161, %s163
      %p167 = scmp.eq.s32.totalorder %s22, 0
      %p168 = por %p166, %p167
      %p169 = scmp.ne.s32.totalorder %s161, %s163
      %p170 = scmp.eq.s32.totalorder %s27, 1
      %p171 = por %p169, %p170
      %p172 = scmp.ne.s32.totalorder %s163, %s164
      %p173 = scmp.eq.s32.totalorder %s27, 0
      %p174 = por %p172, %p173
      %p175 = scmp.ne.s32.totalorder %s163, %s164
      %p176 = scmp.eq.s32.totalorder %s28, 1
      %p177 = por %p175, %p176
      %p179 = scmp.ne.s32.totalorder %s164, %s178
      %p180 = scmp.eq.s32.totalorder %s28, 0
      %p181 = por %p179, %p180
      %s183 = sadd.s32 %s182, 1
      %p186 = scmp.eq.s32.totalorder %s22, 1
      %p187 = scmp.ne.s32.totalorder %s182, %s184
      %p188 = scmp.eq.s32.totalorder %s22, 0
      %p189 = por %p187, %p188
      %p190 = scmp.ne.s32.totalorder %s182, %s184
      %p191 = scmp.eq.s32.totalorder %s27, 1
      %p192 = por %p190, %p191
      %p193 = scmp.ne.s32.totalorder %s184, %s185
      %p194 = scmp.eq.s32.totalorder %s27, 0
      %p195 = por %p193, %p194
      %p196 = scmp.ne.s32.totalorder %s184, %s185
      %p197 = scmp.eq.s32.totalorder %s28, 1
      %p198 = por %p196, %p197
      %p200 = scmp.ne.s32.totalorder %s185, %s199
      %p201 = scmp.eq.s32.totalorder %s28, 0
      %p202 = por %p200, %p201
      %s204 = sadd.s32 %s203, 1
      %p207 = scmp.eq.s32.totalorder %s22, 1
      %p208 = scmp.ne.s32.totalorder %s203, %s205
      %p209 = scmp.eq.s32.totalorder %s22, 0
      %p210 = por %p208, %p209
      %p211 = scmp.ne.s32.totalorder %s203, %s205
      %p212 = scmp.eq.s32.totalorder %s27, 1
      %p213 = por %p211, %p212
      %p214 = scmp.ne.s32.totalorder %s205, %s206
      %p215 = scmp.eq.s32.totalorder %s27, 0
      %p216 = por %p214, %p215
      %p217 = scmp.ne.s32.totalorder %s205, %s206
      %p218 = scmp.eq.s32.totalorder %s28, 1
      %p219 = por %p217, %p218
      %p221 = scmp.ne.s32.totalorder %s206, %s220
      %p222 = scmp.eq.s32.totalorder %s28, 0
      %p223 = por %p221, %p222
      %s225 = sadd.s32 %s224, 1
      %p228 = scmp.eq.s32.totalorder %s22, 1
      %p229 = scmp.ne.s32.totalorder %s224, %s226
      %p230 = scmp.eq.s32.totalorder %s22, 0
      %p231 = por %p229, %p230
      %p232 = scmp.ne.s32.totalorder %s224, %s226
      %p233 = scmp.eq.s32.totalorder %s27, 1
      %p234 = por %p232, %p233
      %p235 = scmp.ne.s32.totalorder %s226, %s227
      %p236 = scmp.eq.s32.totalorder %s27, 0
      %p237 = por %p235, %p236
      %p238 = scmp.ne.s32.totalorder %s226, %s227
      %p239 = scmp.eq.s32.totalorder %s28, 1
      %p240 = por %p238, %p239
      %p242 = scmp.ne.s32.totalorder %s227, %s241
      %p243 = scmp.eq.s32.totalorder %s28, 0
      %p244 = por %p242, %p243
      %s246 = sadd.s32 %s245, 1
      %p249 = scmp.eq.s32.totalorder %s22, 1
      %p250 = scmp.ne.s32.totalorder %s245, %s247
      %p251 = scmp.eq.s32.totalorder %s22, 0
      %p252 = por %p250, %p251
      %p253 = scmp.ne.s32.totalorder %s245, %s247
      %p254 = scmp.eq.s32.totalorder %s27, 1
      %p255 = por %p253, %p254
      %p256 = scmp.ne.s32.totalorder %s247, %s248
      %p257 = scmp.eq.s32.totalorder %s27, 0
      %p258 = por %p256, %p257
      %p259 = scmp.ne.s32.totalorder %s247, %s248
      %p260 = scmp.eq.s32.totalorder %s28, 1
      %p261 = por %p259, %p260
      %p263 = scmp.ne.s32.totalorder %s248, %s262
      %p264 = scmp.eq.s32.totalorder %s28, 0
      %p265 = por %p263, %p264
      %s266 = ssub.s32 %s22, %s29
      %p267 = scmp.eq.s32.totalorder %s266, 0
      %s269 = sadd.s32 %s268, 1
      %s270 = scalar_select %p267, %s268, %s269
      %p273 = pneg %p267
      %p274 = scmp.eq.s32.totalorder %s22, 1
      %p275 = por %p273, %p274
      %p276 = scmp.ne.s32.totalorder %s268, %s271
      %p277 = scmp.eq.s32.totalorder %s22, 0
      %p278 = por %p276, %p277
      %p279 = scmp.ne.s32.totalorder %s268, %s271
      %p280 = scmp.eq.s32.totalorder %s27, 1
      %p281 = por %p279, %p280
      %p282 = scmp.ne.s32.totalorder %s271, %s272
      %p283 = scmp.eq.s32.totalorder %s27, 0
      %p284 = por %p282, %p283
      %p285 = scmp.ne.s32.totalorder %s271, %s272
      %p286 = scmp.eq.s32.totalorder %s28, 1
      %p287 = por %p285, %p286
      %p289 = scmp.ne.s32.totalorder %s272, %s288
      %p290 = scmp.eq.s32.totalorder %s28, 0
      %p291 = por %p289, %p290
      %p292 = scmp.le.s32.totalorder 1, %s22
      %p293 = scmp.lt.s32.totalorder %s22, 3
      %p294 = pnand %p292, %p293
      %p295 = pneg %p294
      // Predicated region
      $region9: #{tpu_custom_call.1} parent=5 // pred_check
        _
      $region10: #{tpu_custom_call.1} parent=5 // pred_check_branch
        %297 = sbr.rel (%p294) target = $region12
      $region11: #{tpu_custom_call.1} parent=5 // pred_region
        %s298 = ssub.s32 %s22, 1
        // Predicated region
        $region13: #{tpu_custom_call.1} parent=11 // pred_check
          %p299 = pneg %p69
        $region14: #{tpu_custom_call.1} parent=11 // pred_check_branch
          %301 = sbr.rel (%p299) target = $region16
        $region15: #{tpu_custom_call.1} parent=11 // pred_region
          %s303 = ssub.s32 512, 512
          %304 = vsyncadd [#allocation5], %s303
          %s305 = sshll.u32 [#allocation4], 4
          %s306 = int_to_ptr.vmem [resolvable:$true] %s305
          %311 = dma.hbm_to_vmem [thread:$0]  %s1, 512, %s306, [#allocation5], 128, 128, 8
        $region16: #{tpu_custom_call.1} parent=11 // pred_fallthru
          _
        // Predicated region
        $region17: #{tpu_custom_call.1} parent=11 // pred_check
          %p312 = pneg %p90
        $region18: #{tpu_custom_call.1} parent=11 // pred_check_branch
          %314 = sbr.rel (%p312) target = $region20
        $region19: #{tpu_custom_call.1} parent=11 // pred_region
          _
        $region20: #{tpu_custom_call.1} parent=11 // pred_fallthru
          _
        // Predicated region
        $region21: #{tpu_custom_call.1} parent=11 // pred_check
          %p315 = pneg %p111
        $region22: #{tpu_custom_call.1} parent=11 // pred_check_branch
          %317 = sbr.rel (%p315) target = $region24
        $region23: #{tpu_custom_call.1} parent=11 // pred_region
          _
        $region24: #{tpu_custom_call.1} parent=11 // pred_fallthru
          _
        // Predicated region
        $region25: #{tpu_custom_call.1} parent=11 // pred_check
          %p318 = pneg %p132
        $region26: #{tpu_custom_call.1} parent=11 // pred_check_branch
          %320 = sbr.rel (%p318) target = $region28
        $region27: #{tpu_custom_call.1} parent=11 // pred_region
          _
        $region28: #{tpu_custom_call.1} parent=11 // pred_fallthru
          _
        // Predicated region
        $region29: #{tpu_custom_call.1} parent=11 // pred_check
          %p321 = pneg %p153
        $region30: #{tpu_custom_call.1} parent=11 // pred_check_branch
          %323 = sbr.rel (%p321) target = $region32
        $region31: #{tpu_custom_call.1} parent=11 // pred_region
          %s325 = ssub.s32 256, 256
          %326 = vsyncadd [#allocation5], %s325
          %s327 = sshll.u32 [#allocation6], 4
          %s328 = int_to_ptr.vmem [resolvable:$true] %s327
          %333 = dma.hbm_to_vmem [thread:$0]  %s5, 256, %s328, [#allocation5], 16, 16, 1
        $region32: #{tpu_custom_call.1} parent=11 // pred_fallthru
          _
        // Predicated region
        $region33: #{tpu_custom_call.1} parent=11 // pred_check
          %p334 = pneg %p174
        $region34: #{tpu_custom_call.1} parent=11 // pred_check_branch
          %336 = sbr.rel (%p334) target = $region36
        $region35: #{tpu_custom_call.1} parent=11 // pred_region
          %s338 = ssub.s32 2048, 2048
          %339 = vsyncadd [#allocation8], %s338
          %s340 = sshll.u32 [#allocation7], 4
          %s341 = int_to_ptr.vmem [resolvable:$true] %s340
          %346 = dma.hbm_to_vmem [thread:$0]  %s6, 2048, %s341, [#allocation8], 512, 512, 32
        $region36: #{tpu_custom_call.1} parent=11 // pred_fallthru
          _
        // Predicated region
        $region37: #{tpu_custom_call.1} parent=11 // pred_check
          %p347 = pneg %p195
        $region38: #{tpu_custom_call.1} parent=11 // pred_check_branch
          %349 = sbr.rel (%p347) target = $region40
        $region39: #{tpu_custom_call.1} parent=11 // pred_region
          _
        $region40: #{tpu_custom_call.1} parent=11 // pred_fallthru
          _
        // Predicated region
        $region41: #{tpu_custom_call.1} parent=11 // pred_check
          %p350 = pneg %p216
        $region42: #{tpu_custom_call.1} parent=11 // pred_check_branch
          %352 = sbr.rel (%p350) target = $region44
        $region43: #{tpu_custom_call.1} parent=11 // pred_region
          _
        $region44: #{tpu_custom_call.1} parent=11 // pred_fallthru
          _
        // Predicated region
        $region45: #{tpu_custom_call.1} parent=11 // pred_check
          %p353 = pneg %p237
        $region46: #{tpu_custom_call.1} parent=11 // pred_check_branch
          %355 = sbr.rel (%p353) target = $region48
        $region47: #{tpu_custom_call.1} parent=11 // pred_region
          %s357 = ssub.s32 2048, 2048
          %358 = vsyncadd [#allocation8], %s357
          %s359 = sshll.u32 [#allocation9], 4
          %s360 = int_to_ptr.vmem [resolvable:$true] %s359
          %365 = dma.hbm_to_vmem [thread:$0]  %s9, 2048, %s360, [#allocation8], 512, 512, 32
        $region48: #{tpu_custom_call.1} parent=11 // pred_fallthru
          _
        // Predicated region
        $region49: #{tpu_custom_call.1} parent=11 // pred_check
          %p366 = pneg %p258
        $region50: #{tpu_custom_call.1} parent=11 // pred_check_branch
          %368 = sbr.rel (%p366) target = $region52
        $region51: #{tpu_custom_call.1} parent=11 // pred_region
          _
        $region52: #{tpu_custom_call.1} parent=11 // pred_fallthru
          _
      $region12: #{tpu_custom_call.1} parent=5 // pred_fallthru
        _
      %p369 = scmp.lt.s32.totalorder %s22, 2
      // Predicated region
      $region53: #{tpu_custom_call.1} parent=5 // pred_check
        %p370 = pneg %p369
      $region54: #{tpu_custom_call.1} parent=5 // pred_check_branch
        %372 = sbr.rel (%p370) target = $region56
      $region55: #{tpu_custom_call.1} parent=5 // pred_region
        // Predicated region
        $region57: #{tpu_custom_call.1} parent=55 // pred_check
          %p373 = pneg %p42
        $region58: #{tpu_custom_call.1} parent=55 // pred_check_branch
          %375 = sbr.rel (%p373) target = $region60
        $region59: #{tpu_custom_call.1} parent=55 // pred_region
          %s376 = sand.u32 %s32, 1
          %s377 = scalar_lea.sflag [#allocation3], %s376
          %s378 = sand.u32 %s32, 1
          %s379 = smul.addr %s378, 256
          %s380 = scalar_lea.vmem [#allocation2], %s379
          %s381 = smul.u32 4, %s22
          %s383 = ssub.s32 4096, 4096
          %384 = vsyncadd %s377, %s383
          %s385 = smul.addr %s381, 128
          %s386 = scalar_lea.hbm %s0, %s385
          %s387 = sshll.u32 %s380, 4
          %s388 = int_to_ptr.vmem [resolvable:$true] %s387
          %393 = dma.hbm_to_vmem [thread:$0]  %s386, 4096, %s388, %s377, 1024, 512, 32
        $region60: #{tpu_custom_call.1} parent=55 // pred_fallthru
          _
      $region56: #{tpu_custom_call.1} parent=5 // pred_fallthru
        _
      %p394 = scmp.le.s32.totalorder 1, %s22
      %p395 = scmp.lt.s32.totalorder %s22, 3
      %p396 = pnand %p394, %p395
      %p397 = pneg %p396
      // Predicated region
      $region61: #{tpu_custom_call.1} parent=5 // pred_check
        _
      $region62: #{tpu_custom_call.1} parent=5 // pred_check_branch
        %399 = sbr.rel (%p396) target = $region64
      $region63: #{tpu_custom_call.1} parent=5 // pred_region
        %s400 = ssub.s32 %s22, 1
        %s401 = sand.u32 %s35, 1
        %s402 = scalar_lea.sflag [#allocation3], %s401
        %s403 = sand.u32 %s35, 1
        %s404 = smul.addr %s403, 256
        %s405 = scalar_lea.vmem [#allocation2], %s404
        // Predicated region
        $region65: #{tpu_custom_call.1} parent=63 // pred_check
          %p406 = pneg %p48
        $region66: #{tpu_custom_call.1} parent=63 // pred_check_branch
          %408 = sbr.rel (%p406) target = $region68
        $region67: #{tpu_custom_call.1} parent=63 // pred_region
          %409 = dma.done %s402, 4096
        $region68: #{tpu_custom_call.1} parent=63 // pred_fallthru
          _
        // Predicated region
        $region69: #{tpu_custom_call.1} parent=63 // pred_check
          %p410 = pneg %p69
        $region70: #{tpu_custom_call.1} parent=63 // pred_check_branch
          %412 = sbr.rel (%p410) target = $region72
        $region71: #{tpu_custom_call.1} parent=63 // pred_region
          %413 = dma.done [#allocation5], 512
        $region72: #{tpu_custom_call.1} parent=63 // pred_fallthru
          _
        // Predicated region
        $region73: #{tpu_custom_call.1} parent=63 // pred_check
          %p414 = pneg %p153
        $region74: #{tpu_custom_call.1} parent=63 // pred_check_branch
          %416 = sbr.rel (%p414) target = $region76
        $region75: #{tpu_custom_call.1} parent=63 // pred_region
          %417 = dma.done [#allocation5], 256
        $region76: #{tpu_custom_call.1} parent=63 // pred_fallthru
          _
        // Predicated region
        $region77: #{tpu_custom_call.1} parent=63 // pred_check
          %p418 = pneg %p174
        $region78: #{tpu_custom_call.1} parent=63 // pred_check_branch
          %420 = sbr.rel (%p418) target = $region80
        $region79: #{tpu_custom_call.1} parent=63 // pred_region
          %421 = dma.done [#allocation8], 2048
        $region80: #{tpu_custom_call.1} parent=63 // pred_fallthru
          _
        // Predicated region
        $region81: #{tpu_custom_call.1} parent=63 // pred_check
          %p422 = pneg %p237
        $region82: #{tpu_custom_call.1} parent=63 // pred_check_branch
          %424 = sbr.rel (%p422) target = $region84
        $region83: #{tpu_custom_call.1} parent=63 // pred_region
          %425 = dma.done [#allocation8], 2048
        $region84: #{tpu_custom_call.1} parent=63 // pred_fallthru
          _
        %s426 = sand.u32 %s35, 1
        %s427 = scalar_lea.sflag [#allocation3], %s426
        %s428 = sand.u32 %s35, 1
        %s429 = smul.addr %s428, 256
        %s430 = scalar_lea.vmem [#allocation2], %s429
        %p431 = pneg %p48
        %p432 = pneg %p45
        %p433 = pneg %p69
        %p434 = pneg %p66
        %p435 = pneg %p90
        %p436 = pneg %p87
        %p437 = pneg %p111
        %p438 = pneg %p108
        %p439 = pneg %p132
        %p440 = pneg %p129
        %p441 = pneg %p153
        %p442 = pneg %p150
        %p443 = pneg %p174
        %p444 = pneg %p171
        %p445 = pneg %p195
        %p446 = pneg %p192
        %p447 = pneg %p216
        %p448 = pneg %p213
        %p449 = pneg %p237
        %p450 = pneg %p234
        %p451 = pneg %p258
        %p452 = pneg %p255
        %p453 = pneg %p284
        %p454 = pneg %p281
        %p455 = scmp.lt.s32.totalorder %s27, 1
        %s456 = scalar_select %p455, %s27, 1
        %s457 = smul.addr %s456, 4
        %s458 = smul.addr %s457, 8
        %s459 = scalar_lea.vmem %s11, %s458
        %s460 = smul.u32 4, %s27
        %p461 = scmp.lt.s32.totalorder %s27, 1
        %s462 = scalar_select %p461, %s27, 1
        %s463 = smul.addr %s462, 4
        %s464 = smul.addr %s463, 8
        %s465 = scalar_lea.vmem %s11, %s464
        %v466 = vld [vmem:[#allocation4] sm:$0xff]
        %v467 = vld [vmem:[#allocation4 + $0x8] sm:$0xff]
        %v468 = vld [vmem:[#allocation4 + $0x10] sm:$0xff]
        %v469 = vld [vmem:[#allocation4 + $0x18] sm:$0xff]
        %v470 = vld [vmem:[%s405] sm:$0xff]
        %v471 = vld [vmem:[%s405 + $0x8] sm:$0xff]
        %v472 = vld [vmem:[%s405 + $0x10] sm:$0xff]
        %v473 = vld [vmem:[%s405 + $0x18] sm:$0xff]
        %v474 = vld [vmem:[%s405 + $0x20] sm:$0xff]
        %v475 = vld [vmem:[%s405 + $0x28] sm:$0xff]
        %v476 = vld [vmem:[%s405 + $0x30] sm:$0xff]
        %v477 = vld [vmem:[%s405 + $0x38] sm:$0xff]
        %v478 = vld [vmem:[%s405 + $0x40] sm:$0xff]
        %v479 = vld [vmem:[%s405 + $0x48] sm:$0xff]
        %v480 = vld [vmem:[%s405 + $0x50] sm:$0xff]
        %v481 = vld [vmem:[%s405 + $0x58] sm:$0xff]
        %v482 = vld [vmem:[%s405 + $0x60] sm:$0xff]
        %v483 = vld [vmem:[%s405 + $0x68] sm:$0xff]
        %v484 = vld [vmem:[%s405 + $0x70] sm:$0xff]
        %v485 = vld [vmem:[%s405 + $0x78] sm:$0xff]
        %v486 = vld [vmem:[%s405 + $0x80] sm:$0xff]
        %v487 = vld [vmem:[%s405 + $0x88] sm:$0xff]
        %v488 = vld [vmem:[%s405 + $0x90] sm:$0xff]
        %v489 = vld [vmem:[%s405 + $0x98] sm:$0xff]
        %v490 = vld [vmem:[%s405 + $0xa0] sm:$0xff]
        %v491 = vld [vmem:[%s405 + $0xa8] sm:$0xff]
        %v492 = vld [vmem:[%s405 + $0xb0] sm:$0xff]
        %v493 = vld [vmem:[%s405 + $0xb8] sm:$0xff]
        %v494 = vld [vmem:[%s405 + $0xc0] sm:$0xff]
        %v495 = vld [vmem:[%s405 + $0xc8] sm:$0xff]
        %v496 = vld [vmem:[%s405 + $0xd0] sm:$0xff]
        %v497 = vld [vmem:[%s405 + $0xd8] sm:$0xff]
        %v498 = vld [vmem:[%s405 + $0xe0] sm:$0xff]
        %v499 = vld [vmem:[%s405 + $0xe8] sm:$0xff]
        %v500 = vld [vmem:[%s405 + $0xf0] sm:$0xff]
        %v501 = vld [vmem:[%s405 + $0xf8] sm:$0xff]
        %v502 = vld [vmem:[%s2] sm:$0xff]
        %v503 = vld [vmem:[%s2 + $0x8] sm:$0xff]
        %v504 = vld [vmem:[%s2 + $0x10] sm:$0xff]
        %v505 = vld [vmem:[%s2 + $0x18] sm:$0xff]
        %507 = vset.pattern.permute.xlu0 0
        %508 = vperm.xlu0 %507, %v502
        %v509 = vpop.permute.xlu0 %508
        %512 = vset.pattern.permute.xlu0 0
        %513 = vperm.xlu0 %512, %v503
        %v514 = vpop.permute.xlu0 %513
        %517 = vset.pattern.permute.xlu0 0
        %518 = vperm.xlu0 %517, %v504
        %v519 = vpop.permute.xlu0 %518
        %522 = vset.pattern.permute.xlu0 0
        %523 = vperm.xlu0 %522, %v505
        %v524 = vpop.permute.xlu0 %523
        %vm526 = vcmask 523264
        %v528 = vsel %vm526, %v466, 0
        %v531 = vsel %vm526, %v467, 0
        %v534 = vsel %vm526, %v468, 0
        %v537 = vsel %vm526, %v469, 0
        %539 = vmatprep.subr.mxu0 0.0
        %540 = vmatpush1.msra.mxu0 0.0
        %541 = vmatprep.subr.mxu0 0.0
        %542 = vmatpush1.msra.mxu0 0.0
        %543 = vmatprep.subr.mxu0 0.0
        %544 = vmatpush1.msra.mxu0 0.0
        %545 = vmatprep.subr.mxu0 0.0
        %546 = vmatpush1.msra.mxu0 0.0
        %547 = vmatprep.subr.mxu0 0.0
        %548 = vmatpush1.msra.mxu0 0.0
        %549 = vmatprep.subr.mxu0 0.0
        %550 = vmatpush1.msra.mxu0 0.0
        %551 = vmatprep.subr.mxu0 0.0
        %552 = vmatpush1.msra.mxu0 0.0
        %553 = vmatprep.subr.mxu0 0.0
        %554 = vmatpush1.msra.mxu0 0.0
        %v555 = vand.u32 %v499, 4294901760
        %556 = vmatprep.subr.mxu0 %v555
        %v557 = vand.u32 %v498, 4294901760
        %558 = vmatpush1.msra.mxu0 %v557
        %v559 = vand.u32 %v495, 4294901760
        %560 = vmatprep.subr.mxu0 %v559
        %v561 = vand.u32 %v494, 4294901760
        %562 = vmatpush1.msra.mxu0 %v561
        %v563 = vand.u32 %v491, 4294901760
        %564 = vmatprep.subr.mxu0 %v563
        %v565 = vand.u32 %v490, 4294901760
        %566 = vmatpush1.msra.mxu0 %v565
        %v567 = vand.u32 %v487, 4294901760
        %568 = vmatprep.subr.mxu0 %v567
        %v569 = vand.u32 %v486, 4294901760
        %570 = vmatpush1.msra.mxu0 %v569
        %v571 = vand.u32 %v483, 4294901760
        %572 = vmatprep.subr.mxu0 %v571
        %v573 = vand.u32 %v482, 4294901760
        %574 = vmatpush1.msra.mxu0 %v573
        %v575 = vand.u32 %v479, 4294901760
        %576 = vmatprep.subr.mxu0 %v575
        %v577 = vand.u32 %v478, 4294901760
        %578 = vmatpush1.msra.mxu0 %v577
        %v579 = vand.u32 %v475, 4294901760
        %580 = vmatprep.subr.mxu0 %v579
        %v581 = vand.u32 %v474, 4294901760
        %582 = vmatpush1.msra.mxu0 %v581
        %v583 = vand.u32 %v471, 4294901760
        %584 = vmatprep.subr.mxu0 %v583
        %v585 = vand.u32 %v470, 4294901760
        %586 = vmatpush1.msra.mxu0 %v585
        %587 = vmatprep.subr.mxu0 0.0
        %588 = vmatpush2.msra.mxu0 0.0
        %589 = vmatprep.subr.mxu0 0.0
        %590 = vmatpush2.msra.mxu0 0.0
        %591 = vmatprep.subr.mxu0 0.0
        %592 = vmatpush2.msra.mxu0 0.0
        %593 = vmatprep.subr.mxu0 0.0
        %594 = vmatpush2.msra.mxu0 0.0
        %595 = vmatprep.subr.mxu0 0.0
        %596 = vmatpush2.msra.mxu0 0.0
        %597 = vmatprep.subr.mxu0 0.0
        %598 = vmatpush2.msra.mxu0 0.0
        %599 = vmatprep.subr.mxu0 0.0
        %600 = vmatpush2.msra.mxu0 0.0
        %601 = vmatprep.subr.mxu0 0.0
        %602 = vmatpush2.msra.mxu0 0.0
        %603 = vmatprep.subr.mxu0 0.0
        %604 = vmatpush2.msra.mxu0 0.0
        %605 = vmatprep.subr.mxu0 0.0
        %606 = vmatpush2.msra.mxu0 0.0
        %607 = vmatprep.subr.mxu0 0.0
        %608 = vmatpush2.msra.mxu0 0.0
        %609 = vmatprep.subr.mxu0 0.0
        %610 = vmatpush2.msra.mxu0 0.0
        %611 = vmatprep.subr.mxu0 0.0
        %612 = vmatpush2.msra.mxu0 0.0
        %613 = vmatprep.subr.mxu0 0.0
        %614 = vmatpush2.msra.mxu0 0.0
        %615 = vmatprep.subr.mxu0 0.0
        %616 = vmatpush2.msra.mxu0 0.0
        %617 = vmatprep.subr.mxu0 0.0
        %618 = vmatpush2.msra.mxu0 0.0
        %619 = vmatprep.mubr.f32.mxu0 0.0
        %v620 = vand.u32 %v528, 4294901760
        %v621 = vsub.f32 %v528, %v620
        %v622 = vand.u32 %v621, 4294901760
        %v623 = vsub.f32 %v621, %v622
        %v624 = vand.u32 %v623, 4294901760
        %625 = vmatmul.mubr.f32.gmra.mxu0 %v624
        %v626 = vpop.f32.mrf.mxu0
        %v627 = vadd.f32 %v509, %v626
        %v628 = vpop.f32.mrf.mxu0
        %v629 = vadd.f32 %v509, %v628
        %630 = vmatprep.mubr.f32.mxu0 0.0
        %v631 = vand.u32 %v531, 4294901760
        %v632 = vsub.f32 %v531, %v631
        %v633 = vand.u32 %v632, 4294901760
        %v634 = vsub.f32 %v632, %v633
        %v635 = vand.u32 %v634, 4294901760
        %636 = vmatmul.mubr.f32.gmra.mxu0 %v635
        %v637 = vpop.f32.mrf.mxu0
        %v638 = vadd.f32 %v514, %v637
        %v639 = vpop.f32.mrf.mxu0
        %v640 = vadd.f32 %v514, %v639
        %641 = vmatprep.mubr.f32.mxu0 0.0
        %v642 = vand.u32 %v534, 4294901760
        %v643 = vsub.f32 %v534, %v642
        %v644 = vand.u32 %v643, 4294901760
        %v645 = vsub.f32 %v643, %v644
        %v646 = vand.u32 %v645, 4294901760
        %647 = vmatmul.mubr.f32.gmra.mxu0 %v646
        %v648 = vpop.f32.mrf.mxu0
        %v649 = vadd.f32 %v519, %v648
        %v650 = vpop.f32.mrf.mxu0
        %v651 = vadd.f32 %v519, %v650
        %652 = vmatprep.mubr.f32.mxu0 0.0
        %v653 = vand.u32 %v537, 4294901760
        %v654 = vsub.f32 %v537, %v653
        %v655 = vand.u32 %v654, 4294901760
        %v656 = vsub.f32 %v654, %v655
        %v657 = vand.u32 %v656, 4294901760
        %658 = vmatmul.mubr.f32.gmra.mxu0 %v657
        %v659 = vpop.f32.mrf.mxu0
        %v660 = vadd.f32 %v524, %v659
        %v661 = vpop.f32.mrf.mxu0
        %v662 = vadd.f32 %v524, %v661
        %663 = vdwg.mxu0
        %664 = vmatprep.subr.mxu0 0.0
        %665 = vmatpush1.msra.mxu0 0.0
        %666 = vmatprep.subr.mxu0 0.0
        %667 = vmatpush1.msra.mxu0 0.0
        %668 = vmatprep.subr.mxu0 0.0
        %669 = vmatpush1.msra.mxu0 0.0
        %670 = vmatprep.subr.mxu0 0.0
        %671 = vmatpush1.msra.mxu0 0.0
        %672 = vmatprep.subr.mxu0 0.0
        %673 = vmatpush1.msra.mxu0 0.0
        %674 = vmatprep.subr.mxu0 0.0
        %675 = vmatpush1.msra.mxu0 0.0
        %676 = vmatprep.subr.mxu0 0.0
        %677 = vmatpush1.msra.mxu0 0.0
        %678 = vmatprep.subr.mxu0 0.0
        %679 = vmatpush1.msra.mxu0 0.0
        %v680 = vand.u32 %v499, 4294901760
        %v681 = vsub.f32 %v499, %v680
        %v682 = vand.u32 %v681, 4294901760
        %v683 = vsub.f32 %v681, %v682
        %v684 = vand.u32 %v683, 4294901760
        %685 = vmatprep.subr.mxu0 %v684
        %v686 = vand.u32 %v498, 4294901760
        %v687 = vsub.f32 %v498, %v686
        %v688 = vand.u32 %v687, 4294901760
        %v689 = vsub.f32 %v687, %v688
        %v690 = vand.u32 %v689, 4294901760
        %691 = vmatpush1.msra.mxu0 %v690
        %v692 = vand.u32 %v495, 4294901760
        %v693 = vsub.f32 %v495, %v692
        %v694 = vand.u32 %v693, 4294901760
        %v695 = vsub.f32 %v693, %v694
        %v696 = vand.u32 %v695, 4294901760
        %697 = vmatprep.subr.mxu0 %v696
        %v698 = vand.u32 %v494, 4294901760
        %v699 = vsub.f32 %v494, %v698
        %v700 = vand.u32 %v699, 4294901760
        %v701 = vsub.f32 %v699, %v700
        %v702 = vand.u32 %v701, 4294901760
        %703 = vmatpush1.msra.mxu0 %v702
        %v704 = vand.u32 %v491, 4294901760
        %v705 = vsub.f32 %v491, %v704
        %v706 = vand.u32 %v705, 4294901760
        %v707 = vsub.f32 %v705, %v706
        %v708 = vand.u32 %v707, 4294901760
        %709 = vmatprep.subr.mxu0 %v708
        %v710 = vand.u32 %v490, 4294901760
        %v711 = vsub.f32 %v490, %v710
        %v712 = vand.u32 %v711, 4294901760
        %v713 = vsub.f32 %v711, %v712
        %v714 = vand.u32 %v713, 4294901760
        %715 = vmatpush1.msra.mxu0 %v714
        %v716 = vand.u32 %v487, 4294901760
        %v717 = vsub.f32 %v487, %v716
        %v718 = vand.u32 %v717, 4294901760
        %v719 = vsub.f32 %v717, %v718
        %v720 = vand.u32 %v719, 4294901760
        %721 = vmatprep.subr.mxu0 %v720
        %v722 = vand.u32 %v486, 4294901760
        %v723 = vsub.f32 %v486, %v722
        %v724 = vand.u32 %v723, 4294901760
        %v725 = vsub.f32 %v723, %v724
        %v726 = vand.u32 %v725, 4294901760
        %727 = vmatpush1.msra.mxu0 %v726
        %v728 = vand.u32 %v483, 4294901760
        %v729 = vsub.f32 %v483, %v728
        %v730 = vand.u32 %v729, 4294901760
        %v731 = vsub.f32 %v729, %v730
        %v732 = vand.u32 %v731, 4294901760
        %733 = vmatprep.subr.mxu0 %v732
        %v734 = vand.u32 %v482, 4294901760
        %v735 = vsub.f32 %v482, %v734
        %v736 = vand.u32 %v735, 4294901760
        %v737 = vsub.f32 %v735, %v736
        %v738 = vand.u32 %v737, 4294901760
        %739 = vmatpush1.msra.mxu0 %v738
        %v740 = vand.u32 %v479, 4294901760
        %v741 = vsub.f32 %v479, %v740
        %v742 = vand.u32 %v741, 4294901760
        %v743 = vsub.f32 %v741, %v742
        %v744 = vand.u32 %v743, 4294901760
        %745 = vmatprep.subr.mxu0 %v744
        %v746 = vand.u32 %v478, 4294901760
        %v747 = vsub.f32 %v478, %v746
        %v748 = vand.u32 %v747, 4294901760
        %v749 = vsub.f32 %v747, %v748
        %v750 = vand.u32 %v749, 4294901760
        %751 = vmatpush1.msra.mxu0 %v750
        %v752 = vand.u32 %v475, 4294901760
        %v753 = vsub.f32 %v475, %v752
        %v754 = vand.u32 %v753, 4294901760
        %v755 = vsub.f32 %v753, %v754
        %v756 = vand.u32 %v755, 4294901760
        %757 = vmatprep.subr.mxu0 %v756
        %v758 = vand.u32 %v474, 4294901760
        %v759 = vsub.f32 %v474, %v758
        %v760 = vand.u32 %v759, 4294901760
        %v761 = vsub.f32 %v759, %v760
        %v762 = vand.u32 %v761, 4294901760
        %763 = vmatpush1.msra.mxu0 %v762
        %v764 = vand.u32 %v471, 4294901760
        %v765 = vsub.f32 %v471, %v764
        %v766 = vand.u32 %v765, 4294901760
        %v767 = vsub.f32 %v765, %v766
        %v768 = vand.u32 %v767, 4294901760
        %769 = vmatprep.subr.mxu0 %v768
        %v770 = vand.u32 %v470, 4294901760
        %v771 = vsub.f32 %v470, %v770
        %v772 = vand.u32 %v771, 4294901760
        %v773 = vsub.f32 %v771, %v772
        %v774 = vand.u32 %v773, 4294901760
        %775 = vmatpush1.msra.mxu0 %v774
        %776 = vmatprep.subr.mxu0 0.0
        %777 = vmatpush2.msra.mxu0 0.0
        %778 = vmatprep.subr.mxu0 0.0
        %779 = vmatpush2.msra.mxu0 0.0
        %780 = vmatprep.subr.mxu0 0.0
        %781 = vmatpush2.msra.mxu0 0.0
        %782 = vmatprep.subr.mxu0 0.0
        %783 = vmatpush2.msra.mxu0 0.0
        %784 = vmatprep.subr.mxu0 0.0
        %785 = vmatpush2.msra.mxu0 0.0
        %786 = vmatprep.subr.mxu0 0.0
        %787 = vmatpush2.msra.mxu0 0.0
        %788 = vmatprep.subr.mxu0 0.0
        %789 = vmatpush2.msra.mxu0 0.0
        %790 = vmatprep.subr.mxu0 0.0
        %791 = vmatpush2.msra.mxu0 0.0
        %792 = vmatprep.subr.mxu0 0.0
        %793 = vmatpush2.msra.mxu0 0.0
        %794 = vmatprep.subr.mxu0 0.0
        %795 = vmatpush2.msra.mxu0 0.0
        %796 = vmatprep.subr.mxu0 0.0
        %797 = vmatpush2.msra.mxu0 0.0
        %798 = vmatprep.subr.mxu0 0.0
        %799 = vmatpush2.msra.mxu0 0.0
        %800 = vmatprep.subr.mxu0 0.0
        %801 = vmatpush2.msra.mxu0 0.0
        %802 = vmatprep.subr.mxu0 0.0
        %803 = vmatpush2.msra.mxu0 0.0
        %804 = vmatprep.subr.mxu0 0.0
        %805 = vmatpush2.msra.mxu0 0.0
        %806 = vmatprep.subr.mxu0 0.0
        %807 = vmatpush2.msra.mxu0 0.0
        %808 = vmatprep.mubr.f32.mxu0 0.0
        %v809 = vand.u32 %v528, 4294901760
        %810 = vmatmul.mubr.f32.gmra.mxu0 %v809
        %v811 = vpop.f32.mrf.mxu0
        %v812 = vadd.f32 %v627, %v811
        %v813 = vpop.f32.mrf.mxu0
        %v814 = vadd.f32 %v629, %v813
        %815 = vmatprep.mubr.f32.mxu0 0.0
        %v816 = vand.u32 %v531, 4294901760
        %817 = vmatmul.mubr.f32.gmra.mxu0 %v816
        %v818 = vpop.f32.mrf.mxu0
        %v819 = vadd.f32 %v638, %v818
        %v820 = vpop.f32.mrf.mxu0
        %v821 = vadd.f32 %v640, %v820
        %822 = vmatprep.mubr.f32.mxu0 0.0
        %v823 = vand.u32 %v534, 4294901760
        %824 = vmatmul.mubr.f32.gmra.mxu0 %v823
        %v825 = vpop.f32.mrf.mxu0
        %v826 = vadd.f32 %v649, %v825
        %v827 = vpop.f32.mrf.mxu0
        %v828 = vadd.f32 %v651, %v827
        %829 = vmatprep.mubr.f32.mxu0 0.0
        %v830 = vand.u32 %v537, 4294901760
        %831 = vmatmul.mubr.f32.gmra.mxu0 %v830
        %v832 = vpop.f32.mrf.mxu0
        %v833 = vadd.f32 %v660, %v832
        %v834 = vpop.f32.mrf.mxu0
        %v835 = vadd.f32 %v662, %v834
        %836 = vdwg.mxu0
        %837 = vmatprep.subr.mxu0 0.0
        %838 = vmatpush1.msra.mxu0 0.0
        %839 = vmatprep.subr.mxu0 0.0
        %840 = vmatpush1.msra.mxu0 0.0
        %841 = vmatprep.subr.mxu0 0.0
        %842 = vmatpush1.msra.mxu0 0.0
        %843 = vmatprep.subr.mxu0 0.0
        %844 = vmatpush1.msra.mxu0 0.0
        %845 = vmatprep.subr.mxu0 0.0
        %846 = vmatpush1.msra.mxu0 0.0
        %847 = vmatprep.subr.mxu0 0.0
        %848 = vmatpush1.msra.mxu0 0.0
        %849 = vmatprep.subr.mxu0 0.0
        %850 = vmatpush1.msra.mxu0 0.0
        %851 = vmatprep.subr.mxu0 0.0
        %852 = vmatpush1.msra.mxu0 0.0
        %v853 = vand.u32 %v499, 4294901760
        %v854 = vsub.f32 %v499, %v853
        %855 = vmatprep.subr.mxu0 %v854
        %v856 = vand.u32 %v498, 4294901760
        %v857 = vsub.f32 %v498, %v856
        %858 = vmatpush1.msra.mxu0 %v857
        %v859 = vand.u32 %v495, 4294901760
        %v860 = vsub.f32 %v495, %v859
        %861 = vmatprep.subr.mxu0 %v860
        %v862 = vand.u32 %v494, 4294901760
        %v863 = vsub.f32 %v494, %v862
        %864 = vmatpush1.msra.mxu0 %v863
        %v865 = vand.u32 %v491, 4294901760
        %v866 = vsub.f32 %v491, %v865
        %867 = vmatprep.subr.mxu0 %v866
        %v868 = vand.u32 %v490, 4294901760
        %v869 = vsub.f32 %v490, %v868
        %870 = vmatpush1.msra.mxu0 %v869
        %v871 = vand.u32 %v487, 4294901760
        %v872 = vsub.f32 %v487, %v871
        %873 = vmatprep.subr.mxu0 %v872
        %v874 = vand.u32 %v486, 4294901760
        %v875 = vsub.f32 %v486, %v874
        %876 = vmatpush1.msra.mxu0 %v875
        %v877 = vand.u32 %v483, 4294901760
        %v878 = vsub.f32 %v483, %v877
        %879 = vmatprep.subr.mxu0 %v878
        %v880 = vand.u32 %v482, 4294901760
        %v881 = vsub.f32 %v482, %v880
        %882 = vmatpush1.msra.mxu0 %v881
        %v883 = vand.u32 %v479, 4294901760
        %v884 = vsub.f32 %v479, %v883
        %885 = vmatprep.subr.mxu0 %v884
        %v886 = vand.u32 %v478, 4294901760
        %v887 = vsub.f32 %v478, %v886
        %888 = vmatpush1.msra.mxu0 %v887
        %v889 = vand.u32 %v475, 4294901760
        %v890 = vsub.f32 %v475, %v889
        %891 = vmatprep.subr.mxu0 %v890
        %v892 = vand.u32 %v474, 4294901760
        %v893 = vsub.f32 %v474, %v892
        %894 = vmatpush1.msra.mxu0 %v893
        %v895 = vand.u32 %v471, 4294901760
        %v896 = vsub.f32 %v471, %v895
        %897 = vmatprep.subr.mxu0 %v896
        %v898 = vand.u32 %v470, 4294901760
        %v899 = vsub.f32 %v470, %v898
        %900 = vmatpush1.msra.mxu0 %v899
        %901 = vmatprep.subr.mxu0 0.0
        %902 = vmatpush2.msra.mxu0 0.0
        %903 = vmatprep.subr.mxu0 0.0
        %904 = vmatpush2.msra.mxu0 0.0
        %905 = vmatprep.subr.mxu0 0.0
        %906 = vmatpush2.msra.mxu0 0.0
        %907 = vmatprep.subr.mxu0 0.0
        %908 = vmatpush2.msra.mxu0 0.0
        %909 = vmatprep.subr.mxu0 0.0
        %910 = vmatpush2.msra.mxu0 0.0
        %911 = vmatprep.subr.mxu0 0.0
        %912 = vmatpush2.msra.mxu0 0.0
        %913 = vmatprep.subr.mxu0 0.0
        %914 = vmatpush2.msra.mxu0 0.0
        %915 = vmatprep.subr.mxu0 0.0
        %916 = vmatpush2.msra.mxu0 0.0
        %917 = vmatprep.subr.mxu0 0.0
        %918 = vmatpush2.msra.mxu0 0.0
        %919 = vmatprep.subr.mxu0 0.0
        %920 = vmatpush2.msra.mxu0 0.0
        %921 = vmatprep.subr.mxu0 0.0
        %922 = vmatpush2.msra.mxu0 0.0
        %923 = vmatprep.subr.mxu0 0.0
        %924 = vmatpush2.msra.mxu0 0.0
        %925 = vmatprep.subr.mxu0 0.0
        %926 = vmatpush2.msra.mxu0 0.0
        %927 = vmatprep.subr.mxu0 0.0
        %928 = vmatpush2.msra.mxu0 0.0
        %929 = vmatprep.subr.mxu0 0.0
        %930 = vmatpush2.msra.mxu0 0.0
        %931 = vmatprep.subr.mxu0 0.0
        %932 = vmatpush2.msra.mxu0 0.0
        %933 = vmatprep.mubr.f32.mxu0 0.0
        %v934 = vand.u32 %v528, 4294901760
        %v935 = vsub.f32 %v528, %v934
        %936 = vmatmul.mubr.f32.gmra.mxu0 %v935
        %v937 = vpop.f32.mrf.mxu0
        %v938 = vadd.f32 %v812, %v937
        %v939 = vpop.f32.mrf.mxu0
        %v940 = vadd.f32 %v814, %v939
        %941 = vmatprep.mubr.f32.mxu0 0.0
        %v942 = vand.u32 %v531, 4294901760
        %v943 = vsub.f32 %v531, %v942
        %944 = vmatmul.mubr.f32.gmra.mxu0 %v943
        %v945 = vpop.f32.mrf.mxu0
        %v946 = vadd.f32 %v819, %v945
        %v947 = vpop.f32.mrf.mxu0
        %v948 = vadd.f32 %v821, %v947
        %949 = vmatprep.mubr.f32.mxu0 0.0
        %v950 = vand.u32 %v534, 4294901760
        %v951 = vsub.f32 %v534, %v950
        %952 = vmatmul.mubr.f32.gmra.mxu0 %v951
        %v953 = vpop.f32.mrf.mxu0
        %v954 = vadd.f32 %v826, %v953
        %v955 = vpop.f32.mrf.mxu0
        %v956 = vadd.f32 %v828, %v955
        %957 = vmatprep.mubr.f32.mxu0 0.0
        %v958 = vand.u32 %v537, 4294901760
        %v959 = vsub.f32 %v537, %v958
        %960 = vmatmul.mubr.f32.gmra.mxu0 %v959
        %v961 = vpop.f32.mrf.mxu0
        %v962 = vadd.f32 %v833, %v961
        %v963 = vpop.f32.mrf.mxu0
        %v964 = vadd.f32 %v835, %v963
        %965 = vdwg.mxu0
        %966 = vmatprep.subr.mxu0 0.0
        %967 = vmatpush1.msra.mxu0 0.0
        %968 = vmatprep.subr.mxu0 0.0
        %969 = vmatpush1.msra.mxu0 0.0
        %970 = vmatprep.subr.mxu0 0.0
        %971 = vmatpush1.msra.mxu0 0.0
        %972 = vmatprep.subr.mxu0 0.0
        %973 = vmatpush1.msra.mxu0 0.0
        %974 = vmatprep.subr.mxu0 0.0
        %975 = vmatpush1.msra.mxu0 0.0
        %976 = vmatprep.subr.mxu0 0.0
        %977 = vmatpush1.msra.mxu0 0.0
        %978 = vmatprep.subr.mxu0 0.0
        %979 = vmatpush1.msra.mxu0 0.0
        %980 = vmatprep.subr.mxu0 0.0
        %981 = vmatpush1.msra.mxu0 0.0
        %v982 = vand.u32 %v499, 4294901760
        %983 = vmatprep.subr.mxu0 %v982
        %v984 = vand.u32 %v498, 4294901760
        %985 = vmatpush1.msra.mxu0 %v984
        %v986 = vand.u32 %v495, 4294901760
        %987 = vmatprep.subr.mxu0 %v986
        %v988 = vand.u32 %v494, 4294901760
        %989 = vmatpush1.msra.mxu0 %v988
        %v990 = vand.u32 %v491, 4294901760
        %991 = vmatprep.subr.mxu0 %v990
        %v992 = vand.u32 %v490, 4294901760
        %993 = vmatpush1.msra.mxu0 %v992
        %v994 = vand.u32 %v487, 4294901760
        %995 = vmatprep.subr.mxu0 %v994
        %v996 = vand.u32 %v486, 4294901760
        %997 = vmatpush1.msra.mxu0 %v996
        %v998 = vand.u32 %v483, 4294901760
        %999 = vmatprep.subr.mxu0 %v998
        %v1000 = vand.u32 %v482, 4294901760
        %1001 = vmatpush1.msra.mxu0 %v1000
        %v1002 = vand.u32 %v479, 4294901760
        %1003 = vmatprep.subr.mxu0 %v1002
        %v1004 = vand.u32 %v478, 4294901760
        %1005 = vmatpush1.msra.mxu0 %v1004
        %v1006 = vand.u32 %v475, 4294901760
        %1007 = vmatprep.subr.mxu0 %v1006
        %v1008 = vand.u32 %v474, 4294901760
        %1009 = vmatpush1.msra.mxu0 %v1008
        %v1010 = vand.u32 %v471, 4294901760
        %1011 = vmatprep.subr.mxu0 %v1010
        %v1012 = vand.u32 %v470, 4294901760
        %1013 = vmatpush1.msra.mxu0 %v1012
        %1014 = vmatprep.subr.mxu0 0.0
        %1015 = vmatpush2.msra.mxu0 0.0
        %1016 = vmatprep.subr.mxu0 0.0
        %1017 = vmatpush2.msra.mxu0 0.0
        %1018 = vmatprep.subr.mxu0 0.0
        %1019 = vmatpush2.msra.mxu0 0.0
        %1020 = vmatprep.subr.mxu0 0.0
        %1021 = vmatpush2.msra.mxu0 0.0
        %1022 = vmatprep.subr.mxu0 0.0
        %1023 = vmatpush2.msra.mxu0 0.0
        %1024 = vmatprep.subr.mxu0 0.0
        %1025 = vmatpush2.msra.mxu0 0.0
        %1026 = vmatprep.subr.mxu0 0.0
        %1027 = vmatpush2.msra.mxu0 0.0
        %1028 = vmatprep.subr.mxu0 0.0
        %1029 = vmatpush2.msra.mxu0 0.0
        %1030 = vmatprep.subr.mxu0 0.0
        %1031 = vmatpush2.msra.mxu0 0.0
        %1032 = vmatprep.subr.mxu0 0.0
        %1033 = vmatpush2.msra.mxu0 0.0
        %1034 = vmatprep.subr.mxu0 0.0
        %1035 = vmatpush2.msra.mxu0 0.0
        %1036 = vmatprep.subr.mxu0 0.0
        %1037 = vmatpush2.msra.mxu0 0.0
        %1038 = vmatprep.subr.mxu0 0.0
        %1039 = vmatpush2.msra.mxu0 0.0
        %1040 = vmatprep.subr.mxu0 0.0
        %1041 = vmatpush2.msra.mxu0 0.0
        %1042 = vmatprep.subr.mxu0 0.0
        %1043 = vmatpush2.msra.mxu0 0.0
        %1044 = vmatprep.subr.mxu0 0.0
        %1045 = vmatpush2.msra.mxu0 0.0
        %1046 = vmatprep.mubr.f32.mxu0 0.0
        %v1047 = vand.u32 %v528, 4294901760
        %v1048 = vsub.f32 %v528, %v1047
        %v1049 = vand.u32 %v1048, 4294901760
        %1050 = vmatmul.mubr.f32.gmra.mxu0 %v1049
        %v1051 = vpop.f32.mrf.mxu0
        %v1052 = vadd.f32 %v938, %v1051
        %v1053 = vpop.f32.mrf.mxu0
        %v1054 = vadd.f32 %v940, %v1053
        %1055 = vmatprep.mubr.f32.mxu0 0.0
        %v1056 = vand.u32 %v531, 4294901760
        %v1057 = vsub.f32 %v531, %v1056
        %v1058 = vand.u32 %v1057, 4294901760
        %1059 = vmatmul.mubr.f32.gmra.mxu0 %v1058
        %v1060 = vpop.f32.mrf.mxu0
        %v1061 = vadd.f32 %v946, %v1060
        %v1062 = vpop.f32.mrf.mxu0
        %v1063 = vadd.f32 %v948, %v1062
        %1064 = vmatprep.mubr.f32.mxu0 0.0
        %v1065 = vand.u32 %v534, 4294901760
        %v1066 = vsub.f32 %v534, %v1065
        %v1067 = vand.u32 %v1066, 4294901760
        %1068 = vmatmul.mubr.f32.gmra.mxu0 %v1067
        %v1069 = vpop.f32.mrf.mxu0
        %v1070 = vadd.f32 %v954, %v1069
        %v1071 = vpop.f32.mrf.mxu0
        %v1072 = vadd.f32 %v956, %v1071
        %1073 = vmatprep.mubr.f32.mxu0 0.0
        %v1074 = vand.u32 %v537, 4294901760
        %v1075 = vsub.f32 %v537, %v1074
        %v1076 = vand.u32 %v1075, 4294901760
        %1077 = vmatmul.mubr.f32.gmra.mxu0 %v1076
        %v1078 = vpop.f32.mrf.mxu0
        %v1079 = vadd.f32 %v962, %v1078
        %v1080 = vpop.f32.mrf.mxu0
        %v1081 = vadd.f32 %v964, %v1080
        %1082 = vdwg.mxu0
        %1083 = vmatprep.subr.mxu0 0.0
        %1084 = vmatpush1.msra.mxu0 0.0
        %1085 = vmatprep.subr.mxu0 0.0
        %1086 = vmatpush1.msra.mxu0 0.0
        %1087 = vmatprep.subr.mxu0 0.0
        %1088 = vmatpush1.msra.mxu0 0.0
        %1089 = vmatprep.subr.mxu0 0.0
        %1090 = vmatpush1.msra.mxu0 0.0
        %1091 = vmatprep.subr.mxu0 0.0
        %1092 = vmatpush1.msra.mxu0 0.0
        %1093 = vmatprep.subr.mxu0 0.0
        %1094 = vmatpush1.msra.mxu0 0.0
        %1095 = vmatprep.subr.mxu0 0.0
        %1096 = vmatpush1.msra.mxu0 0.0
        %1097 = vmatprep.subr.mxu0 0.0
        %1098 = vmatpush1.msra.mxu0 0.0
        %v1099 = vand.u32 %v499, 4294901760
        %v1100 = vsub.f32 %v499, %v1099
        %v1101 = vand.u32 %v1100, 4294901760
        %1102 = vmatprep.subr.mxu0 %v1101
        %v1103 = vand.u32 %v498, 4294901760
        %v1104 = vsub.f32 %v498, %v1103
        %v1105 = vand.u32 %v1104, 4294901760
        %1106 = vmatpush1.msra.mxu0 %v1105
        %v1107 = vand.u32 %v495, 4294901760
        %v1108 = vsub.f32 %v495, %v1107
        %v1109 = vand.u32 %v1108, 4294901760
        %1110 = vmatprep.subr.mxu0 %v1109
        %v1111 = vand.u32 %v494, 4294901760
        %v1112 = vsub.f32 %v494, %v1111
        %v1113 = vand.u32 %v1112, 4294901760
        %1114 = vmatpush1.msra.mxu0 %v1113
        %v1115 = vand.u32 %v491, 4294901760
        %v1116 = vsub.f32 %v491, %v1115
        %v1117 = vand.u32 %v1116, 4294901760
        %1118 = vmatprep.subr.mxu0 %v1117
        %v1119 = vand.u32 %v490, 4294901760
        %v1120 = vsub.f32 %v490, %v1119
        %v1121 = vand.u32 %v1120, 4294901760
        %1122 = vmatpush1.msra.mxu0 %v1121
        %v1123 = vand.u32 %v487, 4294901760
        %v1124 = vsub.f32 %v487, %v1123
        %v1125 = vand.u32 %v1124, 4294901760
        %1126 = vmatprep.subr.mxu0 %v1125
        %v1127 = vand.u32 %v486, 4294901760
        %v1128 = vsub.f32 %v486, %v1127
        %v1129 = vand.u32 %v1128, 4294901760
        %1130 = vmatpush1.msra.mxu0 %v1129
        %v1131 = vand.u32 %v483, 4294901760
        %v1132 = vsub.f32 %v483, %v1131
        %v1133 = vand.u32 %v1132, 4294901760
        %1134 = vmatprep.subr.mxu0 %v1133
        %v1135 = vand.u32 %v482, 4294901760
        %v1136 = vsub.f32 %v482, %v1135
        %v1137 = vand.u32 %v1136, 4294901760
        %1138 = vmatpush1.msra.mxu0 %v1137
        %v1139 = vand.u32 %v479, 4294901760
        %v1140 = vsub.f32 %v479, %v1139
        %v1141 = vand.u32 %v1140, 4294901760
        %1142 = vmatprep.subr.mxu0 %v1141
        %v1143 = vand.u32 %v478, 4294901760
        %v1144 = vsub.f32 %v478, %v1143
        %v1145 = vand.u32 %v1144, 4294901760
        %1146 = vmatpush1.msra.mxu0 %v1145
        %v1147 = vand.u32 %v475, 4294901760
        %v1148 = vsub.f32 %v475, %v1147
        %v1149 = vand.u32 %v1148, 4294901760
        %1150 = vmatprep.subr.mxu0 %v1149
        %v1151 = vand.u32 %v474, 4294901760
        %v1152 = vsub.f32 %v474, %v1151
        %v1153 = vand.u32 %v1152, 4294901760
        %1154 = vmatpush1.msra.mxu0 %v1153
        %v1155 = vand.u32 %v471, 4294901760
        %v1156 = vsub.f32 %v471, %v1155
        %v1157 = vand.u32 %v1156, 4294901760
        %1158 = vmatprep.subr.mxu0 %v1157
        %v1159 = vand.u32 %v470, 4294901760
        %v1160 = vsub.f32 %v470, %v1159
        %v1161 = vand.u32 %v1160, 4294901760
        %1162 = vmatpush1.msra.mxu0 %v1161
        %1163 = vmatprep.subr.mxu0 0.0
        %1164 = vmatpush2.msra.mxu0 0.0
        %1165 = vmatprep.subr.mxu0 0.0
        %1166 = vmatpush2.msra.mxu0 0.0
        %1167 = vmatprep.subr.mxu0 0.0
        %1168 = vmatpush2.msra.mxu0 0.0
        %1169 = vmatprep.subr.mxu0 0.0
        %1170 = vmatpush2.msra.mxu0 0.0
        %1171 = vmatprep.subr.mxu0 0.0
        %1172 = vmatpush2.msra.mxu0 0.0
        %1173 = vmatprep.subr.mxu0 0.0
        %1174 = vmatpush2.msra.mxu0 0.0
        %1175 = vmatprep.subr.mxu0 0.0
        %1176 = vmatpush2.msra.mxu0 0.0
        %1177 = vmatprep.subr.mxu0 0.0
        %1178 = vmatpush2.msra.mxu0 0.0
        %1179 = vmatprep.subr.mxu0 0.0
        %1180 = vmatpush2.msra.mxu0 0.0
        %1181 = vmatprep.subr.mxu0 0.0
        %1182 = vmatpush2.msra.mxu0 0.0
        %1183 = vmatprep.subr.mxu0 0.0
        %1184 = vmatpush2.msra.mxu0 0.0
        %1185 = vmatprep.subr.mxu0 0.0
        %1186 = vmatpush2.msra.mxu0 0.0
        %1187 = vmatprep.subr.mxu0 0.0
        %1188 = vmatpush2.msra.mxu0 0.0
        %1189 = vmatprep.subr.mxu0 0.0
        %1190 = vmatpush2.msra.mxu0 0.0
        %1191 = vmatprep.subr.mxu0 0.0
        %1192 = vmatpush2.msra.mxu0 0.0
        %1193 = vmatprep.subr.mxu0 0.0
        %1194 = vmatpush2.msra.mxu0 0.0
        %1195 = vmatprep.mubr.f32.mxu0 0.0
        %v1196 = vand.u32 %v528, 4294901760
        %1197 = vmatmul.mubr.f32.gmra.mxu0 %v1196
        %v1198 = vpop.f32.mrf.mxu0
        %v1199 = vadd.f32 %v1052, %v1198
        %v1200 = vpop.f32.mrf.mxu0
        %v1201 = vadd.f32 %v1054, %v1200
        %1202 = vmatprep.mubr.f32.mxu0 0.0
        %v1203 = vand.u32 %v531, 4294901760
        %1204 = vmatmul.mubr.f32.gmra.mxu0 %v1203
        %v1205 = vpop.f32.mrf.mxu0
        %v1206 = vadd.f32 %v1061, %v1205
        %v1207 = vpop.f32.mrf.mxu0
        %v1208 = vadd.f32 %v1063, %v1207
        %1209 = vmatprep.mubr.f32.mxu0 0.0
        %v1210 = vand.u32 %v534, 4294901760
        %1211 = vmatmul.mubr.f32.gmra.mxu0 %v1210
        %v1212 = vpop.f32.mrf.mxu0
        %v1213 = vadd.f32 %v1070, %v1212
        %v1214 = vpop.f32.mrf.mxu0
        %v1215 = vadd.f32 %v1072, %v1214
        %1216 = vmatprep.mubr.f32.mxu0 0.0
        %v1217 = vand.u32 %v537, 4294901760
        %1218 = vmatmul.mubr.f32.gmra.mxu0 %v1217
        %v1219 = vpop.f32.mrf.mxu0
        %v1220 = vadd.f32 %v1079, %v1219
        %v1221 = vpop.f32.mrf.mxu0
        %v1222 = vadd.f32 %v1081, %v1221
        %1223 = vdwg.mxu0
        %1224 = vmatprep.subr.mxu0 0.0
        %1225 = vmatpush1.msra.mxu0 0.0
        %1226 = vmatprep.subr.mxu0 0.0
        %1227 = vmatpush1.msra.mxu0 0.0
        %1228 = vmatprep.subr.mxu0 0.0
        %1229 = vmatpush1.msra.mxu0 0.0
        %1230 = vmatprep.subr.mxu0 0.0
        %1231 = vmatpush1.msra.mxu0 0.0
        %1232 = vmatprep.subr.mxu0 0.0
        %1233 = vmatpush1.msra.mxu0 0.0
        %1234 = vmatprep.subr.mxu0 0.0
        %1235 = vmatpush1.msra.mxu0 0.0
        %1236 = vmatprep.subr.mxu0 0.0
        %1237 = vmatpush1.msra.mxu0 0.0
        %1238 = vmatprep.subr.mxu0 0.0
        %1239 = vmatpush1.msra.mxu0 0.0
        %v1240 = vand.u32 %v499, 4294901760
        %1241 = vmatprep.subr.mxu0 %v1240
        %v1242 = vand.u32 %v498, 4294901760
        %1243 = vmatpush1.msra.mxu0 %v1242
        %v1244 = vand.u32 %v495, 4294901760
        %1245 = vmatprep.subr.mxu0 %v1244
        %v1246 = vand.u32 %v494, 4294901760
        %1247 = vmatpush1.msra.mxu0 %v1246
        %v1248 = vand.u32 %v491, 4294901760
        %1249 = vmatprep.subr.mxu0 %v1248
        %v1250 = vand.u32 %v490, 4294901760
        %1251 = vmatpush1.msra.mxu0 %v1250
        %v1252 = vand.u32 %v487, 4294901760
        %1253 = vmatprep.subr.mxu0 %v1252
        %v1254 = vand.u32 %v486, 4294901760
        %1255 = vmatpush1.msra.mxu0 %v1254
        %v1256 = vand.u32 %v483, 4294901760
        %1257 = vmatprep.subr.mxu0 %v1256
        %v1258 = vand.u32 %v482, 4294901760
        %1259 = vmatpush1.msra.mxu0 %v1258
        %v1260 = vand.u32 %v479, 4294901760
        %1261 = vmatprep.subr.mxu0 %v1260
        %v1262 = vand.u32 %v478, 4294901760
        %1263 = vmatpush1.msra.mxu0 %v1262
        %v1264 = vand.u32 %v475, 4294901760
        %1265 = vmatprep.subr.mxu0 %v1264
        %v1266 = vand.u32 %v474, 4294901760
        %1267 = vmatpush1.msra.mxu0 %v1266
        %v1268 = vand.u32 %v471, 4294901760
        %1269 = vmatprep.subr.mxu0 %v1268
        %v1270 = vand.u32 %v470, 4294901760
        %1271 = vmatpush1.msra.mxu0 %v1270
        %1272 = vmatprep.subr.mxu0 0.0
        %1273 = vmatpush2.msra.mxu0 0.0
        %1274 = vmatprep.subr.mxu0 0.0
        %1275 = vmatpush2.msra.mxu0 0.0
        %1276 = vmatprep.subr.mxu0 0.0
        %1277 = vmatpush2.msra.mxu0 0.0
        %1278 = vmatprep.subr.mxu0 0.0
        %1279 = vmatpush2.msra.mxu0 0.0
        %1280 = vmatprep.subr.mxu0 0.0
        %1281 = vmatpush2.msra.mxu0 0.0
        %1282 = vmatprep.subr.mxu0 0.0
        %1283 = vmatpush2.msra.mxu0 0.0
        %1284 = vmatprep.subr.mxu0 0.0
        %1285 = vmatpush2.msra.mxu0 0.0
        %1286 = vmatprep.subr.mxu0 0.0
        %1287 = vmatpush2.msra.mxu0 0.0
        %1288 = vmatprep.subr.mxu0 0.0
        %1289 = vmatpush2.msra.mxu0 0.0
        %1290 = vmatprep.subr.mxu0 0.0
        %1291 = vmatpush2.msra.mxu0 0.0
        %1292 = vmatprep.subr.mxu0 0.0
        %1293 = vmatpush2.msra.mxu0 0.0
        %1294 = vmatprep.subr.mxu0 0.0
        %1295 = vmatpush2.msra.mxu0 0.0
        %1296 = vmatprep.subr.mxu0 0.0
        %1297 = vmatpush2.msra.mxu0 0.0
        %1298 = vmatprep.subr.mxu0 0.0
        %1299 = vmatpush2.msra.mxu0 0.0
        %1300 = vmatprep.subr.mxu0 0.0
        %1301 = vmatpush2.msra.mxu0 0.0
        %1302 = vmatprep.subr.mxu0 0.0
        %1303 = vmatpush2.msra.mxu0 0.0
        %1304 = vmatprep.mubr.f32.mxu0 0.0
        %v1305 = vand.u32 %v528, 4294901760
        %1306 = vmatmul.mubr.f32.gmra.mxu0 %v1305
        %v1307 = vpop.f32.mrf.mxu0
        %v1308 = vadd.f32 %v1199, %v1307
        %v1309 = vpop.f32.mrf.mxu0
        %v1310 = vadd.f32 %v1201, %v1309
        %1311 = vmatprep.mubr.f32.mxu0 0.0
        %v1312 = vand.u32 %v531, 4294901760
        %1313 = vmatmul.mubr.f32.gmra.mxu0 %v1312
        %v1314 = vpop.f32.mrf.mxu0
        %v1315 = vadd.f32 %v1206, %v1314
        %v1316 = vpop.f32.mrf.mxu0
        %v1317 = vadd.f32 %v1208, %v1316
        %1318 = vmatprep.mubr.f32.mxu0 0.0
        %v1319 = vand.u32 %v534, 4294901760
        %1320 = vmatmul.mubr.f32.gmra.mxu0 %v1319
        %v1321 = vpop.f32.mrf.mxu0
        %v1322 = vadd.f32 %v1213, %v1321
        %v1323 = vpop.f32.mrf.mxu0
        %v1324 = vadd.f32 %v1215, %v1323
        %1325 = vmatprep.mubr.f32.mxu0 0.0
        %v1326 = vand.u32 %v537, 4294901760
        %1327 = vmatmul.mubr.f32.gmra.mxu0 %v1326
        %v1328 = vpop.f32.mrf.mxu0
        %v1329 = vadd.f32 %v1220, %v1328
        %v1330 = vpop.f32.mrf.mxu0
        %v1331 = vadd.f32 %v1222, %v1330
        %1332 = vdwg.mxu0
        %1333 = vmatprep.subr.mxu0 0.0
        %1334 = vmatpush1.msra.mxu0 0.0
        %1335 = vmatprep.subr.mxu0 0.0
        %1336 = vmatpush1.msra.mxu0 0.0
        %1337 = vmatprep.subr.mxu0 0.0
        %1338 = vmatpush1.msra.mxu0 0.0
        %1339 = vmatprep.subr.mxu0 0.0
        %1340 = vmatpush1.msra.mxu0 0.0
        %1341 = vmatprep.subr.mxu0 0.0
        %1342 = vmatpush1.msra.mxu0 0.0
        %1343 = vmatprep.subr.mxu0 0.0
        %1344 = vmatpush1.msra.mxu0 0.0
        %1345 = vmatprep.subr.mxu0 0.0
        %1346 = vmatpush1.msra.mxu0 0.0
        %1347 = vmatprep.subr.mxu0 0.0
        %1348 = vmatpush1.msra.mxu0 0.0
        %v1349 = vand.u32 %v501, 4294901760
        %1350 = vmatprep.subr.mxu0 %v1349
        %v1351 = vand.u32 %v500, 4294901760
        %1352 = vmatpush1.msra.mxu0 %v1351
        %v1353 = vand.u32 %v497, 4294901760
        %1354 = vmatprep.subr.mxu0 %v1353
        %v1355 = vand.u32 %v496, 4294901760
        %1356 = vmatpush1.msra.mxu0 %v1355
        %v1357 = vand.u32 %v493, 4294901760
        %1358 = vmatprep.subr.mxu0 %v1357
        %v1359 = vand.u32 %v492, 4294901760
        %1360 = vmatpush1.msra.mxu0 %v1359
        %v1361 = vand.u32 %v489, 4294901760
        %1362 = vmatprep.subr.mxu0 %v1361
        %v1363 = vand.u32 %v488, 4294901760
        %1364 = vmatpush1.msra.mxu0 %v1363
        %v1365 = vand.u32 %v485, 4294901760
        %1366 = vmatprep.subr.mxu0 %v1365
        %v1367 = vand.u32 %v484, 4294901760
        %1368 = vmatpush1.msra.mxu0 %v1367
        %v1369 = vand.u32 %v481, 4294901760
        %1370 = vmatprep.subr.mxu0 %v1369
        %v1371 = vand.u32 %v480, 4294901760
        %1372 = vmatpush1.msra.mxu0 %v1371
        %v1373 = vand.u32 %v477, 4294901760
        %1374 = vmatprep.subr.mxu0 %v1373
        %v1375 = vand.u32 %v476, 4294901760
        %1376 = vmatpush1.msra.mxu0 %v1375
        %v1377 = vand.u32 %v473, 4294901760
        %1378 = vmatprep.subr.mxu0 %v1377
        %v1379 = vand.u32 %v472, 4294901760
        %1380 = vmatpush1.msra.mxu0 %v1379
        %1381 = vmatprep.subr.mxu0 0.0
        %1382 = vmatpush2.msra.mxu0 0.0
        %1383 = vmatprep.subr.mxu0 0.0
        %1384 = vmatpush2.msra.mxu0 0.0
        %1385 = vmatprep.subr.mxu0 0.0
        %1386 = vmatpush2.msra.mxu0 0.0
        %1387 = vmatprep.subr.mxu0 0.0
        %1388 = vmatpush2.msra.mxu0 0.0
        %1389 = vmatprep.subr.mxu0 0.0
        %1390 = vmatpush2.msra.mxu0 0.0
        %1391 = vmatprep.subr.mxu0 0.0
        %1392 = vmatpush2.msra.mxu0 0.0
        %1393 = vmatprep.subr.mxu0 0.0
        %1394 = vmatpush2.msra.mxu0 0.0
        %1395 = vmatprep.subr.mxu0 0.0
        %1396 = vmatpush2.msra.mxu0 0.0
        %1397 = vmatprep.subr.mxu0 0.0
        %1398 = vmatpush2.msra.mxu0 0.0
        %1399 = vmatprep.subr.mxu0 0.0
        %1400 = vmatpush2.msra.mxu0 0.0
        %1401 = vmatprep.subr.mxu0 0.0
        %1402 = vmatpush2.msra.mxu0 0.0
        %1403 = vmatprep.subr.mxu0 0.0
        %1404 = vmatpush2.msra.mxu0 0.0
        %1405 = vmatprep.subr.mxu0 0.0
        %1406 = vmatpush2.msra.mxu0 0.0
        %1407 = vmatprep.subr.mxu0 0.0
        %1408 = vmatpush2.msra.mxu0 0.0
        %1409 = vmatprep.subr.mxu0 0.0
        %1410 = vmatpush2.msra.mxu0 0.0
        %1411 = vmatprep.subr.mxu0 0.0
        %1412 = vmatpush2.msra.mxu0 0.0
        %1413 = vmatprep.mubr.f32.mxu0 0.0
        %v1414 = vand.u32 %v528, 4294901760
        %v1415 = vsub.f32 %v528, %v1414
        %v1416 = vand.u32 %v1415, 4294901760
        %v1417 = vsub.f32 %v1415, %v1416
        %v1418 = vand.u32 %v1417, 4294901760
        %1419 = vmatmul.mubr.f32.gmra.mxu0 %v1418
        %v1420 = vpop.f32.mrf.mxu0
        %v1421 = vadd.f32 %v509, %v1420
        %v1422 = vpop.f32.mrf.mxu0
        %v1423 = vadd.f32 %v509, %v1422
        %1424 = vmatprep.mubr.f32.mxu0 0.0
        %v1425 = vand.u32 %v531, 4294901760
        %v1426 = vsub.f32 %v531, %v1425
        %v1427 = vand.u32 %v1426, 4294901760
        %v1428 = vsub.f32 %v1426, %v1427
        %v1429 = vand.u32 %v1428, 4294901760
        %1430 = vmatmul.mubr.f32.gmra.mxu0 %v1429
        %v1431 = vpop.f32.mrf.mxu0
        %v1432 = vadd.f32 %v514, %v1431
        %v1433 = vpop.f32.mrf.mxu0
        %v1434 = vadd.f32 %v514, %v1433
        %1435 = vmatprep.mubr.f32.mxu0 0.0
        %v1436 = vand.u32 %v534, 4294901760
        %v1437 = vsub.f32 %v534, %v1436
        %v1438 = vand.u32 %v1437, 4294901760
        %v1439 = vsub.f32 %v1437, %v1438
        %v1440 = vand.u32 %v1439, 4294901760
        %1441 = vmatmul.mubr.f32.gmra.mxu0 %v1440
        %v1442 = vpop.f32.mrf.mxu0
        %v1443 = vadd.f32 %v519, %v1442
        %v1444 = vpop.f32.mrf.mxu0
        %v1445 = vadd.f32 %v519, %v1444
        %1446 = vmatprep.mubr.f32.mxu0 0.0
        %v1447 = vand.u32 %v537, 4294901760
        %v1448 = vsub.f32 %v537, %v1447
        %v1449 = vand.u32 %v1448, 4294901760
        %v1450 = vsub.f32 %v1448, %v1449
        %v1451 = vand.u32 %v1450, 4294901760
        %1452 = vmatmul.mubr.f32.gmra.mxu0 %v1451
        %v1453 = vpop.f32.mrf.mxu0
        %v1454 = vadd.f32 %v524, %v1453
        %v1455 = vpop.f32.mrf.mxu0
        %v1456 = vadd.f32 %v524, %v1455
        %1457 = vdwg.mxu0
        %1458 = vmatprep.subr.mxu0 0.0
        %1459 = vmatpush1.msra.mxu0 0.0
        %1460 = vmatprep.subr.mxu0 0.0
        %1461 = vmatpush1.msra.mxu0 0.0
        %1462 = vmatprep.subr.mxu0 0.0
        %1463 = vmatpush1.msra.mxu0 0.0
        %1464 = vmatprep.subr.mxu0 0.0
        %1465 = vmatpush1.msra.mxu0 0.0
        %1466 = vmatprep.subr.mxu0 0.0
        %1467 = vmatpush1.msra.mxu0 0.0
        %1468 = vmatprep.subr.mxu0 0.0
        %1469 = vmatpush1.msra.mxu0 0.0
        %1470 = vmatprep.subr.mxu0 0.0
        %1471 = vmatpush1.msra.mxu0 0.0
        %1472 = vmatprep.subr.mxu0 0.0
        %1473 = vmatpush1.msra.mxu0 0.0
        %v1474 = vand.u32 %v501, 4294901760
        %v1475 = vsub.f32 %v501, %v1474
        %v1476 = vand.u32 %v1475, 4294901760
        %v1477 = vsub.f32 %v1475, %v1476
        %v1478 = vand.u32 %v1477, 4294901760
        %1479 = vmatprep.subr.mxu0 %v1478
        %v1480 = vand.u32 %v500, 4294901760
        %v1481 = vsub.f32 %v500, %v1480
        %v1482 = vand.u32 %v1481, 4294901760
        %v1483 = vsub.f32 %v1481, %v1482
        %v1484 = vand.u32 %v1483, 4294901760
        %1485 = vmatpush1.msra.mxu0 %v1484
        %v1486 = vand.u32 %v497, 4294901760
        %v1487 = vsub.f32 %v497, %v1486
        %v1488 = vand.u32 %v1487, 4294901760
        %v1489 = vsub.f32 %v1487, %v1488
        %v1490 = vand.u32 %v1489, 4294901760
        %1491 = vmatprep.subr.mxu0 %v1490
        %v1492 = vand.u32 %v496, 4294901760
        %v1493 = vsub.f32 %v496, %v1492
        %v1494 = vand.u32 %v1493, 4294901760
        %v1495 = vsub.f32 %v1493, %v1494
        %v1496 = vand.u32 %v1495, 4294901760
        %1497 = vmatpush1.msra.mxu0 %v1496
        %v1498 = vand.u32 %v493, 4294901760
        %v1499 = vsub.f32 %v493, %v1498
        %v1500 = vand.u32 %v1499, 4294901760
        %v1501 = vsub.f32 %v1499, %v1500
        %v1502 = vand.u32 %v1501, 4294901760
        %1503 = vmatprep.subr.mxu0 %v1502
        %v1504 = vand.u32 %v492, 4294901760
        %v1505 = vsub.f32 %v492, %v1504
        %v1506 = vand.u32 %v1505, 4294901760
        %v1507 = vsub.f32 %v1505, %v1506
        %v1508 = vand.u32 %v1507, 4294901760
        %1509 = vmatpush1.msra.mxu0 %v1508
        %v1510 = vand.u32 %v489, 4294901760
        %v1511 = vsub.f32 %v489, %v1510
        %v1512 = vand.u32 %v1511, 4294901760
        %v1513 = vsub.f32 %v1511, %v1512
        %v1514 = vand.u32 %v1513, 4294901760
        %1515 = vmatprep.subr.mxu0 %v1514
        %v1516 = vand.u32 %v488, 4294901760
        %v1517 = vsub.f32 %v488, %v1516
        %v1518 = vand.u32 %v1517, 4294901760
        %v1519 = vsub.f32 %v1517, %v1518
        %v1520 = vand.u32 %v1519, 4294901760
        %1521 = vmatpush1.msra.mxu0 %v1520
        %v1522 = vand.u32 %v485, 4294901760
        %v1523 = vsub.f32 %v485, %v1522
        %v1524 = vand.u32 %v1523, 4294901760
        %v1525 = vsub.f32 %v1523, %v1524
        %v1526 = vand.u32 %v1525, 4294901760
        %1527 = vmatprep.subr.mxu0 %v1526
        %v1528 = vand.u32 %v484, 4294901760
        %v1529 = vsub.f32 %v484, %v1528
        %v1530 = vand.u32 %v1529, 4294901760
        %v1531 = vsub.f32 %v1529, %v1530
        %v1532 = vand.u32 %v1531, 4294901760
        %1533 = vmatpush1.msra.mxu0 %v1532
        %v1534 = vand.u32 %v481, 4294901760
        %v1535 = vsub.f32 %v481, %v1534
        %v1536 = vand.u32 %v1535, 4294901760
        %v1537 = vsub.f32 %v1535, %v1536
        %v1538 = vand.u32 %v1537, 4294901760
        %1539 = vmatprep.subr.mxu0 %v1538
        %v1540 = vand.u32 %v480, 4294901760
        %v1541 = vsub.f32 %v480, %v1540
        %v1542 = vand.u32 %v1541, 4294901760
        %v1543 = vsub.f32 %v1541, %v1542
        %v1544 = vand.u32 %v1543, 4294901760
        %1545 = vmatpush1.msra.mxu0 %v1544
        %v1546 = vand.u32 %v477, 4294901760
        %v1547 = vsub.f32 %v477, %v1546
        %v1548 = vand.u32 %v1547, 4294901760
        %v1549 = vsub.f32 %v1547, %v1548
        %v1550 = vand.u32 %v1549, 4294901760
        %1551 = vmatprep.subr.mxu0 %v1550
        %v1552 = vand.u32 %v476, 4294901760
        %v1553 = vsub.f32 %v476, %v1552
        %v1554 = vand.u32 %v1553, 4294901760
        %v1555 = vsub.f32 %v1553, %v1554
        %v1556 = vand.u32 %v1555, 4294901760
        %1557 = vmatpush1.msra.mxu0 %v1556
        %v1558 = vand.u32 %v473, 4294901760
        %v1559 = vsub.f32 %v473, %v1558
        %v1560 = vand.u32 %v1559, 4294901760
        %v1561 = vsub.f32 %v1559, %v1560
        %v1562 = vand.u32 %v1561, 4294901760
        %1563 = vmatprep.subr.mxu0 %v1562
        %v1564 = vand.u32 %v472, 4294901760
        %v1565 = vsub.f32 %v472, %v1564
        %v1566 = vand.u32 %v1565, 4294901760
        %v1567 = vsub.f32 %v1565, %v1566
        %v1568 = vand.u32 %v1567, 4294901760
        %1569 = vmatpush1.msra.mxu0 %v1568
        %1570 = vmatprep.subr.mxu0 0.0
        %1571 = vmatpush2.msra.mxu0 0.0
        %1572 = vmatprep.subr.mxu0 0.0
        %1573 = vmatpush2.msra.mxu0 0.0
        %1574 = vmatprep.subr.mxu0 0.0
        %1575 = vmatpush2.msra.mxu0 0.0
        %1576 = vmatprep.subr.mxu0 0.0
        %1577 = vmatpush2.msra.mxu0 0.0
        %1578 = vmatprep.subr.mxu0 0.0
        %1579 = vmatpush2.msra.mxu0 0.0
        %1580 = vmatprep.subr.mxu0 0.0
        %1581 = vmatpush2.msra.mxu0 0.0
        %1582 = vmatprep.subr.mxu0 0.0
        %1583 = vmatpush2.msra.mxu0 0.0
        %1584 = vmatprep.subr.mxu0 0.0
        %1585 = vmatpush2.msra.mxu0 0.0
        %1586 = vmatprep.subr.mxu0 0.0
        %1587 = vmatpush2.msra.mxu0 0.0
        %1588 = vmatprep.subr.mxu0 0.0
        %1589 = vmatpush2.msra.mxu0 0.0
        %1590 = vmatprep.subr.mxu0 0.0
        %1591 = vmatpush2.msra.mxu0 0.0
        %1592 = vmatprep.subr.mxu0 0.0
        %1593 = vmatpush2.msra.mxu0 0.0
        %1594 = vmatprep.subr.mxu0 0.0
        %1595 = vmatpush2.msra.mxu0 0.0
        %1596 = vmatprep.subr.mxu0 0.0
        %1597 = vmatpush2.msra.mxu0 0.0
        %1598 = vmatprep.subr.mxu0 0.0
        %1599 = vmatpush2.msra.mxu0 0.0
        %1600 = vmatprep.subr.mxu0 0.0
        %1601 = vmatpush2.msra.mxu0 0.0
        %1602 = vmatprep.mubr.f32.mxu0 0.0
        %v1603 = vand.u32 %v528, 4294901760
        %1604 = vmatmul.mubr.f32.gmra.mxu0 %v1603
        %v1605 = vpop.f32.mrf.mxu0
        %v1606 = vadd.f32 %v1421, %v1605
        %v1607 = vpop.f32.mrf.mxu0
        %v1608 = vadd.f32 %v1423, %v1607
        %1609 = vmatprep.mubr.f32.mxu0 0.0
        %v1610 = vand.u32 %v531, 4294901760
        %1611 = vmatmul.mubr.f32.gmra.mxu0 %v1610
        %v1612 = vpop.f32.mrf.mxu0
        %v1613 = vadd.f32 %v1432, %v1612
        %v1614 = vpop.f32.mrf.mxu0
        %v1615 = vadd.f32 %v1434, %v1614
        %1616 = vmatprep.mubr.f32.mxu0 0.0
        %v1617 = vand.u32 %v534, 4294901760
        %1618 = vmatmul.mubr.f32.gmra.mxu0 %v1617
        %v1619 = vpop.f32.mrf.mxu0
        %v1620 = vadd.f32 %v1443, %v1619
        %v1621 = vpop.f32.mrf.mxu0
        %v1622 = vadd.f32 %v1445, %v1621
        %1623 = vmatprep.mubr.f32.mxu0 0.0
        %v1624 = vand.u32 %v537, 4294901760
        %1625 = vmatmul.mubr.f32.gmra.mxu0 %v1624
        %v1626 = vpop.f32.mrf.mxu0
        %v1627 = vadd.f32 %v1454, %v1626
        %v1628 = vpop.f32.mrf.mxu0
        %v1629 = vadd.f32 %v1456, %v1628
        %1630 = vdwg.mxu0
        %1631 = vmatprep.subr.mxu0 0.0
        %1632 = vmatpush1.msra.mxu0 0.0
        %1633 = vmatprep.subr.mxu0 0.0
        %1634 = vmatpush1.msra.mxu0 0.0
        %1635 = vmatprep.subr.mxu0 0.0
        %1636 = vmatpush1.msra.mxu0 0.0
        %1637 = vmatprep.subr.mxu0 0.0
        %1638 = vmatpush1.msra.mxu0 0.0
        %1639 = vmatprep.subr.mxu0 0.0
        %1640 = vmatpush1.msra.mxu0 0.0
        %1641 = vmatprep.subr.mxu0 0.0
        %1642 = vmatpush1.msra.mxu0 0.0
        %1643 = vmatprep.subr.mxu0 0.0
        %1644 = vmatpush1.msra.mxu0 0.0
        %1645 = vmatprep.subr.mxu0 0.0
        %1646 = vmatpush1.msra.mxu0 0.0
        %v1647 = vand.u32 %v501, 4294901760
        %v1648 = vsub.f32 %v501, %v1647
        %1649 = vmatprep.subr.mxu0 %v1648
        %v1650 = vand.u32 %v500, 4294901760
        %v1651 = vsub.f32 %v500, %v1650
        %1652 = vmatpush1.msra.mxu0 %v1651
        %v1653 = vand.u32 %v497, 4294901760
        %v1654 = vsub.f32 %v497, %v1653
        %1655 = vmatprep.subr.mxu0 %v1654
        %v1656 = vand.u32 %v496, 4294901760
        %v1657 = vsub.f32 %v496, %v1656
        %1658 = vmatpush1.msra.mxu0 %v1657
        %v1659 = vand.u32 %v493, 4294901760
        %v1660 = vsub.f32 %v493, %v1659
        %1661 = vmatprep.subr.mxu0 %v1660
        %v1662 = vand.u32 %v492, 4294901760
        %v1663 = vsub.f32 %v492, %v1662
        %1664 = vmatpush1.msra.mxu0 %v1663
        %v1665 = vand.u32 %v489, 4294901760
        %v1666 = vsub.f32 %v489, %v1665
        %1667 = vmatprep.subr.mxu0 %v1666
        %v1668 = vand.u32 %v488, 4294901760
        %v1669 = vsub.f32 %v488, %v1668
        %1670 = vmatpush1.msra.mxu0 %v1669
        %v1671 = vand.u32 %v485, 4294901760
        %v1672 = vsub.f32 %v485, %v1671
        %1673 = vmatprep.subr.mxu0 %v1672
        %v1674 = vand.u32 %v484, 4294901760
        %v1675 = vsub.f32 %v484, %v1674
        %1676 = vmatpush1.msra.mxu0 %v1675
        %v1677 = vand.u32 %v481, 4294901760
        %v1678 = vsub.f32 %v481, %v1677
        %1679 = vmatprep.subr.mxu0 %v1678
        %v1680 = vand.u32 %v480, 4294901760
        %v1681 = vsub.f32 %v480, %v1680
        %1682 = vmatpush1.msra.mxu0 %v1681
        %v1683 = vand.u32 %v477, 4294901760
        %v1684 = vsub.f32 %v477, %v1683
        %1685 = vmatprep.subr.mxu0 %v1684
        %v1686 = vand.u32 %v476, 4294901760
        %v1687 = vsub.f32 %v476, %v1686
        %1688 = vmatpush1.msra.mxu0 %v1687
        %v1689 = vand.u32 %v473, 4294901760
        %v1690 = vsub.f32 %v473, %v1689
        %1691 = vmatprep.subr.mxu0 %v1690
        %v1692 = vand.u32 %v472, 4294901760
        %v1693 = vsub.f32 %v472, %v1692
        %1694 = vmatpush1.msra.mxu0 %v1693
        %1695 = vmatprep.subr.mxu0 0.0
        %1696 = vmatpush2.msra.mxu0 0.0
        %1697 = vmatprep.subr.mxu0 0.0
        %1698 = vmatpush2.msra.mxu0 0.0
        %1699 = vmatprep.subr.mxu0 0.0
        %1700 = vmatpush2.msra.mxu0 0.0
        %1701 = vmatprep.subr.mxu0 0.0
        %1702 = vmatpush2.msra.mxu0 0.0
        %1703 = vmatprep.subr.mxu0 0.0
        %1704 = vmatpush2.msra.mxu0 0.0
        %1705 = vmatprep.subr.mxu0 0.0
        %1706 = vmatpush2.msra.mxu0 0.0
        %1707 = vmatprep.subr.mxu0 0.0
        %1708 = vmatpush2.msra.mxu0 0.0
        %1709 = vmatprep.subr.mxu0 0.0
        %1710 = vmatpush2.msra.mxu0 0.0
        %1711 = vmatprep.subr.mxu0 0.0
        %1712 = vmatpush2.msra.mxu0 0.0
        %1713 = vmatprep.subr.mxu0 0.0
        %1714 = vmatpush2.msra.mxu0 0.0
        %1715 = vmatprep.subr.mxu0 0.0
        %1716 = vmatpush2.msra.mxu0 0.0
        %1717 = vmatprep.subr.mxu0 0.0
        %1718 = vmatpush2.msra.mxu0 0.0
        %1719 = vmatprep.subr.mxu0 0.0
        %1720 = vmatpush2.msra.mxu0 0.0
        %1721 = vmatprep.subr.mxu0 0.0
        %1722 = vmatpush2.msra.mxu0 0.0
        %1723 = vmatprep.subr.mxu0 0.0
        %1724 = vmatpush2.msra.mxu0 0.0
        %1725 = vmatprep.subr.mxu0 0.0
        %1726 = vmatpush2.msra.mxu0 0.0
        %1727 = vmatprep.mubr.f32.mxu0 0.0
        %v1728 = vand.u32 %v528, 4294901760
        %v1729 = vsub.f32 %v528, %v1728
        %1730 = vmatmul.mubr.f32.gmra.mxu0 %v1729
        %v1731 = vpop.f32.mrf.mxu0
        %v1732 = vadd.f32 %v1606, %v1731
        %v1733 = vpop.f32.mrf.mxu0
        %v1734 = vadd.f32 %v1608, %v1733
        %1735 = vmatprep.mubr.f32.mxu0 0.0
        %v1736 = vand.u32 %v531, 4294901760
        %v1737 = vsub.f32 %v531, %v1736
        %1738 = vmatmul.mubr.f32.gmra.mxu0 %v1737
        %v1739 = vpop.f32.mrf.mxu0
        %v1740 = vadd.f32 %v1613, %v1739
        %v1741 = vpop.f32.mrf.mxu0
        %v1742 = vadd.f32 %v1615, %v1741
        %1743 = vmatprep.mubr.f32.mxu0 0.0
        %v1744 = vand.u32 %v534, 4294901760
        %v1745 = vsub.f32 %v534, %v1744
        %1746 = vmatmul.mubr.f32.gmra.mxu0 %v1745
        %v1747 = vpop.f32.mrf.mxu0
        %v1748 = vadd.f32 %v1620, %v1747
        %v1749 = vpop.f32.mrf.mxu0
        %v1750 = vadd.f32 %v1622, %v1749
        %1751 = vmatprep.mubr.f32.mxu0 0.0
        %v1752 = vand.u32 %v537, 4294901760
        %v1753 = vsub.f32 %v537, %v1752
        %1754 = vmatmul.mubr.f32.gmra.mxu0 %v1753
        %v1755 = vpop.f32.mrf.mxu0
        %v1756 = vadd.f32 %v1627, %v1755
        %v1757 = vpop.f32.mrf.mxu0
        %v1758 = vadd.f32 %v1629, %v1757
        %1759 = vdwg.mxu0
        %1760 = vmatprep.subr.mxu0 0.0
        %1761 = vmatpush1.msra.mxu0 0.0
        %1762 = vmatprep.subr.mxu0 0.0
        %1763 = vmatpush1.msra.mxu0 0.0
        %1764 = vmatprep.subr.mxu0 0.0
        %1765 = vmatpush1.msra.mxu0 0.0
        %1766 = vmatprep.subr.mxu0 0.0
        %1767 = vmatpush1.msra.mxu0 0.0
        %1768 = vmatprep.subr.mxu0 0.0
        %1769 = vmatpush1.msra.mxu0 0.0
        %1770 = vmatprep.subr.mxu0 0.0
        %1771 = vmatpush1.msra.mxu0 0.0
        %1772 = vmatprep.subr.mxu0 0.0
        %1773 = vmatpush1.msra.mxu0 0.0
        %1774 = vmatprep.subr.mxu0 0.0
        %1775 = vmatpush1.msra.mxu0 0.0
        %v1776 = vand.u32 %v501, 4294901760
        %1777 = vmatprep.subr.mxu0 %v1776
        %v1778 = vand.u32 %v500, 4294901760
        %1779 = vmatpush1.msra.mxu0 %v1778
        %v1780 = vand.u32 %v497, 4294901760
        %1781 = vmatprep.subr.mxu0 %v1780
        %v1782 = vand.u32 %v496, 4294901760
        %1783 = vmatpush1.msra.mxu0 %v1782
        %v1784 = vand.u32 %v493, 4294901760
        %1785 = vmatprep.subr.mxu0 %v1784
        %v1786 = vand.u32 %v492, 4294901760
        %1787 = vmatpush1.msra.mxu0 %v1786
        %v1788 = vand.u32 %v489, 4294901760
        %1789 = vmatprep.subr.mxu0 %v1788
        %v1790 = vand.u32 %v488, 4294901760
        %1791 = vmatpush1.msra.mxu0 %v1790
        %v1792 = vand.u32 %v485, 4294901760
        %1793 = vmatprep.subr.mxu0 %v1792
        %v1794 = vand.u32 %v484, 4294901760
        %1795 = vmatpush1.msra.mxu0 %v1794
        %v1796 = vand.u32 %v481, 4294901760
        %1797 = vmatprep.subr.mxu0 %v1796
        %v1798 = vand.u32 %v480, 4294901760
        %1799 = vmatpush1.msra.mxu0 %v1798
        %v1800 = vand.u32 %v477, 4294901760
        %1801 = vmatprep.subr.mxu0 %v1800
        %v1802 = vand.u32 %v476, 4294901760
        %1803 = vmatpush1.msra.mxu0 %v1802
        %v1804 = vand.u32 %v473, 4294901760
        %1805 = vmatprep.subr.mxu0 %v1804
        %v1806 = vand.u32 %v472, 4294901760
        %1807 = vmatpush1.msra.mxu0 %v1806
        %1808 = vmatprep.subr.mxu0 0.0
        %1809 = vmatpush2.msra.mxu0 0.0
        %1810 = vmatprep.subr.mxu0 0.0
        %1811 = vmatpush2.msra.mxu0 0.0
        %1812 = vmatprep.subr.mxu0 0.0
        %1813 = vmatpush2.msra.mxu0 0.0
        %1814 = vmatprep.subr.mxu0 0.0
        %1815 = vmatpush2.msra.mxu0 0.0
        %1816 = vmatprep.subr.mxu0 0.0
        %1817 = vmatpush2.msra.mxu0 0.0
        %1818 = vmatprep.subr.mxu0 0.0
        %1819 = vmatpush2.msra.mxu0 0.0
        %1820 = vmatprep.subr.mxu0 0.0
        %1821 = vmatpush2.msra.mxu0 0.0
        %1822 = vmatprep.subr.mxu0 0.0
        %1823 = vmatpush2.msra.mxu0 0.0
        %1824 = vmatprep.subr.mxu0 0.0
        %1825 = vmatpush2.msra.mxu0 0.0
        %1826 = vmatprep.subr.mxu0 0.0
        %1827 = vmatpush2.msra.mxu0 0.0
        %1828 = vmatprep.subr.mxu0 0.0
        %1829 = vmatpush2.msra.mxu0 0.0
        %1830 = vmatprep.subr.mxu0 0.0
        %1831 = vmatpush2.msra.mxu0 0.0
        %1832 = vmatprep.subr.mxu0 0.0
        %1833 = vmatpush2.msra.mxu0 0.0
        %1834 = vmatprep.subr.mxu0 0.0
        %1835 = vmatpush2.msra.mxu0 0.0
        %1836 = vmatprep.subr.mxu0 0.0
        %1837 = vmatpush2.msra.mxu0 0.0
        %1838 = vmatprep.subr.mxu0 0.0
        %1839 = vmatpush2.msra.mxu0 0.0
        %1840 = vmatprep.mubr.f32.mxu0 0.0
        %v1841 = vand.u32 %v528, 4294901760
        %v1842 = vsub.f32 %v528, %v1841
        %v1843 = vand.u32 %v1842, 4294901760
        %1844 = vmatmul.mubr.f32.gmra.mxu0 %v1843
        %v1845 = vpop.f32.mrf.mxu0
        %v1846 = vadd.f32 %v1732, %v1845
        %v1847 = vpop.f32.mrf.mxu0
        %v1848 = vadd.f32 %v1734, %v1847
        %1849 = vmatprep.mubr.f32.mxu0 0.0
        %v1850 = vand.u32 %v531, 4294901760
        %v1851 = vsub.f32 %v531, %v1850
        %v1852 = vand.u32 %v1851, 4294901760
        %1853 = vmatmul.mubr.f32.gmra.mxu0 %v1852
        %v1854 = vpop.f32.mrf.mxu0
        %v1855 = vadd.f32 %v1740, %v1854
        %v1856 = vpop.f32.mrf.mxu0
        %v1857 = vadd.f32 %v1742, %v1856
        %1858 = vmatprep.mubr.f32.mxu0 0.0
        %v1859 = vand.u32 %v534, 4294901760
        %v1860 = vsub.f32 %v534, %v1859
        %v1861 = vand.u32 %v1860, 4294901760
        %1862 = vmatmul.mubr.f32.gmra.mxu0 %v1861
        %v1863 = vpop.f32.mrf.mxu0
        %v1864 = vadd.f32 %v1748, %v1863
        %v1865 = vpop.f32.mrf.mxu0
        %v1866 = vadd.f32 %v1750, %v1865
        %1867 = vmatprep.mubr.f32.mxu0 0.0
        %v1868 = vand.u32 %v537, 4294901760
        %v1869 = vsub.f32 %v537, %v1868
        %v1870 = vand.u32 %v1869, 4294901760
        %1871 = vmatmul.mubr.f32.gmra.mxu0 %v1870
        %v1872 = vpop.f32.mrf.mxu0
        %v1873 = vadd.f32 %v1756, %v1872
        %v1874 = vpop.f32.mrf.mxu0
        %v1875 = vadd.f32 %v1758, %v1874
        %1876 = vdwg.mxu0
        %1877 = vmatprep.subr.mxu0 0.0
        %1878 = vmatpush1.msra.mxu0 0.0
        %1879 = vmatprep.subr.mxu0 0.0
        %1880 = vmatpush1.msra.mxu0 0.0
        %1881 = vmatprep.subr.mxu0 0.0
        %1882 = vmatpush1.msra.mxu0 0.0
        %1883 = vmatprep.subr.mxu0 0.0
        %1884 = vmatpush1.msra.mxu0 0.0
        %1885 = vmatprep.subr.mxu0 0.0
        %1886 = vmatpush1.msra.mxu0 0.0
        %1887 = vmatprep.subr.mxu0 0.0
        %1888 = vmatpush1.msra.mxu0 0.0
        %1889 = vmatprep.subr.mxu0 0.0
        %1890 = vmatpush1.msra.mxu0 0.0
        %1891 = vmatprep.subr.mxu0 0.0
        %1892 = vmatpush1.msra.mxu0 0.0
        %v1893 = vand.u32 %v501, 4294901760
        %v1894 = vsub.f32 %v501, %v1893
        %v1895 = vand.u32 %v1894, 4294901760
        %1896 = vmatprep.subr.mxu0 %v1895
        %v1897 = vand.u32 %v500, 4294901760
        %v1898 = vsub.f32 %v500, %v1897
        %v1899 = vand.u32 %v1898, 4294901760
        %1900 = vmatpush1.msra.mxu0 %v1899
        %v1901 = vand.u32 %v497, 4294901760
        %v1902 = vsub.f32 %v497, %v1901
        %v1903 = vand.u32 %v1902, 4294901760
        %1904 = vmatprep.subr.mxu0 %v1903
        %v1905 = vand.u32 %v496, 4294901760
        %v1906 = vsub.f32 %v496, %v1905
        %v1907 = vand.u32 %v1906, 4294901760
        %1908 = vmatpush1.msra.mxu0 %v1907
        %v1909 = vand.u32 %v493, 4294901760
        %v1910 = vsub.f32 %v493, %v1909
        %v1911 = vand.u32 %v1910, 4294901760
        %1912 = vmatprep.subr.mxu0 %v1911
        %v1913 = vand.u32 %v492, 4294901760
        %v1914 = vsub.f32 %v492, %v1913
        %v1915 = vand.u32 %v1914, 4294901760
        %1916 = vmatpush1.msra.mxu0 %v1915
        %v1917 = vand.u32 %v489, 4294901760
        %v1918 = vsub.f32 %v489, %v1917
        %v1919 = vand.u32 %v1918, 4294901760
        %1920 = vmatprep.subr.mxu0 %v1919
        %v1921 = vand.u32 %v488, 4294901760
        %v1922 = vsub.f32 %v488, %v1921
        %v1923 = vand.u32 %v1922, 4294901760
        %1924 = vmatpush1.msra.mxu0 %v1923
        %v1925 = vand.u32 %v485, 4294901760
        %v1926 = vsub.f32 %v485, %v1925
        %v1927 = vand.u32 %v1926, 4294901760
        %1928 = vmatprep.subr.mxu0 %v1927
        %v1929 = vand.u32 %v484, 4294901760
        %v1930 = vsub.f32 %v484, %v1929
        %v1931 = vand.u32 %v1930, 4294901760
        %1932 = vmatpush1.msra.mxu0 %v1931
        %v1933 = vand.u32 %v481, 4294901760
        %v1934 = vsub.f32 %v481, %v1933
        %v1935 = vand.u32 %v1934, 4294901760
        %1936 = vmatprep.subr.mxu0 %v1935
        %v1937 = vand.u32 %v480, 4294901760
        %v1938 = vsub.f32 %v480, %v1937
        %v1939 = vand.u32 %v1938, 4294901760
        %1940 = vmatpush1.msra.mxu0 %v1939
        %v1941 = vand.u32 %v477, 4294901760
        %v1942 = vsub.f32 %v477, %v1941
        %v1943 = vand.u32 %v1942, 4294901760
        %1944 = vmatprep.subr.mxu0 %v1943
        %v1945 = vand.u32 %v476, 4294901760
        %v1946 = vsub.f32 %v476, %v1945
        %v1947 = vand.u32 %v1946, 4294901760
        %1948 = vmatpush1.msra.mxu0 %v1947
        %v1949 = vand.u32 %v473, 4294901760
        %v1950 = vsub.f32 %v473, %v1949
        %v1951 = vand.u32 %v1950, 4294901760
        %1952 = vmatprep.subr.mxu0 %v1951
        %v1953 = vand.u32 %v472, 4294901760
        %v1954 = vsub.f32 %v472, %v1953
        %v1955 = vand.u32 %v1954, 4294901760
        %1956 = vmatpush1.msra.mxu0 %v1955
        %1957 = vmatprep.subr.mxu0 0.0
        %1958 = vmatpush2.msra.mxu0 0.0
        %1959 = vmatprep.subr.mxu0 0.0
        %1960 = vmatpush2.msra.mxu0 0.0
        %1961 = vmatprep.subr.mxu0 0.0
        %1962 = vmatpush2.msra.mxu0 0.0
        %1963 = vmatprep.subr.mxu0 0.0
        %1964 = vmatpush2.msra.mxu0 0.0
        %1965 = vmatprep.subr.mxu0 0.0
        %1966 = vmatpush2.msra.mxu0 0.0
        %1967 = vmatprep.subr.mxu0 0.0
        %1968 = vmatpush2.msra.mxu0 0.0
        %1969 = vmatprep.subr.mxu0 0.0
        %1970 = vmatpush2.msra.mxu0 0.0
        %1971 = vmatprep.subr.mxu0 0.0
        %1972 = vmatpush2.msra.mxu0 0.0
        %1973 = vmatprep.subr.mxu0 0.0
        %1974 = vmatpush2.msra.mxu0 0.0
        %1975 = vmatprep.subr.mxu0 0.0
        %1976 = vmatpush2.msra.mxu0 0.0
        %1977 = vmatprep.subr.mxu0 0.0
        %1978 = vmatpush2.msra.mxu0 0.0
        %1979 = vmatprep.subr.mxu0 0.0
        %1980 = vmatpush2.msra.mxu0 0.0
        %1981 = vmatprep.subr.mxu0 0.0
        %1982 = vmatpush2.msra.mxu0 0.0
        %1983 = vmatprep.subr.mxu0 0.0
        %1984 = vmatpush2.msra.mxu0 0.0
        %1985 = vmatprep.subr.mxu0 0.0
        %1986 = vmatpush2.msra.mxu0 0.0
        %1987 = vmatprep.subr.mxu0 0.0
        %1988 = vmatpush2.msra.mxu0 0.0
        %1989 = vmatprep.mubr.f32.mxu0 0.0
        %v1990 = vand.u32 %v528, 4294901760
        %1991 = vmatmul.mubr.f32.gmra.mxu0 %v1990
        %v1992 = vpop.f32.mrf.mxu0
        %v1993 = vadd.f32 %v1846, %v1992
        %v1994 = vpop.f32.mrf.mxu0
        %v1995 = vadd.f32 %v1848, %v1994
        %1996 = vmatprep.mubr.f32.mxu0 0.0
        %v1997 = vand.u32 %v531, 4294901760
        %1998 = vmatmul.mubr.f32.gmra.mxu0 %v1997
        %v1999 = vpop.f32.mrf.mxu0
        %v2000 = vadd.f32 %v1855, %v1999
        %v2001 = vpop.f32.mrf.mxu0
        %v2002 = vadd.f32 %v1857, %v2001
        %2003 = vmatprep.mubr.f32.mxu0 0.0
        %v2004 = vand.u32 %v534, 4294901760
        %2005 = vmatmul.mubr.f32.gmra.mxu0 %v2004
        %v2006 = vpop.f32.mrf.mxu0
        %v2007 = vadd.f32 %v1864, %v2006
        %v2008 = vpop.f32.mrf.mxu0
        %v2009 = vadd.f32 %v1866, %v2008
        %2010 = vmatprep.mubr.f32.mxu0 0.0
        %v2011 = vand.u32 %v537, 4294901760
        %2012 = vmatmul.mubr.f32.gmra.mxu0 %v2011
        %v2013 = vpop.f32.mrf.mxu0
        %v2014 = vadd.f32 %v1873, %v2013
        %v2015 = vpop.f32.mrf.mxu0
        %v2016 = vadd.f32 %v1875, %v2015
        %2017 = vdwg.mxu0
        %2018 = vmatprep.subr.mxu0 0.0
        %2019 = vmatpush1.msra.mxu0 0.0
        %2020 = vmatprep.subr.mxu0 0.0
        %2021 = vmatpush1.msra.mxu0 0.0
        %2022 = vmatprep.subr.mxu0 0.0
        %2023 = vmatpush1.msra.mxu0 0.0
        %2024 = vmatprep.subr.mxu0 0.0
        %2025 = vmatpush1.msra.mxu0 0.0
        %2026 = vmatprep.subr.mxu0 0.0
        %2027 = vmatpush1.msra.mxu0 0.0
        %2028 = vmatprep.subr.mxu0 0.0
        %2029 = vmatpush1.msra.mxu0 0.0
        %2030 = vmatprep.subr.mxu0 0.0
        %2031 = vmatpush1.msra.mxu0 0.0
        %2032 = vmatprep.subr.mxu0 0.0
        %2033 = vmatpush1.msra.mxu0 0.0
        %v2034 = vand.u32 %v501, 4294901760
        %2035 = vmatprep.subr.mxu0 %v2034
        %v2036 = vand.u32 %v500, 4294901760
        %2037 = vmatpush1.msra.mxu0 %v2036
        %v2038 = vand.u32 %v497, 4294901760
        %2039 = vmatprep.subr.mxu0 %v2038
        %v2040 = vand.u32 %v496, 4294901760
        %2041 = vmatpush1.msra.mxu0 %v2040
        %v2042 = vand.u32 %v493, 4294901760
        %2043 = vmatprep.subr.mxu0 %v2042
        %v2044 = vand.u32 %v492, 4294901760
        %2045 = vmatpush1.msra.mxu0 %v2044
        %v2046 = vand.u32 %v489, 4294901760
        %2047 = vmatprep.subr.mxu0 %v2046
        %v2048 = vand.u32 %v488, 4294901760
        %2049 = vmatpush1.msra.mxu0 %v2048
        %v2050 = vand.u32 %v485, 4294901760
        %2051 = vmatprep.subr.mxu0 %v2050
        %v2052 = vand.u32 %v484, 4294901760
        %2053 = vmatpush1.msra.mxu0 %v2052
        %v2054 = vand.u32 %v481, 4294901760
        %2055 = vmatprep.subr.mxu0 %v2054
        %v2056 = vand.u32 %v480, 4294901760
        %2057 = vmatpush1.msra.mxu0 %v2056
        %v2058 = vand.u32 %v477, 4294901760
        %2059 = vmatprep.subr.mxu0 %v2058
        %v2060 = vand.u32 %v476, 4294901760
        %2061 = vmatpush1.msra.mxu0 %v2060
        %v2062 = vand.u32 %v473, 4294901760
        %2063 = vmatprep.subr.mxu0 %v2062
        %v2064 = vand.u32 %v472, 4294901760
        %2065 = vmatpush1.msra.mxu0 %v2064
        %2066 = vmatprep.subr.mxu0 0.0
        %2067 = vmatpush2.msra.mxu0 0.0
        %2068 = vmatprep.subr.mxu0 0.0
        %2069 = vmatpush2.msra.mxu0 0.0
        %2070 = vmatprep.subr.mxu0 0.0
        %2071 = vmatpush2.msra.mxu0 0.0
        %2072 = vmatprep.subr.mxu0 0.0
        %2073 = vmatpush2.msra.mxu0 0.0
        %2074 = vmatprep.subr.mxu0 0.0
        %2075 = vmatpush2.msra.mxu0 0.0
        %2076 = vmatprep.subr.mxu0 0.0
        %2077 = vmatpush2.msra.mxu0 0.0
        %2078 = vmatprep.subr.mxu0 0.0
        %2079 = vmatpush2.msra.mxu0 0.0
        %2080 = vmatprep.subr.mxu0 0.0
        %2081 = vmatpush2.msra.mxu0 0.0
        %2082 = vmatprep.subr.mxu0 0.0
        %2083 = vmatpush2.msra.mxu0 0.0
        %2084 = vmatprep.subr.mxu0 0.0
        %2085 = vmatpush2.msra.mxu0 0.0
        %2086 = vmatprep.subr.mxu0 0.0
        %2087 = vmatpush2.msra.mxu0 0.0
        %2088 = vmatprep.subr.mxu0 0.0
        %2089 = vmatpush2.msra.mxu0 0.0
        %2090 = vmatprep.subr.mxu0 0.0
        %2091 = vmatpush2.msra.mxu0 0.0
        %2092 = vmatprep.subr.mxu0 0.0
        %2093 = vmatpush2.msra.mxu0 0.0
        %2094 = vmatprep.subr.mxu0 0.0
        %2095 = vmatpush2.msra.mxu0 0.0
        %2096 = vmatprep.subr.mxu0 0.0
        %2097 = vmatpush2.msra.mxu0 0.0
        %2098 = vmatprep.mubr.f32.mxu0 0.0
        %v2099 = vand.u32 %v528, 4294901760
        %2100 = vmatmul.mubr.f32.gmra.mxu0 %v2099
        %v2101 = vpop.f32.mrf.mxu0
        %v2102 = vadd.f32 %v1993, %v2101
        %v2103 = vpop.f32.mrf.mxu0
        %v2104 = vadd.f32 %v1995, %v2103
        %2105 = vmatprep.mubr.f32.mxu0 0.0
        %v2106 = vand.u32 %v531, 4294901760
        %2107 = vmatmul.mubr.f32.gmra.mxu0 %v2106
        %v2108 = vpop.f32.mrf.mxu0
        %v2109 = vadd.f32 %v2000, %v2108
        %v2110 = vpop.f32.mrf.mxu0
        %v2111 = vadd.f32 %v2002, %v2110
        %2112 = vmatprep.mubr.f32.mxu0 0.0
        %v2113 = vand.u32 %v534, 4294901760
        %2114 = vmatmul.mubr.f32.gmra.mxu0 %v2113
        %v2115 = vpop.f32.mrf.mxu0
        %v2116 = vadd.f32 %v2007, %v2115
        %v2117 = vpop.f32.mrf.mxu0
        %v2118 = vadd.f32 %v2009, %v2117
        %2119 = vmatprep.mubr.f32.mxu0 0.0
        %v2120 = vand.u32 %v537, 4294901760
        %2121 = vmatmul.mubr.f32.gmra.mxu0 %v2120
        %v2122 = vpop.f32.mrf.mxu0
        %v2123 = vadd.f32 %v2014, %v2122
        %v2124 = vpop.f32.mrf.mxu0
        %v2125 = vadd.f32 %v2016, %v2124
        %2126 = vdwg.mxu0
        %v2127 = vmax.f32 %v1308, 0.0
        %v2128 = vmax.f32 %v1310, 0.0
        %v2129 = vmax.f32 %v2102, 0.0
        %v2130 = vmax.f32 %v2104, 0.0
        %v2131 = vmax.f32 %v1315, 0.0
        %v2132 = vmax.f32 %v1317, 0.0
        %v2133 = vmax.f32 %v2109, 0.0
        %v2134 = vmax.f32 %v2111, 0.0
        %v2135 = vmax.f32 %v1322, 0.0
        %v2136 = vmax.f32 %v1324, 0.0
        %v2137 = vmax.f32 %v2116, 0.0
        %v2138 = vmax.f32 %v2118, 0.0
        %v2139 = vmax.f32 %v1329, 0.0
        %v2140 = vmax.f32 %v1331, 0.0
        %v2141 = vmax.f32 %v2123, 0.0
        %v2142 = vmax.f32 %v2125, 0.0
        %2147 = vrot.lane.b32.xlu0 %v2130, 40
        %v2148 = vpop.permute.xlu0 %2147
        %2149 = vrot.lane.b32.xlu0 %v2134, 40
        %v2150 = vpop.permute.xlu0 %2149
        %2151 = vrot.lane.b32.xlu0 %v2138, 40
        %v2152 = vpop.permute.xlu0 %2151
        %2153 = vrot.lane.b32.xlu0 %v2142, 40
        %v2154 = vpop.permute.xlu0 %2153
        %vm2159 = vcmask 326656
        %v2160 = vsel %vm2159, 0.0, %v2148
        %v2161 = vsel %vm2159, 0.0, %v2150
        %v2162 = vsel %vm2159, 0.0, %v2152
        %v2163 = vsel %vm2159, 0.0, %v2154
        %v2164 = vld [vmem:[#allocation6] sm:$0x1]
        %v2166 = vlaneseq
        %v2167 = vshrl.u32 %v2166, 7
        %v2168 = vsub.s32 0, %v2167
        %v2169 = vrot.slane %v2164, %v2168
        %v2171 = vmul.f32 %v2160, %v2169
        %v2172 = vmul.f32 %v2161, %v2169
        %v2173 = vmul.f32 %v2162, %v2169
        %v2174 = vmul.f32 %v2163, %v2169
        %2179 = vrot.lane.b32.xlu0 %v2129, 32
        %v2180 = vpop.permute.xlu0 %2179
        %2181 = vrot.lane.b32.xlu0 %v2133, 32
        %v2182 = vpop.permute.xlu0 %2181
        %2183 = vrot.lane.b32.xlu0 %v2137, 32
        %v2184 = vpop.permute.xlu0 %2183
        %2185 = vrot.lane.b32.xlu0 %v2141, 32
        %v2186 = vpop.permute.xlu0 %2185
        %vm2191 = vcmask 261120
        %v2192 = vsel %vm2191, 0.0, %v2180
        %v2193 = vsel %vm2191, 0.0, %v2182
        %v2194 = vsel %vm2191, 0.0, %v2184
        %v2195 = vsel %vm2191, 0.0, %v2186
        %s2196 = scalar_lea.vmem [#allocation6], 1
        %v2197 = vld [vmem:[%s2196] sm:$0x1]
        %v2199 = vlaneseq
        %v2200 = vshrl.u32 %v2199, 7
        %v2201 = vsub.s32 0, %v2200
        %v2202 = vrot.slane %v2197, %v2201
        %v2204 = vmul.f32 %v2192, %v2202
        %v2205 = vmul.f32 %v2193, %v2202
        %v2206 = vmul.f32 %v2194, %v2202
        %v2207 = vmul.f32 %v2195, %v2202
        %2208 = vrot.lane.b32.xlu0 %v2130, 32
        %v2209 = vpop.permute.xlu0 %2208
        %2210 = vrot.lane.b32.xlu0 %v2134, 32
        %v2211 = vpop.permute.xlu0 %2210
        %2212 = vrot.lane.b32.xlu0 %v2138, 32
        %v2213 = vpop.permute.xlu0 %2212
        %2214 = vrot.lane.b32.xlu0 %v2142, 32
        %v2215 = vpop.permute.xlu0 %2214
        %v2220 = vsel %vm2191, 0.0, %v2209
        %v2221 = vsel %vm2191, 0.0, %v2211
        %v2222 = vsel %vm2191, 0.0, %v2213
        %v2223 = vsel %vm2191, 0.0, %v2215
        %s2224 = scalar_lea.vmem [#allocation6], 2
        %v2225 = vld [vmem:[%s2224] sm:$0x1]
        %v2227 = vlaneseq
        %v2228 = vshrl.u32 %v2227, 7
        %v2229 = vsub.s32 0, %v2228
        %v2230 = vrot.slane %v2225, %v2229
        %v2232 = vmul.f32 %v2220, %v2230
        %v2233 = vmul.f32 %v2221, %v2230
        %v2234 = vmul.f32 %v2222, %v2230
        %v2235 = vmul.f32 %v2223, %v2230
        %2236 = vrot.lane.b32.xlu0 %v2129, 24
        %v2237 = vpop.permute.xlu0 %2236
        %2238 = vrot.lane.b32.xlu0 %v2133, 24
        %v2239 = vpop.permute.xlu0 %2238
        %2240 = vrot.lane.b32.xlu0 %v2137, 24
        %v2241 = vpop.permute.xlu0 %2240
        %2242 = vrot.lane.b32.xlu0 %v2141, 24
        %v2243 = vpop.permute.xlu0 %2242
        %vm2248 = vcmask 195584
        %v2249 = vsel %vm2248, 0.0, %v2237
        %v2250 = vsel %vm2248, 0.0, %v2239
        %v2251 = vsel %vm2248, 0.0, %v2241
        %v2252 = vsel %vm2248, 0.0, %v2243
        %s2253 = scalar_lea.vmem [#allocation6], 3
        %v2254 = vld [vmem:[%s2253] sm:$0x1]
        %v2256 = vlaneseq
        %v2257 = vshrl.u32 %v2256, 7
        %v2258 = vsub.s32 0, %v2257
        %v2259 = vrot.slane %v2254, %v2258
        %v2261 = vmul.f32 %v2249, %v2259
        %v2262 = vmul.f32 %v2250, %v2259
        %v2263 = vmul.f32 %v2251, %v2259
        %v2264 = vmul.f32 %v2252, %v2259
        %2269 = vrot.lane.b32.xlu0 %v2128, 8
        %v2270 = vpop.permute.xlu0 %2269
        %2271 = vrot.lane.b32.xlu0 %v2132, 8
        %v2272 = vpop.permute.xlu0 %2271
        %2273 = vrot.lane.b32.xlu0 %v2136, 8
        %v2274 = vpop.permute.xlu0 %2273
        %2275 = vrot.lane.b32.xlu0 %v2140, 8
        %v2276 = vpop.permute.xlu0 %2275
        %vm2281 = vcmask 64512
        %v2282 = vsel %vm2281, 0.0, %v2270
        %v2283 = vsel %vm2281, 0.0, %v2272
        %v2284 = vsel %vm2281, 0.0, %v2274
        %v2285 = vsel %vm2281, 0.0, %v2276
        %s2286 = scalar_lea.vmem [#allocation6], 4
        %v2287 = vld [vmem:[%s2286] sm:$0x1]
        %v2289 = vlaneseq
        %v2290 = vshrl.u32 %v2289, 7
        %v2291 = vsub.s32 0, %v2290
        %v2292 = vrot.slane %v2287, %v2291
        %v2294 = vmul.f32 %v2282, %v2292
        %v2295 = vmul.f32 %v2283, %v2292
        %v2296 = vmul.f32 %v2284, %v2292
        %v2297 = vmul.f32 %v2285, %v2292
        %s2298 = scalar_lea.vmem [#allocation6], 5
        %v2299 = vld [vmem:[%s2298] sm:$0x1]
        %v2301 = vlaneseq
        %v2302 = vshrl.u32 %v2301, 7
        %v2303 = vsub.s32 0, %v2302
        %v2304 = vrot.slane %v2299, %v2303
        %v2306 = vmul.f32 %v2127, %v2304
        %v2307 = vmul.f32 %v2131, %v2304
        %v2308 = vmul.f32 %v2135, %v2304
        %v2309 = vmul.f32 %v2139, %v2304
        %s2310 = scalar_lea.vmem [#allocation6], 6
        %v2311 = vld [vmem:[%s2310] sm:$0x1]
        %v2313 = vlaneseq
        %v2314 = vshrl.u32 %v2313, 7
        %v2315 = vsub.s32 0, %v2314
        %v2316 = vrot.slane %v2311, %v2315
        %v2318 = vmul.f32 %v2128, %v2316
        %v2319 = vmul.f32 %v2132, %v2316
        %v2320 = vmul.f32 %v2136, %v2316
        %v2321 = vmul.f32 %v2140, %v2316
        %2326 = vrot.lane.b32.xlu0 %v2127, 120
        %v2327 = vpop.permute.xlu0 %2326
        %2328 = vrot.lane.b32.xlu0 %v2131, 120
        %v2329 = vpop.permute.xlu0 %2328
        %2330 = vrot.lane.b32.xlu0 %v2135, 120
        %v2331 = vpop.permute.xlu0 %2330
        %2332 = vrot.lane.b32.xlu0 %v2139, 120
        %v2333 = vpop.permute.xlu0 %2332
        %vm2338 = vcmask 982016
        %v2339 = vsel %vm2338, %v2327, 0.0
        %v2340 = vsel %vm2338, %v2329, 0.0
        %v2341 = vsel %vm2338, %v2331, 0.0
        %v2342 = vsel %vm2338, %v2333, 0.0
        %s2343 = scalar_lea.vmem [#allocation6], 7
        %v2344 = vld [vmem:[%s2343] sm:$0x1]
        %v2346 = vlaneseq
        %v2347 = vshrl.u32 %v2346, 7
        %v2348 = vsub.s32 0, %v2347
        %v2349 = vrot.slane %v2344, %v2348
        %v2351 = vmul.f32 %v2339, %v2349
        %v2352 = vmul.f32 %v2340, %v2349
        %v2353 = vmul.f32 %v2341, %v2349
        %v2354 = vmul.f32 %v2342, %v2349
        %2355 = vrot.lane.b32.xlu0 %v2130, 8
        %v2356 = vpop.permute.xlu0 %2355
        %2357 = vrot.lane.b32.xlu0 %v2134, 8
        %v2358 = vpop.permute.xlu0 %2357
        %2359 = vrot.lane.b32.xlu0 %v2138, 8
        %v2360 = vpop.permute.xlu0 %2359
        %2361 = vrot.lane.b32.xlu0 %v2142, 8
        %v2362 = vpop.permute.xlu0 %2361
        %v2367 = vsel %vm2281, 0.0, %v2356
        %v2368 = vsel %vm2281, 0.0, %v2358
        %v2369 = vsel %vm2281, 0.0, %v2360
        %v2370 = vsel %vm2281, 0.0, %v2362
        %s2371 = scalar_lea.vmem [#allocation6], 8
        %v2372 = vld [vmem:[%s2371] sm:$0x1]
        %v2374 = vlaneseq
        %v2375 = vshrl.u32 %v2374, 7
        %v2376 = vsub.s32 0, %v2375
        %v2377 = vrot.slane %v2372, %v2376
        %v2379 = vmul.f32 %v2367, %v2377
        %v2380 = vmul.f32 %v2368, %v2377
        %v2381 = vmul.f32 %v2369, %v2377
        %v2382 = vmul.f32 %v2370, %v2377
        %s2383 = scalar_lea.vmem [#allocation6], 9
        %v2384 = vld [vmem:[%s2383] sm:$0x1]
        %v2386 = vlaneseq
        %v2387 = vshrl.u32 %v2386, 7
        %v2388 = vsub.s32 0, %v2387
        %v2389 = vrot.slane %v2384, %v2388
        %v2391 = vmul.f32 %v2129, %v2389
        %v2392 = vmul.f32 %v2133, %v2389
        %v2393 = vmul.f32 %v2137, %v2389
        %v2394 = vmul.f32 %v2141, %v2389
        %s2395 = scalar_lea.vmem [#allocation6], 10
        %v2396 = vld [vmem:[%s2395] sm:$0x1]
        %v2398 = vlaneseq
        %v2399 = vshrl.u32 %v2398, 7
        %v2400 = vsub.s32 0, %v2399
        %v2401 = vrot.slane %v2396, %v2400
        %v2403 = vmul.f32 %v2130, %v2401
        %v2404 = vmul.f32 %v2134, %v2401
        %v2405 = vmul.f32 %v2138, %v2401
        %v2406 = vmul.f32 %v2142, %v2401
        %2407 = vrot.lane.b32.xlu0 %v2129, 120
        %v2408 = vpop.permute.xlu0 %2407
        %2409 = vrot.lane.b32.xlu0 %v2133, 120
        %v2410 = vpop.permute.xlu0 %2409
        %2411 = vrot.lane.b32.xlu0 %v2137, 120
        %v2412 = vpop.permute.xlu0 %2411
        %2413 = vrot.lane.b32.xlu0 %v2141, 120
        %v2414 = vpop.permute.xlu0 %2413
        %v2419 = vsel %vm2338, %v2408, 0.0
        %v2420 = vsel %vm2338, %v2410, 0.0
        %v2421 = vsel %vm2338, %v2412, 0.0
        %v2422 = vsel %vm2338, %v2414, 0.0
        %s2423 = scalar_lea.vmem [#allocation6], 11
        %v2424 = vld [vmem:[%s2423] sm:$0x1]
        %v2426 = vlaneseq
        %v2427 = vshrl.u32 %v2426, 7
        %v2428 = vsub.s32 0, %v2427
        %v2429 = vrot.slane %v2424, %v2428
        %v2431 = vmul.f32 %v2419, %v2429
        %v2432 = vmul.f32 %v2420, %v2429
        %v2433 = vmul.f32 %v2421, %v2429
        %v2434 = vmul.f32 %v2422, %v2429
        %2435 = vrot.lane.b32.xlu0 %v2128, 104
        %v2436 = vpop.permute.xlu0 %2435
        %2437 = vrot.lane.b32.xlu0 %v2132, 104
        %v2438 = vpop.permute.xlu0 %2437
        %2439 = vrot.lane.b32.xlu0 %v2136, 104
        %v2440 = vpop.permute.xlu0 %2439
        %2441 = vrot.lane.b32.xlu0 %v2140, 104
        %v2442 = vpop.permute.xlu0 %2441
        %vm2447 = vcmask 850944
        %v2448 = vsel %vm2447, %v2436, 0.0
        %v2449 = vsel %vm2447, %v2438, 0.0
        %v2450 = vsel %vm2447, %v2440, 0.0
        %v2451 = vsel %vm2447, %v2442, 0.0
        %s2452 = scalar_lea.vmem [#allocation6], 12
        %v2453 = vld [vmem:[%s2452] sm:$0x1]
        %v2455 = vlaneseq
        %v2456 = vshrl.u32 %v2455, 7
        %v2457 = vsub.s32 0, %v2456
        %v2458 = vrot.slane %v2453, %v2457
        %v2460 = vmul.f32 %v2448, %v2458
        %v2461 = vmul.f32 %v2449, %v2458
        %v2462 = vmul.f32 %v2450, %v2458
        %v2463 = vmul.f32 %v2451, %v2458
        %2464 = vrot.lane.b32.xlu0 %v2127, 96
        %v2465 = vpop.permute.xlu0 %2464
        %2466 = vrot.lane.b32.xlu0 %v2131, 96
        %v2467 = vpop.permute.xlu0 %2466
        %2468 = vrot.lane.b32.xlu0 %v2135, 96
        %v2469 = vpop.permute.xlu0 %2468
        %2470 = vrot.lane.b32.xlu0 %v2139, 96
        %v2471 = vpop.permute.xlu0 %2470
        %vm2476 = vcmask 785408
        %v2477 = vsel %vm2476, %v2465, 0.0
        %v2478 = vsel %vm2476, %v2467, 0.0
        %v2479 = vsel %vm2476, %v2469, 0.0
        %v2480 = vsel %vm2476, %v2471, 0.0
        %s2481 = scalar_lea.vmem [#allocation6], 13
        %v2482 = vld [vmem:[%s2481] sm:$0x1]
        %v2484 = vlaneseq
        %v2485 = vshrl.u32 %v2484, 7
        %v2486 = vsub.s32 0, %v2485
        %v2487 = vrot.slane %v2482, %v2486
        %v2489 = vmul.f32 %v2477, %v2487
        %v2490 = vmul.f32 %v2478, %v2487
        %v2491 = vmul.f32 %v2479, %v2487
        %v2492 = vmul.f32 %v2480, %v2487
        %2493 = vrot.lane.b32.xlu0 %v2128, 96
        %v2494 = vpop.permute.xlu0 %2493
        %2495 = vrot.lane.b32.xlu0 %v2132, 96
        %v2496 = vpop.permute.xlu0 %2495
        %2497 = vrot.lane.b32.xlu0 %v2136, 96
        %v2498 = vpop.permute.xlu0 %2497
        %2499 = vrot.lane.b32.xlu0 %v2140, 96
        %v2500 = vpop.permute.xlu0 %2499
        %v2505 = vsel %vm2476, %v2494, 0.0
        %v2506 = vsel %vm2476, %v2496, 0.0
        %v2507 = vsel %vm2476, %v2498, 0.0
        %v2508 = vsel %vm2476, %v2500, 0.0
        %s2509 = scalar_lea.vmem [#allocation6], 14
        %v2510 = vld [vmem:[%s2509] sm:$0x1]
        %v2512 = vlaneseq
        %v2513 = vshrl.u32 %v2512, 7
        %v2514 = vsub.s32 0, %v2513
        %v2515 = vrot.slane %v2510, %v2514
        %v2517 = vmul.f32 %v2505, %v2515
        %v2518 = vmul.f32 %v2506, %v2515
        %v2519 = vmul.f32 %v2507, %v2515
        %v2520 = vmul.f32 %v2508, %v2515
        %2521 = vrot.lane.b32.xlu0 %v2127, 88
        %v2522 = vpop.permute.xlu0 %2521
        %2523 = vrot.lane.b32.xlu0 %v2131, 88
        %v2524 = vpop.permute.xlu0 %2523
        %2525 = vrot.lane.b32.xlu0 %v2135, 88
        %v2526 = vpop.permute.xlu0 %2525
        %2527 = vrot.lane.b32.xlu0 %v2139, 88
        %v2528 = vpop.permute.xlu0 %2527
        %vm2533 = vcmask 719872
        %v2534 = vsel %vm2533, %v2522, 0.0
        %v2535 = vsel %vm2533, %v2524, 0.0
        %v2536 = vsel %vm2533, %v2526, 0.0
        %v2537 = vsel %vm2533, %v2528, 0.0
        %s2538 = scalar_lea.vmem [#allocation6], 15
        %v2539 = vld [vmem:[%s2538] sm:$0x1]
        %v2541 = vlaneseq
        %v2542 = vshrl.u32 %v2541, 7
        %v2543 = vsub.s32 0, %v2542
        %v2544 = vrot.slane %v2539, %v2543
        %v2546 = vmul.f32 %v2534, %v2544
        %v2547 = vmul.f32 %v2535, %v2544
        %v2548 = vmul.f32 %v2536, %v2544
        %v2549 = vmul.f32 %v2537, %v2544
        %v2550 = vld [vmem:[%s3] sm:$0xff]
        %v2551 = vld [vmem:[%s3 + $0x8] sm:$0xff]
        %v2552 = vld [vmem:[%s3 + $0x10] sm:$0xff]
        %v2553 = vld [vmem:[%s3 + $0x18] sm:$0xff]
        %v2554 = vld [vmem:[%s3 + $0x20] sm:$0xff]
        %v2555 = vld [vmem:[%s3 + $0x28] sm:$0xff]
        %v2556 = vld [vmem:[%s3 + $0x30] sm:$0xff]
        %v2557 = vld [vmem:[%s3 + $0x38] sm:$0xff]
        %v2558 = vld [vmem:[%s3 + $0x40] sm:$0xff]
        %v2559 = vld [vmem:[%s3 + $0x48] sm:$0xff]
        %v2560 = vld [vmem:[%s3 + $0x50] sm:$0xff]
        %v2561 = vld [vmem:[%s3 + $0x58] sm:$0xff]
        %v2562 = vld [vmem:[%s3 + $0x60] sm:$0xff]
        %v2563 = vld [vmem:[%s3 + $0x68] sm:$0xff]
        %v2564 = vld [vmem:[%s3 + $0x70] sm:$0xff]
        %v2565 = vld [vmem:[%s3 + $0x78] sm:$0xff]
        %v2566 = vld [vmem:[%s4] sm:$0xff]
        %v2567 = vld [vmem:[%s4 + $0x8] sm:$0xff]
        %v2568 = vld [vmem:[%s4 + $0x10] sm:$0xff]
        %v2569 = vld [vmem:[%s4 + $0x18] sm:$0xff]
        %2571 = vset.pattern.permute.xlu0 0
        %2572 = vperm.xlu0 %2571, %v2566
        %v2573 = vpop.permute.xlu0 %2572
        %2576 = vset.pattern.permute.xlu0 0
        %2577 = vperm.xlu0 %2576, %v2567
        %v2578 = vpop.permute.xlu0 %2577
        %2581 = vset.pattern.permute.xlu0 0
        %2582 = vperm.xlu0 %2581, %v2568
        %v2583 = vpop.permute.xlu0 %2582
        %2586 = vset.pattern.permute.xlu0 0
        %2587 = vperm.xlu0 %2586, %v2569
        %v2588 = vpop.permute.xlu0 %2587
        %2590 = vmatprep.subr.mxu0 0.0
        %v2591 = vand.u32 %v2264, 4294901760
        %2592 = vmatpush1.msra.mxu0 %v2591
        %2593 = vmatprep.subr.mxu0 0.0
        %v2594 = vand.u32 %v2263, 4294901760
        %2595 = vmatpush1.msra.mxu0 %v2594
        %2596 = vmatprep.subr.mxu0 0.0
        %v2597 = vand.u32 %v2262, 4294901760
        %2598 = vmatpush1.msra.mxu0 %v2597
        %2599 = vmatprep.subr.mxu0 0.0
        %v2600 = vand.u32 %v2261, 4294901760
        %2601 = vmatpush1.msra.mxu0 %v2600
        %2602 = vmatprep.subr.mxu0 0.0
        %v2603 = vand.u32 %v2235, 4294901760
        %2604 = vmatpush1.msra.mxu0 %v2603
        %2605 = vmatprep.subr.mxu0 0.0
        %v2606 = vand.u32 %v2234, 4294901760
        %2607 = vmatpush1.msra.mxu0 %v2606
        %2608 = vmatprep.subr.mxu0 0.0
        %v2609 = vand.u32 %v2233, 4294901760
        %2610 = vmatpush1.msra.mxu0 %v2609
        %2611 = vmatprep.subr.mxu0 0.0
        %v2612 = vand.u32 %v2232, 4294901760
        %2613 = vmatpush1.msra.mxu0 %v2612
        %2614 = vmatprep.subr.mxu0 0.0
        %v2615 = vand.u32 %v2207, 4294901760
        %2616 = vmatpush1.msra.mxu0 %v2615
        %2617 = vmatprep.subr.mxu0 0.0
        %v2618 = vand.u32 %v2206, 4294901760
        %2619 = vmatpush1.msra.mxu0 %v2618
        %2620 = vmatprep.subr.mxu0 0.0
        %v2621 = vand.u32 %v2205, 4294901760
        %2622 = vmatpush1.msra.mxu0 %v2621
        %2623 = vmatprep.subr.mxu0 0.0
        %v2624 = vand.u32 %v2204, 4294901760
        %2625 = vmatpush1.msra.mxu0 %v2624
        %2626 = vmatprep.subr.mxu0 0.0
        %v2627 = vand.u32 %v2174, 4294901760
        %2628 = vmatpush1.msra.mxu0 %v2627
        %2629 = vmatprep.subr.mxu0 0.0
        %v2630 = vand.u32 %v2173, 4294901760
        %2631 = vmatpush1.msra.mxu0 %v2630
        %2632 = vmatprep.subr.mxu0 0.0
        %v2633 = vand.u32 %v2172, 4294901760
        %2634 = vmatpush1.msra.mxu0 %v2633
        %2635 = vmatprep.subr.mxu0 0.0
        %v2636 = vand.u32 %v2171, 4294901760
        %2637 = vmatpush1.msra.mxu0 %v2636
        %2638 = vmatprep.subr.mxu0 0.0
        %v2639 = vand.u32 %v2354, 4294901760
        %2640 = vmatpush2.msra.mxu0 %v2639
        %2641 = vmatprep.subr.mxu0 0.0
        %v2642 = vand.u32 %v2353, 4294901760
        %2643 = vmatpush2.msra.mxu0 %v2642
        %2644 = vmatprep.subr.mxu0 0.0
        %v2645 = vand.u32 %v2352, 4294901760
        %2646 = vmatpush2.msra.mxu0 %v2645
        %2647 = vmatprep.subr.mxu0 0.0
        %v2648 = vand.u32 %v2351, 4294901760
        %2649 = vmatpush2.msra.mxu0 %v2648
        %2650 = vmatprep.subr.mxu0 0.0
        %v2651 = vand.u32 %v2321, 4294901760
        %2652 = vmatpush2.msra.mxu0 %v2651
        %2653 = vmatprep.subr.mxu0 0.0
        %v2654 = vand.u32 %v2320, 4294901760
        %2655 = vmatpush2.msra.mxu0 %v2654
        %2656 = vmatprep.subr.mxu0 0.0
        %v2657 = vand.u32 %v2319, 4294901760
        %2658 = vmatpush2.msra.mxu0 %v2657
        %2659 = vmatprep.subr.mxu0 0.0
        %v2660 = vand.u32 %v2318, 4294901760
        %2661 = vmatpush2.msra.mxu0 %v2660
        %2662 = vmatprep.subr.mxu0 0.0
        %v2663 = vand.u32 %v2309, 4294901760
        %2664 = vmatpush2.msra.mxu0 %v2663
        %2665 = vmatprep.subr.mxu0 0.0
        %v2666 = vand.u32 %v2308, 4294901760
        %2667 = vmatpush2.msra.mxu0 %v2666
        %2668 = vmatprep.subr.mxu0 0.0
        %v2669 = vand.u32 %v2307, 4294901760
        %2670 = vmatpush2.msra.mxu0 %v2669
        %2671 = vmatprep.subr.mxu0 0.0
        %v2672 = vand.u32 %v2306, 4294901760
        %2673 = vmatpush2.msra.mxu0 %v2672
        %2674 = vmatprep.subr.mxu0 0.0
        %v2675 = vand.u32 %v2297, 4294901760
        %2676 = vmatpush2.msra.mxu0 %v2675
        %2677 = vmatprep.subr.mxu0 0.0
        %v2678 = vand.u32 %v2296, 4294901760
        %2679 = vmatpush2.msra.mxu0 %v2678
        %2680 = vmatprep.subr.mxu0 0.0
        %v2681 = vand.u32 %v2295, 4294901760
        %2682 = vmatpush2.msra.mxu0 %v2681
        %2683 = vmatprep.subr.mxu0 0.0
        %v2684 = vand.u32 %v2294, 4294901760
        %2685 = vmatpush2.msra.mxu0 %v2684
        %v2686 = vand.u32 %v2551, 4294901760
        %v2687 = vsub.f32 %v2551, %v2686
        %v2688 = vand.u32 %v2687, 4294901760
        %v2689 = vsub.f32 %v2687, %v2688
        %v2690 = vand.u32 %v2689, 4294901760
        %2691 = vmatprep.mubr.f32.mxu0 %v2690
        %v2692 = vand.u32 %v2550, 4294901760
        %v2693 = vsub.f32 %v2550, %v2692
        %v2694 = vand.u32 %v2693, 4294901760
        %v2695 = vsub.f32 %v2693, %v2694
        %v2696 = vand.u32 %v2695, 4294901760
        %2697 = vmatmul.mubr.f32.gmra.mxu0 %v2696
        %v2698 = vpop.f32.mrf.mxu0
        %v2699 = vadd.f32 %v2573, %v2698
        %v2700 = vpop.f32.mrf.mxu0
        %v2701 = vand.u32 %v2555, 4294901760
        %v2702 = vsub.f32 %v2555, %v2701
        %v2703 = vand.u32 %v2702, 4294901760
        %v2704 = vsub.f32 %v2702, %v2703
        %v2705 = vand.u32 %v2704, 4294901760
        %2706 = vmatprep.mubr.f32.mxu0 %v2705
        %v2707 = vand.u32 %v2554, 4294901760
        %v2708 = vsub.f32 %v2554, %v2707
        %v2709 = vand.u32 %v2708, 4294901760
        %v2710 = vsub.f32 %v2708, %v2709
        %v2711 = vand.u32 %v2710, 4294901760
        %2712 = vmatmul.mubr.f32.gmra.mxu0 %v2711
        %v2713 = vpop.f32.mrf.mxu0
        %v2714 = vadd.f32 %v2578, %v2713
        %v2715 = vpop.f32.mrf.mxu0
        %v2716 = vand.u32 %v2559, 4294901760
        %v2717 = vsub.f32 %v2559, %v2716
        %v2718 = vand.u32 %v2717, 4294901760
        %v2719 = vsub.f32 %v2717, %v2718
        %v2720 = vand.u32 %v2719, 4294901760
        %2721 = vmatprep.mubr.f32.mxu0 %v2720
        %v2722 = vand.u32 %v2558, 4294901760
        %v2723 = vsub.f32 %v2558, %v2722
        %v2724 = vand.u32 %v2723, 4294901760
        %v2725 = vsub.f32 %v2723, %v2724
        %v2726 = vand.u32 %v2725, 4294901760
        %2727 = vmatmul.mubr.f32.gmra.mxu0 %v2726
        %v2728 = vpop.f32.mrf.mxu0
        %v2729 = vadd.f32 %v2583, %v2728
        %v2730 = vpop.f32.mrf.mxu0
        %v2731 = vand.u32 %v2563, 4294901760
        %v2732 = vsub.f32 %v2563, %v2731
        %v2733 = vand.u32 %v2732, 4294901760
        %v2734 = vsub.f32 %v2732, %v2733
        %v2735 = vand.u32 %v2734, 4294901760
        %2736 = vmatprep.mubr.f32.mxu0 %v2735
        %v2737 = vand.u32 %v2562, 4294901760
        %v2738 = vsub.f32 %v2562, %v2737
        %v2739 = vand.u32 %v2738, 4294901760
        %v2740 = vsub.f32 %v2738, %v2739
        %v2741 = vand.u32 %v2740, 4294901760
        %2742 = vmatmul.mubr.f32.gmra.mxu0 %v2741
        %v2743 = vpop.f32.mrf.mxu0
        %v2744 = vadd.f32 %v2588, %v2743
        %v2745 = vpop.f32.mrf.mxu0
        %2746 = vdwg.mxu0
        %2747 = vmatprep.subr.mxu0 0.0
        %v2748 = vand.u32 %v2264, 4294901760
        %v2749 = vsub.f32 %v2264, %v2748
        %v2750 = vand.u32 %v2749, 4294901760
        %v2751 = vsub.f32 %v2749, %v2750
        %v2752 = vand.u32 %v2751, 4294901760
        %2753 = vmatpush1.msra.mxu0 %v2752
        %2754 = vmatprep.subr.mxu0 0.0
        %v2755 = vand.u32 %v2263, 4294901760
        %v2756 = vsub.f32 %v2263, %v2755
        %v2757 = vand.u32 %v2756, 4294901760
        %v2758 = vsub.f32 %v2756, %v2757
        %v2759 = vand.u32 %v2758, 4294901760
        %2760 = vmatpush1.msra.mxu0 %v2759
        %2761 = vmatprep.subr.mxu0 0.0
        %v2762 = vand.u32 %v2262, 4294901760
        %v2763 = vsub.f32 %v2262, %v2762
        %v2764 = vand.u32 %v2763, 4294901760
        %v2765 = vsub.f32 %v2763, %v2764
        %v2766 = vand.u32 %v2765, 4294901760
        %2767 = vmatpush1.msra.mxu0 %v2766
        %2768 = vmatprep.subr.mxu0 0.0
        %v2769 = vand.u32 %v2261, 4294901760
        %v2770 = vsub.f32 %v2261, %v2769
        %v2771 = vand.u32 %v2770, 4294901760
        %v2772 = vsub.f32 %v2770, %v2771
        %v2773 = vand.u32 %v2772, 4294901760
        %2774 = vmatpush1.msra.mxu0 %v2773
        %2775 = vmatprep.subr.mxu0 0.0
        %v2776 = vand.u32 %v2235, 4294901760
        %v2777 = vsub.f32 %v2235, %v2776
        %v2778 = vand.u32 %v2777, 4294901760
        %v2779 = vsub.f32 %v2777, %v2778
        %v2780 = vand.u32 %v2779, 4294901760
        %2781 = vmatpush1.msra.mxu0 %v2780
        %2782 = vmatprep.subr.mxu0 0.0
        %v2783 = vand.u32 %v2234, 4294901760
        %v2784 = vsub.f32 %v2234, %v2783
        %v2785 = vand.u32 %v2784, 4294901760
        %v2786 = vsub.f32 %v2784, %v2785
        %v2787 = vand.u32 %v2786, 4294901760
        %2788 = vmatpush1.msra.mxu0 %v2787
        %2789 = vmatprep.subr.mxu0 0.0
        %v2790 = vand.u32 %v2233, 4294901760
        %v2791 = vsub.f32 %v2233, %v2790
        %v2792 = vand.u32 %v2791, 4294901760
        %v2793 = vsub.f32 %v2791, %v2792
        %v2794 = vand.u32 %v2793, 4294901760
        %2795 = vmatpush1.msra.mxu0 %v2794
        %2796 = vmatprep.subr.mxu0 0.0
        %v2797 = vand.u32 %v2232, 4294901760
        %v2798 = vsub.f32 %v2232, %v2797
        %v2799 = vand.u32 %v2798, 4294901760
        %v2800 = vsub.f32 %v2798, %v2799
        %v2801 = vand.u32 %v2800, 4294901760
        %2802 = vmatpush1.msra.mxu0 %v2801
        %2803 = vmatprep.subr.mxu0 0.0
        %v2804 = vand.u32 %v2207, 4294901760
        %v2805 = vsub.f32 %v2207, %v2804
        %v2806 = vand.u32 %v2805, 4294901760
        %v2807 = vsub.f32 %v2805, %v2806
        %v2808 = vand.u32 %v2807, 4294901760
        %2809 = vmatpush1.msra.mxu0 %v2808
        %2810 = vmatprep.subr.mxu0 0.0
        %v2811 = vand.u32 %v2206, 4294901760
        %v2812 = vsub.f32 %v2206, %v2811
        %v2813 = vand.u32 %v2812, 4294901760
        %v2814 = vsub.f32 %v2812, %v2813
        %v2815 = vand.u32 %v2814, 4294901760
        %2816 = vmatpush1.msra.mxu0 %v2815
        %2817 = vmatprep.subr.mxu0 0.0
        %v2818 = vand.u32 %v2205, 4294901760
        %v2819 = vsub.f32 %v2205, %v2818
        %v2820 = vand.u32 %v2819, 4294901760
        %v2821 = vsub.f32 %v2819, %v2820
        %v2822 = vand.u32 %v2821, 4294901760
        %2823 = vmatpush1.msra.mxu0 %v2822
        %2824 = vmatprep.subr.mxu0 0.0
        %v2825 = vand.u32 %v2204, 4294901760
        %v2826 = vsub.f32 %v2204, %v2825
        %v2827 = vand.u32 %v2826, 4294901760
        %v2828 = vsub.f32 %v2826, %v2827
        %v2829 = vand.u32 %v2828, 4294901760
        %2830 = vmatpush1.msra.mxu0 %v2829
        %2831 = vmatprep.subr.mxu0 0.0
        %v2832 = vand.u32 %v2174, 4294901760
        %v2833 = vsub.f32 %v2174, %v2832
        %v2834 = vand.u32 %v2833, 4294901760
        %v2835 = vsub.f32 %v2833, %v2834
        %v2836 = vand.u32 %v2835, 4294901760
        %2837 = vmatpush1.msra.mxu0 %v2836
        %2838 = vmatprep.subr.mxu0 0.0
        %v2839 = vand.u32 %v2173, 4294901760
        %v2840 = vsub.f32 %v2173, %v2839
        %v2841 = vand.u32 %v2840, 4294901760
        %v2842 = vsub.f32 %v2840, %v2841
        %v2843 = vand.u32 %v2842, 4294901760
        %2844 = vmatpush1.msra.mxu0 %v2843
        %2845 = vmatprep.subr.mxu0 0.0
        %v2846 = vand.u32 %v2172, 4294901760
        %v2847 = vsub.f32 %v2172, %v2846
        %v2848 = vand.u32 %v2847, 4294901760
        %v2849 = vsub.f32 %v2847, %v2848
        %v2850 = vand.u32 %v2849, 4294901760
        %2851 = vmatpush1.msra.mxu0 %v2850
        %2852 = vmatprep.subr.mxu0 0.0
        %v2853 = vand.u32 %v2171, 4294901760
        %v2854 = vsub.f32 %v2171, %v2853
        %v2855 = vand.u32 %v2854, 4294901760
        %v2856 = vsub.f32 %v2854, %v2855
        %v2857 = vand.u32 %v2856, 4294901760
        %2858 = vmatpush1.msra.mxu0 %v2857
        %2859 = vmatprep.subr.mxu0 0.0
        %v2860 = vand.u32 %v2354, 4294901760
        %v2861 = vsub.f32 %v2354, %v2860
        %v2862 = vand.u32 %v2861, 4294901760
        %v2863 = vsub.f32 %v2861, %v2862
        %v2864 = vand.u32 %v2863, 4294901760
        %2865 = vmatpush2.msra.mxu0 %v2864
        %2866 = vmatprep.subr.mxu0 0.0
        %v2867 = vand.u32 %v2353, 4294901760
        %v2868 = vsub.f32 %v2353, %v2867
        %v2869 = vand.u32 %v2868, 4294901760
        %v2870 = vsub.f32 %v2868, %v2869
        %v2871 = vand.u32 %v2870, 4294901760
        %2872 = vmatpush2.msra.mxu0 %v2871
        %2873 = vmatprep.subr.mxu0 0.0
        %v2874 = vand.u32 %v2352, 4294901760
        %v2875 = vsub.f32 %v2352, %v2874
        %v2876 = vand.u32 %v2875, 4294901760
        %v2877 = vsub.f32 %v2875, %v2876
        %v2878 = vand.u32 %v2877, 4294901760
        %2879 = vmatpush2.msra.mxu0 %v2878
        %2880 = vmatprep.subr.mxu0 0.0
        %v2881 = vand.u32 %v2351, 4294901760
        %v2882 = vsub.f32 %v2351, %v2881
        %v2883 = vand.u32 %v2882, 4294901760
        %v2884 = vsub.f32 %v2882, %v2883
        %v2885 = vand.u32 %v2884, 4294901760
        %2886 = vmatpush2.msra.mxu0 %v2885
        %2887 = vmatprep.subr.mxu0 0.0
        %v2888 = vand.u32 %v2321, 4294901760
        %v2889 = vsub.f32 %v2321, %v2888
        %v2890 = vand.u32 %v2889, 4294901760
        %v2891 = vsub.f32 %v2889, %v2890
        %v2892 = vand.u32 %v2891, 4294901760
        %2893 = vmatpush2.msra.mxu0 %v2892
        %2894 = vmatprep.subr.mxu0 0.0
        %v2895 = vand.u32 %v2320, 4294901760
        %v2896 = vsub.f32 %v2320, %v2895
        %v2897 = vand.u32 %v2896, 4294901760
        %v2898 = vsub.f32 %v2896, %v2897
        %v2899 = vand.u32 %v2898, 4294901760
        %2900 = vmatpush2.msra.mxu0 %v2899
        %2901 = vmatprep.subr.mxu0 0.0
        %v2902 = vand.u32 %v2319, 4294901760
        %v2903 = vsub.f32 %v2319, %v2902
        %v2904 = vand.u32 %v2903, 4294901760
        %v2905 = vsub.f32 %v2903, %v2904
        %v2906 = vand.u32 %v2905, 4294901760
        %2907 = vmatpush2.msra.mxu0 %v2906
        %2908 = vmatprep.subr.mxu0 0.0
        %v2909 = vand.u32 %v2318, 4294901760
        %v2910 = vsub.f32 %v2318, %v2909
        %v2911 = vand.u32 %v2910, 4294901760
        %v2912 = vsub.f32 %v2910, %v2911
        %v2913 = vand.u32 %v2912, 4294901760
        %2914 = vmatpush2.msra.mxu0 %v2913
        %2915 = vmatprep.subr.mxu0 0.0
        %v2916 = vand.u32 %v2309, 4294901760
        %v2917 = vsub.f32 %v2309, %v2916
        %v2918 = vand.u32 %v2917, 4294901760
        %v2919 = vsub.f32 %v2917, %v2918
        %v2920 = vand.u32 %v2919, 4294901760
        %2921 = vmatpush2.msra.mxu0 %v2920
        %2922 = vmatprep.subr.mxu0 0.0
        %v2923 = vand.u32 %v2308, 4294901760
        %v2924 = vsub.f32 %v2308, %v2923
        %v2925 = vand.u32 %v2924, 4294901760
        %v2926 = vsub.f32 %v2924, %v2925
        %v2927 = vand.u32 %v2926, 4294901760
        %2928 = vmatpush2.msra.mxu0 %v2927
        %2929 = vmatprep.subr.mxu0 0.0
        %v2930 = vand.u32 %v2307, 4294901760
        %v2931 = vsub.f32 %v2307, %v2930
        %v2932 = vand.u32 %v2931, 4294901760
        %v2933 = vsub.f32 %v2931, %v2932
        %v2934 = vand.u32 %v2933, 4294901760
        %2935 = vmatpush2.msra.mxu0 %v2934
        %2936 = vmatprep.subr.mxu0 0.0
        %v2937 = vand.u32 %v2306, 4294901760
        %v2938 = vsub.f32 %v2306, %v2937
        %v2939 = vand.u32 %v2938, 4294901760
        %v2940 = vsub.f32 %v2938, %v2939
        %v2941 = vand.u32 %v2940, 4294901760
        %2942 = vmatpush2.msra.mxu0 %v2941
        %2943 = vmatprep.subr.mxu0 0.0
        %v2944 = vand.u32 %v2297, 4294901760
        %v2945 = vsub.f32 %v2297, %v2944
        %v2946 = vand.u32 %v2945, 4294901760
        %v2947 = vsub.f32 %v2945, %v2946
        %v2948 = vand.u32 %v2947, 4294901760
        %2949 = vmatpush2.msra.mxu0 %v2948
        %2950 = vmatprep.subr.mxu0 0.0
        %v2951 = vand.u32 %v2296, 4294901760
        %v2952 = vsub.f32 %v2296, %v2951
        %v2953 = vand.u32 %v2952, 4294901760
        %v2954 = vsub.f32 %v2952, %v2953
        %v2955 = vand.u32 %v2954, 4294901760
        %2956 = vmatpush2.msra.mxu0 %v2955
        %2957 = vmatprep.subr.mxu0 0.0
        %v2958 = vand.u32 %v2295, 4294901760
        %v2959 = vsub.f32 %v2295, %v2958
        %v2960 = vand.u32 %v2959, 4294901760
        %v2961 = vsub.f32 %v2959, %v2960
        %v2962 = vand.u32 %v2961, 4294901760
        %2963 = vmatpush2.msra.mxu0 %v2962
        %2964 = vmatprep.subr.mxu0 0.0
        %v2965 = vand.u32 %v2294, 4294901760
        %v2966 = vsub.f32 %v2294, %v2965
        %v2967 = vand.u32 %v2966, 4294901760
        %v2968 = vsub.f32 %v2966, %v2967
        %v2969 = vand.u32 %v2968, 4294901760
        %2970 = vmatpush2.msra.mxu0 %v2969
        %v2971 = vand.u32 %v2551, 4294901760
        %2972 = vmatprep.mubr.f32.mxu0 %v2971
        %v2973 = vand.u32 %v2550, 4294901760
        %2974 = vmatmul.mubr.f32.gmra.mxu0 %v2973
        %v2975 = vpop.f32.mrf.mxu0
        %v2976 = vadd.f32 %v2699, %v2975
        %v2977 = vpop.f32.mrf.mxu0
        %v2978 = vand.u32 %v2555, 4294901760
        %2979 = vmatprep.mubr.f32.mxu0 %v2978
        %v2980 = vand.u32 %v2554, 4294901760
        %2981 = vmatmul.mubr.f32.gmra.mxu0 %v2980
        %v2982 = vpop.f32.mrf.mxu0
        %v2983 = vadd.f32 %v2714, %v2982
        %v2984 = vpop.f32.mrf.mxu0
        %v2985 = vand.u32 %v2559, 4294901760
        %2986 = vmatprep.mubr.f32.mxu0 %v2985
        %v2987 = vand.u32 %v2558, 4294901760
        %2988 = vmatmul.mubr.f32.gmra.mxu0 %v2987
        %v2989 = vpop.f32.mrf.mxu0
        %v2990 = vadd.f32 %v2729, %v2989
        %v2991 = vpop.f32.mrf.mxu0
        %v2992 = vand.u32 %v2563, 4294901760
        %2993 = vmatprep.mubr.f32.mxu0 %v2992
        %v2994 = vand.u32 %v2562, 4294901760
        %2995 = vmatmul.mubr.f32.gmra.mxu0 %v2994
        %v2996 = vpop.f32.mrf.mxu0
        %v2997 = vadd.f32 %v2744, %v2996
        %v2998 = vpop.f32.mrf.mxu0
        %2999 = vdwg.mxu0
        %3000 = vmatprep.subr.mxu0 0.0
        %v3001 = vand.u32 %v2264, 4294901760
        %v3002 = vsub.f32 %v2264, %v3001
        %3003 = vmatpush1.msra.mxu0 %v3002
        %3004 = vmatprep.subr.mxu0 0.0
        %v3005 = vand.u32 %v2263, 4294901760
        %v3006 = vsub.f32 %v2263, %v3005
        %3007 = vmatpush1.msra.mxu0 %v3006
        %3008 = vmatprep.subr.mxu0 0.0
        %v3009 = vand.u32 %v2262, 4294901760
        %v3010 = vsub.f32 %v2262, %v3009
        %3011 = vmatpush1.msra.mxu0 %v3010
        %3012 = vmatprep.subr.mxu0 0.0
        %v3013 = vand.u32 %v2261, 4294901760
        %v3014 = vsub.f32 %v2261, %v3013
        %3015 = vmatpush1.msra.mxu0 %v3014
        %3016 = vmatprep.subr.mxu0 0.0
        %v3017 = vand.u32 %v2235, 4294901760
        %v3018 = vsub.f32 %v2235, %v3017
        %3019 = vmatpush1.msra.mxu0 %v3018
        %3020 = vmatprep.subr.mxu0 0.0
        %v3021 = vand.u32 %v2234, 4294901760
        %v3022 = vsub.f32 %v2234, %v3021
        %3023 = vmatpush1.msra.mxu0 %v3022
        %3024 = vmatprep.subr.mxu0 0.0
        %v3025 = vand.u32 %v2233, 4294901760
        %v3026 = vsub.f32 %v2233, %v3025
        %3027 = vmatpush1.msra.mxu0 %v3026
        %3028 = vmatprep.subr.mxu0 0.0
        %v3029 = vand.u32 %v2232, 4294901760
        %v3030 = vsub.f32 %v2232, %v3029
        %3031 = vmatpush1.msra.mxu0 %v3030
        %3032 = vmatprep.subr.mxu0 0.0
        %v3033 = vand.u32 %v2207, 4294901760
        %v3034 = vsub.f32 %v2207, %v3033
        %3035 = vmatpush1.msra.mxu0 %v3034
        %3036 = vmatprep.subr.mxu0 0.0
        %v3037 = vand.u32 %v2206, 4294901760
        %v3038 = vsub.f32 %v2206, %v3037
        %3039 = vmatpush1.msra.mxu0 %v3038
        %3040 = vmatprep.subr.mxu0 0.0
        %v3041 = vand.u32 %v2205, 4294901760
        %v3042 = vsub.f32 %v2205, %v3041
        %3043 = vmatpush1.msra.mxu0 %v3042
        %3044 = vmatprep.subr.mxu0 0.0
        %v3045 = vand.u32 %v2204, 4294901760
        %v3046 = vsub.f32 %v2204, %v3045
        %3047 = vmatpush1.msra.mxu0 %v3046
        %3048 = vmatprep.subr.mxu0 0.0
        %v3049 = vand.u32 %v2174, 4294901760
        %v3050 = vsub.f32 %v2174, %v3049
        %3051 = vmatpush1.msra.mxu0 %v3050
        %3052 = vmatprep.subr.mxu0 0.0
        %v3053 = vand.u32 %v2173, 4294901760
        %v3054 = vsub.f32 %v2173, %v3053
        %3055 = vmatpush1.msra.mxu0 %v3054
        %3056 = vmatprep.subr.mxu0 0.0
        %v3057 = vand.u32 %v2172, 4294901760
        %v3058 = vsub.f32 %v2172, %v3057
        %3059 = vmatpush1.msra.mxu0 %v3058
        %3060 = vmatprep.subr.mxu0 0.0
        %v3061 = vand.u32 %v2171, 4294901760
        %v3062 = vsub.f32 %v2171, %v3061
        %3063 = vmatpush1.msra.mxu0 %v3062
        %3064 = vmatprep.subr.mxu0 0.0
        %v3065 = vand.u32 %v2354, 4294901760
        %v3066 = vsub.f32 %v2354, %v3065
        %3067 = vmatpush2.msra.mxu0 %v3066
        %3068 = vmatprep.subr.mxu0 0.0
        %v3069 = vand.u32 %v2353, 4294901760
        %v3070 = vsub.f32 %v2353, %v3069
        %3071 = vmatpush2.msra.mxu0 %v3070
        %3072 = vmatprep.subr.mxu0 0.0
        %v3073 = vand.u32 %v2352, 4294901760
        %v3074 = vsub.f32 %v2352, %v3073
        %3075 = vmatpush2.msra.mxu0 %v3074
        %3076 = vmatprep.subr.mxu0 0.0
        %v3077 = vand.u32 %v2351, 4294901760
        %v3078 = vsub.f32 %v2351, %v3077
        %3079 = vmatpush2.msra.mxu0 %v3078
        %3080 = vmatprep.subr.mxu0 0.0
        %v3081 = vand.u32 %v2321, 4294901760
        %v3082 = vsub.f32 %v2321, %v3081
        %3083 = vmatpush2.msra.mxu0 %v3082
        %3084 = vmatprep.subr.mxu0 0.0
        %v3085 = vand.u32 %v2320, 4294901760
        %v3086 = vsub.f32 %v2320, %v3085
        %3087 = vmatpush2.msra.mxu0 %v3086
        %3088 = vmatprep.subr.mxu0 0.0
        %v3089 = vand.u32 %v2319, 4294901760
        %v3090 = vsub.f32 %v2319, %v3089
        %3091 = vmatpush2.msra.mxu0 %v3090
        %3092 = vmatprep.subr.mxu0 0.0
        %v3093 = vand.u32 %v2318, 4294901760
        %v3094 = vsub.f32 %v2318, %v3093
        %3095 = vmatpush2.msra.mxu0 %v3094
        %3096 = vmatprep.subr.mxu0 0.0
        %v3097 = vand.u32 %v2309, 4294901760
        %v3098 = vsub.f32 %v2309, %v3097
        %3099 = vmatpush2.msra.mxu0 %v3098
        %3100 = vmatprep.subr.mxu0 0.0
        %v3101 = vand.u32 %v2308, 4294901760
        %v3102 = vsub.f32 %v2308, %v3101
        %3103 = vmatpush2.msra.mxu0 %v3102
        %3104 = vmatprep.subr.mxu0 0.0
        %v3105 = vand.u32 %v2307, 4294901760
        %v3106 = vsub.f32 %v2307, %v3105
        %3107 = vmatpush2.msra.mxu0 %v3106
        %3108 = vmatprep.subr.mxu0 0.0
        %v3109 = vand.u32 %v2306, 4294901760
        %v3110 = vsub.f32 %v2306, %v3109
        %3111 = vmatpush2.msra.mxu0 %v3110
        %3112 = vmatprep.subr.mxu0 0.0
        %v3113 = vand.u32 %v2297, 4294901760
        %v3114 = vsub.f32 %v2297, %v3113
        %3115 = vmatpush2.msra.mxu0 %v3114
        %3116 = vmatprep.subr.mxu0 0.0
        %v3117 = vand.u32 %v2296, 4294901760
        %v3118 = vsub.f32 %v2296, %v3117
        %3119 = vmatpush2.msra.mxu0 %v3118
        %3120 = vmatprep.subr.mxu0 0.0
        %v3121 = vand.u32 %v2295, 4294901760
        %v3122 = vsub.f32 %v2295, %v3121
        %3123 = vmatpush2.msra.mxu0 %v3122
        %3124 = vmatprep.subr.mxu0 0.0
        %v3125 = vand.u32 %v2294, 4294901760
        %v3126 = vsub.f32 %v2294, %v3125
        %3127 = vmatpush2.msra.mxu0 %v3126
        %v3128 = vand.u32 %v2551, 4294901760
        %v3129 = vsub.f32 %v2551, %v3128
        %3130 = vmatprep.mubr.f32.mxu0 %v3129
        %v3131 = vand.u32 %v2550, 4294901760
        %v3132 = vsub.f32 %v2550, %v3131
        %3133 = vmatmul.mubr.f32.gmra.mxu0 %v3132
        %v3134 = vpop.f32.mrf.mxu0
        %v3135 = vadd.f32 %v2976, %v3134
        %v3136 = vpop.f32.mrf.mxu0
        %v3137 = vand.u32 %v2555, 4294901760
        %v3138 = vsub.f32 %v2555, %v3137
        %3139 = vmatprep.mubr.f32.mxu0 %v3138
        %v3140 = vand.u32 %v2554, 4294901760
        %v3141 = vsub.f32 %v2554, %v3140
        %3142 = vmatmul.mubr.f32.gmra.mxu0 %v3141
        %v3143 = vpop.f32.mrf.mxu0
        %v3144 = vadd.f32 %v2983, %v3143
        %v3145 = vpop.f32.mrf.mxu0
        %v3146 = vand.u32 %v2559, 4294901760
        %v3147 = vsub.f32 %v2559, %v3146
        %3148 = vmatprep.mubr.f32.mxu0 %v3147
        %v3149 = vand.u32 %v2558, 4294901760
        %v3150 = vsub.f32 %v2558, %v3149
        %3151 = vmatmul.mubr.f32.gmra.mxu0 %v3150
        %v3152 = vpop.f32.mrf.mxu0
        %v3153 = vadd.f32 %v2990, %v3152
        %v3154 = vpop.f32.mrf.mxu0
        %v3155 = vand.u32 %v2563, 4294901760
        %v3156 = vsub.f32 %v2563, %v3155
        %3157 = vmatprep.mubr.f32.mxu0 %v3156
        %v3158 = vand.u32 %v2562, 4294901760
        %v3159 = vsub.f32 %v2562, %v3158
        %3160 = vmatmul.mubr.f32.gmra.mxu0 %v3159
        %v3161 = vpop.f32.mrf.mxu0
        %v3162 = vadd.f32 %v2997, %v3161
        %v3163 = vpop.f32.mrf.mxu0
        %3164 = vdwg.mxu0
        %3165 = vmatprep.subr.mxu0 0.0
        %v3166 = vand.u32 %v2264, 4294901760
        %3167 = vmatpush1.msra.mxu0 %v3166
        %3168 = vmatprep.subr.mxu0 0.0
        %v3169 = vand.u32 %v2263, 4294901760
        %3170 = vmatpush1.msra.mxu0 %v3169
        %3171 = vmatprep.subr.mxu0 0.0
        %v3172 = vand.u32 %v2262, 4294901760
        %3173 = vmatpush1.msra.mxu0 %v3172
        %3174 = vmatprep.subr.mxu0 0.0
        %v3175 = vand.u32 %v2261, 4294901760
        %3176 = vmatpush1.msra.mxu0 %v3175
        %3177 = vmatprep.subr.mxu0 0.0
        %v3178 = vand.u32 %v2235, 4294901760
        %3179 = vmatpush1.msra.mxu0 %v3178
        %3180 = vmatprep.subr.mxu0 0.0
        %v3181 = vand.u32 %v2234, 4294901760
        %3182 = vmatpush1.msra.mxu0 %v3181
        %3183 = vmatprep.subr.mxu0 0.0
        %v3184 = vand.u32 %v2233, 4294901760
        %3185 = vmatpush1.msra.mxu0 %v3184
        %3186 = vmatprep.subr.mxu0 0.0
        %v3187 = vand.u32 %v2232, 4294901760
        %3188 = vmatpush1.msra.mxu0 %v3187
        %3189 = vmatprep.subr.mxu0 0.0
        %v3190 = vand.u32 %v2207, 4294901760
        %3191 = vmatpush1.msra.mxu0 %v3190
        %3192 = vmatprep.subr.mxu0 0.0
        %v3193 = vand.u32 %v2206, 4294901760
        %3194 = vmatpush1.msra.mxu0 %v3193
        %3195 = vmatprep.subr.mxu0 0.0
        %v3196 = vand.u32 %v2205, 4294901760
        %3197 = vmatpush1.msra.mxu0 %v3196
        %3198 = vmatprep.subr.mxu0 0.0
        %v3199 = vand.u32 %v2204, 4294901760
        %3200 = vmatpush1.msra.mxu0 %v3199
        %3201 = vmatprep.subr.mxu0 0.0
        %v3202 = vand.u32 %v2174, 4294901760
        %3203 = vmatpush1.msra.mxu0 %v3202
        %3204 = vmatprep.subr.mxu0 0.0
        %v3205 = vand.u32 %v2173, 4294901760
        %3206 = vmatpush1.msra.mxu0 %v3205
        %3207 = vmatprep.subr.mxu0 0.0
        %v3208 = vand.u32 %v2172, 4294901760
        %3209 = vmatpush1.msra.mxu0 %v3208
        %3210 = vmatprep.subr.mxu0 0.0
        %v3211 = vand.u32 %v2171, 4294901760
        %3212 = vmatpush1.msra.mxu0 %v3211
        %3213 = vmatprep.subr.mxu0 0.0
        %v3214 = vand.u32 %v2354, 4294901760
        %3215 = vmatpush2.msra.mxu0 %v3214
        %3216 = vmatprep.subr.mxu0 0.0
        %v3217 = vand.u32 %v2353, 4294901760
        %3218 = vmatpush2.msra.mxu0 %v3217
        %3219 = vmatprep.subr.mxu0 0.0
        %v3220 = vand.u32 %v2352, 4294901760
        %3221 = vmatpush2.msra.mxu0 %v3220
        %3222 = vmatprep.subr.mxu0 0.0
        %v3223 = vand.u32 %v2351, 4294901760
        %3224 = vmatpush2.msra.mxu0 %v3223
        %3225 = vmatprep.subr.mxu0 0.0
        %v3226 = vand.u32 %v2321, 4294901760
        %3227 = vmatpush2.msra.mxu0 %v3226
        %3228 = vmatprep.subr.mxu0 0.0
        %v3229 = vand.u32 %v2320, 4294901760
        %3230 = vmatpush2.msra.mxu0 %v3229
        %3231 = vmatprep.subr.mxu0 0.0
        %v3232 = vand.u32 %v2319, 4294901760
        %3233 = vmatpush2.msra.mxu0 %v3232
        %3234 = vmatprep.subr.mxu0 0.0
        %v3235 = vand.u32 %v2318, 4294901760
        %3236 = vmatpush2.msra.mxu0 %v3235
        %3237 = vmatprep.subr.mxu0 0.0
        %v3238 = vand.u32 %v2309, 4294901760
        %3239 = vmatpush2.msra.mxu0 %v3238
        %3240 = vmatprep.subr.mxu0 0.0
        %v3241 = vand.u32 %v2308, 4294901760
        %3242 = vmatpush2.msra.mxu0 %v3241
        %3243 = vmatprep.subr.mxu0 0.0
        %v3244 = vand.u32 %v2307, 4294901760
        %3245 = vmatpush2.msra.mxu0 %v3244
        %3246 = vmatprep.subr.mxu0 0.0
        %v3247 = vand.u32 %v2306, 4294901760
        %3248 = vmatpush2.msra.mxu0 %v3247
        %3249 = vmatprep.subr.mxu0 0.0
        %v3250 = vand.u32 %v2297, 4294901760
        %3251 = vmatpush2.msra.mxu0 %v3250
        %3252 = vmatprep.subr.mxu0 0.0
        %v3253 = vand.u32 %v2296, 4294901760
        %3254 = vmatpush2.msra.mxu0 %v3253
        %3255 = vmatprep.subr.mxu0 0.0
        %v3256 = vand.u32 %v2295, 4294901760
        %3257 = vmatpush2.msra.mxu0 %v3256
        %3258 = vmatprep.subr.mxu0 0.0
        %v3259 = vand.u32 %v2294, 4294901760
        %3260 = vmatpush2.msra.mxu0 %v3259
        %v3261 = vand.u32 %v2551, 4294901760
        %v3262 = vsub.f32 %v2551, %v3261
        %v3263 = vand.u32 %v3262, 4294901760
        %3264 = vmatprep.mubr.f32.mxu0 %v3263
        %v3265 = vand.u32 %v2550, 4294901760
        %v3266 = vsub.f32 %v2550, %v3265
        %v3267 = vand.u32 %v3266, 4294901760
        %3268 = vmatmul.mubr.f32.gmra.mxu0 %v3267
        %v3269 = vpop.f32.mrf.mxu0
        %v3270 = vadd.f32 %v3135, %v3269
        %v3271 = vpop.f32.mrf.mxu0
        %v3272 = vand.u32 %v2555, 4294901760
        %v3273 = vsub.f32 %v2555, %v3272
        %v3274 = vand.u32 %v3273, 4294901760
        %3275 = vmatprep.mubr.f32.mxu0 %v3274
        %v3276 = vand.u32 %v2554, 4294901760
        %v3277 = vsub.f32 %v2554, %v3276
        %v3278 = vand.u32 %v3277, 4294901760
        %3279 = vmatmul.mubr.f32.gmra.mxu0 %v3278
        %v3280 = vpop.f32.mrf.mxu0
        %v3281 = vadd.f32 %v3144, %v3280
        %v3282 = vpop.f32.mrf.mxu0
        %v3283 = vand.u32 %v2559, 4294901760
        %v3284 = vsub.f32 %v2559, %v3283
        %v3285 = vand.u32 %v3284, 4294901760
        %3286 = vmatprep.mubr.f32.mxu0 %v3285
        %v3287 = vand.u32 %v2558, 4294901760
        %v3288 = vsub.f32 %v2558, %v3287
        %v3289 = vand.u32 %v3288, 4294901760
        %3290 = vmatmul.mubr.f32.gmra.mxu0 %v3289
        %v3291 = vpop.f32.mrf.mxu0
        %v3292 = vadd.f32 %v3153, %v3291
        %v3293 = vpop.f32.mrf.mxu0
        %v3294 = vand.u32 %v2563, 4294901760
        %v3295 = vsub.f32 %v2563, %v3294
        %v3296 = vand.u32 %v3295, 4294901760
        %3297 = vmatprep.mubr.f32.mxu0 %v3296
        %v3298 = vand.u32 %v2562, 4294901760
        %v3299 = vsub.f32 %v2562, %v3298
        %v3300 = vand.u32 %v3299, 4294901760
        %3301 = vmatmul.mubr.f32.gmra.mxu0 %v3300
        %v3302 = vpop.f32.mrf.mxu0
        %v3303 = vadd.f32 %v3162, %v3302
        %v3304 = vpop.f32.mrf.mxu0
        %3305 = vdwg.mxu0
        %3306 = vmatprep.subr.mxu0 0.0
        %v3307 = vand.u32 %v2264, 4294901760
        %v3308 = vsub.f32 %v2264, %v3307
        %v3309 = vand.u32 %v3308, 4294901760
        %3310 = vmatpush1.msra.mxu0 %v3309
        %3311 = vmatprep.subr.mxu0 0.0
        %v3312 = vand.u32 %v2263, 4294901760
        %v3313 = vsub.f32 %v2263, %v3312
        %v3314 = vand.u32 %v3313, 4294901760
        %3315 = vmatpush1.msra.mxu0 %v3314
        %3316 = vmatprep.subr.mxu0 0.0
        %v3317 = vand.u32 %v2262, 4294901760
        %v3318 = vsub.f32 %v2262, %v3317
        %v3319 = vand.u32 %v3318, 4294901760
        %3320 = vmatpush1.msra.mxu0 %v3319
        %3321 = vmatprep.subr.mxu0 0.0
        %v3322 = vand.u32 %v2261, 4294901760
        %v3323 = vsub.f32 %v2261, %v3322
        %v3324 = vand.u32 %v3323, 4294901760
        %3325 = vmatpush1.msra.mxu0 %v3324
        %3326 = vmatprep.subr.mxu0 0.0
        %v3327 = vand.u32 %v2235, 4294901760
        %v3328 = vsub.f32 %v2235, %v3327
        %v3329 = vand.u32 %v3328, 4294901760
        %3330 = vmatpush1.msra.mxu0 %v3329
        %3331 = vmatprep.subr.mxu0 0.0
        %v3332 = vand.u32 %v2234, 4294901760
        %v3333 = vsub.f32 %v2234, %v3332
        %v3334 = vand.u32 %v3333, 4294901760
        %3335 = vmatpush1.msra.mxu0 %v3334
        %3336 = vmatprep.subr.mxu0 0.0
        %v3337 = vand.u32 %v2233, 4294901760
        %v3338 = vsub.f32 %v2233, %v3337
        %v3339 = vand.u32 %v3338, 4294901760
        %3340 = vmatpush1.msra.mxu0 %v3339
        %3341 = vmatprep.subr.mxu0 0.0
        %v3342 = vand.u32 %v2232, 4294901760
        %v3343 = vsub.f32 %v2232, %v3342
        %v3344 = vand.u32 %v3343, 4294901760
        %3345 = vmatpush1.msra.mxu0 %v3344
        %3346 = vmatprep.subr.mxu0 0.0
        %v3347 = vand.u32 %v2207, 4294901760
        %v3348 = vsub.f32 %v2207, %v3347
        %v3349 = vand.u32 %v3348, 4294901760
        %3350 = vmatpush1.msra.mxu0 %v3349
        %3351 = vmatprep.subr.mxu0 0.0
        %v3352 = vand.u32 %v2206, 4294901760
        %v3353 = vsub.f32 %v2206, %v3352
        %v3354 = vand.u32 %v3353, 4294901760
        %3355 = vmatpush1.msra.mxu0 %v3354
        %3356 = vmatprep.subr.mxu0 0.0
        %v3357 = vand.u32 %v2205, 4294901760
        %v3358 = vsub.f32 %v2205, %v3357
        %v3359 = vand.u32 %v3358, 4294901760
        %3360 = vmatpush1.msra.mxu0 %v3359
        %3361 = vmatprep.subr.mxu0 0.0
        %v3362 = vand.u32 %v2204, 4294901760
        %v3363 = vsub.f32 %v2204, %v3362
        %v3364 = vand.u32 %v3363, 4294901760
        %3365 = vmatpush1.msra.mxu0 %v3364
        %3366 = vmatprep.subr.mxu0 0.0
        %v3367 = vand.u32 %v2174, 4294901760
        %v3368 = vsub.f32 %v2174, %v3367
        %v3369 = vand.u32 %v3368, 4294901760
        %3370 = vmatpush1.msra.mxu0 %v3369
        %3371 = vmatprep.subr.mxu0 0.0
        %v3372 = vand.u32 %v2173, 4294901760
        %v3373 = vsub.f32 %v2173, %v3372
        %v3374 = vand.u32 %v3373, 4294901760
        %3375 = vmatpush1.msra.mxu0 %v3374
        %3376 = vmatprep.subr.mxu0 0.0
        %v3377 = vand.u32 %v2172, 4294901760
        %v3378 = vsub.f32 %v2172, %v3377
        %v3379 = vand.u32 %v3378, 4294901760
        %3380 = vmatpush1.msra.mxu0 %v3379
        %3381 = vmatprep.subr.mxu0 0.0
        %v3382 = vand.u32 %v2171, 4294901760
        %v3383 = vsub.f32 %v2171, %v3382
        %v3384 = vand.u32 %v3383, 4294901760
        %3385 = vmatpush1.msra.mxu0 %v3384
        %3386 = vmatprep.subr.mxu0 0.0
        %v3387 = vand.u32 %v2354, 4294901760
        %v3388 = vsub.f32 %v2354, %v3387
        %v3389 = vand.u32 %v3388, 4294901760
        %3390 = vmatpush2.msra.mxu0 %v3389
        %3391 = vmatprep.subr.mxu0 0.0
        %v3392 = vand.u32 %v2353, 4294901760
        %v3393 = vsub.f32 %v2353, %v3392
        %v3394 = vand.u32 %v3393, 4294901760
        %3395 = vmatpush2.msra.mxu0 %v3394
        %3396 = vmatprep.subr.mxu0 0.0
        %v3397 = vand.u32 %v2352, 4294901760
        %v3398 = vsub.f32 %v2352, %v3397
        %v3399 = vand.u32 %v3398, 4294901760
        %3400 = vmatpush2.msra.mxu0 %v3399
        %3401 = vmatprep.subr.mxu0 0.0
        %v3402 = vand.u32 %v2351, 4294901760
        %v3403 = vsub.f32 %v2351, %v3402
        %v3404 = vand.u32 %v3403, 4294901760
        %3405 = vmatpush2.msra.mxu0 %v3404
        %3406 = vmatprep.subr.mxu0 0.0
        %v3407 = vand.u32 %v2321, 4294901760
        %v3408 = vsub.f32 %v2321, %v3407
        %v3409 = vand.u32 %v3408, 4294901760
        %3410 = vmatpush2.msra.mxu0 %v3409
        %3411 = vmatprep.subr.mxu0 0.0
        %v3412 = vand.u32 %v2320, 4294901760
        %v3413 = vsub.f32 %v2320, %v3412
        %v3414 = vand.u32 %v3413, 4294901760
        %3415 = vmatpush2.msra.mxu0 %v3414
        %3416 = vmatprep.subr.mxu0 0.0
        %v3417 = vand.u32 %v2319, 4294901760
        %v3418 = vsub.f32 %v2319, %v3417
        %v3419 = vand.u32 %v3418, 4294901760
        %3420 = vmatpush2.msra.mxu0 %v3419
        %3421 = vmatprep.subr.mxu0 0.0
        %v3422 = vand.u32 %v2318, 4294901760
        %v3423 = vsub.f32 %v2318, %v3422
        %v3424 = vand.u32 %v3423, 4294901760
        %3425 = vmatpush2.msra.mxu0 %v3424
        %3426 = vmatprep.subr.mxu0 0.0
        %v3427 = vand.u32 %v2309, 4294901760
        %v3428 = vsub.f32 %v2309, %v3427
        %v3429 = vand.u32 %v3428, 4294901760
        %3430 = vmatpush2.msra.mxu0 %v3429
        %3431 = vmatprep.subr.mxu0 0.0
        %v3432 = vand.u32 %v2308, 4294901760
        %v3433 = vsub.f32 %v2308, %v3432
        %v3434 = vand.u32 %v3433, 4294901760
        %3435 = vmatpush2.msra.mxu0 %v3434
        %3436 = vmatprep.subr.mxu0 0.0
        %v3437 = vand.u32 %v2307, 4294901760
        %v3438 = vsub.f32 %v2307, %v3437
        %v3439 = vand.u32 %v3438, 4294901760
        %3440 = vmatpush2.msra.mxu0 %v3439
        %3441 = vmatprep.subr.mxu0 0.0
        %v3442 = vand.u32 %v2306, 4294901760
        %v3443 = vsub.f32 %v2306, %v3442
        %v3444 = vand.u32 %v3443, 4294901760
        %3445 = vmatpush2.msra.mxu0 %v3444
        %3446 = vmatprep.subr.mxu0 0.0
        %v3447 = vand.u32 %v2297, 4294901760
        %v3448 = vsub.f32 %v2297, %v3447
        %v3449 = vand.u32 %v3448, 4294901760
        %3450 = vmatpush2.msra.mxu0 %v3449
        %3451 = vmatprep.subr.mxu0 0.0
        %v3452 = vand.u32 %v2296, 4294901760
        %v3453 = vsub.f32 %v2296, %v3452
        %v3454 = vand.u32 %v3453, 4294901760
        %3455 = vmatpush2.msra.mxu0 %v3454
        %3456 = vmatprep.subr.mxu0 0.0
        %v3457 = vand.u32 %v2295, 4294901760
        %v3458 = vsub.f32 %v2295, %v3457
        %v3459 = vand.u32 %v3458, 4294901760
        %3460 = vmatpush2.msra.mxu0 %v3459
        %3461 = vmatprep.subr.mxu0 0.0
        %v3462 = vand.u32 %v2294, 4294901760
        %v3463 = vsub.f32 %v2294, %v3462
        %v3464 = vand.u32 %v3463, 4294901760
        %3465 = vmatpush2.msra.mxu0 %v3464
        %v3466 = vand.u32 %v2551, 4294901760
        %3467 = vmatprep.mubr.f32.mxu0 %v3466
        %v3468 = vand.u32 %v2550, 4294901760
        %3469 = vmatmul.mubr.f32.gmra.mxu0 %v3468
        %v3470 = vpop.f32.mrf.mxu0
        %v3471 = vadd.f32 %v3270, %v3470
        %v3472 = vpop.f32.mrf.mxu0
        %v3473 = vand.u32 %v2555, 4294901760
        %3474 = vmatprep.mubr.f32.mxu0 %v3473
        %v3475 = vand.u32 %v2554, 4294901760
        %3476 = vmatmul.mubr.f32.gmra.mxu0 %v3475
        %v3477 = vpop.f32.mrf.mxu0
        %v3478 = vadd.f32 %v3281, %v3477
        %v3479 = vpop.f32.mrf.mxu0
        %v3480 = vand.u32 %v2559, 4294901760
        %3481 = vmatprep.mubr.f32.mxu0 %v3480
        %v3482 = vand.u32 %v2558, 4294901760
        %3483 = vmatmul.mubr.f32.gmra.mxu0 %v3482
        %v3484 = vpop.f32.mrf.mxu0
        %v3485 = vadd.f32 %v3292, %v3484
        %v3486 = vpop.f32.mrf.mxu0
        %v3487 = vand.u32 %v2563, 4294901760
        %3488 = vmatprep.mubr.f32.mxu0 %v3487
        %v3489 = vand.u32 %v2562, 4294901760
        %3490 = vmatmul.mubr.f32.gmra.mxu0 %v3489
        %v3491 = vpop.f32.mrf.mxu0
        %v3492 = vadd.f32 %v3303, %v3491
        %v3493 = vpop.f32.mrf.mxu0
        %3494 = vdwg.mxu0
        %3495 = vmatprep.subr.mxu0 0.0
        %v3496 = vand.u32 %v2264, 4294901760
        %3497 = vmatpush1.msra.mxu0 %v3496
        %3498 = vmatprep.subr.mxu0 0.0
        %v3499 = vand.u32 %v2263, 4294901760
        %3500 = vmatpush1.msra.mxu0 %v3499
        %3501 = vmatprep.subr.mxu0 0.0
        %v3502 = vand.u32 %v2262, 4294901760
        %3503 = vmatpush1.msra.mxu0 %v3502
        %3504 = vmatprep.subr.mxu0 0.0
        %v3505 = vand.u32 %v2261, 4294901760
        %3506 = vmatpush1.msra.mxu0 %v3505
        %3507 = vmatprep.subr.mxu0 0.0
        %v3508 = vand.u32 %v2235, 4294901760
        %3509 = vmatpush1.msra.mxu0 %v3508
        %3510 = vmatprep.subr.mxu0 0.0
        %v3511 = vand.u32 %v2234, 4294901760
        %3512 = vmatpush1.msra.mxu0 %v3511
        %3513 = vmatprep.subr.mxu0 0.0
        %v3514 = vand.u32 %v2233, 4294901760
        %3515 = vmatpush1.msra.mxu0 %v3514
        %3516 = vmatprep.subr.mxu0 0.0
        %v3517 = vand.u32 %v2232, 4294901760
        %3518 = vmatpush1.msra.mxu0 %v3517
        %3519 = vmatprep.subr.mxu0 0.0
        %v3520 = vand.u32 %v2207, 4294901760
        %3521 = vmatpush1.msra.mxu0 %v3520
        %3522 = vmatprep.subr.mxu0 0.0
        %v3523 = vand.u32 %v2206, 4294901760
        %3524 = vmatpush1.msra.mxu0 %v3523
        %3525 = vmatprep.subr.mxu0 0.0
        %v3526 = vand.u32 %v2205, 4294901760
        %3527 = vmatpush1.msra.mxu0 %v3526
        %3528 = vmatprep.subr.mxu0 0.0
        %v3529 = vand.u32 %v2204, 4294901760
        %3530 = vmatpush1.msra.mxu0 %v3529
        %3531 = vmatprep.subr.mxu0 0.0
        %v3532 = vand.u32 %v2174, 4294901760
        %3533 = vmatpush1.msra.mxu0 %v3532
        %3534 = vmatprep.subr.mxu0 0.0
        %v3535 = vand.u32 %v2173, 4294901760
        %3536 = vmatpush1.msra.mxu0 %v3535
        %3537 = vmatprep.subr.mxu0 0.0
        %v3538 = vand.u32 %v2172, 4294901760
        %3539 = vmatpush1.msra.mxu0 %v3538
        %3540 = vmatprep.subr.mxu0 0.0
        %v3541 = vand.u32 %v2171, 4294901760
        %3542 = vmatpush1.msra.mxu0 %v3541
        %3543 = vmatprep.subr.mxu0 0.0
        %v3544 = vand.u32 %v2354, 4294901760
        %3545 = vmatpush2.msra.mxu0 %v3544
        %3546 = vmatprep.subr.mxu0 0.0
        %v3547 = vand.u32 %v2353, 4294901760
        %3548 = vmatpush2.msra.mxu0 %v3547
        %3549 = vmatprep.subr.mxu0 0.0
        %v3550 = vand.u32 %v2352, 4294901760
        %3551 = vmatpush2.msra.mxu0 %v3550
        %3552 = vmatprep.subr.mxu0 0.0
        %v3553 = vand.u32 %v2351, 4294901760
        %3554 = vmatpush2.msra.mxu0 %v3553
        %3555 = vmatprep.subr.mxu0 0.0
        %v3556 = vand.u32 %v2321, 4294901760
        %3557 = vmatpush2.msra.mxu0 %v3556
        %3558 = vmatprep.subr.mxu0 0.0
        %v3559 = vand.u32 %v2320, 4294901760
        %3560 = vmatpush2.msra.mxu0 %v3559
        %3561 = vmatprep.subr.mxu0 0.0
        %v3562 = vand.u32 %v2319, 4294901760
        %3563 = vmatpush2.msra.mxu0 %v3562
        %3564 = vmatprep.subr.mxu0 0.0
        %v3565 = vand.u32 %v2318, 4294901760
        %3566 = vmatpush2.msra.mxu0 %v3565
        %3567 = vmatprep.subr.mxu0 0.0
        %v3568 = vand.u32 %v2309, 4294901760
        %3569 = vmatpush2.msra.mxu0 %v3568
        %3570 = vmatprep.subr.mxu0 0.0
        %v3571 = vand.u32 %v2308, 4294901760
        %3572 = vmatpush2.msra.mxu0 %v3571
        %3573 = vmatprep.subr.mxu0 0.0
        %v3574 = vand.u32 %v2307, 4294901760
        %3575 = vmatpush2.msra.mxu0 %v3574
        %3576 = vmatprep.subr.mxu0 0.0
        %v3577 = vand.u32 %v2306, 4294901760
        %3578 = vmatpush2.msra.mxu0 %v3577
        %3579 = vmatprep.subr.mxu0 0.0
        %v3580 = vand.u32 %v2297, 4294901760
        %3581 = vmatpush2.msra.mxu0 %v3580
        %3582 = vmatprep.subr.mxu0 0.0
        %v3583 = vand.u32 %v2296, 4294901760
        %3584 = vmatpush2.msra.mxu0 %v3583
        %3585 = vmatprep.subr.mxu0 0.0
        %v3586 = vand.u32 %v2295, 4294901760
        %3587 = vmatpush2.msra.mxu0 %v3586
        %3588 = vmatprep.subr.mxu0 0.0
        %v3589 = vand.u32 %v2294, 4294901760
        %3590 = vmatpush2.msra.mxu0 %v3589
        %v3591 = vand.u32 %v2551, 4294901760
        %3592 = vmatprep.mubr.f32.mxu0 %v3591
        %v3593 = vand.u32 %v2550, 4294901760
        %3594 = vmatmul.mubr.f32.gmra.mxu0 %v3593
        %v3595 = vpop.f32.mrf.mxu0
        %v3596 = vadd.f32 %v3471, %v3595
        %v3597 = vpop.f32.mrf.mxu0
        %v3598 = vand.u32 %v2555, 4294901760
        %3599 = vmatprep.mubr.f32.mxu0 %v3598
        %v3600 = vand.u32 %v2554, 4294901760
        %3601 = vmatmul.mubr.f32.gmra.mxu0 %v3600
        %v3602 = vpop.f32.mrf.mxu0
        %v3603 = vadd.f32 %v3478, %v3602
        %v3604 = vpop.f32.mrf.mxu0
        %v3605 = vand.u32 %v2559, 4294901760
        %3606 = vmatprep.mubr.f32.mxu0 %v3605
        %v3607 = vand.u32 %v2558, 4294901760
        %3608 = vmatmul.mubr.f32.gmra.mxu0 %v3607
        %v3609 = vpop.f32.mrf.mxu0
        %v3610 = vadd.f32 %v3485, %v3609
        %v3611 = vpop.f32.mrf.mxu0
        %v3612 = vand.u32 %v2563, 4294901760
        %3613 = vmatprep.mubr.f32.mxu0 %v3612
        %v3614 = vand.u32 %v2562, 4294901760
        %3615 = vmatmul.mubr.f32.gmra.mxu0 %v3614
        %v3616 = vpop.f32.mrf.mxu0
        %v3617 = vadd.f32 %v3492, %v3616
        %v3618 = vpop.f32.mrf.mxu0
        %3619 = vdwg.mxu0
        %3620 = vmatprep.subr.mxu0 0.0
        %v3621 = vand.u32 %v2434, 4294901760
        %3622 = vmatpush1.msra.mxu0 %v3621
        %3623 = vmatprep.subr.mxu0 0.0
        %v3624 = vand.u32 %v2433, 4294901760
        %3625 = vmatpush1.msra.mxu0 %v3624
        %3626 = vmatprep.subr.mxu0 0.0
        %v3627 = vand.u32 %v2432, 4294901760
        %3628 = vmatpush1.msra.mxu0 %v3627
        %3629 = vmatprep.subr.mxu0 0.0
        %v3630 = vand.u32 %v2431, 4294901760
        %3631 = vmatpush1.msra.mxu0 %v3630
        %3632 = vmatprep.subr.mxu0 0.0
        %v3633 = vand.u32 %v2406, 4294901760
        %3634 = vmatpush1.msra.mxu0 %v3633
        %3635 = vmatprep.subr.mxu0 0.0
        %v3636 = vand.u32 %v2405, 4294901760
        %3637 = vmatpush1.msra.mxu0 %v3636
        %3638 = vmatprep.subr.mxu0 0.0
        %v3639 = vand.u32 %v2404, 4294901760
        %3640 = vmatpush1.msra.mxu0 %v3639
        %3641 = vmatprep.subr.mxu0 0.0
        %v3642 = vand.u32 %v2403, 4294901760
        %3643 = vmatpush1.msra.mxu0 %v3642
        %3644 = vmatprep.subr.mxu0 0.0
        %v3645 = vand.u32 %v2394, 4294901760
        %3646 = vmatpush1.msra.mxu0 %v3645
        %3647 = vmatprep.subr.mxu0 0.0
        %v3648 = vand.u32 %v2393, 4294901760
        %3649 = vmatpush1.msra.mxu0 %v3648
        %3650 = vmatprep.subr.mxu0 0.0
        %v3651 = vand.u32 %v2392, 4294901760
        %3652 = vmatpush1.msra.mxu0 %v3651
        %3653 = vmatprep.subr.mxu0 0.0
        %v3654 = vand.u32 %v2391, 4294901760
        %3655 = vmatpush1.msra.mxu0 %v3654
        %3656 = vmatprep.subr.mxu0 0.0
        %v3657 = vand.u32 %v2382, 4294901760
        %3658 = vmatpush1.msra.mxu0 %v3657
        %3659 = vmatprep.subr.mxu0 0.0
        %v3660 = vand.u32 %v2381, 4294901760
        %3661 = vmatpush1.msra.mxu0 %v3660
        %3662 = vmatprep.subr.mxu0 0.0
        %v3663 = vand.u32 %v2380, 4294901760
        %3664 = vmatpush1.msra.mxu0 %v3663
        %3665 = vmatprep.subr.mxu0 0.0
        %v3666 = vand.u32 %v2379, 4294901760
        %3667 = vmatpush1.msra.mxu0 %v3666
        %3668 = vmatprep.subr.mxu0 0.0
        %v3669 = vand.u32 %v2549, 4294901760
        %3670 = vmatpush2.msra.mxu0 %v3669
        %3671 = vmatprep.subr.mxu0 0.0
        %v3672 = vand.u32 %v2548, 4294901760
        %3673 = vmatpush2.msra.mxu0 %v3672
        %3674 = vmatprep.subr.mxu0 0.0
        %v3675 = vand.u32 %v2547, 4294901760
        %3676 = vmatpush2.msra.mxu0 %v3675
        %3677 = vmatprep.subr.mxu0 0.0
        %v3678 = vand.u32 %v2546, 4294901760
        %3679 = vmatpush2.msra.mxu0 %v3678
        %3680 = vmatprep.subr.mxu0 0.0
        %v3681 = vand.u32 %v2520, 4294901760
        %3682 = vmatpush2.msra.mxu0 %v3681
        %3683 = vmatprep.subr.mxu0 0.0
        %v3684 = vand.u32 %v2519, 4294901760
        %3685 = vmatpush2.msra.mxu0 %v3684
        %3686 = vmatprep.subr.mxu0 0.0
        %v3687 = vand.u32 %v2518, 4294901760
        %3688 = vmatpush2.msra.mxu0 %v3687
        %3689 = vmatprep.subr.mxu0 0.0
        %v3690 = vand.u32 %v2517, 4294901760
        %3691 = vmatpush2.msra.mxu0 %v3690
        %3692 = vmatprep.subr.mxu0 0.0
        %v3693 = vand.u32 %v2492, 4294901760
        %3694 = vmatpush2.msra.mxu0 %v3693
        %3695 = vmatprep.subr.mxu0 0.0
        %v3696 = vand.u32 %v2491, 4294901760
        %3697 = vmatpush2.msra.mxu0 %v3696
        %3698 = vmatprep.subr.mxu0 0.0
        %v3699 = vand.u32 %v2490, 4294901760
        %3700 = vmatpush2.msra.mxu0 %v3699
        %3701 = vmatprep.subr.mxu0 0.0
        %v3702 = vand.u32 %v2489, 4294901760
        %3703 = vmatpush2.msra.mxu0 %v3702
        %3704 = vmatprep.subr.mxu0 0.0
        %v3705 = vand.u32 %v2463, 4294901760
        %3706 = vmatpush2.msra.mxu0 %v3705
        %3707 = vmatprep.subr.mxu0 0.0
        %v3708 = vand.u32 %v2462, 4294901760
        %3709 = vmatpush2.msra.mxu0 %v3708
        %3710 = vmatprep.subr.mxu0 0.0
        %v3711 = vand.u32 %v2461, 4294901760
        %3712 = vmatpush2.msra.mxu0 %v3711
        %3713 = vmatprep.subr.mxu0 0.0
        %v3714 = vand.u32 %v2460, 4294901760
        %3715 = vmatpush2.msra.mxu0 %v3714
        %v3716 = vand.u32 %v2553, 4294901760
        %v3717 = vsub.f32 %v2553, %v3716
        %v3718 = vand.u32 %v3717, 4294901760
        %v3719 = vsub.f32 %v3717, %v3718
        %v3720 = vand.u32 %v3719, 4294901760
        %3721 = vmatprep.mubr.f32.mxu0 %v3720
        %v3722 = vand.u32 %v2552, 4294901760
        %v3723 = vsub.f32 %v2552, %v3722
        %v3724 = vand.u32 %v3723, 4294901760
        %v3725 = vsub.f32 %v3723, %v3724
        %v3726 = vand.u32 %v3725, 4294901760
        %3727 = vmatmul.mubr.f32.gmra.mxu0 %v3726
        %v3728 = vpop.f32.mrf.mxu0
        %v3729 = vadd.f32 %v3596, %v3728
        %v3730 = vpop.f32.mrf.mxu0
        %v3731 = vand.u32 %v2557, 4294901760
        %v3732 = vsub.f32 %v2557, %v3731
        %v3733 = vand.u32 %v3732, 4294901760
        %v3734 = vsub.f32 %v3732, %v3733
        %v3735 = vand.u32 %v3734, 4294901760
        %3736 = vmatprep.mubr.f32.mxu0 %v3735
        %v3737 = vand.u32 %v2556, 4294901760
        %v3738 = vsub.f32 %v2556, %v3737
        %v3739 = vand.u32 %v3738, 4294901760
        %v3740 = vsub.f32 %v3738, %v3739
        %v3741 = vand.u32 %v3740, 4294901760
        %3742 = vmatmul.mubr.f32.gmra.mxu0 %v3741
        %v3743 = vpop.f32.mrf.mxu0
        %v3744 = vadd.f32 %v3603, %v3743
        %v3745 = vpop.f32.mrf.mxu0
        %v3746 = vand.u32 %v2561, 4294901760
        %v3747 = vsub.f32 %v2561, %v3746
        %v3748 = vand.u32 %v3747, 4294901760
        %v3749 = vsub.f32 %v3747, %v3748
        %v3750 = vand.u32 %v3749, 4294901760
        %3751 = vmatprep.mubr.f32.mxu0 %v3750
        %v3752 = vand.u32 %v2560, 4294901760
        %v3753 = vsub.f32 %v2560, %v3752
        %v3754 = vand.u32 %v3753, 4294901760
        %v3755 = vsub.f32 %v3753, %v3754
        %v3756 = vand.u32 %v3755, 4294901760
        %3757 = vmatmul.mubr.f32.gmra.mxu0 %v3756
        %v3758 = vpop.f32.mrf.mxu0
        %v3759 = vadd.f32 %v3610, %v3758
        %v3760 = vpop.f32.mrf.mxu0
        %v3761 = vand.u32 %v2565, 4294901760
        %v3762 = vsub.f32 %v2565, %v3761
        %v3763 = vand.u32 %v3762, 4294901760
        %v3764 = vsub.f32 %v3762, %v3763
        %v3765 = vand.u32 %v3764, 4294901760
        %3766 = vmatprep.mubr.f32.mxu0 %v3765
        %v3767 = vand.u32 %v2564, 4294901760
        %v3768 = vsub.f32 %v2564, %v3767
        %v3769 = vand.u32 %v3768, 4294901760
        %v3770 = vsub.f32 %v3768, %v3769
        %v3771 = vand.u32 %v3770, 4294901760
        %3772 = vmatmul.mubr.f32.gmra.mxu0 %v3771
        %v3773 = vpop.f32.mrf.mxu0
        %v3774 = vadd.f32 %v3617, %v3773
        %v3775 = vpop.f32.mrf.mxu0
        %3776 = vdwg.mxu0
        %3777 = vmatprep.subr.mxu0 0.0
        %v3778 = vand.u32 %v2434, 4294901760
        %v3779 = vsub.f32 %v2434, %v3778
        %v3780 = vand.u32 %v3779, 4294901760
        %v3781 = vsub.f32 %v3779, %v3780
        %v3782 = vand.u32 %v3781, 4294901760
        %3783 = vmatpush1.msra.mxu0 %v3782
        %3784 = vmatprep.subr.mxu0 0.0
        %v3785 = vand.u32 %v2433, 4294901760
        %v3786 = vsub.f32 %v2433, %v3785
        %v3787 = vand.u32 %v3786, 4294901760
        %v3788 = vsub.f32 %v3786, %v3787
        %v3789 = vand.u32 %v3788, 4294901760
        %3790 = vmatpush1.msra.mxu0 %v3789
        %3791 = vmatprep.subr.mxu0 0.0
        %v3792 = vand.u32 %v2432, 4294901760
        %v3793 = vsub.f32 %v2432, %v3792
        %v3794 = vand.u32 %v3793, 4294901760
        %v3795 = vsub.f32 %v3793, %v3794
        %v3796 = vand.u32 %v3795, 4294901760
        %3797 = vmatpush1.msra.mxu0 %v3796
        %3798 = vmatprep.subr.mxu0 0.0
        %v3799 = vand.u32 %v2431, 4294901760
        %v3800 = vsub.f32 %v2431, %v3799
        %v3801 = vand.u32 %v3800, 4294901760
        %v3802 = vsub.f32 %v3800, %v3801
        %v3803 = vand.u32 %v3802, 4294901760
        %3804 = vmatpush1.msra.mxu0 %v3803
        %3805 = vmatprep.subr.mxu0 0.0
        %v3806 = vand.u32 %v2406, 4294901760
        %v3807 = vsub.f32 %v2406, %v3806
        %v3808 = vand.u32 %v3807, 4294901760
        %v3809 = vsub.f32 %v3807, %v3808
        %v3810 = vand.u32 %v3809, 4294901760
        %3811 = vmatpush1.msra.mxu0 %v3810
        %3812 = vmatprep.subr.mxu0 0.0
        %v3813 = vand.u32 %v2405, 4294901760
        %v3814 = vsub.f32 %v2405, %v3813
        %v3815 = vand.u32 %v3814, 4294901760
        %v3816 = vsub.f32 %v3814, %v3815
        %v3817 = vand.u32 %v3816, 4294901760
        %3818 = vmatpush1.msra.mxu0 %v3817
        %3819 = vmatprep.subr.mxu0 0.0
        %v3820 = vand.u32 %v2404, 4294901760
        %v3821 = vsub.f32 %v2404, %v3820
        %v3822 = vand.u32 %v3821, 4294901760
        %v3823 = vsub.f32 %v3821, %v3822
        %v3824 = vand.u32 %v3823, 4294901760
        %3825 = vmatpush1.msra.mxu0 %v3824
        %3826 = vmatprep.subr.mxu0 0.0
        %v3827 = vand.u32 %v2403, 4294901760
        %v3828 = vsub.f32 %v2403, %v3827
        %v3829 = vand.u32 %v3828, 4294901760
        %v3830 = vsub.f32 %v3828, %v3829
        %v3831 = vand.u32 %v3830, 4294901760
        %3832 = vmatpush1.msra.mxu0 %v3831
        %3833 = vmatprep.subr.mxu0 0.0
        %v3834 = vand.u32 %v2394, 4294901760
        %v3835 = vsub.f32 %v2394, %v3834
        %v3836 = vand.u32 %v3835, 4294901760
        %v3837 = vsub.f32 %v3835, %v3836
        %v3838 = vand.u32 %v3837, 4294901760
        %3839 = vmatpush1.msra.mxu0 %v3838
        %3840 = vmatprep.subr.mxu0 0.0
        %v3841 = vand.u32 %v2393, 4294901760
        %v3842 = vsub.f32 %v2393, %v3841
        %v3843 = vand.u32 %v3842, 4294901760
        %v3844 = vsub.f32 %v3842, %v3843
        %v3845 = vand.u32 %v3844, 4294901760
        %3846 = vmatpush1.msra.mxu0 %v3845
        %3847 = vmatprep.subr.mxu0 0.0
        %v3848 = vand.u32 %v2392, 4294901760
        %v3849 = vsub.f32 %v2392, %v3848
        %v3850 = vand.u32 %v3849, 4294901760
        %v3851 = vsub.f32 %v3849, %v3850
        %v3852 = vand.u32 %v3851, 4294901760
        %3853 = vmatpush1.msra.mxu0 %v3852
        %3854 = vmatprep.subr.mxu0 0.0
        %v3855 = vand.u32 %v2391, 4294901760
        %v3856 = vsub.f32 %v2391, %v3855
        %v3857 = vand.u32 %v3856, 4294901760
        %v3858 = vsub.f32 %v3856, %v3857
        %v3859 = vand.u32 %v3858, 4294901760
        %3860 = vmatpush1.msra.mxu0 %v3859
        %3861 = vmatprep.subr.mxu0 0.0
        %v3862 = vand.u32 %v2382, 4294901760
        %v3863 = vsub.f32 %v2382, %v3862
        %v3864 = vand.u32 %v3863, 4294901760
        %v3865 = vsub.f32 %v3863, %v3864
        %v3866 = vand.u32 %v3865, 4294901760
        %3867 = vmatpush1.msra.mxu0 %v3866
        %3868 = vmatprep.subr.mxu0 0.0
        %v3869 = vand.u32 %v2381, 4294901760
        %v3870 = vsub.f32 %v2381, %v3869
        %v3871 = vand.u32 %v3870, 4294901760
        %v3872 = vsub.f32 %v3870, %v3871
        %v3873 = vand.u32 %v3872, 4294901760
        %3874 = vmatpush1.msra.mxu0 %v3873
        %3875 = vmatprep.subr.mxu0 0.0
        %v3876 = vand.u32 %v2380, 4294901760
        %v3877 = vsub.f32 %v2380, %v3876
        %v3878 = vand.u32 %v3877, 4294901760
        %v3879 = vsub.f32 %v3877, %v3878
        %v3880 = vand.u32 %v3879, 4294901760
        %3881 = vmatpush1.msra.mxu0 %v3880
        %3882 = vmatprep.subr.mxu0 0.0
        %v3883 = vand.u32 %v2379, 4294901760
        %v3884 = vsub.f32 %v2379, %v3883
        %v3885 = vand.u32 %v3884, 4294901760
        %v3886 = vsub.f32 %v3884, %v3885
        %v3887 = vand.u32 %v3886, 4294901760
        %3888 = vmatpush1.msra.mxu0 %v3887
        %3889 = vmatprep.subr.mxu0 0.0
        %v3890 = vand.u32 %v2549, 4294901760
        %v3891 = vsub.f32 %v2549, %v3890
        %v3892 = vand.u32 %v3891, 4294901760
        %v3893 = vsub.f32 %v3891, %v3892
        %v3894 = vand.u32 %v3893, 4294901760
        %3895 = vmatpush2.msra.mxu0 %v3894
        %3896 = vmatprep.subr.mxu0 0.0
        %v3897 = vand.u32 %v2548, 4294901760
        %v3898 = vsub.f32 %v2548, %v3897
        %v3899 = vand.u32 %v3898, 4294901760
        %v3900 = vsub.f32 %v3898, %v3899
        %v3901 = vand.u32 %v3900, 4294901760
        %3902 = vmatpush2.msra.mxu0 %v3901
        %3903 = vmatprep.subr.mxu0 0.0
        %v3904 = vand.u32 %v2547, 4294901760
        %v3905 = vsub.f32 %v2547, %v3904
        %v3906 = vand.u32 %v3905, 4294901760
        %v3907 = vsub.f32 %v3905, %v3906
        %v3908 = vand.u32 %v3907, 4294901760
        %3909 = vmatpush2.msra.mxu0 %v3908
        %3910 = vmatprep.subr.mxu0 0.0
        %v3911 = vand.u32 %v2546, 4294901760
        %v3912 = vsub.f32 %v2546, %v3911
        %v3913 = vand.u32 %v3912, 4294901760
        %v3914 = vsub.f32 %v3912, %v3913
        %v3915 = vand.u32 %v3914, 4294901760
        %3916 = vmatpush2.msra.mxu0 %v3915
        %3917 = vmatprep.subr.mxu0 0.0
        %v3918 = vand.u32 %v2520, 4294901760
        %v3919 = vsub.f32 %v2520, %v3918
        %v3920 = vand.u32 %v3919, 4294901760
        %v3921 = vsub.f32 %v3919, %v3920
        %v3922 = vand.u32 %v3921, 4294901760
        %3923 = vmatpush2.msra.mxu0 %v3922
        %3924 = vmatprep.subr.mxu0 0.0
        %v3925 = vand.u32 %v2519, 4294901760
        %v3926 = vsub.f32 %v2519, %v3925
        %v3927 = vand.u32 %v3926, 4294901760
        %v3928 = vsub.f32 %v3926, %v3927
        %v3929 = vand.u32 %v3928, 4294901760
        %3930 = vmatpush2.msra.mxu0 %v3929
        %3931 = vmatprep.subr.mxu0 0.0
        %v3932 = vand.u32 %v2518, 4294901760
        %v3933 = vsub.f32 %v2518, %v3932
        %v3934 = vand.u32 %v3933, 4294901760
        %v3935 = vsub.f32 %v3933, %v3934
        %v3936 = vand.u32 %v3935, 4294901760
        %3937 = vmatpush2.msra.mxu0 %v3936
        %3938 = vmatprep.subr.mxu0 0.0
        %v3939 = vand.u32 %v2517, 4294901760
        %v3940 = vsub.f32 %v2517, %v3939
        %v3941 = vand.u32 %v3940, 4294901760
        %v3942 = vsub.f32 %v3940, %v3941
        %v3943 = vand.u32 %v3942, 4294901760
        %3944 = vmatpush2.msra.mxu0 %v3943
        %3945 = vmatprep.subr.mxu0 0.0
        %v3946 = vand.u32 %v2492, 4294901760
        %v3947 = vsub.f32 %v2492, %v3946
        %v3948 = vand.u32 %v3947, 4294901760
        %v3949 = vsub.f32 %v3947, %v3948
        %v3950 = vand.u32 %v3949, 4294901760
        %3951 = vmatpush2.msra.mxu0 %v3950
        %3952 = vmatprep.subr.mxu0 0.0
        %v3953 = vand.u32 %v2491, 4294901760
        %v3954 = vsub.f32 %v2491, %v3953
        %v3955 = vand.u32 %v3954, 4294901760
        %v3956 = vsub.f32 %v3954, %v3955
        %v3957 = vand.u32 %v3956, 4294901760
        %3958 = vmatpush2.msra.mxu0 %v3957
        %3959 = vmatprep.subr.mxu0 0.0
        %v3960 = vand.u32 %v2490, 4294901760
        %v3961 = vsub.f32 %v2490, %v3960
        %v3962 = vand.u32 %v3961, 4294901760
        %v3963 = vsub.f32 %v3961, %v3962
        %v3964 = vand.u32 %v3963, 4294901760
        %3965 = vmatpush2.msra.mxu0 %v3964
        %3966 = vmatprep.subr.mxu0 0.0
        %v3967 = vand.u32 %v2489, 4294901760
        %v3968 = vsub.f32 %v2489, %v3967
        %v3969 = vand.u32 %v3968, 4294901760
        %v3970 = vsub.f32 %v3968, %v3969
        %v3971 = vand.u32 %v3970, 4294901760
        %3972 = vmatpush2.msra.mxu0 %v3971
        %3973 = vmatprep.subr.mxu0 0.0
        %v3974 = vand.u32 %v2463, 4294901760
        %v3975 = vsub.f32 %v2463, %v3974
        %v3976 = vand.u32 %v3975, 4294901760
        %v3977 = vsub.f32 %v3975, %v3976
        %v3978 = vand.u32 %v3977, 4294901760
        %3979 = vmatpush2.msra.mxu0 %v3978
        %3980 = vmatprep.subr.mxu0 0.0
        %v3981 = vand.u32 %v2462, 4294901760
        %v3982 = vsub.f32 %v2462, %v3981
        %v3983 = vand.u32 %v3982, 4294901760
        %v3984 = vsub.f32 %v3982, %v3983
        %v3985 = vand.u32 %v3984, 4294901760
        %3986 = vmatpush2.msra.mxu0 %v3985
        %3987 = vmatprep.subr.mxu0 0.0
        %v3988 = vand.u32 %v2461, 4294901760
        %v3989 = vsub.f32 %v2461, %v3988
        %v3990 = vand.u32 %v3989, 4294901760
        %v3991 = vsub.f32 %v3989, %v3990
        %v3992 = vand.u32 %v3991, 4294901760
        %3993 = vmatpush2.msra.mxu0 %v3992
        %3994 = vmatprep.subr.mxu0 0.0
        %v3995 = vand.u32 %v2460, 4294901760
        %v3996 = vsub.f32 %v2460, %v3995
        %v3997 = vand.u32 %v3996, 4294901760
        %v3998 = vsub.f32 %v3996, %v3997
        %v3999 = vand.u32 %v3998, 4294901760
        %4000 = vmatpush2.msra.mxu0 %v3999
        %v4001 = vand.u32 %v2553, 4294901760
        %4002 = vmatprep.mubr.f32.mxu0 %v4001
        %v4003 = vand.u32 %v2552, 4294901760
        %4004 = vmatmul.mubr.f32.gmra.mxu0 %v4003
        %v4005 = vpop.f32.mrf.mxu0
        %v4006 = vadd.f32 %v3729, %v4005
        %v4007 = vpop.f32.mrf.mxu0
        %v4008 = vand.u32 %v2557, 4294901760
        %4009 = vmatprep.mubr.f32.mxu0 %v4008
        %v4010 = vand.u32 %v2556, 4294901760
        %4011 = vmatmul.mubr.f32.gmra.mxu0 %v4010
        %v4012 = vpop.f32.mrf.mxu0
        %v4013 = vadd.f32 %v3744, %v4012
        %v4014 = vpop.f32.mrf.mxu0
        %v4015 = vand.u32 %v2561, 4294901760
        %4016 = vmatprep.mubr.f32.mxu0 %v4015
        %v4017 = vand.u32 %v2560, 4294901760
        %4018 = vmatmul.mubr.f32.gmra.mxu0 %v4017
        %v4019 = vpop.f32.mrf.mxu0
        %v4020 = vadd.f32 %v3759, %v4019
        %v4021 = vpop.f32.mrf.mxu0
        %v4022 = vand.u32 %v2565, 4294901760
        %4023 = vmatprep.mubr.f32.mxu0 %v4022
        %v4024 = vand.u32 %v2564, 4294901760
        %4025 = vmatmul.mubr.f32.gmra.mxu0 %v4024
        %v4026 = vpop.f32.mrf.mxu0
        %v4027 = vadd.f32 %v3774, %v4026
        %v4028 = vpop.f32.mrf.mxu0
        %4029 = vdwg.mxu0
        %4030 = vmatprep.subr.mxu0 0.0
        %v4031 = vand.u32 %v2434, 4294901760
        %v4032 = vsub.f32 %v2434, %v4031
        %4033 = vmatpush1.msra.mxu0 %v4032
        %4034 = vmatprep.subr.mxu0 0.0
        %v4035 = vand.u32 %v2433, 4294901760
        %v4036 = vsub.f32 %v2433, %v4035
        %4037 = vmatpush1.msra.mxu0 %v4036
        %4038 = vmatprep.subr.mxu0 0.0
        %v4039 = vand.u32 %v2432, 4294901760
        %v4040 = vsub.f32 %v2432, %v4039
        %4041 = vmatpush1.msra.mxu0 %v4040
        %4042 = vmatprep.subr.mxu0 0.0
        %v4043 = vand.u32 %v2431, 4294901760
        %v4044 = vsub.f32 %v2431, %v4043
        %4045 = vmatpush1.msra.mxu0 %v4044
        %4046 = vmatprep.subr.mxu0 0.0
        %v4047 = vand.u32 %v2406, 4294901760
        %v4048 = vsub.f32 %v2406, %v4047
        %4049 = vmatpush1.msra.mxu0 %v4048
        %4050 = vmatprep.subr.mxu0 0.0
        %v4051 = vand.u32 %v2405, 4294901760
        %v4052 = vsub.f32 %v2405, %v4051
        %4053 = vmatpush1.msra.mxu0 %v4052
        %4054 = vmatprep.subr.mxu0 0.0
        %v4055 = vand.u32 %v2404, 4294901760
        %v4056 = vsub.f32 %v2404, %v4055
        %4057 = vmatpush1.msra.mxu0 %v4056
        %4058 = vmatprep.subr.mxu0 0.0
        %v4059 = vand.u32 %v2403, 4294901760
        %v4060 = vsub.f32 %v2403, %v4059
        %4061 = vmatpush1.msra.mxu0 %v4060
        %4062 = vmatprep.subr.mxu0 0.0
        %v4063 = vand.u32 %v2394, 4294901760
        %v4064 = vsub.f32 %v2394, %v4063
        %4065 = vmatpush1.msra.mxu0 %v4064
        %4066 = vmatprep.subr.mxu0 0.0
        %v4067 = vand.u32 %v2393, 4294901760
        %v4068 = vsub.f32 %v2393, %v4067
        %4069 = vmatpush1.msra.mxu0 %v4068
        %4070 = vmatprep.subr.mxu0 0.0
        %v4071 = vand.u32 %v2392, 4294901760
        %v4072 = vsub.f32 %v2392, %v4071
        %4073 = vmatpush1.msra.mxu0 %v4072
        %4074 = vmatprep.subr.mxu0 0.0
        %v4075 = vand.u32 %v2391, 4294901760
        %v4076 = vsub.f32 %v2391, %v4075
        %4077 = vmatpush1.msra.mxu0 %v4076
        %4078 = vmatprep.subr.mxu0 0.0
        %v4079 = vand.u32 %v2382, 4294901760
        %v4080 = vsub.f32 %v2382, %v4079
        %4081 = vmatpush1.msra.mxu0 %v4080
        %4082 = vmatprep.subr.mxu0 0.0
        %v4083 = vand.u32 %v2381, 4294901760
        %v4084 = vsub.f32 %v2381, %v4083
        %4085 = vmatpush1.msra.mxu0 %v4084
        %4086 = vmatprep.subr.mxu0 0.0
        %v4087 = vand.u32 %v2380, 4294901760
        %v4088 = vsub.f32 %v2380, %v4087
        %4089 = vmatpush1.msra.mxu0 %v4088
        %4090 = vmatprep.subr.mxu0 0.0
        %v4091 = vand.u32 %v2379, 4294901760
        %v4092 = vsub.f32 %v2379, %v4091
        %4093 = vmatpush1.msra.mxu0 %v4092
        %4094 = vmatprep.subr.mxu0 0.0
        %v4095 = vand.u32 %v2549, 4294901760
        %v4096 = vsub.f32 %v2549, %v4095
        %4097 = vmatpush2.msra.mxu0 %v4096
        %4098 = vmatprep.subr.mxu0 0.0
        %v4099 = vand.u32 %v2548, 4294901760
        %v4100 = vsub.f32 %v2548, %v4099
        %4101 = vmatpush2.msra.mxu0 %v4100
        %4102 = vmatprep.subr.mxu0 0.0
        %v4103 = vand.u32 %v2547, 4294901760
        %v4104 = vsub.f32 %v2547, %v4103
        %4105 = vmatpush2.msra.mxu0 %v4104
        %4106 = vmatprep.subr.mxu0 0.0
        %v4107 = vand.u32 %v2546, 4294901760
        %v4108 = vsub.f32 %v2546, %v4107
        %4109 = vmatpush2.msra.mxu0 %v4108
        %4110 = vmatprep.subr.mxu0 0.0
        %v4111 = vand.u32 %v2520, 4294901760
        %v4112 = vsub.f32 %v2520, %v4111
        %4113 = vmatpush2.msra.mxu0 %v4112
        %4114 = vmatprep.subr.mxu0 0.0
        %v4115 = vand.u32 %v2519, 4294901760
        %v4116 = vsub.f32 %v2519, %v4115
        %4117 = vmatpush2.msra.mxu0 %v4116
        %4118 = vmatprep.subr.mxu0 0.0
        %v4119 = vand.u32 %v2518, 4294901760
        %v4120 = vsub.f32 %v2518, %v4119
        %4121 = vmatpush2.msra.mxu0 %v4120
        %4122 = vmatprep.subr.mxu0 0.0
        %v4123 = vand.u32 %v2517, 4294901760
        %v4124 = vsub.f32 %v2517, %v4123
        %4125 = vmatpush2.msra.mxu0 %v4124
        %4126 = vmatprep.subr.mxu0 0.0
        %v4127 = vand.u32 %v2492, 4294901760
        %v4128 = vsub.f32 %v2492, %v4127
        %4129 = vmatpush2.msra.mxu0 %v4128
        %4130 = vmatprep.subr.mxu0 0.0
        %v4131 = vand.u32 %v2491, 4294901760
        %v4132 = vsub.f32 %v2491, %v4131
        %4133 = vmatpush2.msra.mxu0 %v4132
        %4134 = vmatprep.subr.mxu0 0.0
        %v4135 = vand.u32 %v2490, 4294901760
        %v4136 = vsub.f32 %v2490, %v4135
        %4137 = vmatpush2.msra.mxu0 %v4136
        %4138 = vmatprep.subr.mxu0 0.0
        %v4139 = vand.u32 %v2489, 4294901760
        %v4140 = vsub.f32 %v2489, %v4139
        %4141 = vmatpush2.msra.mxu0 %v4140
        %4142 = vmatprep.subr.mxu0 0.0
        %v4143 = vand.u32 %v2463, 4294901760
        %v4144 = vsub.f32 %v2463, %v4143
        %4145 = vmatpush2.msra.mxu0 %v4144
        %4146 = vmatprep.subr.mxu0 0.0
        %v4147 = vand.u32 %v2462, 4294901760
        %v4148 = vsub.f32 %v2462, %v4147
        %4149 = vmatpush2.msra.mxu0 %v4148
        %4150 = vmatprep.subr.mxu0 0.0
        %v4151 = vand.u32 %v2461, 4294901760
        %v4152 = vsub.f32 %v2461, %v4151
        %4153 = vmatpush2.msra.mxu0 %v4152
        %4154 = vmatprep.subr.mxu0 0.0
        %v4155 = vand.u32 %v2460, 4294901760
        %v4156 = vsub.f32 %v2460, %v4155
        %4157 = vmatpush2.msra.mxu0 %v4156
        %v4158 = vand.u32 %v2553, 4294901760
        %v4159 = vsub.f32 %v2553, %v4158
        %4160 = vmatprep.mubr.f32.mxu0 %v4159
        %v4161 = vand.u32 %v2552, 4294901760
        %v4162 = vsub.f32 %v2552, %v4161
        %4163 = vmatmul.mubr.f32.gmra.mxu0 %v4162
        %v4164 = vpop.f32.mrf.mxu0
        %v4165 = vadd.f32 %v4006, %v4164
        %v4166 = vpop.f32.mrf.mxu0
        %v4167 = vand.u32 %v2557, 4294901760
        %v4168 = vsub.f32 %v2557, %v4167
        %4169 = vmatprep.mubr.f32.mxu0 %v4168
        %v4170 = vand.u32 %v2556, 4294901760
        %v4171 = vsub.f32 %v2556, %v4170
        %4172 = vmatmul.mubr.f32.gmra.mxu0 %v4171
        %v4173 = vpop.f32.mrf.mxu0
        %v4174 = vadd.f32 %v4013, %v4173
        %v4175 = vpop.f32.mrf.mxu0
        %v4176 = vand.u32 %v2561, 4294901760
        %v4177 = vsub.f32 %v2561, %v4176
        %4178 = vmatprep.mubr.f32.mxu0 %v4177
        %v4179 = vand.u32 %v2560, 4294901760
        %v4180 = vsub.f32 %v2560, %v4179
        %4181 = vmatmul.mubr.f32.gmra.mxu0 %v4180
        %v4182 = vpop.f32.mrf.mxu0
        %v4183 = vadd.f32 %v4020, %v4182
        %v4184 = vpop.f32.mrf.mxu0
        %v4185 = vand.u32 %v2565, 4294901760
        %v4186 = vsub.f32 %v2565, %v4185
        %4187 = vmatprep.mubr.f32.mxu0 %v4186
        %v4188 = vand.u32 %v2564, 4294901760
        %v4189 = vsub.f32 %v2564, %v4188
        %4190 = vmatmul.mubr.f32.gmra.mxu0 %v4189
        %v4191 = vpop.f32.mrf.mxu0
        %v4192 = vadd.f32 %v4027, %v4191
        %v4193 = vpop.f32.mrf.mxu0
        %4194 = vdwg.mxu0
        %4195 = vmatprep.subr.mxu0 0.0
        %v4196 = vand.u32 %v2434, 4294901760
        %4197 = vmatpush1.msra.mxu0 %v4196
        %4198 = vmatprep.subr.mxu0 0.0
        %v4199 = vand.u32 %v2433, 4294901760
        %4200 = vmatpush1.msra.mxu0 %v4199
        %4201 = vmatprep.subr.mxu0 0.0
        %v4202 = vand.u32 %v2432, 4294901760
        %4203 = vmatpush1.msra.mxu0 %v4202
        %4204 = vmatprep.subr.mxu0 0.0
        %v4205 = vand.u32 %v2431, 4294901760
        %4206 = vmatpush1.msra.mxu0 %v4205
        %4207 = vmatprep.subr.mxu0 0.0
        %v4208 = vand.u32 %v2406, 4294901760
        %4209 = vmatpush1.msra.mxu0 %v4208
        %4210 = vmatprep.subr.mxu0 0.0
        %v4211 = vand.u32 %v2405, 4294901760
        %4212 = vmatpush1.msra.mxu0 %v4211
        %4213 = vmatprep.subr.mxu0 0.0
        %v4214 = vand.u32 %v2404, 4294901760
        %4215 = vmatpush1.msra.mxu0 %v4214
        %4216 = vmatprep.subr.mxu0 0.0
        %v4217 = vand.u32 %v2403, 4294901760
        %4218 = vmatpush1.msra.mxu0 %v4217
        %4219 = vmatprep.subr.mxu0 0.0
        %v4220 = vand.u32 %v2394, 4294901760
        %4221 = vmatpush1.msra.mxu0 %v4220
        %4222 = vmatprep.subr.mxu0 0.0
        %v4223 = vand.u32 %v2393, 4294901760
        %4224 = vmatpush1.msra.mxu0 %v4223
        %4225 = vmatprep.subr.mxu0 0.0
        %v4226 = vand.u32 %v2392, 4294901760
        %4227 = vmatpush1.msra.mxu0 %v4226
        %4228 = vmatprep.subr.mxu0 0.0
        %v4229 = vand.u32 %v2391, 4294901760
        %4230 = vmatpush1.msra.mxu0 %v4229
        %4231 = vmatprep.subr.mxu0 0.0
        %v4232 = vand.u32 %v2382, 4294901760
        %4233 = vmatpush1.msra.mxu0 %v4232
        %4234 = vmatprep.subr.mxu0 0.0
        %v4235 = vand.u32 %v2381, 4294901760
        %4236 = vmatpush1.msra.mxu0 %v4235
        %4237 = vmatprep.subr.mxu0 0.0
        %v4238 = vand.u32 %v2380, 4294901760
        %4239 = vmatpush1.msra.mxu0 %v4238
        %4240 = vmatprep.subr.mxu0 0.0
        %v4241 = vand.u32 %v2379, 4294901760
        %4242 = vmatpush1.msra.mxu0 %v4241
        %4243 = vmatprep.subr.mxu0 0.0
        %v4244 = vand.u32 %v2549, 4294901760
        %4245 = vmatpush2.msra.mxu0 %v4244
        %4246 = vmatprep.subr.mxu0 0.0
        %v4247 = vand.u32 %v2548, 4294901760
        %4248 = vmatpush2.msra.mxu0 %v4247
        %4249 = vmatprep.subr.mxu0 0.0
        %v4250 = vand.u32 %v2547, 4294901760
        %4251 = vmatpush2.msra.mxu0 %v4250
        %4252 = vmatprep.subr.mxu0 0.0
        %v4253 = vand.u32 %v2546, 4294901760
        %4254 = vmatpush2.msra.mxu0 %v4253
        %4255 = vmatprep.subr.mxu0 0.0
        %v4256 = vand.u32 %v2520, 4294901760
        %4257 = vmatpush2.msra.mxu0 %v4256
        %4258 = vmatprep.subr.mxu0 0.0
        %v4259 = vand.u32 %v2519, 4294901760
        %4260 = vmatpush2.msra.mxu0 %v4259
        %4261 = vmatprep.subr.mxu0 0.0
        %v4262 = vand.u32 %v2518, 4294901760
        %4263 = vmatpush2.msra.mxu0 %v4262
        %4264 = vmatprep.subr.mxu0 0.0
        %v4265 = vand.u32 %v2517, 4294901760
        %4266 = vmatpush2.msra.mxu0 %v4265
        %4267 = vmatprep.subr.mxu0 0.0
        %v4268 = vand.u32 %v2492, 4294901760
        %4269 = vmatpush2.msra.mxu0 %v4268
        %4270 = vmatprep.subr.mxu0 0.0
        %v4271 = vand.u32 %v2491, 4294901760
        %4272 = vmatpush2.msra.mxu0 %v4271
        %4273 = vmatprep.subr.mxu0 0.0
        %v4274 = vand.u32 %v2490, 4294901760
        %4275 = vmatpush2.msra.mxu0 %v4274
        %4276 = vmatprep.subr.mxu0 0.0
        %v4277 = vand.u32 %v2489, 4294901760
        %4278 = vmatpush2.msra.mxu0 %v4277
        %4279 = vmatprep.subr.mxu0 0.0
        %v4280 = vand.u32 %v2463, 4294901760
        %4281 = vmatpush2.msra.mxu0 %v4280
        %4282 = vmatprep.subr.mxu0 0.0
        %v4283 = vand.u32 %v2462, 4294901760
        %4284 = vmatpush2.msra.mxu0 %v4283
        %4285 = vmatprep.subr.mxu0 0.0
        %v4286 = vand.u32 %v2461, 4294901760
        %4287 = vmatpush2.msra.mxu0 %v4286
        %4288 = vmatprep.subr.mxu0 0.0
        %v4289 = vand.u32 %v2460, 4294901760
        %4290 = vmatpush2.msra.mxu0 %v4289
        %v4291 = vand.u32 %v2553, 4294901760
        %v4292 = vsub.f32 %v2553, %v4291
        %v4293 = vand.u32 %v4292, 4294901760
        %4294 = vmatprep.mubr.f32.mxu0 %v4293
        %v4295 = vand.u32 %v2552, 4294901760
        %v4296 = vsub.f32 %v2552, %v4295
        %v4297 = vand.u32 %v4296, 4294901760
        %4298 = vmatmul.mubr.f32.gmra.mxu0 %v4297
        %v4299 = vpop.f32.mrf.mxu0
        %v4300 = vadd.f32 %v4165, %v4299
        %v4301 = vpop.f32.mrf.mxu0
        %v4302 = vand.u32 %v2557, 4294901760
        %v4303 = vsub.f32 %v2557, %v4302
        %v4304 = vand.u32 %v4303, 4294901760
        %4305 = vmatprep.mubr.f32.mxu0 %v4304
        %v4306 = vand.u32 %v2556, 4294901760
        %v4307 = vsub.f32 %v2556, %v4306
        %v4308 = vand.u32 %v4307, 4294901760
        %4309 = vmatmul.mubr.f32.gmra.mxu0 %v4308
        %v4310 = vpop.f32.mrf.mxu0
        %v4311 = vadd.f32 %v4174, %v4310
        %v4312 = vpop.f32.mrf.mxu0
        %v4313 = vand.u32 %v2561, 4294901760
        %v4314 = vsub.f32 %v2561, %v4313
        %v4315 = vand.u32 %v4314, 4294901760
        %4316 = vmatprep.mubr.f32.mxu0 %v4315
        %v4317 = vand.u32 %v2560, 4294901760
        %v4318 = vsub.f32 %v2560, %v4317
        %v4319 = vand.u32 %v4318, 4294901760
        %4320 = vmatmul.mubr.f32.gmra.mxu0 %v4319
        %v4321 = vpop.f32.mrf.mxu0
        %v4322 = vadd.f32 %v4183, %v4321
        %v4323 = vpop.f32.mrf.mxu0
        %v4324 = vand.u32 %v2565, 4294901760
        %v4325 = vsub.f32 %v2565, %v4324
        %v4326 = vand.u32 %v4325, 4294901760
        %4327 = vmatprep.mubr.f32.mxu0 %v4326
        %v4328 = vand.u32 %v2564, 4294901760
        %v4329 = vsub.f32 %v2564, %v4328
        %v4330 = vand.u32 %v4329, 4294901760
        %4331 = vmatmul.mubr.f32.gmra.mxu0 %v4330
        %v4332 = vpop.f32.mrf.mxu0
        %v4333 = vadd.f32 %v4192, %v4332
        %v4334 = vpop.f32.mrf.mxu0
        %4335 = vdwg.mxu0
        %4336 = vmatprep.subr.mxu0 0.0
        %v4337 = vand.u32 %v2434, 4294901760
        %v4338 = vsub.f32 %v2434, %v4337
        %v4339 = vand.u32 %v4338, 4294901760
        %4340 = vmatpush1.msra.mxu0 %v4339
        %4341 = vmatprep.subr.mxu0 0.0
        %v4342 = vand.u32 %v2433, 4294901760
        %v4343 = vsub.f32 %v2433, %v4342
        %v4344 = vand.u32 %v4343, 4294901760
        %4345 = vmatpush1.msra.mxu0 %v4344
        %4346 = vmatprep.subr.mxu0 0.0
        %v4347 = vand.u32 %v2432, 4294901760
        %v4348 = vsub.f32 %v2432, %v4347
        %v4349 = vand.u32 %v4348, 4294901760
        %4350 = vmatpush1.msra.mxu0 %v4349
        %4351 = vmatprep.subr.mxu0 0.0
        %v4352 = vand.u32 %v2431, 4294901760
        %v4353 = vsub.f32 %v2431, %v4352
        %v4354 = vand.u32 %v4353, 4294901760
        %4355 = vmatpush1.msra.mxu0 %v4354
        %4356 = vmatprep.subr.mxu0 0.0
        %v4357 = vand.u32 %v2406, 4294901760
        %v4358 = vsub.f32 %v2406, %v4357
        %v4359 = vand.u32 %v4358, 4294901760
        %4360 = vmatpush1.msra.mxu0 %v4359
        %4361 = vmatprep.subr.mxu0 0.0
        %v4362 = vand.u32 %v2405, 4294901760
        %v4363 = vsub.f32 %v2405, %v4362
        %v4364 = vand.u32 %v4363, 4294901760
        %4365 = vmatpush1.msra.mxu0 %v4364
        %4366 = vmatprep.subr.mxu0 0.0
        %v4367 = vand.u32 %v2404, 4294901760
        %v4368 = vsub.f32 %v2404, %v4367
        %v4369 = vand.u32 %v4368, 4294901760
        %4370 = vmatpush1.msra.mxu0 %v4369
        %4371 = vmatprep.subr.mxu0 0.0
        %v4372 = vand.u32 %v2403, 4294901760
        %v4373 = vsub.f32 %v2403, %v4372
        %v4374 = vand.u32 %v4373, 4294901760
        %4375 = vmatpush1.msra.mxu0 %v4374
        %4376 = vmatprep.subr.mxu0 0.0
        %v4377 = vand.u32 %v2394, 4294901760
        %v4378 = vsub.f32 %v2394, %v4377
        %v4379 = vand.u32 %v4378, 4294901760
        %4380 = vmatpush1.msra.mxu0 %v4379
        %4381 = vmatprep.subr.mxu0 0.0
        %v4382 = vand.u32 %v2393, 4294901760
        %v4383 = vsub.f32 %v2393, %v4382
        %v4384 = vand.u32 %v4383, 4294901760
        %4385 = vmatpush1.msra.mxu0 %v4384
        %4386 = vmatprep.subr.mxu0 0.0
        %v4387 = vand.u32 %v2392, 4294901760
        %v4388 = vsub.f32 %v2392, %v4387
        %v4389 = vand.u32 %v4388, 4294901760
        %4390 = vmatpush1.msra.mxu0 %v4389
        %4391 = vmatprep.subr.mxu0 0.0
        %v4392 = vand.u32 %v2391, 4294901760
        %v4393 = vsub.f32 %v2391, %v4392
        %v4394 = vand.u32 %v4393, 4294901760
        %4395 = vmatpush1.msra.mxu0 %v4394
        %4396 = vmatprep.subr.mxu0 0.0
        %v4397 = vand.u32 %v2382, 4294901760
        %v4398 = vsub.f32 %v2382, %v4397
        %v4399 = vand.u32 %v4398, 4294901760
        %4400 = vmatpush1.msra.mxu0 %v4399
        %4401 = vmatprep.subr.mxu0 0.0
        %v4402 = vand.u32 %v2381, 4294901760
        %v4403 = vsub.f32 %v2381, %v4402
        %v4404 = vand.u32 %v4403, 4294901760
        %4405 = vmatpush1.msra.mxu0 %v4404
        %4406 = vmatprep.subr.mxu0 0.0
        %v4407 = vand.u32 %v2380, 4294901760
        %v4408 = vsub.f32 %v2380, %v4407
        %v4409 = vand.u32 %v4408, 4294901760
        %4410 = vmatpush1.msra.mxu0 %v4409
        %4411 = vmatprep.subr.mxu0 0.0
        %v4412 = vand.u32 %v2379, 4294901760
        %v4413 = vsub.f32 %v2379, %v4412
        %v4414 = vand.u32 %v4413, 4294901760
        %4415 = vmatpush1.msra.mxu0 %v4414
        %4416 = vmatprep.subr.mxu0 0.0
        %v4417 = vand.u32 %v2549, 4294901760
        %v4418 = vsub.f32 %v2549, %v4417
        %v4419 = vand.u32 %v4418, 4294901760
        %4420 = vmatpush2.msra.mxu0 %v4419
        %4421 = vmatprep.subr.mxu0 0.0
        %v4422 = vand.u32 %v2548, 4294901760
        %v4423 = vsub.f32 %v2548, %v4422
        %v4424 = vand.u32 %v4423, 4294901760
        %4425 = vmatpush2.msra.mxu0 %v4424
        %4426 = vmatprep.subr.mxu0 0.0
        %v4427 = vand.u32 %v2547, 4294901760
        %v4428 = vsub.f32 %v2547, %v4427
        %v4429 = vand.u32 %v4428, 4294901760
        %4430 = vmatpush2.msra.mxu0 %v4429
        %4431 = vmatprep.subr.mxu0 0.0
        %v4432 = vand.u32 %v2546, 4294901760
        %v4433 = vsub.f32 %v2546, %v4432
        %v4434 = vand.u32 %v4433, 4294901760
        %4435 = vmatpush2.msra.mxu0 %v4434
        %4436 = vmatprep.subr.mxu0 0.0
        %v4437 = vand.u32 %v2520, 4294901760
        %v4438 = vsub.f32 %v2520, %v4437
        %v4439 = vand.u32 %v4438, 4294901760
        %4440 = vmatpush2.msra.mxu0 %v4439
        %4441 = vmatprep.subr.mxu0 0.0
        %v4442 = vand.u32 %v2519, 4294901760
        %v4443 = vsub.f32 %v2519, %v4442
        %v4444 = vand.u32 %v4443, 4294901760
        %4445 = vmatpush2.msra.mxu0 %v4444
        %4446 = vmatprep.subr.mxu0 0.0
        %v4447 = vand.u32 %v2518, 4294901760
        %v4448 = vsub.f32 %v2518, %v4447
        %v4449 = vand.u32 %v4448, 4294901760
        %4450 = vmatpush2.msra.mxu0 %v4449
        %4451 = vmatprep.subr.mxu0 0.0
        %v4452 = vand.u32 %v2517, 4294901760
        %v4453 = vsub.f32 %v2517, %v4452
        %v4454 = vand.u32 %v4453, 4294901760
        %4455 = vmatpush2.msra.mxu0 %v4454
        %4456 = vmatprep.subr.mxu0 0.0
        %v4457 = vand.u32 %v2492, 4294901760
        %v4458 = vsub.f32 %v2492, %v4457
        %v4459 = vand.u32 %v4458, 4294901760
        %4460 = vmatpush2.msra.mxu0 %v4459
        %4461 = vmatprep.subr.mxu0 0.0
        %v4462 = vand.u32 %v2491, 4294901760
        %v4463 = vsub.f32 %v2491, %v4462
        %v4464 = vand.u32 %v4463, 4294901760
        %4465 = vmatpush2.msra.mxu0 %v4464
        %4466 = vmatprep.subr.mxu0 0.0
        %v4467 = vand.u32 %v2490, 4294901760
        %v4468 = vsub.f32 %v2490, %v4467
        %v4469 = vand.u32 %v4468, 4294901760
        %4470 = vmatpush2.msra.mxu0 %v4469
        %4471 = vmatprep.subr.mxu0 0.0
        %v4472 = vand.u32 %v2489, 4294901760
        %v4473 = vsub.f32 %v2489, %v4472
        %v4474 = vand.u32 %v4473, 4294901760
        %4475 = vmatpush2.msra.mxu0 %v4474
        %4476 = vmatprep.subr.mxu0 0.0
        %v4477 = vand.u32 %v2463, 4294901760
        %v4478 = vsub.f32 %v2463, %v4477
        %v4479 = vand.u32 %v4478, 4294901760
        %4480 = vmatpush2.msra.mxu0 %v4479
        %4481 = vmatprep.subr.mxu0 0.0
        %v4482 = vand.u32 %v2462, 4294901760
        %v4483 = vsub.f32 %v2462, %v4482
        %v4484 = vand.u32 %v4483, 4294901760
        %4485 = vmatpush2.msra.mxu0 %v4484
        %4486 = vmatprep.subr.mxu0 0.0
        %v4487 = vand.u32 %v2461, 4294901760
        %v4488 = vsub.f32 %v2461, %v4487
        %v4489 = vand.u32 %v4488, 4294901760
        %4490 = vmatpush2.msra.mxu0 %v4489
        %4491 = vmatprep.subr.mxu0 0.0
        %v4492 = vand.u32 %v2460, 4294901760
        %v4493 = vsub.f32 %v2460, %v4492
        %v4494 = vand.u32 %v4493, 4294901760
        %4495 = vmatpush2.msra.mxu0 %v4494
        %v4496 = vand.u32 %v2553, 4294901760
        %4497 = vmatprep.mubr.f32.mxu0 %v4496
        %v4498 = vand.u32 %v2552, 4294901760
        %4499 = vmatmul.mubr.f32.gmra.mxu0 %v4498
        %v4500 = vpop.f32.mrf.mxu0
        %v4501 = vadd.f32 %v4300, %v4500
        %v4502 = vpop.f32.mrf.mxu0
        %v4503 = vand.u32 %v2557, 4294901760
        %4504 = vmatprep.mubr.f32.mxu0 %v4503
        %v4505 = vand.u32 %v2556, 4294901760
        %4506 = vmatmul.mubr.f32.gmra.mxu0 %v4505
        %v4507 = vpop.f32.mrf.mxu0
        %v4508 = vadd.f32 %v4311, %v4507
        %v4509 = vpop.f32.mrf.mxu0
        %v4510 = vand.u32 %v2561, 4294901760
        %4511 = vmatprep.mubr.f32.mxu0 %v4510
        %v4512 = vand.u32 %v2560, 4294901760
        %4513 = vmatmul.mubr.f32.gmra.mxu0 %v4512
        %v4514 = vpop.f32.mrf.mxu0
        %v4515 = vadd.f32 %v4322, %v4514
        %v4516 = vpop.f32.mrf.mxu0
        %v4517 = vand.u32 %v2565, 4294901760
        %4518 = vmatprep.mubr.f32.mxu0 %v4517
        %v4519 = vand.u32 %v2564, 4294901760
        %4520 = vmatmul.mubr.f32.gmra.mxu0 %v4519
        %v4521 = vpop.f32.mrf.mxu0
        %v4522 = vadd.f32 %v4333, %v4521
        %v4523 = vpop.f32.mrf.mxu0
        %4524 = vdwg.mxu0
        %4525 = vmatprep.subr.mxu0 0.0
        %v4526 = vand.u32 %v2434, 4294901760
        %4527 = vmatpush1.msra.mxu0 %v4526
        %4528 = vmatprep.subr.mxu0 0.0
        %v4529 = vand.u32 %v2433, 4294901760
        %4530 = vmatpush1.msra.mxu0 %v4529
        %4531 = vmatprep.subr.mxu0 0.0
        %v4532 = vand.u32 %v2432, 4294901760
        %4533 = vmatpush1.msra.mxu0 %v4532
        %4534 = vmatprep.subr.mxu0 0.0
        %v4535 = vand.u32 %v2431, 4294901760
        %4536 = vmatpush1.msra.mxu0 %v4535
        %4537 = vmatprep.subr.mxu0 0.0
        %v4538 = vand.u32 %v2406, 4294901760
        %4539 = vmatpush1.msra.mxu0 %v4538
        %4540 = vmatprep.subr.mxu0 0.0
        %v4541 = vand.u32 %v2405, 4294901760
        %4542 = vmatpush1.msra.mxu0 %v4541
        %4543 = vmatprep.subr.mxu0 0.0
        %v4544 = vand.u32 %v2404, 4294901760
        %4545 = vmatpush1.msra.mxu0 %v4544
        %4546 = vmatprep.subr.mxu0 0.0
        %v4547 = vand.u32 %v2403, 4294901760
        %4548 = vmatpush1.msra.mxu0 %v4547
        %4549 = vmatprep.subr.mxu0 0.0
        %v4550 = vand.u32 %v2394, 4294901760
        %4551 = vmatpush1.msra.mxu0 %v4550
        %4552 = vmatprep.subr.mxu0 0.0
        %v4553 = vand.u32 %v2393, 4294901760
        %4554 = vmatpush1.msra.mxu0 %v4553
        %4555 = vmatprep.subr.mxu0 0.0
        %v4556 = vand.u32 %v2392, 4294901760
        %4557 = vmatpush1.msra.mxu0 %v4556
        %4558 = vmatprep.subr.mxu0 0.0
        %v4559 = vand.u32 %v2391, 4294901760
        %4560 = vmatpush1.msra.mxu0 %v4559
        %4561 = vmatprep.subr.mxu0 0.0
        %v4562 = vand.u32 %v2382, 4294901760
        %4563 = vmatpush1.msra.mxu0 %v4562
        %4564 = vmatprep.subr.mxu0 0.0
        %v4565 = vand.u32 %v2381, 4294901760
        %4566 = vmatpush1.msra.mxu0 %v4565
        %4567 = vmatprep.subr.mxu0 0.0
        %v4568 = vand.u32 %v2380, 4294901760
        %4569 = vmatpush1.msra.mxu0 %v4568
        %4570 = vmatprep.subr.mxu0 0.0
        %v4571 = vand.u32 %v2379, 4294901760
        %4572 = vmatpush1.msra.mxu0 %v4571
        %4573 = vmatprep.subr.mxu0 0.0
        %v4574 = vand.u32 %v2549, 4294901760
        %4575 = vmatpush2.msra.mxu0 %v4574
        %4576 = vmatprep.subr.mxu0 0.0
        %v4577 = vand.u32 %v2548, 4294901760
        %4578 = vmatpush2.msra.mxu0 %v4577
        %4579 = vmatprep.subr.mxu0 0.0
        %v4580 = vand.u32 %v2547, 4294901760
        %4581 = vmatpush2.msra.mxu0 %v4580
        %4582 = vmatprep.subr.mxu0 0.0
        %v4583 = vand.u32 %v2546, 4294901760
        %4584 = vmatpush2.msra.mxu0 %v4583
        %4585 = vmatprep.subr.mxu0 0.0
        %v4586 = vand.u32 %v2520, 4294901760
        %4587 = vmatpush2.msra.mxu0 %v4586
        %4588 = vmatprep.subr.mxu0 0.0
        %v4589 = vand.u32 %v2519, 4294901760
        %4590 = vmatpush2.msra.mxu0 %v4589
        %4591 = vmatprep.subr.mxu0 0.0
        %v4592 = vand.u32 %v2518, 4294901760
        %4593 = vmatpush2.msra.mxu0 %v4592
        %4594 = vmatprep.subr.mxu0 0.0
        %v4595 = vand.u32 %v2517, 4294901760
        %4596 = vmatpush2.msra.mxu0 %v4595
        %4597 = vmatprep.subr.mxu0 0.0
        %v4598 = vand.u32 %v2492, 4294901760
        %4599 = vmatpush2.msra.mxu0 %v4598
        %4600 = vmatprep.subr.mxu0 0.0
        %v4601 = vand.u32 %v2491, 4294901760
        %4602 = vmatpush2.msra.mxu0 %v4601
        %4603 = vmatprep.subr.mxu0 0.0
        %v4604 = vand.u32 %v2490, 4294901760
        %4605 = vmatpush2.msra.mxu0 %v4604
        %4606 = vmatprep.subr.mxu0 0.0
        %v4607 = vand.u32 %v2489, 4294901760
        %4608 = vmatpush2.msra.mxu0 %v4607
        %4609 = vmatprep.subr.mxu0 0.0
        %v4610 = vand.u32 %v2463, 4294901760
        %4611 = vmatpush2.msra.mxu0 %v4610
        %4612 = vmatprep.subr.mxu0 0.0
        %v4613 = vand.u32 %v2462, 4294901760
        %4614 = vmatpush2.msra.mxu0 %v4613
        %4615 = vmatprep.subr.mxu0 0.0
        %v4616 = vand.u32 %v2461, 4294901760
        %4617 = vmatpush2.msra.mxu0 %v4616
        %4618 = vmatprep.subr.mxu0 0.0
        %v4619 = vand.u32 %v2460, 4294901760
        %4620 = vmatpush2.msra.mxu0 %v4619
        %v4621 = vand.u32 %v2553, 4294901760
        %4622 = vmatprep.mubr.f32.mxu0 %v4621
        %v4623 = vand.u32 %v2552, 4294901760
        %4624 = vmatmul.mubr.f32.gmra.mxu0 %v4623
        %v4625 = vpop.f32.mrf.mxu0
        %v4626 = vadd.f32 %v4501, %v4625
        %v4627 = vpop.f32.mrf.mxu0
        %v4628 = vand.u32 %v2557, 4294901760
        %4629 = vmatprep.mubr.f32.mxu0 %v4628
        %v4630 = vand.u32 %v2556, 4294901760
        %4631 = vmatmul.mubr.f32.gmra.mxu0 %v4630
        %v4632 = vpop.f32.mrf.mxu0
        %v4633 = vadd.f32 %v4508, %v4632
        %v4634 = vpop.f32.mrf.mxu0
        %v4635 = vand.u32 %v2561, 4294901760
        %4636 = vmatprep.mubr.f32.mxu0 %v4635
        %v4637 = vand.u32 %v2560, 4294901760
        %4638 = vmatmul.mubr.f32.gmra.mxu0 %v4637
        %v4639 = vpop.f32.mrf.mxu0
        %v4640 = vadd.f32 %v4515, %v4639
        %v4641 = vpop.f32.mrf.mxu0
        %v4642 = vand.u32 %v2565, 4294901760
        %4643 = vmatprep.mubr.f32.mxu0 %v4642
        %v4644 = vand.u32 %v2564, 4294901760
        %4645 = vmatmul.mubr.f32.gmra.mxu0 %v4644
        %v4646 = vpop.f32.mrf.mxu0
        %v4647 = vadd.f32 %v4522, %v4646
        %v4648 = vpop.f32.mrf.mxu0
        %4649 = vdwg.mxu0
        %v4650 = vmax.f32 %v4626, 0.0
        %v4651 = vmax.f32 %v4633, 0.0
        %v4652 = vmax.f32 %v4640, 0.0
        %v4653 = vmax.f32 %v4647, 0.0
        %4658 = vrot.lane.b32.xlu0 %v4650, 40
        %v4659 = vpop.permute.xlu0 %4658
        %4660 = vrot.lane.b32.xlu0 %v4651, 40
        %v4661 = vpop.permute.xlu0 %4660
        %4662 = vrot.lane.b32.xlu0 %v4652, 40
        %v4663 = vpop.permute.xlu0 %4662
        %4664 = vrot.lane.b32.xlu0 %v4653, 40
        %v4665 = vpop.permute.xlu0 %4664
        %v4670 = vsel %vm2159, 0.0, %v4659
        %v4671 = vsel %vm2159, 0.0, %v4661
        %v4672 = vsel %vm2159, 0.0, %v4663
        %v4673 = vsel %vm2159, 0.0, %v4665
        %v4674 = vld [vmem:[%s8] sm:$0x1]
        %v4676 = vlaneseq
        %v4677 = vshrl.u32 %v4676, 7
        %v4678 = vsub.s32 0, %v4677
        %v4679 = vrot.slane %v4674, %v4678
        %v4681 = vmul.f32 %v4670, %v4679
        %v4682 = vmul.f32 %v4671, %v4679
        %v4683 = vmul.f32 %v4672, %v4679
        %v4684 = vmul.f32 %v4673, %v4679
        %4685 = vrot.lane.b32.xlu0 %v4650, 32
        %v4686 = vpop.permute.xlu0 %4685
        %4687 = vrot.lane.b32.xlu0 %v4651, 32
        %v4688 = vpop.permute.xlu0 %4687
        %4689 = vrot.lane.b32.xlu0 %v4652, 32
        %v4690 = vpop.permute.xlu0 %4689
        %4691 = vrot.lane.b32.xlu0 %v4653, 32
        %v4692 = vpop.permute.xlu0 %4691
        %v4697 = vsel %vm2191, 0.0, %v4686
        %v4698 = vsel %vm2191, 0.0, %v4688
        %v4699 = vsel %vm2191, 0.0, %v4690
        %v4700 = vsel %vm2191, 0.0, %v4692
        %s4701 = scalar_lea.vmem %s8, 1
        %v4702 = vld [vmem:[%s4701] sm:$0x1]
        %v4704 = vlaneseq
        %v4705 = vshrl.u32 %v4704, 7
        %v4706 = vsub.s32 0, %v4705
        %v4707 = vrot.slane %v4702, %v4706
        %v4709 = vmul.f32 %v4697, %v4707
        %v4710 = vmul.f32 %v4698, %v4707
        %v4711 = vmul.f32 %v4699, %v4707
        %v4712 = vmul.f32 %v4700, %v4707
        %4713 = vrot.lane.b32.xlu0 %v4650, 24
        %v4714 = vpop.permute.xlu0 %4713
        %4715 = vrot.lane.b32.xlu0 %v4651, 24
        %v4716 = vpop.permute.xlu0 %4715
        %4717 = vrot.lane.b32.xlu0 %v4652, 24
        %v4718 = vpop.permute.xlu0 %4717
        %4719 = vrot.lane.b32.xlu0 %v4653, 24
        %v4720 = vpop.permute.xlu0 %4719
        %v4725 = vsel %vm2248, 0.0, %v4714
        %v4726 = vsel %vm2248, 0.0, %v4716
        %v4727 = vsel %vm2248, 0.0, %v4718
        %v4728 = vsel %vm2248, 0.0, %v4720
        %s4729 = scalar_lea.vmem %s8, 2
        %v4730 = vld [vmem:[%s4729] sm:$0x1]
        %v4732 = vlaneseq
        %v4733 = vshrl.u32 %v4732, 7
        %v4734 = vsub.s32 0, %v4733
        %v4735 = vrot.slane %v4730, %v4734
        %v4737 = vmul.f32 %v4725, %v4735
        %v4738 = vmul.f32 %v4726, %v4735
        %v4739 = vmul.f32 %v4727, %v4735
        %v4740 = vmul.f32 %v4728, %v4735
        %4741 = vrot.lane.b32.xlu0 %v4650, 16
        %v4742 = vpop.permute.xlu0 %4741
        %4743 = vrot.lane.b32.xlu0 %v4651, 16
        %v4744 = vpop.permute.xlu0 %4743
        %4745 = vrot.lane.b32.xlu0 %v4652, 16
        %v4746 = vpop.permute.xlu0 %4745
        %4747 = vrot.lane.b32.xlu0 %v4653, 16
        %v4748 = vpop.permute.xlu0 %4747
        %vm4753 = vcmask 130048
        %v4754 = vsel %vm4753, 0.0, %v4742
        %v4755 = vsel %vm4753, 0.0, %v4744
        %v4756 = vsel %vm4753, 0.0, %v4746
        %v4757 = vsel %vm4753, 0.0, %v4748
        %s4758 = scalar_lea.vmem %s8, 3
        %v4759 = vld [vmem:[%s4758] sm:$0x1]
        %v4761 = vlaneseq
        %v4762 = vshrl.u32 %v4761, 7
        %v4763 = vsub.s32 0, %v4762
        %v4764 = vrot.slane %v4759, %v4763
        %v4766 = vmul.f32 %v4754, %v4764
        %v4767 = vmul.f32 %v4755, %v4764
        %v4768 = vmul.f32 %v4756, %v4764
        %v4769 = vmul.f32 %v4757, %v4764
        %4770 = vrot.lane.b32.xlu0 %v4650, 8
        %v4771 = vpop.permute.xlu0 %4770
        %4772 = vrot.lane.b32.xlu0 %v4651, 8
        %v4773 = vpop.permute.xlu0 %4772
        %4774 = vrot.lane.b32.xlu0 %v4652, 8
        %v4775 = vpop.permute.xlu0 %4774
        %4776 = vrot.lane.b32.xlu0 %v4653, 8
        %v4777 = vpop.permute.xlu0 %4776
        %v4782 = vsel %vm2281, 0.0, %v4771
        %v4783 = vsel %vm2281, 0.0, %v4773
        %v4784 = vsel %vm2281, 0.0, %v4775
        %v4785 = vsel %vm2281, 0.0, %v4777
        %s4786 = scalar_lea.vmem %s8, 4
        %v4787 = vld [vmem:[%s4786] sm:$0x1]
        %v4789 = vlaneseq
        %v4790 = vshrl.u32 %v4789, 7
        %v4791 = vsub.s32 0, %v4790
        %v4792 = vrot.slane %v4787, %v4791
        %v4794 = vmul.f32 %v4782, %v4792
        %v4795 = vmul.f32 %v4783, %v4792
        %v4796 = vmul.f32 %v4784, %v4792
        %v4797 = vmul.f32 %v4785, %v4792
        %s4798 = scalar_lea.vmem %s8, 5
        %v4799 = vld [vmem:[%s4798] sm:$0x1]
        %v4801 = vlaneseq
        %v4802 = vshrl.u32 %v4801, 7
        %v4803 = vsub.s32 0, %v4802
        %v4804 = vrot.slane %v4799, %v4803
        %v4806 = vmul.f32 %v4650, %v4804
        %v4807 = vmul.f32 %v4651, %v4804
        %v4808 = vmul.f32 %v4652, %v4804
        %v4809 = vmul.f32 %v4653, %v4804
        %4810 = vrot.lane.b32.xlu0 %v4650, 120
        %v4811 = vpop.permute.xlu0 %4810
        %4812 = vrot.lane.b32.xlu0 %v4651, 120
        %v4813 = vpop.permute.xlu0 %4812
        %4814 = vrot.lane.b32.xlu0 %v4652, 120
        %v4815 = vpop.permute.xlu0 %4814
        %4816 = vrot.lane.b32.xlu0 %v4653, 120
        %v4817 = vpop.permute.xlu0 %4816
        %v4822 = vsel %vm2338, %v4811, 0.0
        %v4823 = vsel %vm2338, %v4813, 0.0
        %v4824 = vsel %vm2338, %v4815, 0.0
        %v4825 = vsel %vm2338, %v4817, 0.0
        %s4826 = scalar_lea.vmem %s8, 6
        %v4827 = vld [vmem:[%s4826] sm:$0x1]
        %v4829 = vlaneseq
        %v4830 = vshrl.u32 %v4829, 7
        %v4831 = vsub.s32 0, %v4830
        %v4832 = vrot.slane %v4827, %v4831
        %v4834 = vmul.f32 %v4822, %v4832
        %v4835 = vmul.f32 %v4823, %v4832
        %v4836 = vmul.f32 %v4824, %v4832
        %v4837 = vmul.f32 %v4825, %v4832
        %4838 = vrot.lane.b32.xlu0 %v4650, 112
        %v4839 = vpop.permute.xlu0 %4838
        %4840 = vrot.lane.b32.xlu0 %v4651, 112
        %v4841 = vpop.permute.xlu0 %4840
        %4842 = vrot.lane.b32.xlu0 %v4652, 112
        %v4843 = vpop.permute.xlu0 %4842
        %4844 = vrot.lane.b32.xlu0 %v4653, 112
        %v4845 = vpop.permute.xlu0 %4844
        %vm4850 = vcmask 916480
        %v4851 = vsel %vm4850, %v4839, 0.0
        %v4852 = vsel %vm4850, %v4841, 0.0
        %v4853 = vsel %vm4850, %v4843, 0.0
        %v4854 = vsel %vm4850, %v4845, 0.0
        %s4855 = scalar_lea.vmem %s8, 7
        %v4856 = vld [vmem:[%s4855] sm:$0x1]
        %v4858 = vlaneseq
        %v4859 = vshrl.u32 %v4858, 7
        %v4860 = vsub.s32 0, %v4859
        %v4861 = vrot.slane %v4856, %v4860
        %v4863 = vmul.f32 %v4851, %v4861
        %v4864 = vmul.f32 %v4852, %v4861
        %v4865 = vmul.f32 %v4853, %v4861
        %v4866 = vmul.f32 %v4854, %v4861
        %4867 = vrot.lane.b32.xlu0 %v4650, 104
        %v4868 = vpop.permute.xlu0 %4867
        %4869 = vrot.lane.b32.xlu0 %v4651, 104
        %v4870 = vpop.permute.xlu0 %4869
        %4871 = vrot.lane.b32.xlu0 %v4652, 104
        %v4872 = vpop.permute.xlu0 %4871
        %4873 = vrot.lane.b32.xlu0 %v4653, 104
        %v4874 = vpop.permute.xlu0 %4873
        %v4879 = vsel %vm2447, %v4868, 0.0
        %v4880 = vsel %vm2447, %v4870, 0.0
        %v4881 = vsel %vm2447, %v4872, 0.0
        %v4882 = vsel %vm2447, %v4874, 0.0
        %s4883 = scalar_lea.vmem %s8, 8
        %v4884 = vld [vmem:[%s4883] sm:$0x1]
        %v4886 = vlaneseq
        %v4887 = vshrl.u32 %v4886, 7
        %v4888 = vsub.s32 0, %v4887
        %v4889 = vrot.slane %v4884, %v4888
        %v4891 = vmul.f32 %v4879, %v4889
        %v4892 = vmul.f32 %v4880, %v4889
        %v4893 = vmul.f32 %v4881, %v4889
        %v4894 = vmul.f32 %v4882, %v4889
        %4895 = vrot.lane.b32.xlu0 %v4650, 96
        %v4896 = vpop.permute.xlu0 %4895
        %4897 = vrot.lane.b32.xlu0 %v4651, 96
        %v4898 = vpop.permute.xlu0 %4897
        %4899 = vrot.lane.b32.xlu0 %v4652, 96
        %v4900 = vpop.permute.xlu0 %4899
        %4901 = vrot.lane.b32.xlu0 %v4653, 96
        %v4902 = vpop.permute.xlu0 %4901
        %v4907 = vsel %vm2476, %v4896, 0.0
        %v4908 = vsel %vm2476, %v4898, 0.0
        %v4909 = vsel %vm2476, %v4900, 0.0
        %v4910 = vsel %vm2476, %v4902, 0.0
        %s4911 = scalar_lea.vmem %s8, 9
        %v4912 = vld [vmem:[%s4911] sm:$0x1]
        %v4914 = vlaneseq
        %v4915 = vshrl.u32 %v4914, 7
        %v4916 = vsub.s32 0, %v4915
        %v4917 = vrot.slane %v4912, %v4916
        %v4919 = vmul.f32 %v4907, %v4917
        %v4920 = vmul.f32 %v4908, %v4917
        %v4921 = vmul.f32 %v4909, %v4917
        %v4922 = vmul.f32 %v4910, %v4917
        %4923 = vrot.lane.b32.xlu0 %v4650, 88
        %v4924 = vpop.permute.xlu0 %4923
        %4925 = vrot.lane.b32.xlu0 %v4651, 88
        %v4926 = vpop.permute.xlu0 %4925
        %4927 = vrot.lane.b32.xlu0 %v4652, 88
        %v4928 = vpop.permute.xlu0 %4927
        %4929 = vrot.lane.b32.xlu0 %v4653, 88
        %v4930 = vpop.permute.xlu0 %4929
        %v4935 = vsel %vm2533, %v4924, 0.0
        %v4936 = vsel %vm2533, %v4926, 0.0
        %v4937 = vsel %vm2533, %v4928, 0.0
        %v4938 = vsel %vm2533, %v4930, 0.0
        %s4939 = scalar_lea.vmem %s8, 10
        %v4940 = vld [vmem:[%s4939] sm:$0x1]
        %v4942 = vlaneseq
        %v4943 = vshrl.u32 %v4942, 7
        %v4944 = vsub.s32 0, %v4943
        %v4945 = vrot.slane %v4940, %v4944
        %v4947 = vmul.f32 %v4935, %v4945
        %v4948 = vmul.f32 %v4936, %v4945
        %v4949 = vmul.f32 %v4937, %v4945
        %v4950 = vmul.f32 %v4938, %v4945
        %4951 = vrot.lane.b32.xlu0 %v4650, 80
        %v4952 = vpop.permute.xlu0 %4951
        %4953 = vrot.lane.b32.xlu0 %v4651, 80
        %v4954 = vpop.permute.xlu0 %4953
        %4955 = vrot.lane.b32.xlu0 %v4652, 80
        %v4956 = vpop.permute.xlu0 %4955
        %4957 = vrot.lane.b32.xlu0 %v4653, 80
        %v4958 = vpop.permute.xlu0 %4957
        %vm4963 = vcmask 654336
        %v4964 = vsel %vm4963, %v4952, 0.0
        %v4965 = vsel %vm4963, %v4954, 0.0
        %v4966 = vsel %vm4963, %v4956, 0.0
        %v4967 = vsel %vm4963, %v4958, 0.0
        %s4968 = scalar_lea.vmem %s8, 11
        %v4969 = vld [vmem:[%s4968] sm:$0x1]
        %v4971 = vlaneseq
        %v4972 = vshrl.u32 %v4971, 7
        %v4973 = vsub.s32 0, %v4972
        %v4974 = vrot.slane %v4969, %v4973
        %v4976 = vmul.f32 %v4964, %v4974
        %v4977 = vmul.f32 %v4965, %v4974
        %v4978 = vmul.f32 %v4966, %v4974
        %v4979 = vmul.f32 %v4967, %v4974
        %4980 = vrot.lane.b32.xlu0 %v4650, 72
        %v4981 = vpop.permute.xlu0 %4980
        %4982 = vrot.lane.b32.xlu0 %v4651, 72
        %v4983 = vpop.permute.xlu0 %4982
        %4984 = vrot.lane.b32.xlu0 %v4652, 72
        %v4985 = vpop.permute.xlu0 %4984
        %4986 = vrot.lane.b32.xlu0 %v4653, 72
        %v4987 = vpop.permute.xlu0 %4986
        %vm4992 = vcmask 588800
        %v4993 = vsel %vm4992, %v4981, 0.0
        %v4994 = vsel %vm4992, %v4983, 0.0
        %v4995 = vsel %vm4992, %v4985, 0.0
        %v4996 = vsel %vm4992, %v4987, 0.0
        %s4997 = scalar_lea.vmem %s8, 12
        %v4998 = vld [vmem:[%s4997] sm:$0x1]
        %v5000 = vlaneseq
        %v5001 = vshrl.u32 %v5000, 7
        %v5002 = vsub.s32 0, %v5001
        %v5003 = vrot.slane %v4998, %v5002
        %v5005 = vmul.f32 %v4993, %v5003
        %v5006 = vmul.f32 %v4994, %v5003
        %v5007 = vmul.f32 %v4995, %v5003
        %v5008 = vmul.f32 %v4996, %v5003
        %5009 = vrot.lane.b32.xlu0 %v4650, 64
        %v5010 = vpop.permute.xlu0 %5009
        %5011 = vrot.lane.b32.xlu0 %v4651, 64
        %v5012 = vpop.permute.xlu0 %5011
        %5013 = vrot.lane.b32.xlu0 %v4652, 64
        %v5014 = vpop.permute.xlu0 %5013
        %5015 = vrot.lane.b32.xlu0 %v4653, 64
        %v5016 = vpop.permute.xlu0 %5015
        %v5021 = vsel %vm526, %v5010, 0.0
        %v5022 = vsel %vm526, %v5012, 0.0
        %v5023 = vsel %vm526, %v5014, 0.0
        %v5024 = vsel %vm526, %v5016, 0.0
        %s5025 = scalar_lea.vmem %s8, 13
        %v5026 = vld [vmem:[%s5025] sm:$0x1]
        %v5028 = vlaneseq
        %v5029 = vshrl.u32 %v5028, 7
        %v5030 = vsub.s32 0, %v5029
        %v5031 = vrot.slane %v5026, %v5030
        %v5033 = vmul.f32 %v5021, %v5031
        %v5034 = vmul.f32 %v5022, %v5031
        %v5035 = vmul.f32 %v5023, %v5031
        %v5036 = vmul.f32 %v5024, %v5031
        %5037 = vrot.lane.b32.xlu0 %v4650, 56
        %v5038 = vpop.permute.xlu0 %5037
        %5039 = vrot.lane.b32.xlu0 %v4651, 56
        %v5040 = vpop.permute.xlu0 %5039
        %5041 = vrot.lane.b32.xlu0 %v4652, 56
        %v5042 = vpop.permute.xlu0 %5041
        %5043 = vrot.lane.b32.xlu0 %v4653, 56
        %v5044 = vpop.permute.xlu0 %5043
        %vm5049 = vcmask 457728
        %v5050 = vsel %vm5049, %v5038, 0.0
        %v5051 = vsel %vm5049, %v5040, 0.0
        %v5052 = vsel %vm5049, %v5042, 0.0
        %v5053 = vsel %vm5049, %v5044, 0.0
        %s5054 = scalar_lea.vmem %s8, 14
        %v5055 = vld [vmem:[%s5054] sm:$0x1]
        %v5057 = vlaneseq
        %v5058 = vshrl.u32 %v5057, 7
        %v5059 = vsub.s32 0, %v5058
        %v5060 = vrot.slane %v5055, %v5059
        %v5062 = vmul.f32 %v5050, %v5060
        %v5063 = vmul.f32 %v5051, %v5060
        %v5064 = vmul.f32 %v5052, %v5060
        %v5065 = vmul.f32 %v5053, %v5060
        %5066 = vrot.lane.b32.xlu0 %v4650, 48
        %v5067 = vpop.permute.xlu0 %5066
        %5068 = vrot.lane.b32.xlu0 %v4651, 48
        %v5069 = vpop.permute.xlu0 %5068
        %5070 = vrot.lane.b32.xlu0 %v4652, 48
        %v5071 = vpop.permute.xlu0 %5070
        %5072 = vrot.lane.b32.xlu0 %v4653, 48
        %v5073 = vpop.permute.xlu0 %5072
        %vm5078 = vcmask 392192
        %v5079 = vsel %vm5078, %v5067, 0.0
        %v5080 = vsel %vm5078, %v5069, 0.0
        %v5081 = vsel %vm5078, %v5071, 0.0
        %v5082 = vsel %vm5078, %v5073, 0.0
        %s5083 = scalar_lea.vmem %s8, 15
        %v5084 = vld [vmem:[%s5083] sm:$0x1]
        %v5086 = vlaneseq
        %v5087 = vshrl.u32 %v5086, 7
        %v5088 = vsub.s32 0, %v5087
        %v5089 = vrot.slane %v5084, %v5088
        %v5091 = vmul.f32 %v5079, %v5089
        %v5092 = vmul.f32 %v5080, %v5089
        %v5093 = vmul.f32 %v5081, %v5089
        %v5094 = vmul.f32 %v5082, %v5089
        %v5095 = vld [vmem:[#allocation7] sm:$0xff]
        %v5096 = vld [vmem:[#allocation7 + $0x8] sm:$0xff]
        %v5097 = vld [vmem:[#allocation7 + $0x10] sm:$0xff]
        %v5098 = vld [vmem:[#allocation7 + $0x18] sm:$0xff]
        %v5099 = vld [vmem:[#allocation7 + $0x20] sm:$0xff]
        %v5100 = vld [vmem:[#allocation7 + $0x28] sm:$0xff]
        %v5101 = vld [vmem:[#allocation7 + $0x30] sm:$0xff]
        %v5102 = vld [vmem:[#allocation7 + $0x38] sm:$0xff]
        %v5103 = vld [vmem:[#allocation7 + $0x40] sm:$0xff]
        %v5104 = vld [vmem:[#allocation7 + $0x48] sm:$0xff]
        %v5105 = vld [vmem:[#allocation7 + $0x50] sm:$0xff]
        %v5106 = vld [vmem:[#allocation7 + $0x58] sm:$0xff]
        %v5107 = vld [vmem:[#allocation7 + $0x60] sm:$0xff]
        %v5108 = vld [vmem:[#allocation7 + $0x68] sm:$0xff]
        %v5109 = vld [vmem:[#allocation7 + $0x70] sm:$0xff]
        %v5110 = vld [vmem:[#allocation7 + $0x78] sm:$0xff]
        %v5111 = vld [vmem:[%s7] sm:$0xff]
        %v5112 = vld [vmem:[%s7 + $0x8] sm:$0xff]
        %v5113 = vld [vmem:[%s7 + $0x10] sm:$0xff]
        %v5114 = vld [vmem:[%s7 + $0x18] sm:$0xff]
        %5116 = vset.pattern.permute.xlu0 0
        %5117 = vperm.xlu0 %5116, %v5111
        %v5118 = vpop.permute.xlu0 %5117
        %5121 = vset.pattern.permute.xlu0 0
        %5122 = vperm.xlu0 %5121, %v5112
        %v5123 = vpop.permute.xlu0 %5122
        %5126 = vset.pattern.permute.xlu0 0
        %5127 = vperm.xlu0 %5126, %v5113
        %v5128 = vpop.permute.xlu0 %5127
        %5131 = vset.pattern.permute.xlu0 0
        %5132 = vperm.xlu0 %5131, %v5114
        %v5133 = vpop.permute.xlu0 %5132
        %5135 = vmatprep.subr.mxu0 0.0
        %v5136 = vand.u32 %v4769, 4294901760
        %5137 = vmatpush1.msra.mxu0 %v5136
        %5138 = vmatprep.subr.mxu0 0.0
        %v5139 = vand.u32 %v4768, 4294901760
        %5140 = vmatpush1.msra.mxu0 %v5139
        %5141 = vmatprep.subr.mxu0 0.0
        %v5142 = vand.u32 %v4767, 4294901760
        %5143 = vmatpush1.msra.mxu0 %v5142
        %5144 = vmatprep.subr.mxu0 0.0
        %v5145 = vand.u32 %v4766, 4294901760
        %5146 = vmatpush1.msra.mxu0 %v5145
        %5147 = vmatprep.subr.mxu0 0.0
        %v5148 = vand.u32 %v4740, 4294901760
        %5149 = vmatpush1.msra.mxu0 %v5148
        %5150 = vmatprep.subr.mxu0 0.0
        %v5151 = vand.u32 %v4739, 4294901760
        %5152 = vmatpush1.msra.mxu0 %v5151
        %5153 = vmatprep.subr.mxu0 0.0
        %v5154 = vand.u32 %v4738, 4294901760
        %5155 = vmatpush1.msra.mxu0 %v5154
        %5156 = vmatprep.subr.mxu0 0.0
        %v5157 = vand.u32 %v4737, 4294901760
        %5158 = vmatpush1.msra.mxu0 %v5157
        %5159 = vmatprep.subr.mxu0 0.0
        %v5160 = vand.u32 %v4712, 4294901760
        %5161 = vmatpush1.msra.mxu0 %v5160
        %5162 = vmatprep.subr.mxu0 0.0
        %v5163 = vand.u32 %v4711, 4294901760
        %5164 = vmatpush1.msra.mxu0 %v5163
        %5165 = vmatprep.subr.mxu0 0.0
        %v5166 = vand.u32 %v4710, 4294901760
        %5167 = vmatpush1.msra.mxu0 %v5166
        %5168 = vmatprep.subr.mxu0 0.0
        %v5169 = vand.u32 %v4709, 4294901760
        %5170 = vmatpush1.msra.mxu0 %v5169
        %5171 = vmatprep.subr.mxu0 0.0
        %v5172 = vand.u32 %v4684, 4294901760
        %5173 = vmatpush1.msra.mxu0 %v5172
        %5174 = vmatprep.subr.mxu0 0.0
        %v5175 = vand.u32 %v4683, 4294901760
        %5176 = vmatpush1.msra.mxu0 %v5175
        %5177 = vmatprep.subr.mxu0 0.0
        %v5178 = vand.u32 %v4682, 4294901760
        %5179 = vmatpush1.msra.mxu0 %v5178
        %5180 = vmatprep.subr.mxu0 0.0
        %v5181 = vand.u32 %v4681, 4294901760
        %5182 = vmatpush1.msra.mxu0 %v5181
        %5183 = vmatprep.subr.mxu0 0.0
        %v5184 = vand.u32 %v4866, 4294901760
        %5185 = vmatpush2.msra.mxu0 %v5184
        %5186 = vmatprep.subr.mxu0 0.0
        %v5187 = vand.u32 %v4865, 4294901760
        %5188 = vmatpush2.msra.mxu0 %v5187
        %5189 = vmatprep.subr.mxu0 0.0
        %v5190 = vand.u32 %v4864, 4294901760
        %5191 = vmatpush2.msra.mxu0 %v5190
        %5192 = vmatprep.subr.mxu0 0.0
        %v5193 = vand.u32 %v4863, 4294901760
        %5194 = vmatpush2.msra.mxu0 %v5193
        %5195 = vmatprep.subr.mxu0 0.0
        %v5196 = vand.u32 %v4837, 4294901760
        %5197 = vmatpush2.msra.mxu0 %v5196
        %5198 = vmatprep.subr.mxu0 0.0
        %v5199 = vand.u32 %v4836, 4294901760
        %5200 = vmatpush2.msra.mxu0 %v5199
        %5201 = vmatprep.subr.mxu0 0.0
        %v5202 = vand.u32 %v4835, 4294901760
        %5203 = vmatpush2.msra.mxu0 %v5202
        %5204 = vmatprep.subr.mxu0 0.0
        %v5205 = vand.u32 %v4834, 4294901760
        %5206 = vmatpush2.msra.mxu0 %v5205
        %5207 = vmatprep.subr.mxu0 0.0
        %v5208 = vand.u32 %v4809, 4294901760
        %5209 = vmatpush2.msra.mxu0 %v5208
        %5210 = vmatprep.subr.mxu0 0.0
        %v5211 = vand.u32 %v4808, 4294901760
        %5212 = vmatpush2.msra.mxu0 %v5211
        %5213 = vmatprep.subr.mxu0 0.0
        %v5214 = vand.u32 %v4807, 4294901760
        %5215 = vmatpush2.msra.mxu0 %v5214
        %5216 = vmatprep.subr.mxu0 0.0
        %v5217 = vand.u32 %v4806, 4294901760
        %5218 = vmatpush2.msra.mxu0 %v5217
        %5219 = vmatprep.subr.mxu0 0.0
        %v5220 = vand.u32 %v4797, 4294901760
        %5221 = vmatpush2.msra.mxu0 %v5220
        %5222 = vmatprep.subr.mxu0 0.0
        %v5223 = vand.u32 %v4796, 4294901760
        %5224 = vmatpush2.msra.mxu0 %v5223
        %5225 = vmatprep.subr.mxu0 0.0
        %v5226 = vand.u32 %v4795, 4294901760
        %5227 = vmatpush2.msra.mxu0 %v5226
        %5228 = vmatprep.subr.mxu0 0.0
        %v5229 = vand.u32 %v4794, 4294901760
        %5230 = vmatpush2.msra.mxu0 %v5229
        %v5231 = vand.u32 %v5096, 4294901760
        %v5232 = vsub.f32 %v5096, %v5231
        %v5233 = vand.u32 %v5232, 4294901760
        %v5234 = vsub.f32 %v5232, %v5233
        %v5235 = vand.u32 %v5234, 4294901760
        %5236 = vmatprep.mubr.f32.mxu0 %v5235
        %v5237 = vand.u32 %v5095, 4294901760
        %v5238 = vsub.f32 %v5095, %v5237
        %v5239 = vand.u32 %v5238, 4294901760
        %v5240 = vsub.f32 %v5238, %v5239
        %v5241 = vand.u32 %v5240, 4294901760
        %5242 = vmatmul.mubr.f32.gmra.mxu0 %v5241
        %v5243 = vpop.f32.mrf.mxu0
        %v5244 = vadd.f32 %v5118, %v5243
        %v5245 = vpop.f32.mrf.mxu0
        %v5246 = vand.u32 %v5100, 4294901760
        %v5247 = vsub.f32 %v5100, %v5246
        %v5248 = vand.u32 %v5247, 4294901760
        %v5249 = vsub.f32 %v5247, %v5248
        %v5250 = vand.u32 %v5249, 4294901760
        %5251 = vmatprep.mubr.f32.mxu0 %v5250
        %v5252 = vand.u32 %v5099, 4294901760
        %v5253 = vsub.f32 %v5099, %v5252
        %v5254 = vand.u32 %v5253, 4294901760
        %v5255 = vsub.f32 %v5253, %v5254
        %v5256 = vand.u32 %v5255, 4294901760
        %5257 = vmatmul.mubr.f32.gmra.mxu0 %v5256
        %v5258 = vpop.f32.mrf.mxu0
        %v5259 = vadd.f32 %v5123, %v5258
        %v5260 = vpop.f32.mrf.mxu0
        %v5261 = vand.u32 %v5104, 4294901760
        %v5262 = vsub.f32 %v5104, %v5261
        %v5263 = vand.u32 %v5262, 4294901760
        %v5264 = vsub.f32 %v5262, %v5263
        %v5265 = vand.u32 %v5264, 4294901760
        %5266 = vmatprep.mubr.f32.mxu0 %v5265
        %v5267 = vand.u32 %v5103, 4294901760
        %v5268 = vsub.f32 %v5103, %v5267
        %v5269 = vand.u32 %v5268, 4294901760
        %v5270 = vsub.f32 %v5268, %v5269
        %v5271 = vand.u32 %v5270, 4294901760
        %5272 = vmatmul.mubr.f32.gmra.mxu0 %v5271
        %v5273 = vpop.f32.mrf.mxu0
        %v5274 = vadd.f32 %v5128, %v5273
        %v5275 = vpop.f32.mrf.mxu0
        %v5276 = vand.u32 %v5108, 4294901760
        %v5277 = vsub.f32 %v5108, %v5276
        %v5278 = vand.u32 %v5277, 4294901760
        %v5279 = vsub.f32 %v5277, %v5278
        %v5280 = vand.u32 %v5279, 4294901760
        %5281 = vmatprep.mubr.f32.mxu0 %v5280
        %v5282 = vand.u32 %v5107, 4294901760
        %v5283 = vsub.f32 %v5107, %v5282
        %v5284 = vand.u32 %v5283, 4294901760
        %v5285 = vsub.f32 %v5283, %v5284
        %v5286 = vand.u32 %v5285, 4294901760
        %5287 = vmatmul.mubr.f32.gmra.mxu0 %v5286
        %v5288 = vpop.f32.mrf.mxu0
        %v5289 = vadd.f32 %v5133, %v5288
        %v5290 = vpop.f32.mrf.mxu0
        %5291 = vdwg.mxu0
        %5292 = vmatprep.subr.mxu0 0.0
        %v5293 = vand.u32 %v4769, 4294901760
        %v5294 = vsub.f32 %v4769, %v5293
        %v5295 = vand.u32 %v5294, 4294901760
        %v5296 = vsub.f32 %v5294, %v5295
        %v5297 = vand.u32 %v5296, 4294901760
        %5298 = vmatpush1.msra.mxu0 %v5297
        %5299 = vmatprep.subr.mxu0 0.0
        %v5300 = vand.u32 %v4768, 4294901760
        %v5301 = vsub.f32 %v4768, %v5300
        %v5302 = vand.u32 %v5301, 4294901760
        %v5303 = vsub.f32 %v5301, %v5302
        %v5304 = vand.u32 %v5303, 4294901760
        %5305 = vmatpush1.msra.mxu0 %v5304
        %5306 = vmatprep.subr.mxu0 0.0
        %v5307 = vand.u32 %v4767, 4294901760
        %v5308 = vsub.f32 %v4767, %v5307
        %v5309 = vand.u32 %v5308, 4294901760
        %v5310 = vsub.f32 %v5308, %v5309
        %v5311 = vand.u32 %v5310, 4294901760
        %5312 = vmatpush1.msra.mxu0 %v5311
        %5313 = vmatprep.subr.mxu0 0.0
        %v5314 = vand.u32 %v4766, 4294901760
        %v5315 = vsub.f32 %v4766, %v5314
        %v5316 = vand.u32 %v5315, 4294901760
        %v5317 = vsub.f32 %v5315, %v5316
        %v5318 = vand.u32 %v5317, 4294901760
        %5319 = vmatpush1.msra.mxu0 %v5318
        %5320 = vmatprep.subr.mxu0 0.0
        %v5321 = vand.u32 %v4740, 4294901760
        %v5322 = vsub.f32 %v4740, %v5321
        %v5323 = vand.u32 %v5322, 4294901760
        %v5324 = vsub.f32 %v5322, %v5323
        %v5325 = vand.u32 %v5324, 4294901760
        %5326 = vmatpush1.msra.mxu0 %v5325
        %5327 = vmatprep.subr.mxu0 0.0
        %v5328 = vand.u32 %v4739, 4294901760
        %v5329 = vsub.f32 %v4739, %v5328
        %v5330 = vand.u32 %v5329, 4294901760
        %v5331 = vsub.f32 %v5329, %v5330
        %v5332 = vand.u32 %v5331, 4294901760
        %5333 = vmatpush1.msra.mxu0 %v5332
        %5334 = vmatprep.subr.mxu0 0.0
        %v5335 = vand.u32 %v4738, 4294901760
        %v5336 = vsub.f32 %v4738, %v5335
        %v5337 = vand.u32 %v5336, 4294901760
        %v5338 = vsub.f32 %v5336, %v5337
        %v5339 = vand.u32 %v5338, 4294901760
        %5340 = vmatpush1.msra.mxu0 %v5339
        %5341 = vmatprep.subr.mxu0 0.0
        %v5342 = vand.u32 %v4737, 4294901760
        %v5343 = vsub.f32 %v4737, %v5342
        %v5344 = vand.u32 %v5343, 4294901760
        %v5345 = vsub.f32 %v5343, %v5344
        %v5346 = vand.u32 %v5345, 4294901760
        %5347 = vmatpush1.msra.mxu0 %v5346
        %5348 = vmatprep.subr.mxu0 0.0
        %v5349 = vand.u32 %v4712, 4294901760
        %v5350 = vsub.f32 %v4712, %v5349
        %v5351 = vand.u32 %v5350, 4294901760
        %v5352 = vsub.f32 %v5350, %v5351
        %v5353 = vand.u32 %v5352, 4294901760
        %5354 = vmatpush1.msra.mxu0 %v5353
        %5355 = vmatprep.subr.mxu0 0.0
        %v5356 = vand.u32 %v4711, 4294901760
        %v5357 = vsub.f32 %v4711, %v5356
        %v5358 = vand.u32 %v5357, 4294901760
        %v5359 = vsub.f32 %v5357, %v5358
        %v5360 = vand.u32 %v5359, 4294901760
        %5361 = vmatpush1.msra.mxu0 %v5360
        %5362 = vmatprep.subr.mxu0 0.0
        %v5363 = vand.u32 %v4710, 4294901760
        %v5364 = vsub.f32 %v4710, %v5363
        %v5365 = vand.u32 %v5364, 4294901760
        %v5366 = vsub.f32 %v5364, %v5365
        %v5367 = vand.u32 %v5366, 4294901760
        %5368 = vmatpush1.msra.mxu0 %v5367
        %5369 = vmatprep.subr.mxu0 0.0
        %v5370 = vand.u32 %v4709, 4294901760
        %v5371 = vsub.f32 %v4709, %v5370
        %v5372 = vand.u32 %v5371, 4294901760
        %v5373 = vsub.f32 %v5371, %v5372
        %v5374 = vand.u32 %v5373, 4294901760
        %5375 = vmatpush1.msra.mxu0 %v5374
        %5376 = vmatprep.subr.mxu0 0.0
        %v5377 = vand.u32 %v4684, 4294901760
        %v5378 = vsub.f32 %v4684, %v5377
        %v5379 = vand.u32 %v5378, 4294901760
        %v5380 = vsub.f32 %v5378, %v5379
        %v5381 = vand.u32 %v5380, 4294901760
        %5382 = vmatpush1.msra.mxu0 %v5381
        %5383 = vmatprep.subr.mxu0 0.0
        %v5384 = vand.u32 %v4683, 4294901760
        %v5385 = vsub.f32 %v4683, %v5384
        %v5386 = vand.u32 %v5385, 4294901760
        %v5387 = vsub.f32 %v5385, %v5386
        %v5388 = vand.u32 %v5387, 4294901760
        %5389 = vmatpush1.msra.mxu0 %v5388
        %5390 = vmatprep.subr.mxu0 0.0
        %v5391 = vand.u32 %v4682, 4294901760
        %v5392 = vsub.f32 %v4682, %v5391
        %v5393 = vand.u32 %v5392, 4294901760
        %v5394 = vsub.f32 %v5392, %v5393
        %v5395 = vand.u32 %v5394, 4294901760
        %5396 = vmatpush1.msra.mxu0 %v5395
        %5397 = vmatprep.subr.mxu0 0.0
        %v5398 = vand.u32 %v4681, 4294901760
        %v5399 = vsub.f32 %v4681, %v5398
        %v5400 = vand.u32 %v5399, 4294901760
        %v5401 = vsub.f32 %v5399, %v5400
        %v5402 = vand.u32 %v5401, 4294901760
        %5403 = vmatpush1.msra.mxu0 %v5402
        %5404 = vmatprep.subr.mxu0 0.0
        %v5405 = vand.u32 %v4866, 4294901760
        %v5406 = vsub.f32 %v4866, %v5405
        %v5407 = vand.u32 %v5406, 4294901760
        %v5408 = vsub.f32 %v5406, %v5407
        %v5409 = vand.u32 %v5408, 4294901760
        %5410 = vmatpush2.msra.mxu0 %v5409
        %5411 = vmatprep.subr.mxu0 0.0
        %v5412 = vand.u32 %v4865, 4294901760
        %v5413 = vsub.f32 %v4865, %v5412
        %v5414 = vand.u32 %v5413, 4294901760
        %v5415 = vsub.f32 %v5413, %v5414
        %v5416 = vand.u32 %v5415, 4294901760
        %5417 = vmatpush2.msra.mxu0 %v5416
        %5418 = vmatprep.subr.mxu0 0.0
        %v5419 = vand.u32 %v4864, 4294901760
        %v5420 = vsub.f32 %v4864, %v5419
        %v5421 = vand.u32 %v5420, 4294901760
        %v5422 = vsub.f32 %v5420, %v5421
        %v5423 = vand.u32 %v5422, 4294901760
        %5424 = vmatpush2.msra.mxu0 %v5423
        %5425 = vmatprep.subr.mxu0 0.0
        %v5426 = vand.u32 %v4863, 4294901760
        %v5427 = vsub.f32 %v4863, %v5426
        %v5428 = vand.u32 %v5427, 4294901760
        %v5429 = vsub.f32 %v5427, %v5428
        %v5430 = vand.u32 %v5429, 4294901760
        %5431 = vmatpush2.msra.mxu0 %v5430
        %5432 = vmatprep.subr.mxu0 0.0
        %v5433 = vand.u32 %v4837, 4294901760
        %v5434 = vsub.f32 %v4837, %v5433
        %v5435 = vand.u32 %v5434, 4294901760
        %v5436 = vsub.f32 %v5434, %v5435
        %v5437 = vand.u32 %v5436, 4294901760
        %5438 = vmatpush2.msra.mxu0 %v5437
        %5439 = vmatprep.subr.mxu0 0.0
        %v5440 = vand.u32 %v4836, 4294901760
        %v5441 = vsub.f32 %v4836, %v5440
        %v5442 = vand.u32 %v5441, 4294901760
        %v5443 = vsub.f32 %v5441, %v5442
        %v5444 = vand.u32 %v5443, 4294901760
        %5445 = vmatpush2.msra.mxu0 %v5444
        %5446 = vmatprep.subr.mxu0 0.0
        %v5447 = vand.u32 %v4835, 4294901760
        %v5448 = vsub.f32 %v4835, %v5447
        %v5449 = vand.u32 %v5448, 4294901760
        %v5450 = vsub.f32 %v5448, %v5449
        %v5451 = vand.u32 %v5450, 4294901760
        %5452 = vmatpush2.msra.mxu0 %v5451
        %5453 = vmatprep.subr.mxu0 0.0
        %v5454 = vand.u32 %v4834, 4294901760
        %v5455 = vsub.f32 %v4834, %v5454
        %v5456 = vand.u32 %v5455, 4294901760
        %v5457 = vsub.f32 %v5455, %v5456
        %v5458 = vand.u32 %v5457, 4294901760
        %5459 = vmatpush2.msra.mxu0 %v5458
        %5460 = vmatprep.subr.mxu0 0.0
        %v5461 = vand.u32 %v4809, 4294901760
        %v5462 = vsub.f32 %v4809, %v5461
        %v5463 = vand.u32 %v5462, 4294901760
        %v5464 = vsub.f32 %v5462, %v5463
        %v5465 = vand.u32 %v5464, 4294901760
        %5466 = vmatpush2.msra.mxu0 %v5465
        %5467 = vmatprep.subr.mxu0 0.0
        %v5468 = vand.u32 %v4808, 4294901760
        %v5469 = vsub.f32 %v4808, %v5468
        %v5470 = vand.u32 %v5469, 4294901760
        %v5471 = vsub.f32 %v5469, %v5470
        %v5472 = vand.u32 %v5471, 4294901760
        %5473 = vmatpush2.msra.mxu0 %v5472
        %5474 = vmatprep.subr.mxu0 0.0
        %v5475 = vand.u32 %v4807, 4294901760
        %v5476 = vsub.f32 %v4807, %v5475
        %v5477 = vand.u32 %v5476, 4294901760
        %v5478 = vsub.f32 %v5476, %v5477
        %v5479 = vand.u32 %v5478, 4294901760
        %5480 = vmatpush2.msra.mxu0 %v5479
        %5481 = vmatprep.subr.mxu0 0.0
        %v5482 = vand.u32 %v4806, 4294901760
        %v5483 = vsub.f32 %v4806, %v5482
        %v5484 = vand.u32 %v5483, 4294901760
        %v5485 = vsub.f32 %v5483, %v5484
        %v5486 = vand.u32 %v5485, 4294901760
        %5487 = vmatpush2.msra.mxu0 %v5486
        %5488 = vmatprep.subr.mxu0 0.0
        %v5489 = vand.u32 %v4797, 4294901760
        %v5490 = vsub.f32 %v4797, %v5489
        %v5491 = vand.u32 %v5490, 4294901760
        %v5492 = vsub.f32 %v5490, %v5491
        %v5493 = vand.u32 %v5492, 4294901760
        %5494 = vmatpush2.msra.mxu0 %v5493
        %5495 = vmatprep.subr.mxu0 0.0
        %v5496 = vand.u32 %v4796, 4294901760
        %v5497 = vsub.f32 %v4796, %v5496
        %v5498 = vand.u32 %v5497, 4294901760
        %v5499 = vsub.f32 %v5497, %v5498
        %v5500 = vand.u32 %v5499, 4294901760
        %5501 = vmatpush2.msra.mxu0 %v5500
        %5502 = vmatprep.subr.mxu0 0.0
        %v5503 = vand.u32 %v4795, 4294901760
        %v5504 = vsub.f32 %v4795, %v5503
        %v5505 = vand.u32 %v5504, 4294901760
        %v5506 = vsub.f32 %v5504, %v5505
        %v5507 = vand.u32 %v5506, 4294901760
        %5508 = vmatpush2.msra.mxu0 %v5507
        %5509 = vmatprep.subr.mxu0 0.0
        %v5510 = vand.u32 %v4794, 4294901760
        %v5511 = vsub.f32 %v4794, %v5510
        %v5512 = vand.u32 %v5511, 4294901760
        %v5513 = vsub.f32 %v5511, %v5512
        %v5514 = vand.u32 %v5513, 4294901760
        %5515 = vmatpush2.msra.mxu0 %v5514
        %v5516 = vand.u32 %v5096, 4294901760
        %5517 = vmatprep.mubr.f32.mxu0 %v5516
        %v5518 = vand.u32 %v5095, 4294901760
        %5519 = vmatmul.mubr.f32.gmra.mxu0 %v5518
        %v5520 = vpop.f32.mrf.mxu0
        %v5521 = vadd.f32 %v5244, %v5520
        %v5522 = vpop.f32.mrf.mxu0
        %v5523 = vand.u32 %v5100, 4294901760
        %5524 = vmatprep.mubr.f32.mxu0 %v5523
        %v5525 = vand.u32 %v5099, 4294901760
        %5526 = vmatmul.mubr.f32.gmra.mxu0 %v5525
        %v5527 = vpop.f32.mrf.mxu0
        %v5528 = vadd.f32 %v5259, %v5527
        %v5529 = vpop.f32.mrf.mxu0
        %v5530 = vand.u32 %v5104, 4294901760
        %5531 = vmatprep.mubr.f32.mxu0 %v5530
        %v5532 = vand.u32 %v5103, 4294901760
        %5533 = vmatmul.mubr.f32.gmra.mxu0 %v5532
        %v5534 = vpop.f32.mrf.mxu0
        %v5535 = vadd.f32 %v5274, %v5534
        %v5536 = vpop.f32.mrf.mxu0
        %v5537 = vand.u32 %v5108, 4294901760
        %5538 = vmatprep.mubr.f32.mxu0 %v5537
        %v5539 = vand.u32 %v5107, 4294901760
        %5540 = vmatmul.mubr.f32.gmra.mxu0 %v5539
        %v5541 = vpop.f32.mrf.mxu0
        %v5542 = vadd.f32 %v5289, %v5541
        %v5543 = vpop.f32.mrf.mxu0
        %5544 = vdwg.mxu0
        %5545 = vmatprep.subr.mxu0 0.0
        %v5546 = vand.u32 %v4769, 4294901760
        %v5547 = vsub.f32 %v4769, %v5546
        %5548 = vmatpush1.msra.mxu0 %v5547
        %5549 = vmatprep.subr.mxu0 0.0
        %v5550 = vand.u32 %v4768, 4294901760
        %v5551 = vsub.f32 %v4768, %v5550
        %5552 = vmatpush1.msra.mxu0 %v5551
        %5553 = vmatprep.subr.mxu0 0.0
        %v5554 = vand.u32 %v4767, 4294901760
        %v5555 = vsub.f32 %v4767, %v5554
        %5556 = vmatpush1.msra.mxu0 %v5555
        %5557 = vmatprep.subr.mxu0 0.0
        %v5558 = vand.u32 %v4766, 4294901760
        %v5559 = vsub.f32 %v4766, %v5558
        %5560 = vmatpush1.msra.mxu0 %v5559
        %5561 = vmatprep.subr.mxu0 0.0
        %v5562 = vand.u32 %v4740, 4294901760
        %v5563 = vsub.f32 %v4740, %v5562
        %5564 = vmatpush1.msra.mxu0 %v5563
        %5565 = vmatprep.subr.mxu0 0.0
        %v5566 = vand.u32 %v4739, 4294901760
        %v5567 = vsub.f32 %v4739, %v5566
        %5568 = vmatpush1.msra.mxu0 %v5567
        %5569 = vmatprep.subr.mxu0 0.0
        %v5570 = vand.u32 %v4738, 4294901760
        %v5571 = vsub.f32 %v4738, %v5570
        %5572 = vmatpush1.msra.mxu0 %v5571
        %5573 = vmatprep.subr.mxu0 0.0
        %v5574 = vand.u32 %v4737, 4294901760
        %v5575 = vsub.f32 %v4737, %v5574
        %5576 = vmatpush1.msra.mxu0 %v5575
        %5577 = vmatprep.subr.mxu0 0.0
        %v5578 = vand.u32 %v4712, 4294901760
        %v5579 = vsub.f32 %v4712, %v5578
        %5580 = vmatpush1.msra.mxu0 %v5579
        %5581 = vmatprep.subr.mxu0 0.0
        %v5582 = vand.u32 %v4711, 4294901760
        %v5583 = vsub.f32 %v4711, %v5582
        %5584 = vmatpush1.msra.mxu0 %v5583
        %5585 = vmatprep.subr.mxu0 0.0
        %v5586 = vand.u32 %v4710, 4294901760
        %v5587 = vsub.f32 %v4710, %v5586
        %5588 = vmatpush1.msra.mxu0 %v5587
        %5589 = vmatprep.subr.mxu0 0.0
        %v5590 = vand.u32 %v4709, 4294901760
        %v5591 = vsub.f32 %v4709, %v5590
        %5592 = vmatpush1.msra.mxu0 %v5591
        %5593 = vmatprep.subr.mxu0 0.0
        %v5594 = vand.u32 %v4684, 4294901760
        %v5595 = vsub.f32 %v4684, %v5594
        %5596 = vmatpush1.msra.mxu0 %v5595
        %5597 = vmatprep.subr.mxu0 0.0
        %v5598 = vand.u32 %v4683, 4294901760
        %v5599 = vsub.f32 %v4683, %v5598
        %5600 = vmatpush1.msra.mxu0 %v5599
        %5601 = vmatprep.subr.mxu0 0.0
        %v5602 = vand.u32 %v4682, 4294901760
        %v5603 = vsub.f32 %v4682, %v5602
        %5604 = vmatpush1.msra.mxu0 %v5603
        %5605 = vmatprep.subr.mxu0 0.0
        %v5606 = vand.u32 %v4681, 4294901760
        %v5607 = vsub.f32 %v4681, %v5606
        %5608 = vmatpush1.msra.mxu0 %v5607
        %5609 = vmatprep.subr.mxu0 0.0
        %v5610 = vand.u32 %v4866, 4294901760
        %v5611 = vsub.f32 %v4866, %v5610
        %5612 = vmatpush2.msra.mxu0 %v5611
        %5613 = vmatprep.subr.mxu0 0.0
        %v5614 = vand.u32 %v4865, 4294901760
        %v5615 = vsub.f32 %v4865, %v5614
        %5616 = vmatpush2.msra.mxu0 %v5615
        %5617 = vmatprep.subr.mxu0 0.0
        %v5618 = vand.u32 %v4864, 4294901760
        %v5619 = vsub.f32 %v4864, %v5618
        %5620 = vmatpush2.msra.mxu0 %v5619
        %5621 = vmatprep.subr.mxu0 0.0
        %v5622 = vand.u32 %v4863, 4294901760
        %v5623 = vsub.f32 %v4863, %v5622
        %5624 = vmatpush2.msra.mxu0 %v5623
        %5625 = vmatprep.subr.mxu0 0.0
        %v5626 = vand.u32 %v4837, 4294901760
        %v5627 = vsub.f32 %v4837, %v5626
        %5628 = vmatpush2.msra.mxu0 %v5627
        %5629 = vmatprep.subr.mxu0 0.0
        %v5630 = vand.u32 %v4836, 4294901760
        %v5631 = vsub.f32 %v4836, %v5630
        %5632 = vmatpush2.msra.mxu0 %v5631
        %5633 = vmatprep.subr.mxu0 0.0
        %v5634 = vand.u32 %v4835, 4294901760
        %v5635 = vsub.f32 %v4835, %v5634
        %5636 = vmatpush2.msra.mxu0 %v5635
        %5637 = vmatprep.subr.mxu0 0.0
        %v5638 = vand.u32 %v4834, 4294901760
        %v5639 = vsub.f32 %v4834, %v5638
        %5640 = vmatpush2.msra.mxu0 %v5639
        %5641 = vmatprep.subr.mxu0 0.0
        %v5642 = vand.u32 %v4809, 4294901760
        %v5643 = vsub.f32 %v4809, %v5642
        %5644 = vmatpush2.msra.mxu0 %v5643
        %5645 = vmatprep.subr.mxu0 0.0
        %v5646 = vand.u32 %v4808, 4294901760
        %v5647 = vsub.f32 %v4808, %v5646
        %5648 = vmatpush2.msra.mxu0 %v5647
        %5649 = vmatprep.subr.mxu0 0.0
        %v5650 = vand.u32 %v4807, 4294901760
        %v5651 = vsub.f32 %v4807, %v5650
        %5652 = vmatpush2.msra.mxu0 %v5651
        %5653 = vmatprep.subr.mxu0 0.0
        %v5654 = vand.u32 %v4806, 4294901760
        %v5655 = vsub.f32 %v4806, %v5654
        %5656 = vmatpush2.msra.mxu0 %v5655
        %5657 = vmatprep.subr.mxu0 0.0
        %v5658 = vand.u32 %v4797, 4294901760
        %v5659 = vsub.f32 %v4797, %v5658
        %5660 = vmatpush2.msra.mxu0 %v5659
        %5661 = vmatprep.subr.mxu0 0.0
        %v5662 = vand.u32 %v4796, 4294901760
        %v5663 = vsub.f32 %v4796, %v5662
        %5664 = vmatpush2.msra.mxu0 %v5663
        %5665 = vmatprep.subr.mxu0 0.0
        %v5666 = vand.u32 %v4795, 4294901760
        %v5667 = vsub.f32 %v4795, %v5666
        %5668 = vmatpush2.msra.mxu0 %v5667
        %5669 = vmatprep.subr.mxu0 0.0
        %v5670 = vand.u32 %v4794, 4294901760
        %v5671 = vsub.f32 %v4794, %v5670
        %5672 = vmatpush2.msra.mxu0 %v5671
        %v5673 = vand.u32 %v5096, 4294901760
        %v5674 = vsub.f32 %v5096, %v5673
        %5675 = vmatprep.mubr.f32.mxu0 %v5674
        %v5676 = vand.u32 %v5095, 4294901760
        %v5677 = vsub.f32 %v5095, %v5676
        %5678 = vmatmul.mubr.f32.gmra.mxu0 %v5677
        %v5679 = vpop.f32.mrf.mxu0
        %v5680 = vadd.f32 %v5521, %v5679
        %v5681 = vpop.f32.mrf.mxu0
        %v5682 = vand.u32 %v5100, 4294901760
        %v5683 = vsub.f32 %v5100, %v5682
        %5684 = vmatprep.mubr.f32.mxu0 %v5683
        %v5685 = vand.u32 %v5099, 4294901760
        %v5686 = vsub.f32 %v5099, %v5685
        %5687 = vmatmul.mubr.f32.gmra.mxu0 %v5686
        %v5688 = vpop.f32.mrf.mxu0
        %v5689 = vadd.f32 %v5528, %v5688
        %v5690 = vpop.f32.mrf.mxu0
        %v5691 = vand.u32 %v5104, 4294901760
        %v5692 = vsub.f32 %v5104, %v5691
        %5693 = vmatprep.mubr.f32.mxu0 %v5692
        %v5694 = vand.u32 %v5103, 4294901760
        %v5695 = vsub.f32 %v5103, %v5694
        %5696 = vmatmul.mubr.f32.gmra.mxu0 %v5695
        %v5697 = vpop.f32.mrf.mxu0
        %v5698 = vadd.f32 %v5535, %v5697
        %v5699 = vpop.f32.mrf.mxu0
        %v5700 = vand.u32 %v5108, 4294901760
        %v5701 = vsub.f32 %v5108, %v5700
        %5702 = vmatprep.mubr.f32.mxu0 %v5701
        %v5703 = vand.u32 %v5107, 4294901760
        %v5704 = vsub.f32 %v5107, %v5703
        %5705 = vmatmul.mubr.f32.gmra.mxu0 %v5704
        %v5706 = vpop.f32.mrf.mxu0
        %v5707 = vadd.f32 %v5542, %v5706
        %v5708 = vpop.f32.mrf.mxu0
        %5709 = vdwg.mxu0
        %5710 = vmatprep.subr.mxu0 0.0
        %v5711 = vand.u32 %v4769, 4294901760
        %5712 = vmatpush1.msra.mxu0 %v5711
        %5713 = vmatprep.subr.mxu0 0.0
        %v5714 = vand.u32 %v4768, 4294901760
        %5715 = vmatpush1.msra.mxu0 %v5714
        %5716 = vmatprep.subr.mxu0 0.0
        %v5717 = vand.u32 %v4767, 4294901760
        %5718 = vmatpush1.msra.mxu0 %v5717
        %5719 = vmatprep.subr.mxu0 0.0
        %v5720 = vand.u32 %v4766, 4294901760
        %5721 = vmatpush1.msra.mxu0 %v5720
        %5722 = vmatprep.subr.mxu0 0.0
        %v5723 = vand.u32 %v4740, 4294901760
        %5724 = vmatpush1.msra.mxu0 %v5723
        %5725 = vmatprep.subr.mxu0 0.0
        %v5726 = vand.u32 %v4739, 4294901760
        %5727 = vmatpush1.msra.mxu0 %v5726
        %5728 = vmatprep.subr.mxu0 0.0
        %v5729 = vand.u32 %v4738, 4294901760
        %5730 = vmatpush1.msra.mxu0 %v5729
        %5731 = vmatprep.subr.mxu0 0.0
        %v5732 = vand.u32 %v4737, 4294901760
        %5733 = vmatpush1.msra.mxu0 %v5732
        %5734 = vmatprep.subr.mxu0 0.0
        %v5735 = vand.u32 %v4712, 4294901760
        %5736 = vmatpush1.msra.mxu0 %v5735
        %5737 = vmatprep.subr.mxu0 0.0
        %v5738 = vand.u32 %v4711, 4294901760
        %5739 = vmatpush1.msra.mxu0 %v5738
        %5740 = vmatprep.subr.mxu0 0.0
        %v5741 = vand.u32 %v4710, 4294901760
        %5742 = vmatpush1.msra.mxu0 %v5741
        %5743 = vmatprep.subr.mxu0 0.0
        %v5744 = vand.u32 %v4709, 4294901760
        %5745 = vmatpush1.msra.mxu0 %v5744
        %5746 = vmatprep.subr.mxu0 0.0
        %v5747 = vand.u32 %v4684, 4294901760
        %5748 = vmatpush1.msra.mxu0 %v5747
        %5749 = vmatprep.subr.mxu0 0.0
        %v5750 = vand.u32 %v4683, 4294901760
        %5751 = vmatpush1.msra.mxu0 %v5750
        %5752 = vmatprep.subr.mxu0 0.0
        %v5753 = vand.u32 %v4682, 4294901760
        %5754 = vmatpush1.msra.mxu0 %v5753
        %5755 = vmatprep.subr.mxu0 0.0
        %v5756 = vand.u32 %v4681, 4294901760
        %5757 = vmatpush1.msra.mxu0 %v5756
        %5758 = vmatprep.subr.mxu0 0.0
        %v5759 = vand.u32 %v4866, 4294901760
        %5760 = vmatpush2.msra.mxu0 %v5759
        %5761 = vmatprep.subr.mxu0 0.0
        %v5762 = vand.u32 %v4865, 4294901760
        %5763 = vmatpush2.msra.mxu0 %v5762
        %5764 = vmatprep.subr.mxu0 0.0
        %v5765 = vand.u32 %v4864, 4294901760
        %5766 = vmatpush2.msra.mxu0 %v5765
        %5767 = vmatprep.subr.mxu0 0.0
        %v5768 = vand.u32 %v4863, 4294901760
        %5769 = vmatpush2.msra.mxu0 %v5768
        %5770 = vmatprep.subr.mxu0 0.0
        %v5771 = vand.u32 %v4837, 4294901760
        %5772 = vmatpush2.msra.mxu0 %v5771
        %5773 = vmatprep.subr.mxu0 0.0
        %v5774 = vand.u32 %v4836, 4294901760
        %5775 = vmatpush2.msra.mxu0 %v5774
        %5776 = vmatprep.subr.mxu0 0.0
        %v5777 = vand.u32 %v4835, 4294901760
        %5778 = vmatpush2.msra.mxu0 %v5777
        %5779 = vmatprep.subr.mxu0 0.0
        %v5780 = vand.u32 %v4834, 4294901760
        %5781 = vmatpush2.msra.mxu0 %v5780
        %5782 = vmatprep.subr.mxu0 0.0
        %v5783 = vand.u32 %v4809, 4294901760
        %5784 = vmatpush2.msra.mxu0 %v5783
        %5785 = vmatprep.subr.mxu0 0.0
        %v5786 = vand.u32 %v4808, 4294901760
        %5787 = vmatpush2.msra.mxu0 %v5786
        %5788 = vmatprep.subr.mxu0 0.0
        %v5789 = vand.u32 %v4807, 4294901760
        %5790 = vmatpush2.msra.mxu0 %v5789
        %5791 = vmatprep.subr.mxu0 0.0
        %v5792 = vand.u32 %v4806, 4294901760
        %5793 = vmatpush2.msra.mxu0 %v5792
        %5794 = vmatprep.subr.mxu0 0.0
        %v5795 = vand.u32 %v4797, 4294901760
        %5796 = vmatpush2.msra.mxu0 %v5795
        %5797 = vmatprep.subr.mxu0 0.0
        %v5798 = vand.u32 %v4796, 4294901760
        %5799 = vmatpush2.msra.mxu0 %v5798
        %5800 = vmatprep.subr.mxu0 0.0
        %v5801 = vand.u32 %v4795, 4294901760
        %5802 = vmatpush2.msra.mxu0 %v5801
        %5803 = vmatprep.subr.mxu0 0.0
        %v5804 = vand.u32 %v4794, 4294901760
        %5805 = vmatpush2.msra.mxu0 %v5804
        %v5806 = vand.u32 %v5096, 4294901760
        %v5807 = vsub.f32 %v5096, %v5806
        %v5808 = vand.u32 %v5807, 4294901760
        %5809 = vmatprep.mubr.f32.mxu0 %v5808
        %v5810 = vand.u32 %v5095, 4294901760
        %v5811 = vsub.f32 %v5095, %v5810
        %v5812 = vand.u32 %v5811, 4294901760
        %5813 = vmatmul.mubr.f32.gmra.mxu0 %v5812
        %v5814 = vpop.f32.mrf.mxu0
        %v5815 = vadd.f32 %v5680, %v5814
        %v5816 = vpop.f32.mrf.mxu0
        %v5817 = vand.u32 %v5100, 4294901760
        %v5818 = vsub.f32 %v5100, %v5817
        %v5819 = vand.u32 %v5818, 4294901760
        %5820 = vmatprep.mubr.f32.mxu0 %v5819
        %v5821 = vand.u32 %v5099, 4294901760
        %v5822 = vsub.f32 %v5099, %v5821
        %v5823 = vand.u32 %v5822, 4294901760
        %5824 = vmatmul.mubr.f32.gmra.mxu0 %v5823
        %v5825 = vpop.f32.mrf.mxu0
        %v5826 = vadd.f32 %v5689, %v5825
        %v5827 = vpop.f32.mrf.mxu0
        %v5828 = vand.u32 %v5104, 4294901760
        %v5829 = vsub.f32 %v5104, %v5828
        %v5830 = vand.u32 %v5829, 4294901760
        %5831 = vmatprep.mubr.f32.mxu0 %v5830
        %v5832 = vand.u32 %v5103, 4294901760
        %v5833 = vsub.f32 %v5103, %v5832
        %v5834 = vand.u32 %v5833, 4294901760
        %5835 = vmatmul.mubr.f32.gmra.mxu0 %v5834
        %v5836 = vpop.f32.mrf.mxu0
        %v5837 = vadd.f32 %v5698, %v5836
        %v5838 = vpop.f32.mrf.mxu0
        %v5839 = vand.u32 %v5108, 4294901760
        %v5840 = vsub.f32 %v5108, %v5839
        %v5841 = vand.u32 %v5840, 4294901760
        %5842 = vmatprep.mubr.f32.mxu0 %v5841
        %v5843 = vand.u32 %v5107, 4294901760
        %v5844 = vsub.f32 %v5107, %v5843
        %v5845 = vand.u32 %v5844, 4294901760
        %5846 = vmatmul.mubr.f32.gmra.mxu0 %v5845
        %v5847 = vpop.f32.mrf.mxu0
        %v5848 = vadd.f32 %v5707, %v5847
        %v5849 = vpop.f32.mrf.mxu0
        %5850 = vdwg.mxu0
        %5851 = vmatprep.subr.mxu0 0.0
        %v5852 = vand.u32 %v4769, 4294901760
        %v5853 = vsub.f32 %v4769, %v5852
        %v5854 = vand.u32 %v5853, 4294901760
        %5855 = vmatpush1.msra.mxu0 %v5854
        %5856 = vmatprep.subr.mxu0 0.0
        %v5857 = vand.u32 %v4768, 4294901760
        %v5858 = vsub.f32 %v4768, %v5857
        %v5859 = vand.u32 %v5858, 4294901760
        %5860 = vmatpush1.msra.mxu0 %v5859
        %5861 = vmatprep.subr.mxu0 0.0
        %v5862 = vand.u32 %v4767, 4294901760
        %v5863 = vsub.f32 %v4767, %v5862
        %v5864 = vand.u32 %v5863, 4294901760
        %5865 = vmatpush1.msra.mxu0 %v5864
        %5866 = vmatprep.subr.mxu0 0.0
        %v5867 = vand.u32 %v4766, 4294901760
        %v5868 = vsub.f32 %v4766, %v5867
        %v5869 = vand.u32 %v5868, 4294901760
        %5870 = vmatpush1.msra.mxu0 %v5869
        %5871 = vmatprep.subr.mxu0 0.0
        %v5872 = vand.u32 %v4740, 4294901760
        %v5873 = vsub.f32 %v4740, %v5872
        %v5874 = vand.u32 %v5873, 4294901760
        %5875 = vmatpush1.msra.mxu0 %v5874
        %5876 = vmatprep.subr.mxu0 0.0
        %v5877 = vand.u32 %v4739, 4294901760
        %v5878 = vsub.f32 %v4739, %v5877
        %v5879 = vand.u32 %v5878, 4294901760
        %5880 = vmatpush1.msra.mxu0 %v5879
        %5881 = vmatprep.subr.mxu0 0.0
        %v5882 = vand.u32 %v4738, 4294901760
        %v5883 = vsub.f32 %v4738, %v5882
        %v5884 = vand.u32 %v5883, 4294901760
        %5885 = vmatpush1.msra.mxu0 %v5884
        %5886 = vmatprep.subr.mxu0 0.0
        %v5887 = vand.u32 %v4737, 4294901760
        %v5888 = vsub.f32 %v4737, %v5887
        %v5889 = vand.u32 %v5888, 4294901760
        %5890 = vmatpush1.msra.mxu0 %v5889
        %5891 = vmatprep.subr.mxu0 0.0
        %v5892 = vand.u32 %v4712, 4294901760
        %v5893 = vsub.f32 %v4712, %v5892
        %v5894 = vand.u32 %v5893, 4294901760
        %5895 = vmatpush1.msra.mxu0 %v5894
        %5896 = vmatprep.subr.mxu0 0.0
        %v5897 = vand.u32 %v4711, 4294901760
        %v5898 = vsub.f32 %v4711, %v5897
        %v5899 = vand.u32 %v5898, 4294901760
        %5900 = vmatpush1.msra.mxu0 %v5899
        %5901 = vmatprep.subr.mxu0 0.0
        %v5902 = vand.u32 %v4710, 4294901760
        %v5903 = vsub.f32 %v4710, %v5902
        %v5904 = vand.u32 %v5903, 4294901760
        %5905 = vmatpush1.msra.mxu0 %v5904
        %5906 = vmatprep.subr.mxu0 0.0
        %v5907 = vand.u32 %v4709, 4294901760
        %v5908 = vsub.f32 %v4709, %v5907
        %v5909 = vand.u32 %v5908, 4294901760
        %5910 = vmatpush1.msra.mxu0 %v5909
        %5911 = vmatprep.subr.mxu0 0.0
        %v5912 = vand.u32 %v4684, 4294901760
        %v5913 = vsub.f32 %v4684, %v5912
        %v5914 = vand.u32 %v5913, 4294901760
        %5915 = vmatpush1.msra.mxu0 %v5914
        %5916 = vmatprep.subr.mxu0 0.0
        %v5917 = vand.u32 %v4683, 4294901760
        %v5918 = vsub.f32 %v4683, %v5917
        %v5919 = vand.u32 %v5918, 4294901760
        %5920 = vmatpush1.msra.mxu0 %v5919
        %5921 = vmatprep.subr.mxu0 0.0
        %v5922 = vand.u32 %v4682, 4294901760
        %v5923 = vsub.f32 %v4682, %v5922
        %v5924 = vand.u32 %v5923, 4294901760
        %5925 = vmatpush1.msra.mxu0 %v5924
        %5926 = vmatprep.subr.mxu0 0.0
        %v5927 = vand.u32 %v4681, 4294901760
        %v5928 = vsub.f32 %v4681, %v5927
        %v5929 = vand.u32 %v5928, 4294901760
        %5930 = vmatpush1.msra.mxu0 %v5929
        %5931 = vmatprep.subr.mxu0 0.0
        %v5932 = vand.u32 %v4866, 4294901760
        %v5933 = vsub.f32 %v4866, %v5932
        %v5934 = vand.u32 %v5933, 4294901760
        %5935 = vmatpush2.msra.mxu0 %v5934
        %5936 = vmatprep.subr.mxu0 0.0
        %v5937 = vand.u32 %v4865, 4294901760
        %v5938 = vsub.f32 %v4865, %v5937
        %v5939 = vand.u32 %v5938, 4294901760
        %5940 = vmatpush2.msra.mxu0 %v5939
        %5941 = vmatprep.subr.mxu0 0.0
        %v5942 = vand.u32 %v4864, 4294901760
        %v5943 = vsub.f32 %v4864, %v5942
        %v5944 = vand.u32 %v5943, 4294901760
        %5945 = vmatpush2.msra.mxu0 %v5944
        %5946 = vmatprep.subr.mxu0 0.0
        %v5947 = vand.u32 %v4863, 4294901760
        %v5948 = vsub.f32 %v4863, %v5947
        %v5949 = vand.u32 %v5948, 4294901760
        %5950 = vmatpush2.msra.mxu0 %v5949
        %5951 = vmatprep.subr.mxu0 0.0
        %v5952 = vand.u32 %v4837, 4294901760
        %v5953 = vsub.f32 %v4837, %v5952
        %v5954 = vand.u32 %v5953, 4294901760
        %5955 = vmatpush2.msra.mxu0 %v5954
        %5956 = vmatprep.subr.mxu0 0.0
        %v5957 = vand.u32 %v4836, 4294901760
        %v5958 = vsub.f32 %v4836, %v5957
        %v5959 = vand.u32 %v5958, 4294901760
        %5960 = vmatpush2.msra.mxu0 %v5959
        %5961 = vmatprep.subr.mxu0 0.0
        %v5962 = vand.u32 %v4835, 4294901760
        %v5963 = vsub.f32 %v4835, %v5962
        %v5964 = vand.u32 %v5963, 4294901760
        %5965 = vmatpush2.msra.mxu0 %v5964
        %5966 = vmatprep.subr.mxu0 0.0
        %v5967 = vand.u32 %v4834, 4294901760
        %v5968 = vsub.f32 %v4834, %v5967
        %v5969 = vand.u32 %v5968, 4294901760
        %5970 = vmatpush2.msra.mxu0 %v5969
        %5971 = vmatprep.subr.mxu0 0.0
        %v5972 = vand.u32 %v4809, 4294901760
        %v5973 = vsub.f32 %v4809, %v5972
        %v5974 = vand.u32 %v5973, 4294901760
        %5975 = vmatpush2.msra.mxu0 %v5974
        %5976 = vmatprep.subr.mxu0 0.0
        %v5977 = vand.u32 %v4808, 4294901760
        %v5978 = vsub.f32 %v4808, %v5977
        %v5979 = vand.u32 %v5978, 4294901760
        %5980 = vmatpush2.msra.mxu0 %v5979
        %5981 = vmatprep.subr.mxu0 0.0
        %v5982 = vand.u32 %v4807, 4294901760
        %v5983 = vsub.f32 %v4807, %v5982
        %v5984 = vand.u32 %v5983, 4294901760
        %5985 = vmatpush2.msra.mxu0 %v5984
        %5986 = vmatprep.subr.mxu0 0.0
        %v5987 = vand.u32 %v4806, 4294901760
        %v5988 = vsub.f32 %v4806, %v5987
        %v5989 = vand.u32 %v5988, 4294901760
        %5990 = vmatpush2.msra.mxu0 %v5989
        %5991 = vmatprep.subr.mxu0 0.0
        %v5992 = vand.u32 %v4797, 4294901760
        %v5993 = vsub.f32 %v4797, %v5992
        %v5994 = vand.u32 %v5993, 4294901760
        %5995 = vmatpush2.msra.mxu0 %v5994
        %5996 = vmatprep.subr.mxu0 0.0
        %v5997 = vand.u32 %v4796, 4294901760
        %v5998 = vsub.f32 %v4796, %v5997
        %v5999 = vand.u32 %v5998, 4294901760
        %6000 = vmatpush2.msra.mxu0 %v5999
        %6001 = vmatprep.subr.mxu0 0.0
        %v6002 = vand.u32 %v4795, 4294901760
        %v6003 = vsub.f32 %v4795, %v6002
        %v6004 = vand.u32 %v6003, 4294901760
        %6005 = vmatpush2.msra.mxu0 %v6004
        %6006 = vmatprep.subr.mxu0 0.0
        %v6007 = vand.u32 %v4794, 4294901760
        %v6008 = vsub.f32 %v4794, %v6007
        %v6009 = vand.u32 %v6008, 4294901760
        %6010 = vmatpush2.msra.mxu0 %v6009
        %v6011 = vand.u32 %v5096, 4294901760
        %6012 = vmatprep.mubr.f32.mxu0 %v6011
        %v6013 = vand.u32 %v5095, 4294901760
        %6014 = vmatmul.mubr.f32.gmra.mxu0 %v6013
        %v6015 = vpop.f32.mrf.mxu0
        %v6016 = vadd.f32 %v5815, %v6015
        %v6017 = vpop.f32.mrf.mxu0
        %v6018 = vand.u32 %v5100, 4294901760
        %6019 = vmatprep.mubr.f32.mxu0 %v6018
        %v6020 = vand.u32 %v5099, 4294901760
        %6021 = vmatmul.mubr.f32.gmra.mxu0 %v6020
        %v6022 = vpop.f32.mrf.mxu0
        %v6023 = vadd.f32 %v5826, %v6022
        %v6024 = vpop.f32.mrf.mxu0
        %v6025 = vand.u32 %v5104, 4294901760
        %6026 = vmatprep.mubr.f32.mxu0 %v6025
        %v6027 = vand.u32 %v5103, 4294901760
        %6028 = vmatmul.mubr.f32.gmra.mxu0 %v6027
        %v6029 = vpop.f32.mrf.mxu0
        %v6030 = vadd.f32 %v5837, %v6029
        %v6031 = vpop.f32.mrf.mxu0
        %v6032 = vand.u32 %v5108, 4294901760
        %6033 = vmatprep.mubr.f32.mxu0 %v6032
        %v6034 = vand.u32 %v5107, 4294901760
        %6035 = vmatmul.mubr.f32.gmra.mxu0 %v6034
        %v6036 = vpop.f32.mrf.mxu0
        %v6037 = vadd.f32 %v5848, %v6036
        %v6038 = vpop.f32.mrf.mxu0
        %6039 = vdwg.mxu0
        %6040 = vmatprep.subr.mxu0 0.0
        %v6041 = vand.u32 %v4769, 4294901760
        %6042 = vmatpush1.msra.mxu0 %v6041
        %6043 = vmatprep.subr.mxu0 0.0
        %v6044 = vand.u32 %v4768, 4294901760
        %6045 = vmatpush1.msra.mxu0 %v6044
        %6046 = vmatprep.subr.mxu0 0.0
        %v6047 = vand.u32 %v4767, 4294901760
        %6048 = vmatpush1.msra.mxu0 %v6047
        %6049 = vmatprep.subr.mxu0 0.0
        %v6050 = vand.u32 %v4766, 4294901760
        %6051 = vmatpush1.msra.mxu0 %v6050
        %6052 = vmatprep.subr.mxu0 0.0
        %v6053 = vand.u32 %v4740, 4294901760
        %6054 = vmatpush1.msra.mxu0 %v6053
        %6055 = vmatprep.subr.mxu0 0.0
        %v6056 = vand.u32 %v4739, 4294901760
        %6057 = vmatpush1.msra.mxu0 %v6056
        %6058 = vmatprep.subr.mxu0 0.0
        %v6059 = vand.u32 %v4738, 4294901760
        %6060 = vmatpush1.msra.mxu0 %v6059
        %6061 = vmatprep.subr.mxu0 0.0
        %v6062 = vand.u32 %v4737, 4294901760
        %6063 = vmatpush1.msra.mxu0 %v6062
        %6064 = vmatprep.subr.mxu0 0.0
        %v6065 = vand.u32 %v4712, 4294901760
        %6066 = vmatpush1.msra.mxu0 %v6065
        %6067 = vmatprep.subr.mxu0 0.0
        %v6068 = vand.u32 %v4711, 4294901760
        %6069 = vmatpush1.msra.mxu0 %v6068
        %6070 = vmatprep.subr.mxu0 0.0
        %v6071 = vand.u32 %v4710, 4294901760
        %6072 = vmatpush1.msra.mxu0 %v6071
        %6073 = vmatprep.subr.mxu0 0.0
        %v6074 = vand.u32 %v4709, 4294901760
        %6075 = vmatpush1.msra.mxu0 %v6074
        %6076 = vmatprep.subr.mxu0 0.0
        %v6077 = vand.u32 %v4684, 4294901760
        %6078 = vmatpush1.msra.mxu0 %v6077
        %6079 = vmatprep.subr.mxu0 0.0
        %v6080 = vand.u32 %v4683, 4294901760
        %6081 = vmatpush1.msra.mxu0 %v6080
        %6082 = vmatprep.subr.mxu0 0.0
        %v6083 = vand.u32 %v4682, 4294901760
        %6084 = vmatpush1.msra.mxu0 %v6083
        %6085 = vmatprep.subr.mxu0 0.0
        %v6086 = vand.u32 %v4681, 4294901760
        %6087 = vmatpush1.msra.mxu0 %v6086
        %6088 = vmatprep.subr.mxu0 0.0
        %v6089 = vand.u32 %v4866, 4294901760
        %6090 = vmatpush2.msra.mxu0 %v6089
        %6091 = vmatprep.subr.mxu0 0.0
        %v6092 = vand.u32 %v4865, 4294901760
        %6093 = vmatpush2.msra.mxu0 %v6092
        %6094 = vmatprep.subr.mxu0 0.0
        %v6095 = vand.u32 %v4864, 4294901760
        %6096 = vmatpush2.msra.mxu0 %v6095
        %6097 = vmatprep.subr.mxu0 0.0
        %v6098 = vand.u32 %v4863, 4294901760
        %6099 = vmatpush2.msra.mxu0 %v6098
        %6100 = vmatprep.subr.mxu0 0.0
        %v6101 = vand.u32 %v4837, 4294901760
        %6102 = vmatpush2.msra.mxu0 %v6101
        %6103 = vmatprep.subr.mxu0 0.0
        %v6104 = vand.u32 %v4836, 4294901760
        %6105 = vmatpush2.msra.mxu0 %v6104
        %6106 = vmatprep.subr.mxu0 0.0
        %v6107 = vand.u32 %v4835, 4294901760
        %6108 = vmatpush2.msra.mxu0 %v6107
        %6109 = vmatprep.subr.mxu0 0.0
        %v6110 = vand.u32 %v4834, 4294901760
        %6111 = vmatpush2.msra.mxu0 %v6110
        %6112 = vmatprep.subr.mxu0 0.0
        %v6113 = vand.u32 %v4809, 4294901760
        %6114 = vmatpush2.msra.mxu0 %v6113
        %6115 = vmatprep.subr.mxu0 0.0
        %v6116 = vand.u32 %v4808, 4294901760
        %6117 = vmatpush2.msra.mxu0 %v6116
        %6118 = vmatprep.subr.mxu0 0.0
        %v6119 = vand.u32 %v4807, 4294901760
        %6120 = vmatpush2.msra.mxu0 %v6119
        %6121 = vmatprep.subr.mxu0 0.0
        %v6122 = vand.u32 %v4806, 4294901760
        %6123 = vmatpush2.msra.mxu0 %v6122
        %6124 = vmatprep.subr.mxu0 0.0
        %v6125 = vand.u32 %v4797, 4294901760
        %6126 = vmatpush2.msra.mxu0 %v6125
        %6127 = vmatprep.subr.mxu0 0.0
        %v6128 = vand.u32 %v4796, 4294901760
        %6129 = vmatpush2.msra.mxu0 %v6128
        %6130 = vmatprep.subr.mxu0 0.0
        %v6131 = vand.u32 %v4795, 4294901760
        %6132 = vmatpush2.msra.mxu0 %v6131
        %6133 = vmatprep.subr.mxu0 0.0
        %v6134 = vand.u32 %v4794, 4294901760
        %6135 = vmatpush2.msra.mxu0 %v6134
        %v6136 = vand.u32 %v5096, 4294901760
        %6137 = vmatprep.mubr.f32.mxu0 %v6136
        %v6138 = vand.u32 %v5095, 4294901760
        %6139 = vmatmul.mubr.f32.gmra.mxu0 %v6138
        %v6140 = vpop.f32.mrf.mxu0
        %v6141 = vadd.f32 %v6016, %v6140
        %v6142 = vpop.f32.mrf.mxu0
        %v6143 = vand.u32 %v5100, 4294901760
        %6144 = vmatprep.mubr.f32.mxu0 %v6143
        %v6145 = vand.u32 %v5099, 4294901760
        %6146 = vmatmul.mubr.f32.gmra.mxu0 %v6145
        %v6147 = vpop.f32.mrf.mxu0
        %v6148 = vadd.f32 %v6023, %v6147
        %v6149 = vpop.f32.mrf.mxu0
        %v6150 = vand.u32 %v5104, 4294901760
        %6151 = vmatprep.mubr.f32.mxu0 %v6150
        %v6152 = vand.u32 %v5103, 4294901760
        %6153 = vmatmul.mubr.f32.gmra.mxu0 %v6152
        %v6154 = vpop.f32.mrf.mxu0
        %v6155 = vadd.f32 %v6030, %v6154
        %v6156 = vpop.f32.mrf.mxu0
        %v6157 = vand.u32 %v5108, 4294901760
        %6158 = vmatprep.mubr.f32.mxu0 %v6157
        %v6159 = vand.u32 %v5107, 4294901760
        %6160 = vmatmul.mubr.f32.gmra.mxu0 %v6159
        %v6161 = vpop.f32.mrf.mxu0
        %v6162 = vadd.f32 %v6037, %v6161
        %v6163 = vpop.f32.mrf.mxu0
        %6164 = vdwg.mxu0
        %6165 = vmatprep.subr.mxu0 0.0
        %v6166 = vand.u32 %v4979, 4294901760
        %6167 = vmatpush1.msra.mxu0 %v6166
        %6168 = vmatprep.subr.mxu0 0.0
        %v6169 = vand.u32 %v4978, 4294901760
        %6170 = vmatpush1.msra.mxu0 %v6169
        %6171 = vmatprep.subr.mxu0 0.0
        %v6172 = vand.u32 %v4977, 4294901760
        %6173 = vmatpush1.msra.mxu0 %v6172
        %6174 = vmatprep.subr.mxu0 0.0
        %v6175 = vand.u32 %v4976, 4294901760
        %6176 = vmatpush1.msra.mxu0 %v6175
        %6177 = vmatprep.subr.mxu0 0.0
        %v6178 = vand.u32 %v4950, 4294901760
        %6179 = vmatpush1.msra.mxu0 %v6178
        %6180 = vmatprep.subr.mxu0 0.0
        %v6181 = vand.u32 %v4949, 4294901760
        %6182 = vmatpush1.msra.mxu0 %v6181
        %6183 = vmatprep.subr.mxu0 0.0
        %v6184 = vand.u32 %v4948, 4294901760
        %6185 = vmatpush1.msra.mxu0 %v6184
        %6186 = vmatprep.subr.mxu0 0.0
        %v6187 = vand.u32 %v4947, 4294901760
        %6188 = vmatpush1.msra.mxu0 %v6187
        %6189 = vmatprep.subr.mxu0 0.0
        %v6190 = vand.u32 %v4922, 4294901760
        %6191 = vmatpush1.msra.mxu0 %v6190
        %6192 = vmatprep.subr.mxu0 0.0
        %v6193 = vand.u32 %v4921, 4294901760
        %6194 = vmatpush1.msra.mxu0 %v6193
        %6195 = vmatprep.subr.mxu0 0.0
        %v6196 = vand.u32 %v4920, 4294901760
        %6197 = vmatpush1.msra.mxu0 %v6196
        %6198 = vmatprep.subr.mxu0 0.0
        %v6199 = vand.u32 %v4919, 4294901760
        %6200 = vmatpush1.msra.mxu0 %v6199
        %6201 = vmatprep.subr.mxu0 0.0
        %v6202 = vand.u32 %v4894, 4294901760
        %6203 = vmatpush1.msra.mxu0 %v6202
        %6204 = vmatprep.subr.mxu0 0.0
        %v6205 = vand.u32 %v4893, 4294901760
        %6206 = vmatpush1.msra.mxu0 %v6205
        %6207 = vmatprep.subr.mxu0 0.0
        %v6208 = vand.u32 %v4892, 4294901760
        %6209 = vmatpush1.msra.mxu0 %v6208
        %6210 = vmatprep.subr.mxu0 0.0
        %v6211 = vand.u32 %v4891, 4294901760
        %6212 = vmatpush1.msra.mxu0 %v6211
        %6213 = vmatprep.subr.mxu0 0.0
        %v6214 = vand.u32 %v5094, 4294901760
        %6215 = vmatpush2.msra.mxu0 %v6214
        %6216 = vmatprep.subr.mxu0 0.0
        %v6217 = vand.u32 %v5093, 4294901760
        %6218 = vmatpush2.msra.mxu0 %v6217
        %6219 = vmatprep.subr.mxu0 0.0
        %v6220 = vand.u32 %v5092, 4294901760
        %6221 = vmatpush2.msra.mxu0 %v6220
        %6222 = vmatprep.subr.mxu0 0.0
        %v6223 = vand.u32 %v5091, 4294901760
        %6224 = vmatpush2.msra.mxu0 %v6223
        %6225 = vmatprep.subr.mxu0 0.0
        %v6226 = vand.u32 %v5065, 4294901760
        %6227 = vmatpush2.msra.mxu0 %v6226
        %6228 = vmatprep.subr.mxu0 0.0
        %v6229 = vand.u32 %v5064, 4294901760
        %6230 = vmatpush2.msra.mxu0 %v6229
        %6231 = vmatprep.subr.mxu0 0.0
        %v6232 = vand.u32 %v5063, 4294901760
        %6233 = vmatpush2.msra.mxu0 %v6232
        %6234 = vmatprep.subr.mxu0 0.0
        %v6235 = vand.u32 %v5062, 4294901760
        %6236 = vmatpush2.msra.mxu0 %v6235
        %6237 = vmatprep.subr.mxu0 0.0
        %v6238 = vand.u32 %v5036, 4294901760
        %6239 = vmatpush2.msra.mxu0 %v6238
        %6240 = vmatprep.subr.mxu0 0.0
        %v6241 = vand.u32 %v5035, 4294901760
        %6242 = vmatpush2.msra.mxu0 %v6241
        %6243 = vmatprep.subr.mxu0 0.0
        %v6244 = vand.u32 %v5034, 4294901760
        %6245 = vmatpush2.msra.mxu0 %v6244
        %6246 = vmatprep.subr.mxu0 0.0
        %v6247 = vand.u32 %v5033, 4294901760
        %6248 = vmatpush2.msra.mxu0 %v6247
        %6249 = vmatprep.subr.mxu0 0.0
        %v6250 = vand.u32 %v5008, 4294901760
        %6251 = vmatpush2.msra.mxu0 %v6250
        %6252 = vmatprep.subr.mxu0 0.0
        %v6253 = vand.u32 %v5007, 4294901760
        %6254 = vmatpush2.msra.mxu0 %v6253
        %6255 = vmatprep.subr.mxu0 0.0
        %v6256 = vand.u32 %v5006, 4294901760
        %6257 = vmatpush2.msra.mxu0 %v6256
        %6258 = vmatprep.subr.mxu0 0.0
        %v6259 = vand.u32 %v5005, 4294901760
        %6260 = vmatpush2.msra.mxu0 %v6259
        %v6261 = vand.u32 %v5098, 4294901760
        %v6262 = vsub.f32 %v5098, %v6261
        %v6263 = vand.u32 %v6262, 4294901760
        %v6264 = vsub.f32 %v6262, %v6263
        %v6265 = vand.u32 %v6264, 4294901760
        %6266 = vmatprep.mubr.f32.mxu0 %v6265
        %v6267 = vand.u32 %v5097, 4294901760
        %v6268 = vsub.f32 %v5097, %v6267
        %v6269 = vand.u32 %v6268, 4294901760
        %v6270 = vsub.f32 %v6268, %v6269
        %v6271 = vand.u32 %v6270, 4294901760
        %6272 = vmatmul.mubr.f32.gmra.mxu0 %v6271
        %v6273 = vpop.f32.mrf.mxu0
        %v6274 = vadd.f32 %v6141, %v6273
        %v6275 = vpop.f32.mrf.mxu0
        %v6276 = vand.u32 %v5102, 4294901760
        %v6277 = vsub.f32 %v5102, %v6276
        %v6278 = vand.u32 %v6277, 4294901760
        %v6279 = vsub.f32 %v6277, %v6278
        %v6280 = vand.u32 %v6279, 4294901760
        %6281 = vmatprep.mubr.f32.mxu0 %v6280
        %v6282 = vand.u32 %v5101, 4294901760
        %v6283 = vsub.f32 %v5101, %v6282
        %v6284 = vand.u32 %v6283, 4294901760
        %v6285 = vsub.f32 %v6283, %v6284
        %v6286 = vand.u32 %v6285, 4294901760
        %6287 = vmatmul.mubr.f32.gmra.mxu0 %v6286
        %v6288 = vpop.f32.mrf.mxu0
        %v6289 = vadd.f32 %v6148, %v6288
        %v6290 = vpop.f32.mrf.mxu0
        %v6291 = vand.u32 %v5106, 4294901760
        %v6292 = vsub.f32 %v5106, %v6291
        %v6293 = vand.u32 %v6292, 4294901760
        %v6294 = vsub.f32 %v6292, %v6293
        %v6295 = vand.u32 %v6294, 4294901760
        %6296 = vmatprep.mubr.f32.mxu0 %v6295
        %v6297 = vand.u32 %v5105, 4294901760
        %v6298 = vsub.f32 %v5105, %v6297
        %v6299 = vand.u32 %v6298, 4294901760
        %v6300 = vsub.f32 %v6298, %v6299
        %v6301 = vand.u32 %v6300, 4294901760
        %6302 = vmatmul.mubr.f32.gmra.mxu0 %v6301
        %v6303 = vpop.f32.mrf.mxu0
        %v6304 = vadd.f32 %v6155, %v6303
        %v6305 = vpop.f32.mrf.mxu0
        %v6306 = vand.u32 %v5110, 4294901760
        %v6307 = vsub.f32 %v5110, %v6306
        %v6308 = vand.u32 %v6307, 4294901760
        %v6309 = vsub.f32 %v6307, %v6308
        %v6310 = vand.u32 %v6309, 4294901760
        %6311 = vmatprep.mubr.f32.mxu0 %v6310
        %v6312 = vand.u32 %v5109, 4294901760
        %v6313 = vsub.f32 %v5109, %v6312
        %v6314 = vand.u32 %v6313, 4294901760
        %v6315 = vsub.f32 %v6313, %v6314
        %v6316 = vand.u32 %v6315, 4294901760
        %6317 = vmatmul.mubr.f32.gmra.mxu0 %v6316
        %v6318 = vpop.f32.mrf.mxu0
        %v6319 = vadd.f32 %v6162, %v6318
        %v6320 = vpop.f32.mrf.mxu0
        %6321 = vdwg.mxu0
        %6322 = vmatprep.subr.mxu0 0.0
        %v6323 = vand.u32 %v4979, 4294901760
        %v6324 = vsub.f32 %v4979, %v6323
        %v6325 = vand.u32 %v6324, 4294901760
        %v6326 = vsub.f32 %v6324, %v6325
        %v6327 = vand.u32 %v6326, 4294901760
        %6328 = vmatpush1.msra.mxu0 %v6327
        %6329 = vmatprep.subr.mxu0 0.0
        %v6330 = vand.u32 %v4978, 4294901760
        %v6331 = vsub.f32 %v4978, %v6330
        %v6332 = vand.u32 %v6331, 4294901760
        %v6333 = vsub.f32 %v6331, %v6332
        %v6334 = vand.u32 %v6333, 4294901760
        %6335 = vmatpush1.msra.mxu0 %v6334
        %6336 = vmatprep.subr.mxu0 0.0
        %v6337 = vand.u32 %v4977, 4294901760
        %v6338 = vsub.f32 %v4977, %v6337
        %v6339 = vand.u32 %v6338, 4294901760
        %v6340 = vsub.f32 %v6338, %v6339
        %v6341 = vand.u32 %v6340, 4294901760
        %6342 = vmatpush1.msra.mxu0 %v6341
        %6343 = vmatprep.subr.mxu0 0.0
        %v6344 = vand.u32 %v4976, 4294901760
        %v6345 = vsub.f32 %v4976, %v6344
        %v6346 = vand.u32 %v6345, 4294901760
        %v6347 = vsub.f32 %v6345, %v6346
        %v6348 = vand.u32 %v6347, 4294901760
        %6349 = vmatpush1.msra.mxu0 %v6348
        %6350 = vmatprep.subr.mxu0 0.0
        %v6351 = vand.u32 %v4950, 4294901760
        %v6352 = vsub.f32 %v4950, %v6351
        %v6353 = vand.u32 %v6352, 4294901760
        %v6354 = vsub.f32 %v6352, %v6353
        %v6355 = vand.u32 %v6354, 4294901760
        %6356 = vmatpush1.msra.mxu0 %v6355
        %6357 = vmatprep.subr.mxu0 0.0
        %v6358 = vand.u32 %v4949, 4294901760
        %v6359 = vsub.f32 %v4949, %v6358
        %v6360 = vand.u32 %v6359, 4294901760
        %v6361 = vsub.f32 %v6359, %v6360
        %v6362 = vand.u32 %v6361, 4294901760
        %6363 = vmatpush1.msra.mxu0 %v6362
        %6364 = vmatprep.subr.mxu0 0.0
        %v6365 = vand.u32 %v4948, 4294901760
        %v6366 = vsub.f32 %v4948, %v6365
        %v6367 = vand.u32 %v6366, 4294901760
        %v6368 = vsub.f32 %v6366, %v6367
        %v6369 = vand.u32 %v6368, 4294901760
        %6370 = vmatpush1.msra.mxu0 %v6369
        %6371 = vmatprep.subr.mxu0 0.0
        %v6372 = vand.u32 %v4947, 4294901760
        %v6373 = vsub.f32 %v4947, %v6372
        %v6374 = vand.u32 %v6373, 4294901760
        %v6375 = vsub.f32 %v6373, %v6374
        %v6376 = vand.u32 %v6375, 4294901760
        %6377 = vmatpush1.msra.mxu0 %v6376
        %6378 = vmatprep.subr.mxu0 0.0
        %v6379 = vand.u32 %v4922, 4294901760
        %v6380 = vsub.f32 %v4922, %v6379
        %v6381 = vand.u32 %v6380, 4294901760
        %v6382 = vsub.f32 %v6380, %v6381
        %v6383 = vand.u32 %v6382, 4294901760
        %6384 = vmatpush1.msra.mxu0 %v6383
        %6385 = vmatprep.subr.mxu0 0.0
        %v6386 = vand.u32 %v4921, 4294901760
        %v6387 = vsub.f32 %v4921, %v6386
        %v6388 = vand.u32 %v6387, 4294901760
        %v6389 = vsub.f32 %v6387, %v6388
        %v6390 = vand.u32 %v6389, 4294901760
        %6391 = vmatpush1.msra.mxu0 %v6390
        %6392 = vmatprep.subr.mxu0 0.0
        %v6393 = vand.u32 %v4920, 4294901760
        %v6394 = vsub.f32 %v4920, %v6393
        %v6395 = vand.u32 %v6394, 4294901760
        %v6396 = vsub.f32 %v6394, %v6395
        %v6397 = vand.u32 %v6396, 4294901760
        %6398 = vmatpush1.msra.mxu0 %v6397
        %6399 = vmatprep.subr.mxu0 0.0
        %v6400 = vand.u32 %v4919, 4294901760
        %v6401 = vsub.f32 %v4919, %v6400
        %v6402 = vand.u32 %v6401, 4294901760
        %v6403 = vsub.f32 %v6401, %v6402
        %v6404 = vand.u32 %v6403, 4294901760
        %6405 = vmatpush1.msra.mxu0 %v6404
        %6406 = vmatprep.subr.mxu0 0.0
        %v6407 = vand.u32 %v4894, 4294901760
        %v6408 = vsub.f32 %v4894, %v6407
        %v6409 = vand.u32 %v6408, 4294901760
        %v6410 = vsub.f32 %v6408, %v6409
        %v6411 = vand.u32 %v6410, 4294901760
        %6412 = vmatpush1.msra.mxu0 %v6411
        %6413 = vmatprep.subr.mxu0 0.0
        %v6414 = vand.u32 %v4893, 4294901760
        %v6415 = vsub.f32 %v4893, %v6414
        %v6416 = vand.u32 %v6415, 4294901760
        %v6417 = vsub.f32 %v6415, %v6416
        %v6418 = vand.u32 %v6417, 4294901760
        %6419 = vmatpush1.msra.mxu0 %v6418
        %6420 = vmatprep.subr.mxu0 0.0
        %v6421 = vand.u32 %v4892, 4294901760
        %v6422 = vsub.f32 %v4892, %v6421
        %v6423 = vand.u32 %v6422, 4294901760
        %v6424 = vsub.f32 %v6422, %v6423
        %v6425 = vand.u32 %v6424, 4294901760
        %6426 = vmatpush1.msra.mxu0 %v6425
        %6427 = vmatprep.subr.mxu0 0.0
        %v6428 = vand.u32 %v4891, 4294901760
        %v6429 = vsub.f32 %v4891, %v6428
        %v6430 = vand.u32 %v6429, 4294901760
        %v6431 = vsub.f32 %v6429, %v6430
        %v6432 = vand.u32 %v6431, 4294901760
        %6433 = vmatpush1.msra.mxu0 %v6432
        %6434 = vmatprep.subr.mxu0 0.0
        %v6435 = vand.u32 %v5094, 4294901760
        %v6436 = vsub.f32 %v5094, %v6435
        %v6437 = vand.u32 %v6436, 4294901760
        %v6438 = vsub.f32 %v6436, %v6437
        %v6439 = vand.u32 %v6438, 4294901760
        %6440 = vmatpush2.msra.mxu0 %v6439
        %6441 = vmatprep.subr.mxu0 0.0
        %v6442 = vand.u32 %v5093, 4294901760
        %v6443 = vsub.f32 %v5093, %v6442
        %v6444 = vand.u32 %v6443, 4294901760
        %v6445 = vsub.f32 %v6443, %v6444
        %v6446 = vand.u32 %v6445, 4294901760
        %6447 = vmatpush2.msra.mxu0 %v6446
        %6448 = vmatprep.subr.mxu0 0.0
        %v6449 = vand.u32 %v5092, 4294901760
        %v6450 = vsub.f32 %v5092, %v6449
        %v6451 = vand.u32 %v6450, 4294901760
        %v6452 = vsub.f32 %v6450, %v6451
        %v6453 = vand.u32 %v6452, 4294901760
        %6454 = vmatpush2.msra.mxu0 %v6453
        %6455 = vmatprep.subr.mxu0 0.0
        %v6456 = vand.u32 %v5091, 4294901760
        %v6457 = vsub.f32 %v5091, %v6456
        %v6458 = vand.u32 %v6457, 4294901760
        %v6459 = vsub.f32 %v6457, %v6458
        %v6460 = vand.u32 %v6459, 4294901760
        %6461 = vmatpush2.msra.mxu0 %v6460
        %6462 = vmatprep.subr.mxu0 0.0
        %v6463 = vand.u32 %v5065, 4294901760
        %v6464 = vsub.f32 %v5065, %v6463
        %v6465 = vand.u32 %v6464, 4294901760
        %v6466 = vsub.f32 %v6464, %v6465
        %v6467 = vand.u32 %v6466, 4294901760
        %6468 = vmatpush2.msra.mxu0 %v6467
        %6469 = vmatprep.subr.mxu0 0.0
        %v6470 = vand.u32 %v5064, 4294901760
        %v6471 = vsub.f32 %v5064, %v6470
        %v6472 = vand.u32 %v6471, 4294901760
        %v6473 = vsub.f32 %v6471, %v6472
        %v6474 = vand.u32 %v6473, 4294901760
        %6475 = vmatpush2.msra.mxu0 %v6474
        %6476 = vmatprep.subr.mxu0 0.0
        %v6477 = vand.u32 %v5063, 4294901760
        %v6478 = vsub.f32 %v5063, %v6477
        %v6479 = vand.u32 %v6478, 4294901760
        %v6480 = vsub.f32 %v6478, %v6479
        %v6481 = vand.u32 %v6480, 4294901760
        %6482 = vmatpush2.msra.mxu0 %v6481
        %6483 = vmatprep.subr.mxu0 0.0
        %v6484 = vand.u32 %v5062, 4294901760
        %v6485 = vsub.f32 %v5062, %v6484
        %v6486 = vand.u32 %v6485, 4294901760
        %v6487 = vsub.f32 %v6485, %v6486
        %v6488 = vand.u32 %v6487, 4294901760
        %6489 = vmatpush2.msra.mxu0 %v6488
        %6490 = vmatprep.subr.mxu0 0.0
        %v6491 = vand.u32 %v5036, 4294901760
        %v6492 = vsub.f32 %v5036, %v6491
        %v6493 = vand.u32 %v6492, 4294901760
        %v6494 = vsub.f32 %v6492, %v6493
        %v6495 = vand.u32 %v6494, 4294901760
        %6496 = vmatpush2.msra.mxu0 %v6495
        %6497 = vmatprep.subr.mxu0 0.0
        %v6498 = vand.u32 %v5035, 4294901760
        %v6499 = vsub.f32 %v5035, %v6498
        %v6500 = vand.u32 %v6499, 4294901760
        %v6501 = vsub.f32 %v6499, %v6500
        %v6502 = vand.u32 %v6501, 4294901760
        %6503 = vmatpush2.msra.mxu0 %v6502
        %6504 = vmatprep.subr.mxu0 0.0
        %v6505 = vand.u32 %v5034, 4294901760
        %v6506 = vsub.f32 %v5034, %v6505
        %v6507 = vand.u32 %v6506, 4294901760
        %v6508 = vsub.f32 %v6506, %v6507
        %v6509 = vand.u32 %v6508, 4294901760
        %6510 = vmatpush2.msra.mxu0 %v6509
        %6511 = vmatprep.subr.mxu0 0.0
        %v6512 = vand.u32 %v5033, 4294901760
        %v6513 = vsub.f32 %v5033, %v6512
        %v6514 = vand.u32 %v6513, 4294901760
        %v6515 = vsub.f32 %v6513, %v6514
        %v6516 = vand.u32 %v6515, 4294901760
        %6517 = vmatpush2.msra.mxu0 %v6516
        %6518 = vmatprep.subr.mxu0 0.0
        %v6519 = vand.u32 %v5008, 4294901760
        %v6520 = vsub.f32 %v5008, %v6519
        %v6521 = vand.u32 %v6520, 4294901760
        %v6522 = vsub.f32 %v6520, %v6521
        %v6523 = vand.u32 %v6522, 4294901760
        %6524 = vmatpush2.msra.mxu0 %v6523
        %6525 = vmatprep.subr.mxu0 0.0
        %v6526 = vand.u32 %v5007, 4294901760
        %v6527 = vsub.f32 %v5007, %v6526
        %v6528 = vand.u32 %v6527, 4294901760
        %v6529 = vsub.f32 %v6527, %v6528
        %v6530 = vand.u32 %v6529, 4294901760
        %6531 = vmatpush2.msra.mxu0 %v6530
        %6532 = vmatprep.subr.mxu0 0.0
        %v6533 = vand.u32 %v5006, 4294901760
        %v6534 = vsub.f32 %v5006, %v6533
        %v6535 = vand.u32 %v6534, 4294901760
        %v6536 = vsub.f32 %v6534, %v6535
        %v6537 = vand.u32 %v6536, 4294901760
        %6538 = vmatpush2.msra.mxu0 %v6537
        %6539 = vmatprep.subr.mxu0 0.0
        %v6540 = vand.u32 %v5005, 4294901760
        %v6541 = vsub.f32 %v5005, %v6540
        %v6542 = vand.u32 %v6541, 4294901760
        %v6543 = vsub.f32 %v6541, %v6542
        %v6544 = vand.u32 %v6543, 4294901760
        %6545 = vmatpush2.msra.mxu0 %v6544
        %v6546 = vand.u32 %v5098, 4294901760
        %6547 = vmatprep.mubr.f32.mxu0 %v6546
        %v6548 = vand.u32 %v5097, 4294901760
        %6549 = vmatmul.mubr.f32.gmra.mxu0 %v6548
        %v6550 = vpop.f32.mrf.mxu0
        %v6551 = vadd.f32 %v6274, %v6550
        %v6552 = vpop.f32.mrf.mxu0
        %v6553 = vand.u32 %v5102, 4294901760
        %6554 = vmatprep.mubr.f32.mxu0 %v6553
        %v6555 = vand.u32 %v5101, 4294901760
        %6556 = vmatmul.mubr.f32.gmra.mxu0 %v6555
        %v6557 = vpop.f32.mrf.mxu0
        %v6558 = vadd.f32 %v6289, %v6557
        %v6559 = vpop.f32.mrf.mxu0
        %v6560 = vand.u32 %v5106, 4294901760
        %6561 = vmatprep.mubr.f32.mxu0 %v6560
        %v6562 = vand.u32 %v5105, 4294901760
        %6563 = vmatmul.mubr.f32.gmra.mxu0 %v6562
        %v6564 = vpop.f32.mrf.mxu0
        %v6565 = vadd.f32 %v6304, %v6564
        %v6566 = vpop.f32.mrf.mxu0
        %v6567 = vand.u32 %v5110, 4294901760
        %6568 = vmatprep.mubr.f32.mxu0 %v6567
        %v6569 = vand.u32 %v5109, 4294901760
        %6570 = vmatmul.mubr.f32.gmra.mxu0 %v6569
        %v6571 = vpop.f32.mrf.mxu0
        %v6572 = vadd.f32 %v6319, %v6571
        %v6573 = vpop.f32.mrf.mxu0
        %6574 = vdwg.mxu0
        %6575 = vmatprep.subr.mxu0 0.0
        %v6576 = vand.u32 %v4979, 4294901760
        %v6577 = vsub.f32 %v4979, %v6576
        %6578 = vmatpush1.msra.mxu0 %v6577
        %6579 = vmatprep.subr.mxu0 0.0
        %v6580 = vand.u32 %v4978, 4294901760
        %v6581 = vsub.f32 %v4978, %v6580
        %6582 = vmatpush1.msra.mxu0 %v6581
        %6583 = vmatprep.subr.mxu0 0.0
        %v6584 = vand.u32 %v4977, 4294901760
        %v6585 = vsub.f32 %v4977, %v6584
        %6586 = vmatpush1.msra.mxu0 %v6585
        %6587 = vmatprep.subr.mxu0 0.0
        %v6588 = vand.u32 %v4976, 4294901760
        %v6589 = vsub.f32 %v4976, %v6588
        %6590 = vmatpush1.msra.mxu0 %v6589
        %6591 = vmatprep.subr.mxu0 0.0
        %v6592 = vand.u32 %v4950, 4294901760
        %v6593 = vsub.f32 %v4950, %v6592
        %6594 = vmatpush1.msra.mxu0 %v6593
        %6595 = vmatprep.subr.mxu0 0.0
        %v6596 = vand.u32 %v4949, 4294901760
        %v6597 = vsub.f32 %v4949, %v6596
        %6598 = vmatpush1.msra.mxu0 %v6597
        %6599 = vmatprep.subr.mxu0 0.0
        %v6600 = vand.u32 %v4948, 4294901760
        %v6601 = vsub.f32 %v4948, %v6600
        %6602 = vmatpush1.msra.mxu0 %v6601
        %6603 = vmatprep.subr.mxu0 0.0
        %v6604 = vand.u32 %v4947, 4294901760
        %v6605 = vsub.f32 %v4947, %v6604
        %6606 = vmatpush1.msra.mxu0 %v6605
        %6607 = vmatprep.subr.mxu0 0.0
        %v6608 = vand.u32 %v4922, 4294901760
        %v6609 = vsub.f32 %v4922, %v6608
        %6610 = vmatpush1.msra.mxu0 %v6609
        %6611 = vmatprep.subr.mxu0 0.0
        %v6612 = vand.u32 %v4921, 4294901760
        %v6613 = vsub.f32 %v4921, %v6612
        %6614 = vmatpush1.msra.mxu0 %v6613
        %6615 = vmatprep.subr.mxu0 0.0
        %v6616 = vand.u32 %v4920, 4294901760
        %v6617 = vsub.f32 %v4920, %v6616
        %6618 = vmatpush1.msra.mxu0 %v6617
        %6619 = vmatprep.subr.mxu0 0.0
        %v6620 = vand.u32 %v4919, 4294901760
        %v6621 = vsub.f32 %v4919, %v6620
        %6622 = vmatpush1.msra.mxu0 %v6621
        %6623 = vmatprep.subr.mxu0 0.0
        %v6624 = vand.u32 %v4894, 4294901760
        %v6625 = vsub.f32 %v4894, %v6624
        %6626 = vmatpush1.msra.mxu0 %v6625
        %6627 = vmatprep.subr.mxu0 0.0
        %v6628 = vand.u32 %v4893, 4294901760
        %v6629 = vsub.f32 %v4893, %v6628
        %6630 = vmatpush1.msra.mxu0 %v6629
        %6631 = vmatprep.subr.mxu0 0.0
        %v6632 = vand.u32 %v4892, 4294901760
        %v6633 = vsub.f32 %v4892, %v6632
        %6634 = vmatpush1.msra.mxu0 %v6633
        %6635 = vmatprep.subr.mxu0 0.0
        %v6636 = vand.u32 %v4891, 4294901760
        %v6637 = vsub.f32 %v4891, %v6636
        %6638 = vmatpush1.msra.mxu0 %v6637
        %6639 = vmatprep.subr.mxu0 0.0
        %v6640 = vand.u32 %v5094, 4294901760
        %v6641 = vsub.f32 %v5094, %v6640
        %6642 = vmatpush2.msra.mxu0 %v6641
        %6643 = vmatprep.subr.mxu0 0.0
        %v6644 = vand.u32 %v5093, 4294901760
        %v6645 = vsub.f32 %v5093, %v6644
        %6646 = vmatpush2.msra.mxu0 %v6645
        %6647 = vmatprep.subr.mxu0 0.0
        %v6648 = vand.u32 %v5092, 4294901760
        %v6649 = vsub.f32 %v5092, %v6648
        %6650 = vmatpush2.msra.mxu0 %v6649
        %6651 = vmatprep.subr.mxu0 0.0
        %v6652 = vand.u32 %v5091, 4294901760
        %v6653 = vsub.f32 %v5091, %v6652
        %6654 = vmatpush2.msra.mxu0 %v6653
        %6655 = vmatprep.subr.mxu0 0.0
        %v6656 = vand.u32 %v5065, 4294901760
        %v6657 = vsub.f32 %v5065, %v6656
        %6658 = vmatpush2.msra.mxu0 %v6657
        %6659 = vmatprep.subr.mxu0 0.0
        %v6660 = vand.u32 %v5064, 4294901760
        %v6661 = vsub.f32 %v5064, %v6660
        %6662 = vmatpush2.msra.mxu0 %v6661
        %6663 = vmatprep.subr.mxu0 0.0
        %v6664 = vand.u32 %v5063, 4294901760
        %v6665 = vsub.f32 %v5063, %v6664
        %6666 = vmatpush2.msra.mxu0 %v6665
        %6667 = vmatprep.subr.mxu0 0.0
        %v6668 = vand.u32 %v5062, 4294901760
        %v6669 = vsub.f32 %v5062, %v6668
        %6670 = vmatpush2.msra.mxu0 %v6669
        %6671 = vmatprep.subr.mxu0 0.0
        %v6672 = vand.u32 %v5036, 4294901760
        %v6673 = vsub.f32 %v5036, %v6672
        %6674 = vmatpush2.msra.mxu0 %v6673
        %6675 = vmatprep.subr.mxu0 0.0
        %v6676 = vand.u32 %v5035, 4294901760
        %v6677 = vsub.f32 %v5035, %v6676
        %6678 = vmatpush2.msra.mxu0 %v6677
        %6679 = vmatprep.subr.mxu0 0.0
        %v6680 = vand.u32 %v5034, 4294901760
        %v6681 = vsub.f32 %v5034, %v6680
        %6682 = vmatpush2.msra.mxu0 %v6681
        %6683 = vmatprep.subr.mxu0 0.0
        %v6684 = vand.u32 %v5033, 4294901760
        %v6685 = vsub.f32 %v5033, %v6684
        %6686 = vmatpush2.msra.mxu0 %v6685
        %6687 = vmatprep.subr.mxu0 0.0
        %v6688 = vand.u32 %v5008, 4294901760
        %v6689 = vsub.f32 %v5008, %v6688
        %6690 = vmatpush2.msra.mxu0 %v6689
        %6691 = vmatprep.subr.mxu0 0.0
        %v6692 = vand.u32 %v5007, 4294901760
        %v6693 = vsub.f32 %v5007, %v6692
        %6694 = vmatpush2.msra.mxu0 %v6693
        %6695 = vmatprep.subr.mxu0 0.0
        %v6696 = vand.u32 %v5006, 4294901760
        %v6697 = vsub.f32 %v5006, %v6696
        %6698 = vmatpush2.msra.mxu0 %v6697
        %6699 = vmatprep.subr.mxu0 0.0
        %v6700 = vand.u32 %v5005, 4294901760
        %v6701 = vsub.f32 %v5005, %v6700
        %6702 = vmatpush2.msra.mxu0 %v6701
        %v6703 = vand.u32 %v5098, 4294901760
        %v6704 = vsub.f32 %v5098, %v6703
        %6705 = vmatprep.mubr.f32.mxu0 %v6704
        %v6706 = vand.u32 %v5097, 4294901760
        %v6707 = vsub.f32 %v5097, %v6706
        %6708 = vmatmul.mubr.f32.gmra.mxu0 %v6707
        %v6709 = vpop.f32.mrf.mxu0
        %v6710 = vadd.f32 %v6551, %v6709
        %v6711 = vpop.f32.mrf.mxu0
        %v6712 = vand.u32 %v5102, 4294901760
        %v6713 = vsub.f32 %v5102, %v6712
        %6714 = vmatprep.mubr.f32.mxu0 %v6713
        %v6715 = vand.u32 %v5101, 4294901760
        %v6716 = vsub.f32 %v5101, %v6715
        %6717 = vmatmul.mubr.f32.gmra.mxu0 %v6716
        %v6718 = vpop.f32.mrf.mxu0
        %v6719 = vadd.f32 %v6558, %v6718
        %v6720 = vpop.f32.mrf.mxu0
        %v6721 = vand.u32 %v5106, 4294901760
        %v6722 = vsub.f32 %v5106, %v6721
        %6723 = vmatprep.mubr.f32.mxu0 %v6722
        %v6724 = vand.u32 %v5105, 4294901760
        %v6725 = vsub.f32 %v5105, %v6724
        %6726 = vmatmul.mubr.f32.gmra.mxu0 %v6725
        %v6727 = vpop.f32.mrf.mxu0
        %v6728 = vadd.f32 %v6565, %v6727
        %v6729 = vpop.f32.mrf.mxu0
        %v6730 = vand.u32 %v5110, 4294901760
        %v6731 = vsub.f32 %v5110, %v6730
        %6732 = vmatprep.mubr.f32.mxu0 %v6731
        %v6733 = vand.u32 %v5109, 4294901760
        %v6734 = vsub.f32 %v5109, %v6733
        %6735 = vmatmul.mubr.f32.gmra.mxu0 %v6734
        %v6736 = vpop.f32.mrf.mxu0
        %v6737 = vadd.f32 %v6572, %v6736
        %v6738 = vpop.f32.mrf.mxu0
        %6739 = vdwg.mxu0
        %6740 = vmatprep.subr.mxu0 0.0
        %v6741 = vand.u32 %v4979, 4294901760
        %6742 = vmatpush1.msra.mxu0 %v6741
        %6743 = vmatprep.subr.mxu0 0.0
        %v6744 = vand.u32 %v4978, 4294901760
        %6745 = vmatpush1.msra.mxu0 %v6744
        %6746 = vmatprep.subr.mxu0 0.0
        %v6747 = vand.u32 %v4977, 4294901760
        %6748 = vmatpush1.msra.mxu0 %v6747
        %6749 = vmatprep.subr.mxu0 0.0
        %v6750 = vand.u32 %v4976, 4294901760
        %6751 = vmatpush1.msra.mxu0 %v6750
        %6752 = vmatprep.subr.mxu0 0.0
        %v6753 = vand.u32 %v4950, 4294901760
        %6754 = vmatpush1.msra.mxu0 %v6753
        %6755 = vmatprep.subr.mxu0 0.0
        %v6756 = vand.u32 %v4949, 4294901760
        %6757 = vmatpush1.msra.mxu0 %v6756
        %6758 = vmatprep.subr.mxu0 0.0
        %v6759 = vand.u32 %v4948, 4294901760
        %6760 = vmatpush1.msra.mxu0 %v6759
        %6761 = vmatprep.subr.mxu0 0.0
        %v6762 = vand.u32 %v4947, 4294901760
        %6763 = vmatpush1.msra.mxu0 %v6762
        %6764 = vmatprep.subr.mxu0 0.0
        %v6765 = vand.u32 %v4922, 4294901760
        %6766 = vmatpush1.msra.mxu0 %v6765
        %6767 = vmatprep.subr.mxu0 0.0
        %v6768 = vand.u32 %v4921, 4294901760
        %6769 = vmatpush1.msra.mxu0 %v6768
        %6770 = vmatprep.subr.mxu0 0.0
        %v6771 = vand.u32 %v4920, 4294901760
        %6772 = vmatpush1.msra.mxu0 %v6771
        %6773 = vmatprep.subr.mxu0 0.0
        %v6774 = vand.u32 %v4919, 4294901760
        %6775 = vmatpush1.msra.mxu0 %v6774
        %6776 = vmatprep.subr.mxu0 0.0
        %v6777 = vand.u32 %v4894, 4294901760
        %6778 = vmatpush1.msra.mxu0 %v6777
        %6779 = vmatprep.subr.mxu0 0.0
        %v6780 = vand.u32 %v4893, 4294901760
        %6781 = vmatpush1.msra.mxu0 %v6780
        %6782 = vmatprep.subr.mxu0 0.0
        %v6783 = vand.u32 %v4892, 4294901760
        %6784 = vmatpush1.msra.mxu0 %v6783
        %6785 = vmatprep.subr.mxu0 0.0
        %v6786 = vand.u32 %v4891, 4294901760
        %6787 = vmatpush1.msra.mxu0 %v6786
        %6788 = vmatprep.subr.mxu0 0.0
        %v6789 = vand.u32 %v5094, 4294901760
        %6790 = vmatpush2.msra.mxu0 %v6789
        %6791 = vmatprep.subr.mxu0 0.0
        %v6792 = vand.u32 %v5093, 4294901760
        %6793 = vmatpush2.msra.mxu0 %v6792
        %6794 = vmatprep.subr.mxu0 0.0
        %v6795 = vand.u32 %v5092, 4294901760
        %6796 = vmatpush2.msra.mxu0 %v6795
        %6797 = vmatprep.subr.mxu0 0.0
        %v6798 = vand.u32 %v5091, 4294901760
        %6799 = vmatpush2.msra.mxu0 %v6798
        %6800 = vmatprep.subr.mxu0 0.0
        %v6801 = vand.u32 %v5065, 4294901760
        %6802 = vmatpush2.msra.mxu0 %v6801
        %6803 = vmatprep.subr.mxu0 0.0
        %v6804 = vand.u32 %v5064, 4294901760
        %6805 = vmatpush2.msra.mxu0 %v6804
        %6806 = vmatprep.subr.mxu0 0.0
        %v6807 = vand.u32 %v5063, 4294901760
        %6808 = vmatpush2.msra.mxu0 %v6807
        %6809 = vmatprep.subr.mxu0 0.0
        %v6810 = vand.u32 %v5062, 4294901760
        %6811 = vmatpush2.msra.mxu0 %v6810
        %6812 = vmatprep.subr.mxu0 0.0
        %v6813 = vand.u32 %v5036, 4294901760
        %6814 = vmatpush2.msra.mxu0 %v6813
        %6815 = vmatprep.subr.mxu0 0.0
        %v6816 = vand.u32 %v5035, 4294901760
        %6817 = vmatpush2.msra.mxu0 %v6816
        %6818 = vmatprep.subr.mxu0 0.0
        %v6819 = vand.u32 %v5034, 4294901760
        %6820 = vmatpush2.msra.mxu0 %v6819
        %6821 = vmatprep.subr.mxu0 0.0
        %v6822 = vand.u32 %v5033, 4294901760
        %6823 = vmatpush2.msra.mxu0 %v6822
        %6824 = vmatprep.subr.mxu0 0.0
        %v6825 = vand.u32 %v5008, 4294901760
        %6826 = vmatpush2.msra.mxu0 %v6825
        %6827 = vmatprep.subr.mxu0 0.0
        %v6828 = vand.u32 %v5007, 4294901760
        %6829 = vmatpush2.msra.mxu0 %v6828
        %6830 = vmatprep.subr.mxu0 0.0
        %v6831 = vand.u32 %v5006, 4294901760
        %6832 = vmatpush2.msra.mxu0 %v6831
        %6833 = vmatprep.subr.mxu0 0.0
        %v6834 = vand.u32 %v5005, 4294901760
        %6835 = vmatpush2.msra.mxu0 %v6834
        %v6836 = vand.u32 %v5098, 4294901760
        %v6837 = vsub.f32 %v5098, %v6836
        %v6838 = vand.u32 %v6837, 4294901760
        %6839 = vmatprep.mubr.f32.mxu0 %v6838
        %v6840 = vand.u32 %v5097, 4294901760
        %v6841 = vsub.f32 %v5097, %v6840
        %v6842 = vand.u32 %v6841, 4294901760
        %6843 = vmatmul.mubr.f32.gmra.mxu0 %v6842
        %v6844 = vpop.f32.mrf.mxu0
        %v6845 = vadd.f32 %v6710, %v6844
        %v6846 = vpop.f32.mrf.mxu0
        %v6847 = vand.u32 %v5102, 4294901760
        %v6848 = vsub.f32 %v5102, %v6847
        %v6849 = vand.u32 %v6848, 4294901760
        %6850 = vmatprep.mubr.f32.mxu0 %v6849
        %v6851 = vand.u32 %v5101, 4294901760
        %v6852 = vsub.f32 %v5101, %v6851
        %v6853 = vand.u32 %v6852, 4294901760
        %6854 = vmatmul.mubr.f32.gmra.mxu0 %v6853
        %v6855 = vpop.f32.mrf.mxu0
        %v6856 = vadd.f32 %v6719, %v6855
        %v6857 = vpop.f32.mrf.mxu0
        %v6858 = vand.u32 %v5106, 4294901760
        %v6859 = vsub.f32 %v5106, %v6858
        %v6860 = vand.u32 %v6859, 4294901760
        %6861 = vmatprep.mubr.f32.mxu0 %v6860
        %v6862 = vand.u32 %v5105, 4294901760
        %v6863 = vsub.f32 %v5105, %v6862
        %v6864 = vand.u32 %v6863, 4294901760
        %6865 = vmatmul.mubr.f32.gmra.mxu0 %v6864
        %v6866 = vpop.f32.mrf.mxu0
        %v6867 = vadd.f32 %v6728, %v6866
        %v6868 = vpop.f32.mrf.mxu0
        %v6869 = vand.u32 %v5110, 4294901760
        %v6870 = vsub.f32 %v5110, %v6869
        %v6871 = vand.u32 %v6870, 4294901760
        %6872 = vmatprep.mubr.f32.mxu0 %v6871
        %v6873 = vand.u32 %v5109, 4294901760
        %v6874 = vsub.f32 %v5109, %v6873
        %v6875 = vand.u32 %v6874, 4294901760
        %6876 = vmatmul.mubr.f32.gmra.mxu0 %v6875
        %v6877 = vpop.f32.mrf.mxu0
        %v6878 = vadd.f32 %v6737, %v6877
        %v6879 = vpop.f32.mrf.mxu0
        %6880 = vdwg.mxu0
        %6881 = vmatprep.subr.mxu0 0.0
        %v6882 = vand.u32 %v4979, 4294901760
        %v6883 = vsub.f32 %v4979, %v6882
        %v6884 = vand.u32 %v6883, 4294901760
        %6885 = vmatpush1.msra.mxu0 %v6884
        %6886 = vmatprep.subr.mxu0 0.0
        %v6887 = vand.u32 %v4978, 4294901760
        %v6888 = vsub.f32 %v4978, %v6887
        %v6889 = vand.u32 %v6888, 4294901760
        %6890 = vmatpush1.msra.mxu0 %v6889
        %6891 = vmatprep.subr.mxu0 0.0
        %v6892 = vand.u32 %v4977, 4294901760
        %v6893 = vsub.f32 %v4977, %v6892
        %v6894 = vand.u32 %v6893, 4294901760
        %6895 = vmatpush1.msra.mxu0 %v6894
        %6896 = vmatprep.subr.mxu0 0.0
        %v6897 = vand.u32 %v4976, 4294901760
        %v6898 = vsub.f32 %v4976, %v6897
        %v6899 = vand.u32 %v6898, 4294901760
        %6900 = vmatpush1.msra.mxu0 %v6899
        %6901 = vmatprep.subr.mxu0 0.0
        %v6902 = vand.u32 %v4950, 4294901760
        %v6903 = vsub.f32 %v4950, %v6902
        %v6904 = vand.u32 %v6903, 4294901760
        %6905 = vmatpush1.msra.mxu0 %v6904
        %6906 = vmatprep.subr.mxu0 0.0
        %v6907 = vand.u32 %v4949, 4294901760
        %v6908 = vsub.f32 %v4949, %v6907
        %v6909 = vand.u32 %v6908, 4294901760
        %6910 = vmatpush1.msra.mxu0 %v6909
        %6911 = vmatprep.subr.mxu0 0.0
        %v6912 = vand.u32 %v4948, 4294901760
        %v6913 = vsub.f32 %v4948, %v6912
        %v6914 = vand.u32 %v6913, 4294901760
        %6915 = vmatpush1.msra.mxu0 %v6914
        %6916 = vmatprep.subr.mxu0 0.0
        %v6917 = vand.u32 %v4947, 4294901760
        %v6918 = vsub.f32 %v4947, %v6917
        %v6919 = vand.u32 %v6918, 4294901760
        %6920 = vmatpush1.msra.mxu0 %v6919
        %6921 = vmatprep.subr.mxu0 0.0
        %v6922 = vand.u32 %v4922, 4294901760
        %v6923 = vsub.f32 %v4922, %v6922
        %v6924 = vand.u32 %v6923, 4294901760
        %6925 = vmatpush1.msra.mxu0 %v6924
        %6926 = vmatprep.subr.mxu0 0.0
        %v6927 = vand.u32 %v4921, 4294901760
        %v6928 = vsub.f32 %v4921, %v6927
        %v6929 = vand.u32 %v6928, 4294901760
        %6930 = vmatpush1.msra.mxu0 %v6929
        %6931 = vmatprep.subr.mxu0 0.0
        %v6932 = vand.u32 %v4920, 4294901760
        %v6933 = vsub.f32 %v4920, %v6932
        %v6934 = vand.u32 %v6933, 4294901760
        %6935 = vmatpush1.msra.mxu0 %v6934
        %6936 = vmatprep.subr.mxu0 0.0
        %v6937 = vand.u32 %v4919, 4294901760
        %v6938 = vsub.f32 %v4919, %v6937
        %v6939 = vand.u32 %v6938, 4294901760
        %6940 = vmatpush1.msra.mxu0 %v6939
        %6941 = vmatprep.subr.mxu0 0.0
        %v6942 = vand.u32 %v4894, 4294901760
        %v6943 = vsub.f32 %v4894, %v6942
        %v6944 = vand.u32 %v6943, 4294901760
        %6945 = vmatpush1.msra.mxu0 %v6944
        %6946 = vmatprep.subr.mxu0 0.0
        %v6947 = vand.u32 %v4893, 4294901760
        %v6948 = vsub.f32 %v4893, %v6947
        %v6949 = vand.u32 %v6948, 4294901760
        %6950 = vmatpush1.msra.mxu0 %v6949
        %6951 = vmatprep.subr.mxu0 0.0
        %v6952 = vand.u32 %v4892, 4294901760
        %v6953 = vsub.f32 %v4892, %v6952
        %v6954 = vand.u32 %v6953, 4294901760
        %6955 = vmatpush1.msra.mxu0 %v6954
        %6956 = vmatprep.subr.mxu0 0.0
        %v6957 = vand.u32 %v4891, 4294901760
        %v6958 = vsub.f32 %v4891, %v6957
        %v6959 = vand.u32 %v6958, 4294901760
        %6960 = vmatpush1.msra.mxu0 %v6959
        %6961 = vmatprep.subr.mxu0 0.0
        %v6962 = vand.u32 %v5094, 4294901760
        %v6963 = vsub.f32 %v5094, %v6962
        %v6964 = vand.u32 %v6963, 4294901760
        %6965 = vmatpush2.msra.mxu0 %v6964
        %6966 = vmatprep.subr.mxu0 0.0
        %v6967 = vand.u32 %v5093, 4294901760
        %v6968 = vsub.f32 %v5093, %v6967
        %v6969 = vand.u32 %v6968, 4294901760
        %6970 = vmatpush2.msra.mxu0 %v6969
        %6971 = vmatprep.subr.mxu0 0.0
        %v6972 = vand.u32 %v5092, 4294901760
        %v6973 = vsub.f32 %v5092, %v6972
        %v6974 = vand.u32 %v6973, 4294901760
        %6975 = vmatpush2.msra.mxu0 %v6974
        %6976 = vmatprep.subr.mxu0 0.0
        %v6977 = vand.u32 %v5091, 4294901760
        %v6978 = vsub.f32 %v5091, %v6977
        %v6979 = vand.u32 %v6978, 4294901760
        %6980 = vmatpush2.msra.mxu0 %v6979
        %6981 = vmatprep.subr.mxu0 0.0
        %v6982 = vand.u32 %v5065, 4294901760
        %v6983 = vsub.f32 %v5065, %v6982
        %v6984 = vand.u32 %v6983, 4294901760
        %6985 = vmatpush2.msra.mxu0 %v6984
        %6986 = vmatprep.subr.mxu0 0.0
        %v6987 = vand.u32 %v5064, 4294901760
        %v6988 = vsub.f32 %v5064, %v6987
        %v6989 = vand.u32 %v6988, 4294901760
        %6990 = vmatpush2.msra.mxu0 %v6989
        %6991 = vmatprep.subr.mxu0 0.0
        %v6992 = vand.u32 %v5063, 4294901760
        %v6993 = vsub.f32 %v5063, %v6992
        %v6994 = vand.u32 %v6993, 4294901760
        %6995 = vmatpush2.msra.mxu0 %v6994
        %6996 = vmatprep.subr.mxu0 0.0
        %v6997 = vand.u32 %v5062, 4294901760
        %v6998 = vsub.f32 %v5062, %v6997
        %v6999 = vand.u32 %v6998, 4294901760
        %7000 = vmatpush2.msra.mxu0 %v6999
        %7001 = vmatprep.subr.mxu0 0.0
        %v7002 = vand.u32 %v5036, 4294901760
        %v7003 = vsub.f32 %v5036, %v7002
        %v7004 = vand.u32 %v7003, 4294901760
        %7005 = vmatpush2.msra.mxu0 %v7004
        %7006 = vmatprep.subr.mxu0 0.0
        %v7007 = vand.u32 %v5035, 4294901760
        %v7008 = vsub.f32 %v5035, %v7007
        %v7009 = vand.u32 %v7008, 4294901760
        %7010 = vmatpush2.msra.mxu0 %v7009
        %7011 = vmatprep.subr.mxu0 0.0
        %v7012 = vand.u32 %v5034, 4294901760
        %v7013 = vsub.f32 %v5034, %v7012
        %v7014 = vand.u32 %v7013, 4294901760
        %7015 = vmatpush2.msra.mxu0 %v7014
        %7016 = vmatprep.subr.mxu0 0.0
        %v7017 = vand.u32 %v5033, 4294901760
        %v7018 = vsub.f32 %v5033, %v7017
        %v7019 = vand.u32 %v7018, 4294901760
        %7020 = vmatpush2.msra.mxu0 %v7019
        %7021 = vmatprep.subr.mxu0 0.0
        %v7022 = vand.u32 %v5008, 4294901760
        %v7023 = vsub.f32 %v5008, %v7022
        %v7024 = vand.u32 %v7023, 4294901760
        %7025 = vmatpush2.msra.mxu0 %v7024
        %7026 = vmatprep.subr.mxu0 0.0
        %v7027 = vand.u32 %v5007, 4294901760
        %v7028 = vsub.f32 %v5007, %v7027
        %v7029 = vand.u32 %v7028, 4294901760
        %7030 = vmatpush2.msra.mxu0 %v7029
        %7031 = vmatprep.subr.mxu0 0.0
        %v7032 = vand.u32 %v5006, 4294901760
        %v7033 = vsub.f32 %v5006, %v7032
        %v7034 = vand.u32 %v7033, 4294901760
        %7035 = vmatpush2.msra.mxu0 %v7034
        %7036 = vmatprep.subr.mxu0 0.0
        %v7037 = vand.u32 %v5005, 4294901760
        %v7038 = vsub.f32 %v5005, %v7037
        %v7039 = vand.u32 %v7038, 4294901760
        %7040 = vmatpush2.msra.mxu0 %v7039
        %v7041 = vand.u32 %v5098, 4294901760
        %7042 = vmatprep.mubr.f32.mxu0 %v7041
        %v7043 = vand.u32 %v5097, 4294901760
        %7044 = vmatmul.mubr.f32.gmra.mxu0 %v7043
        %v7045 = vpop.f32.mrf.mxu0
        %v7046 = vadd.f32 %v6845, %v7045
        %v7047 = vpop.f32.mrf.mxu0
        %v7048 = vand.u32 %v5102, 4294901760
        %7049 = vmatprep.mubr.f32.mxu0 %v7048
        %v7050 = vand.u32 %v5101, 4294901760
        %7051 = vmatmul.mubr.f32.gmra.mxu0 %v7050
        %v7052 = vpop.f32.mrf.mxu0
        %v7053 = vadd.f32 %v6856, %v7052
        %v7054 = vpop.f32.mrf.mxu0
        %v7055 = vand.u32 %v5106, 4294901760
        %7056 = vmatprep.mubr.f32.mxu0 %v7055
        %v7057 = vand.u32 %v5105, 4294901760
        %7058 = vmatmul.mubr.f32.gmra.mxu0 %v7057
        %v7059 = vpop.f32.mrf.mxu0
        %v7060 = vadd.f32 %v6867, %v7059
        %v7061 = vpop.f32.mrf.mxu0
        %v7062 = vand.u32 %v5110, 4294901760
        %7063 = vmatprep.mubr.f32.mxu0 %v7062
        %v7064 = vand.u32 %v5109, 4294901760
        %7065 = vmatmul.mubr.f32.gmra.mxu0 %v7064
        %v7066 = vpop.f32.mrf.mxu0
        %v7067 = vadd.f32 %v6878, %v7066
        %v7068 = vpop.f32.mrf.mxu0
        %7069 = vdwg.mxu0
        %7070 = vmatprep.subr.mxu0 0.0
        %v7071 = vand.u32 %v4979, 4294901760
        %7072 = vmatpush1.msra.mxu0 %v7071
        %7073 = vmatprep.subr.mxu0 0.0
        %v7074 = vand.u32 %v4978, 4294901760
        %7075 = vmatpush1.msra.mxu0 %v7074
        %7076 = vmatprep.subr.mxu0 0.0
        %v7077 = vand.u32 %v4977, 4294901760
        %7078 = vmatpush1.msra.mxu0 %v7077
        %7079 = vmatprep.subr.mxu0 0.0
        %v7080 = vand.u32 %v4976, 4294901760
        %7081 = vmatpush1.msra.mxu0 %v7080
        %7082 = vmatprep.subr.mxu0 0.0
        %v7083 = vand.u32 %v4950, 4294901760
        %7084 = vmatpush1.msra.mxu0 %v7083
        %7085 = vmatprep.subr.mxu0 0.0
        %v7086 = vand.u32 %v4949, 4294901760
        %7087 = vmatpush1.msra.mxu0 %v7086
        %7088 = vmatprep.subr.mxu0 0.0
        %v7089 = vand.u32 %v4948, 4294901760
        %7090 = vmatpush1.msra.mxu0 %v7089
        %7091 = vmatprep.subr.mxu0 0.0
        %v7092 = vand.u32 %v4947, 4294901760
        %7093 = vmatpush1.msra.mxu0 %v7092
        %7094 = vmatprep.subr.mxu0 0.0
        %v7095 = vand.u32 %v4922, 4294901760
        %7096 = vmatpush1.msra.mxu0 %v7095
        %7097 = vmatprep.subr.mxu0 0.0
        %v7098 = vand.u32 %v4921, 4294901760
        %7099 = vmatpush1.msra.mxu0 %v7098
        %7100 = vmatprep.subr.mxu0 0.0
        %v7101 = vand.u32 %v4920, 4294901760
        %7102 = vmatpush1.msra.mxu0 %v7101
        %7103 = vmatprep.subr.mxu0 0.0
        %v7104 = vand.u32 %v4919, 4294901760
        %7105 = vmatpush1.msra.mxu0 %v7104
        %7106 = vmatprep.subr.mxu0 0.0
        %v7107 = vand.u32 %v4894, 4294901760
        %7108 = vmatpush1.msra.mxu0 %v7107
        %7109 = vmatprep.subr.mxu0 0.0
        %v7110 = vand.u32 %v4893, 4294901760
        %7111 = vmatpush1.msra.mxu0 %v7110
        %7112 = vmatprep.subr.mxu0 0.0
        %v7113 = vand.u32 %v4892, 4294901760
        %7114 = vmatpush1.msra.mxu0 %v7113
        %7115 = vmatprep.subr.mxu0 0.0
        %v7116 = vand.u32 %v4891, 4294901760
        %7117 = vmatpush1.msra.mxu0 %v7116
        %7118 = vmatprep.subr.mxu0 0.0
        %v7119 = vand.u32 %v5094, 4294901760
        %7120 = vmatpush2.msra.mxu0 %v7119
        %7121 = vmatprep.subr.mxu0 0.0
        %v7122 = vand.u32 %v5093, 4294901760
        %7123 = vmatpush2.msra.mxu0 %v7122
        %7124 = vmatprep.subr.mxu0 0.0
        %v7125 = vand.u32 %v5092, 4294901760
        %7126 = vmatpush2.msra.mxu0 %v7125
        %7127 = vmatprep.subr.mxu0 0.0
        %v7128 = vand.u32 %v5091, 4294901760
        %7129 = vmatpush2.msra.mxu0 %v7128
        %7130 = vmatprep.subr.mxu0 0.0
        %v7131 = vand.u32 %v5065, 4294901760
        %7132 = vmatpush2.msra.mxu0 %v7131
        %7133 = vmatprep.subr.mxu0 0.0
        %v7134 = vand.u32 %v5064, 4294901760
        %7135 = vmatpush2.msra.mxu0 %v7134
        %7136 = vmatprep.subr.mxu0 0.0
        %v7137 = vand.u32 %v5063, 4294901760
        %7138 = vmatpush2.msra.mxu0 %v7137
        %7139 = vmatprep.subr.mxu0 0.0
        %v7140 = vand.u32 %v5062, 4294901760
        %7141 = vmatpush2.msra.mxu0 %v7140
        %7142 = vmatprep.subr.mxu0 0.0
        %v7143 = vand.u32 %v5036, 4294901760
        %7144 = vmatpush2.msra.mxu0 %v7143
        %7145 = vmatprep.subr.mxu0 0.0
        %v7146 = vand.u32 %v5035, 4294901760
        %7147 = vmatpush2.msra.mxu0 %v7146
        %7148 = vmatprep.subr.mxu0 0.0
        %v7149 = vand.u32 %v5034, 4294901760
        %7150 = vmatpush2.msra.mxu0 %v7149
        %7151 = vmatprep.subr.mxu0 0.0
        %v7152 = vand.u32 %v5033, 4294901760
        %7153 = vmatpush2.msra.mxu0 %v7152
        %7154 = vmatprep.subr.mxu0 0.0
        %v7155 = vand.u32 %v5008, 4294901760
        %7156 = vmatpush2.msra.mxu0 %v7155
        %7157 = vmatprep.subr.mxu0 0.0
        %v7158 = vand.u32 %v5007, 4294901760
        %7159 = vmatpush2.msra.mxu0 %v7158
        %7160 = vmatprep.subr.mxu0 0.0
        %v7161 = vand.u32 %v5006, 4294901760
        %7162 = vmatpush2.msra.mxu0 %v7161
        %7163 = vmatprep.subr.mxu0 0.0
        %v7164 = vand.u32 %v5005, 4294901760
        %7165 = vmatpush2.msra.mxu0 %v7164
        %v7166 = vand.u32 %v5098, 4294901760
        %7167 = vmatprep.mubr.f32.mxu0 %v7166
        %v7168 = vand.u32 %v5097, 4294901760
        %7169 = vmatmul.mubr.f32.gmra.mxu0 %v7168
        %v7170 = vpop.f32.mrf.mxu0
        %v7171 = vadd.f32 %v7046, %v7170
        %v7172 = vpop.f32.mrf.mxu0
        %v7173 = vand.u32 %v5102, 4294901760
        %7174 = vmatprep.mubr.f32.mxu0 %v7173
        %v7175 = vand.u32 %v5101, 4294901760
        %7176 = vmatmul.mubr.f32.gmra.mxu0 %v7175
        %v7177 = vpop.f32.mrf.mxu0
        %v7178 = vadd.f32 %v7053, %v7177
        %v7179 = vpop.f32.mrf.mxu0
        %v7180 = vand.u32 %v5106, 4294901760
        %7181 = vmatprep.mubr.f32.mxu0 %v7180
        %v7182 = vand.u32 %v5105, 4294901760
        %7183 = vmatmul.mubr.f32.gmra.mxu0 %v7182
        %v7184 = vpop.f32.mrf.mxu0
        %v7185 = vadd.f32 %v7060, %v7184
        %v7186 = vpop.f32.mrf.mxu0
        %v7187 = vand.u32 %v5110, 4294901760
        %7188 = vmatprep.mubr.f32.mxu0 %v7187
        %v7189 = vand.u32 %v5109, 4294901760
        %7190 = vmatmul.mubr.f32.gmra.mxu0 %v7189
        %v7191 = vpop.f32.mrf.mxu0
        %v7192 = vadd.f32 %v7067, %v7191
        %v7193 = vpop.f32.mrf.mxu0
        %7194 = vdwg.mxu0
        %v7195 = vmax.f32 %v7171, 0.0
        %v7196 = vmax.f32 %v7178, 0.0
        %v7197 = vmax.f32 %v7185, 0.0
        %v7198 = vmax.f32 %v7192, 0.0
        %7203 = vrot.lane.b32.xlu0 %v7195, 120
        %v7204 = vpop.permute.xlu0 %7203
        %7205 = vrot.lane.b32.xlu0 %v7196, 120
        %v7206 = vpop.permute.xlu0 %7205
        %7207 = vrot.lane.b32.xlu0 %v7197, 120
        %v7208 = vpop.permute.xlu0 %7207
        %7209 = vrot.lane.b32.xlu0 %v7198, 120
        %v7210 = vpop.permute.xlu0 %7209
        %7215 = vrot.lane.b32.xlu0 %v7195, 112
        %v7216 = vpop.permute.xlu0 %7215
        %7217 = vrot.lane.b32.xlu0 %v7196, 112
        %v7218 = vpop.permute.xlu0 %7217
        %7219 = vrot.lane.b32.xlu0 %v7197, 112
        %v7220 = vpop.permute.xlu0 %7219
        %7221 = vrot.lane.b32.xlu0 %v7198, 112
        %v7222 = vpop.permute.xlu0 %7221
        %7227 = vrot.lane.b32.xlu0 %v7195, 104
        %v7228 = vpop.permute.xlu0 %7227
        %7229 = vrot.lane.b32.xlu0 %v7196, 104
        %v7230 = vpop.permute.xlu0 %7229
        %7231 = vrot.lane.b32.xlu0 %v7197, 104
        %v7232 = vpop.permute.xlu0 %7231
        %7233 = vrot.lane.b32.xlu0 %v7198, 104
        %v7234 = vpop.permute.xlu0 %7233
        %7239 = vrot.lane.b32.xlu0 %v7195, 96
        %v7240 = vpop.permute.xlu0 %7239
        %7241 = vrot.lane.b32.xlu0 %v7196, 96
        %v7242 = vpop.permute.xlu0 %7241
        %7243 = vrot.lane.b32.xlu0 %v7197, 96
        %v7244 = vpop.permute.xlu0 %7243
        %7245 = vrot.lane.b32.xlu0 %v7198, 96
        %v7246 = vpop.permute.xlu0 %7245
        %7251 = vrot.lane.b32.xlu0 %v7195, 88
        %v7252 = vpop.permute.xlu0 %7251
        %7253 = vrot.lane.b32.xlu0 %v7196, 88
        %v7254 = vpop.permute.xlu0 %7253
        %7255 = vrot.lane.b32.xlu0 %v7197, 88
        %v7256 = vpop.permute.xlu0 %7255
        %7257 = vrot.lane.b32.xlu0 %v7198, 88
        %v7258 = vpop.permute.xlu0 %7257
        %7263 = vrot.lane.b32.xlu0 %v7195, 80
        %v7264 = vpop.permute.xlu0 %7263
        %7265 = vrot.lane.b32.xlu0 %v7196, 80
        %v7266 = vpop.permute.xlu0 %7265
        %7267 = vrot.lane.b32.xlu0 %v7197, 80
        %v7268 = vpop.permute.xlu0 %7267
        %7269 = vrot.lane.b32.xlu0 %v7198, 80
        %v7270 = vpop.permute.xlu0 %7269
        %7275 = vrot.lane.b32.xlu0 %v7195, 72
        %v7276 = vpop.permute.xlu0 %7275
        %7277 = vrot.lane.b32.xlu0 %v7196, 72
        %v7278 = vpop.permute.xlu0 %7277
        %7279 = vrot.lane.b32.xlu0 %v7197, 72
        %v7280 = vpop.permute.xlu0 %7279
        %7281 = vrot.lane.b32.xlu0 %v7198, 72
        %v7282 = vpop.permute.xlu0 %7281
        %7287 = vrot.lane.b32.xlu0 %v7195, 64
        %v7288 = vpop.permute.xlu0 %7287
        %7289 = vrot.lane.b32.xlu0 %v7196, 64
        %v7290 = vpop.permute.xlu0 %7289
        %7291 = vrot.lane.b32.xlu0 %v7197, 64
        %v7292 = vpop.permute.xlu0 %7291
        %7293 = vrot.lane.b32.xlu0 %v7198, 64
        %v7294 = vpop.permute.xlu0 %7293
        %7299 = vrot.lane.b32.xlu0 %v7195, 56
        %v7300 = vpop.permute.xlu0 %7299
        %7301 = vrot.lane.b32.xlu0 %v7196, 56
        %v7302 = vpop.permute.xlu0 %7301
        %7303 = vrot.lane.b32.xlu0 %v7197, 56
        %v7304 = vpop.permute.xlu0 %7303
        %7305 = vrot.lane.b32.xlu0 %v7198, 56
        %v7306 = vpop.permute.xlu0 %7305
        %7311 = vrot.lane.b32.xlu0 %v7195, 48
        %v7312 = vpop.permute.xlu0 %7311
        %7313 = vrot.lane.b32.xlu0 %v7196, 48
        %v7314 = vpop.permute.xlu0 %7313
        %7315 = vrot.lane.b32.xlu0 %v7197, 48
        %v7316 = vpop.permute.xlu0 %7315
        %7317 = vrot.lane.b32.xlu0 %v7198, 48
        %v7318 = vpop.permute.xlu0 %7317
        %7323 = vrot.lane.b32.xlu0 %v7195, 40
        %v7324 = vpop.permute.xlu0 %7323
        %7325 = vrot.lane.b32.xlu0 %v7196, 40
        %v7326 = vpop.permute.xlu0 %7325
        %7327 = vrot.lane.b32.xlu0 %v7197, 40
        %v7328 = vpop.permute.xlu0 %7327
        %7329 = vrot.lane.b32.xlu0 %v7198, 40
        %v7330 = vpop.permute.xlu0 %7329
        %7335 = vrot.lane.b32.xlu0 %v7195, 32
        %v7336 = vpop.permute.xlu0 %7335
        %7337 = vrot.lane.b32.xlu0 %v7196, 32
        %v7338 = vpop.permute.xlu0 %7337
        %7339 = vrot.lane.b32.xlu0 %v7197, 32
        %v7340 = vpop.permute.xlu0 %7339
        %7341 = vrot.lane.b32.xlu0 %v7198, 32
        %v7342 = vpop.permute.xlu0 %7341
        %7347 = vrot.lane.b32.xlu0 %v7195, 24
        %v7348 = vpop.permute.xlu0 %7347
        %7349 = vrot.lane.b32.xlu0 %v7196, 24
        %v7350 = vpop.permute.xlu0 %7349
        %7351 = vrot.lane.b32.xlu0 %v7197, 24
        %v7352 = vpop.permute.xlu0 %7351
        %7353 = vrot.lane.b32.xlu0 %v7198, 24
        %v7354 = vpop.permute.xlu0 %7353
        %7359 = vrot.lane.b32.xlu0 %v7195, 16
        %v7360 = vpop.permute.xlu0 %7359
        %7361 = vrot.lane.b32.xlu0 %v7196, 16
        %v7362 = vpop.permute.xlu0 %7361
        %7363 = vrot.lane.b32.xlu0 %v7197, 16
        %v7364 = vpop.permute.xlu0 %7363
        %7365 = vrot.lane.b32.xlu0 %v7198, 16
        %v7366 = vpop.permute.xlu0 %7365
        %7371 = vrot.lane.b32.xlu0 %v7195, 8
        %v7372 = vpop.permute.xlu0 %7371
        %7373 = vrot.lane.b32.xlu0 %v7196, 8
        %v7374 = vpop.permute.xlu0 %7373
        %7375 = vrot.lane.b32.xlu0 %v7197, 8
        %v7376 = vpop.permute.xlu0 %7375
        %7377 = vrot.lane.b32.xlu0 %v7198, 8
        %v7378 = vpop.permute.xlu0 %7377
        %v7383 = vld [vmem:[#allocation9] sm:$0xff]
        %v7384 = vld [vmem:[#allocation9 + $0x8] sm:$0xff]
        %v7385 = vld [vmem:[#allocation9 + $0x10] sm:$0xff]
        %v7386 = vld [vmem:[#allocation9 + $0x18] sm:$0xff]
        %v7387 = vld [vmem:[#allocation9 + $0x20] sm:$0xff]
        %v7388 = vld [vmem:[#allocation9 + $0x28] sm:$0xff]
        %v7389 = vld [vmem:[#allocation9 + $0x30] sm:$0xff]
        %v7390 = vld [vmem:[#allocation9 + $0x38] sm:$0xff]
        %v7391 = vld [vmem:[#allocation9 + $0x40] sm:$0xff]
        %v7392 = vld [vmem:[#allocation9 + $0x48] sm:$0xff]
        %v7393 = vld [vmem:[#allocation9 + $0x50] sm:$0xff]
        %v7394 = vld [vmem:[#allocation9 + $0x58] sm:$0xff]
        %v7395 = vld [vmem:[#allocation9 + $0x60] sm:$0xff]
        %v7396 = vld [vmem:[#allocation9 + $0x68] sm:$0xff]
        %v7397 = vld [vmem:[#allocation9 + $0x70] sm:$0xff]
        %v7398 = vld [vmem:[#allocation9 + $0x78] sm:$0xff]
        %v7399 = vld [vmem:[%s10] sm:$0xff]
        %v7400 = vld [vmem:[%s10 + $0x8] sm:$0xff]
        %v7401 = vld [vmem:[%s10 + $0x10] sm:$0xff]
        %v7402 = vld [vmem:[%s10 + $0x18] sm:$0xff]
        %7404 = vset.pattern.permute.xlu0 0
        %7405 = vperm.xlu0 %7404, %v7399
        %v7406 = vpop.permute.xlu0 %7405
        %7409 = vset.pattern.permute.xlu0 0
        %7410 = vperm.xlu0 %7409, %v7400
        %v7411 = vpop.permute.xlu0 %7410
        %7414 = vset.pattern.permute.xlu0 0
        %7415 = vperm.xlu0 %7414, %v7401
        %v7416 = vpop.permute.xlu0 %7415
        %7419 = vset.pattern.permute.xlu0 0
        %7420 = vperm.xlu0 %7419, %v7402
        %v7421 = vpop.permute.xlu0 %7420
        %7423 = vmatprep.subr.mxu0 0.0
        %v7424 = vand.u32 %v7234, 4294901760
        %7425 = vmatpush1.msra.mxu0 %v7424
        %7426 = vmatprep.subr.mxu0 0.0
        %v7427 = vand.u32 %v7232, 4294901760
        %7428 = vmatpush1.msra.mxu0 %v7427
        %7429 = vmatprep.subr.mxu0 0.0
        %v7430 = vand.u32 %v7230, 4294901760
        %7431 = vmatpush1.msra.mxu0 %v7430
        %7432 = vmatprep.subr.mxu0 0.0
        %v7433 = vand.u32 %v7228, 4294901760
        %7434 = vmatpush1.msra.mxu0 %v7433
        %7435 = vmatprep.subr.mxu0 0.0
        %v7436 = vand.u32 %v7222, 4294901760
        %7437 = vmatpush1.msra.mxu0 %v7436
        %7438 = vmatprep.subr.mxu0 0.0
        %v7439 = vand.u32 %v7220, 4294901760
        %7440 = vmatpush1.msra.mxu0 %v7439
        %7441 = vmatprep.subr.mxu0 0.0
        %v7442 = vand.u32 %v7218, 4294901760
        %7443 = vmatpush1.msra.mxu0 %v7442
        %7444 = vmatprep.subr.mxu0 0.0
        %v7445 = vand.u32 %v7216, 4294901760
        %7446 = vmatpush1.msra.mxu0 %v7445
        %7447 = vmatprep.subr.mxu0 0.0
        %v7448 = vand.u32 %v7210, 4294901760
        %7449 = vmatpush1.msra.mxu0 %v7448
        %7450 = vmatprep.subr.mxu0 0.0
        %v7451 = vand.u32 %v7208, 4294901760
        %7452 = vmatpush1.msra.mxu0 %v7451
        %7453 = vmatprep.subr.mxu0 0.0
        %v7454 = vand.u32 %v7206, 4294901760
        %7455 = vmatpush1.msra.mxu0 %v7454
        %7456 = vmatprep.subr.mxu0 0.0
        %v7457 = vand.u32 %v7204, 4294901760
        %7458 = vmatpush1.msra.mxu0 %v7457
        %7459 = vmatprep.subr.mxu0 0.0
        %v7460 = vand.u32 %v7198, 4294901760
        %7461 = vmatpush1.msra.mxu0 %v7460
        %7462 = vmatprep.subr.mxu0 0.0
        %v7463 = vand.u32 %v7197, 4294901760
        %7464 = vmatpush1.msra.mxu0 %v7463
        %7465 = vmatprep.subr.mxu0 0.0
        %v7466 = vand.u32 %v7196, 4294901760
        %7467 = vmatpush1.msra.mxu0 %v7466
        %7468 = vmatprep.subr.mxu0 0.0
        %v7469 = vand.u32 %v7195, 4294901760
        %7470 = vmatpush1.msra.mxu0 %v7469
        %7471 = vmatprep.subr.mxu0 0.0
        %v7472 = vand.u32 %v7282, 4294901760
        %7473 = vmatpush2.msra.mxu0 %v7472
        %7474 = vmatprep.subr.mxu0 0.0
        %v7475 = vand.u32 %v7280, 4294901760
        %7476 = vmatpush2.msra.mxu0 %v7475
        %7477 = vmatprep.subr.mxu0 0.0
        %v7478 = vand.u32 %v7278, 4294901760
        %7479 = vmatpush2.msra.mxu0 %v7478
        %7480 = vmatprep.subr.mxu0 0.0
        %v7481 = vand.u32 %v7276, 4294901760
        %7482 = vmatpush2.msra.mxu0 %v7481
        %7483 = vmatprep.subr.mxu0 0.0
        %v7484 = vand.u32 %v7270, 4294901760
        %7485 = vmatpush2.msra.mxu0 %v7484
        %7486 = vmatprep.subr.mxu0 0.0
        %v7487 = vand.u32 %v7268, 4294901760
        %7488 = vmatpush2.msra.mxu0 %v7487
        %7489 = vmatprep.subr.mxu0 0.0
        %v7490 = vand.u32 %v7266, 4294901760
        %7491 = vmatpush2.msra.mxu0 %v7490
        %7492 = vmatprep.subr.mxu0 0.0
        %v7493 = vand.u32 %v7264, 4294901760
        %7494 = vmatpush2.msra.mxu0 %v7493
        %7495 = vmatprep.subr.mxu0 0.0
        %v7496 = vand.u32 %v7258, 4294901760
        %7497 = vmatpush2.msra.mxu0 %v7496
        %7498 = vmatprep.subr.mxu0 0.0
        %v7499 = vand.u32 %v7256, 4294901760
        %7500 = vmatpush2.msra.mxu0 %v7499
        %7501 = vmatprep.subr.mxu0 0.0
        %v7502 = vand.u32 %v7254, 4294901760
        %7503 = vmatpush2.msra.mxu0 %v7502
        %7504 = vmatprep.subr.mxu0 0.0
        %v7505 = vand.u32 %v7252, 4294901760
        %7506 = vmatpush2.msra.mxu0 %v7505
        %7507 = vmatprep.subr.mxu0 0.0
        %v7508 = vand.u32 %v7246, 4294901760
        %7509 = vmatpush2.msra.mxu0 %v7508
        %7510 = vmatprep.subr.mxu0 0.0
        %v7511 = vand.u32 %v7244, 4294901760
        %7512 = vmatpush2.msra.mxu0 %v7511
        %7513 = vmatprep.subr.mxu0 0.0
        %v7514 = vand.u32 %v7242, 4294901760
        %7515 = vmatpush2.msra.mxu0 %v7514
        %7516 = vmatprep.subr.mxu0 0.0
        %v7517 = vand.u32 %v7240, 4294901760
        %7518 = vmatpush2.msra.mxu0 %v7517
        %v7519 = vand.u32 %v7384, 4294901760
        %v7520 = vsub.f32 %v7384, %v7519
        %v7521 = vand.u32 %v7520, 4294901760
        %v7522 = vsub.f32 %v7520, %v7521
        %v7523 = vand.u32 %v7522, 4294901760
        %7524 = vmatprep.mubr.f32.mxu0 %v7523
        %v7525 = vand.u32 %v7383, 4294901760
        %v7526 = vsub.f32 %v7383, %v7525
        %v7527 = vand.u32 %v7526, 4294901760
        %v7528 = vsub.f32 %v7526, %v7527
        %v7529 = vand.u32 %v7528, 4294901760
        %7530 = vmatmul.mubr.f32.gmra.mxu0 %v7529
        %v7531 = vpop.f32.mrf.mxu0
        %v7532 = vadd.f32 %v7406, %v7531
        %v7533 = vpop.f32.mrf.mxu0
        %v7534 = vand.u32 %v7388, 4294901760
        %v7535 = vsub.f32 %v7388, %v7534
        %v7536 = vand.u32 %v7535, 4294901760
        %v7537 = vsub.f32 %v7535, %v7536
        %v7538 = vand.u32 %v7537, 4294901760
        %7539 = vmatprep.mubr.f32.mxu0 %v7538
        %v7540 = vand.u32 %v7387, 4294901760
        %v7541 = vsub.f32 %v7387, %v7540
        %v7542 = vand.u32 %v7541, 4294901760
        %v7543 = vsub.f32 %v7541, %v7542
        %v7544 = vand.u32 %v7543, 4294901760
        %7545 = vmatmul.mubr.f32.gmra.mxu0 %v7544
        %v7546 = vpop.f32.mrf.mxu0
        %v7547 = vadd.f32 %v7411, %v7546
        %v7548 = vpop.f32.mrf.mxu0
        %v7549 = vand.u32 %v7392, 4294901760
        %v7550 = vsub.f32 %v7392, %v7549
        %v7551 = vand.u32 %v7550, 4294901760
        %v7552 = vsub.f32 %v7550, %v7551
        %v7553 = vand.u32 %v7552, 4294901760
        %7554 = vmatprep.mubr.f32.mxu0 %v7553
        %v7555 = vand.u32 %v7391, 4294901760
        %v7556 = vsub.f32 %v7391, %v7555
        %v7557 = vand.u32 %v7556, 4294901760
        %v7558 = vsub.f32 %v7556, %v7557
        %v7559 = vand.u32 %v7558, 4294901760
        %7560 = vmatmul.mubr.f32.gmra.mxu0 %v7559
        %v7561 = vpop.f32.mrf.mxu0
        %v7562 = vadd.f32 %v7416, %v7561
        %v7563 = vpop.f32.mrf.mxu0
        %v7564 = vand.u32 %v7396, 4294901760
        %v7565 = vsub.f32 %v7396, %v7564
        %v7566 = vand.u32 %v7565, 4294901760
        %v7567 = vsub.f32 %v7565, %v7566
        %v7568 = vand.u32 %v7567, 4294901760
        %7569 = vmatprep.mubr.f32.mxu0 %v7568
        %v7570 = vand.u32 %v7395, 4294901760
        %v7571 = vsub.f32 %v7395, %v7570
        %v7572 = vand.u32 %v7571, 4294901760
        %v7573 = vsub.f32 %v7571, %v7572
        %v7574 = vand.u32 %v7573, 4294901760
        %7575 = vmatmul.mubr.f32.gmra.mxu0 %v7574
        %v7576 = vpop.f32.mrf.mxu0
        %v7577 = vadd.f32 %v7421, %v7576
        %v7578 = vpop.f32.mrf.mxu0
        %7579 = vdwg.mxu0
        %7580 = vmatprep.subr.mxu0 0.0
        %v7581 = vand.u32 %v7234, 4294901760
        %v7582 = vsub.f32 %v7234, %v7581
        %v7583 = vand.u32 %v7582, 4294901760
        %v7584 = vsub.f32 %v7582, %v7583
        %v7585 = vand.u32 %v7584, 4294901760
        %7586 = vmatpush1.msra.mxu0 %v7585
        %7587 = vmatprep.subr.mxu0 0.0
        %v7588 = vand.u32 %v7232, 4294901760
        %v7589 = vsub.f32 %v7232, %v7588
        %v7590 = vand.u32 %v7589, 4294901760
        %v7591 = vsub.f32 %v7589, %v7590
        %v7592 = vand.u32 %v7591, 4294901760
        %7593 = vmatpush1.msra.mxu0 %v7592
        %7594 = vmatprep.subr.mxu0 0.0
        %v7595 = vand.u32 %v7230, 4294901760
        %v7596 = vsub.f32 %v7230, %v7595
        %v7597 = vand.u32 %v7596, 4294901760
        %v7598 = vsub.f32 %v7596, %v7597
        %v7599 = vand.u32 %v7598, 4294901760
        %7600 = vmatpush1.msra.mxu0 %v7599
        %7601 = vmatprep.subr.mxu0 0.0
        %v7602 = vand.u32 %v7228, 4294901760
        %v7603 = vsub.f32 %v7228, %v7602
        %v7604 = vand.u32 %v7603, 4294901760
        %v7605 = vsub.f32 %v7603, %v7604
        %v7606 = vand.u32 %v7605, 4294901760
        %7607 = vmatpush1.msra.mxu0 %v7606
        %7608 = vmatprep.subr.mxu0 0.0
        %v7609 = vand.u32 %v7222, 4294901760
        %v7610 = vsub.f32 %v7222, %v7609
        %v7611 = vand.u32 %v7610, 4294901760
        %v7612 = vsub.f32 %v7610, %v7611
        %v7613 = vand.u32 %v7612, 4294901760
        %7614 = vmatpush1.msra.mxu0 %v7613
        %7615 = vmatprep.subr.mxu0 0.0
        %v7616 = vand.u32 %v7220, 4294901760
        %v7617 = vsub.f32 %v7220, %v7616
        %v7618 = vand.u32 %v7617, 4294901760
        %v7619 = vsub.f32 %v7617, %v7618
        %v7620 = vand.u32 %v7619, 4294901760
        %7621 = vmatpush1.msra.mxu0 %v7620
        %7622 = vmatprep.subr.mxu0 0.0
        %v7623 = vand.u32 %v7218, 4294901760
        %v7624 = vsub.f32 %v7218, %v7623
        %v7625 = vand.u32 %v7624, 4294901760
        %v7626 = vsub.f32 %v7624, %v7625
        %v7627 = vand.u32 %v7626, 4294901760
        %7628 = vmatpush1.msra.mxu0 %v7627
        %7629 = vmatprep.subr.mxu0 0.0
        %v7630 = vand.u32 %v7216, 4294901760
        %v7631 = vsub.f32 %v7216, %v7630
        %v7632 = vand.u32 %v7631, 4294901760
        %v7633 = vsub.f32 %v7631, %v7632
        %v7634 = vand.u32 %v7633, 4294901760
        %7635 = vmatpush1.msra.mxu0 %v7634
        %7636 = vmatprep.subr.mxu0 0.0
        %v7637 = vand.u32 %v7210, 4294901760
        %v7638 = vsub.f32 %v7210, %v7637
        %v7639 = vand.u32 %v7638, 4294901760
        %v7640 = vsub.f32 %v7638, %v7639
        %v7641 = vand.u32 %v7640, 4294901760
        %7642 = vmatpush1.msra.mxu0 %v7641
        %7643 = vmatprep.subr.mxu0 0.0
        %v7644 = vand.u32 %v7208, 4294901760
        %v7645 = vsub.f32 %v7208, %v7644
        %v7646 = vand.u32 %v7645, 4294901760
        %v7647 = vsub.f32 %v7645, %v7646
        %v7648 = vand.u32 %v7647, 4294901760
        %7649 = vmatpush1.msra.mxu0 %v7648
        %7650 = vmatprep.subr.mxu0 0.0
        %v7651 = vand.u32 %v7206, 4294901760
        %v7652 = vsub.f32 %v7206, %v7651
        %v7653 = vand.u32 %v7652, 4294901760
        %v7654 = vsub.f32 %v7652, %v7653
        %v7655 = vand.u32 %v7654, 4294901760
        %7656 = vmatpush1.msra.mxu0 %v7655
        %7657 = vmatprep.subr.mxu0 0.0
        %v7658 = vand.u32 %v7204, 4294901760
        %v7659 = vsub.f32 %v7204, %v7658
        %v7660 = vand.u32 %v7659, 4294901760
        %v7661 = vsub.f32 %v7659, %v7660
        %v7662 = vand.u32 %v7661, 4294901760
        %7663 = vmatpush1.msra.mxu0 %v7662
        %7664 = vmatprep.subr.mxu0 0.0
        %v7665 = vand.u32 %v7198, 4294901760
        %v7666 = vsub.f32 %v7198, %v7665
        %v7667 = vand.u32 %v7666, 4294901760
        %v7668 = vsub.f32 %v7666, %v7667
        %v7669 = vand.u32 %v7668, 4294901760
        %7670 = vmatpush1.msra.mxu0 %v7669
        %7671 = vmatprep.subr.mxu0 0.0
        %v7672 = vand.u32 %v7197, 4294901760
        %v7673 = vsub.f32 %v7197, %v7672
        %v7674 = vand.u32 %v7673, 4294901760
        %v7675 = vsub.f32 %v7673, %v7674
        %v7676 = vand.u32 %v7675, 4294901760
        %7677 = vmatpush1.msra.mxu0 %v7676
        %7678 = vmatprep.subr.mxu0 0.0
        %v7679 = vand.u32 %v7196, 4294901760
        %v7680 = vsub.f32 %v7196, %v7679
        %v7681 = vand.u32 %v7680, 4294901760
        %v7682 = vsub.f32 %v7680, %v7681
        %v7683 = vand.u32 %v7682, 4294901760
        %7684 = vmatpush1.msra.mxu0 %v7683
        %7685 = vmatprep.subr.mxu0 0.0
        %v7686 = vand.u32 %v7195, 4294901760
        %v7687 = vsub.f32 %v7195, %v7686
        %v7688 = vand.u32 %v7687, 4294901760
        %v7689 = vsub.f32 %v7687, %v7688
        %v7690 = vand.u32 %v7689, 4294901760
        %7691 = vmatpush1.msra.mxu0 %v7690
        %7692 = vmatprep.subr.mxu0 0.0
        %v7693 = vand.u32 %v7282, 4294901760
        %v7694 = vsub.f32 %v7282, %v7693
        %v7695 = vand.u32 %v7694, 4294901760
        %v7696 = vsub.f32 %v7694, %v7695
        %v7697 = vand.u32 %v7696, 4294901760
        %7698 = vmatpush2.msra.mxu0 %v7697
        %7699 = vmatprep.subr.mxu0 0.0
        %v7700 = vand.u32 %v7280, 4294901760
        %v7701 = vsub.f32 %v7280, %v7700
        %v7702 = vand.u32 %v7701, 4294901760
        %v7703 = vsub.f32 %v7701, %v7702
        %v7704 = vand.u32 %v7703, 4294901760
        %7705 = vmatpush2.msra.mxu0 %v7704
        %7706 = vmatprep.subr.mxu0 0.0
        %v7707 = vand.u32 %v7278, 4294901760
        %v7708 = vsub.f32 %v7278, %v7707
        %v7709 = vand.u32 %v7708, 4294901760
        %v7710 = vsub.f32 %v7708, %v7709
        %v7711 = vand.u32 %v7710, 4294901760
        %7712 = vmatpush2.msra.mxu0 %v7711
        %7713 = vmatprep.subr.mxu0 0.0
        %v7714 = vand.u32 %v7276, 4294901760
        %v7715 = vsub.f32 %v7276, %v7714
        %v7716 = vand.u32 %v7715, 4294901760
        %v7717 = vsub.f32 %v7715, %v7716
        %v7718 = vand.u32 %v7717, 4294901760
        %7719 = vmatpush2.msra.mxu0 %v7718
        %7720 = vmatprep.subr.mxu0 0.0
        %v7721 = vand.u32 %v7270, 4294901760
        %v7722 = vsub.f32 %v7270, %v7721
        %v7723 = vand.u32 %v7722, 4294901760
        %v7724 = vsub.f32 %v7722, %v7723
        %v7725 = vand.u32 %v7724, 4294901760
        %7726 = vmatpush2.msra.mxu0 %v7725
        %7727 = vmatprep.subr.mxu0 0.0
        %v7728 = vand.u32 %v7268, 4294901760
        %v7729 = vsub.f32 %v7268, %v7728
        %v7730 = vand.u32 %v7729, 4294901760
        %v7731 = vsub.f32 %v7729, %v7730
        %v7732 = vand.u32 %v7731, 4294901760
        %7733 = vmatpush2.msra.mxu0 %v7732
        %7734 = vmatprep.subr.mxu0 0.0
        %v7735 = vand.u32 %v7266, 4294901760
        %v7736 = vsub.f32 %v7266, %v7735
        %v7737 = vand.u32 %v7736, 4294901760
        %v7738 = vsub.f32 %v7736, %v7737
        %v7739 = vand.u32 %v7738, 4294901760
        %7740 = vmatpush2.msra.mxu0 %v7739
        %7741 = vmatprep.subr.mxu0 0.0
        %v7742 = vand.u32 %v7264, 4294901760
        %v7743 = vsub.f32 %v7264, %v7742
        %v7744 = vand.u32 %v7743, 4294901760
        %v7745 = vsub.f32 %v7743, %v7744
        %v7746 = vand.u32 %v7745, 4294901760
        %7747 = vmatpush2.msra.mxu0 %v7746
        %7748 = vmatprep.subr.mxu0 0.0
        %v7749 = vand.u32 %v7258, 4294901760
        %v7750 = vsub.f32 %v7258, %v7749
        %v7751 = vand.u32 %v7750, 4294901760
        %v7752 = vsub.f32 %v7750, %v7751
        %v7753 = vand.u32 %v7752, 4294901760
        %7754 = vmatpush2.msra.mxu0 %v7753
        %7755 = vmatprep.subr.mxu0 0.0
        %v7756 = vand.u32 %v7256, 4294901760
        %v7757 = vsub.f32 %v7256, %v7756
        %v7758 = vand.u32 %v7757, 4294901760
        %v7759 = vsub.f32 %v7757, %v7758
        %v7760 = vand.u32 %v7759, 4294901760
        %7761 = vmatpush2.msra.mxu0 %v7760
        %7762 = vmatprep.subr.mxu0 0.0
        %v7763 = vand.u32 %v7254, 4294901760
        %v7764 = vsub.f32 %v7254, %v7763
        %v7765 = vand.u32 %v7764, 4294901760
        %v7766 = vsub.f32 %v7764, %v7765
        %v7767 = vand.u32 %v7766, 4294901760
        %7768 = vmatpush2.msra.mxu0 %v7767
        %7769 = vmatprep.subr.mxu0 0.0
        %v7770 = vand.u32 %v7252, 4294901760
        %v7771 = vsub.f32 %v7252, %v7770
        %v7772 = vand.u32 %v7771, 4294901760
        %v7773 = vsub.f32 %v7771, %v7772
        %v7774 = vand.u32 %v7773, 4294901760
        %7775 = vmatpush2.msra.mxu0 %v7774
        %7776 = vmatprep.subr.mxu0 0.0
        %v7777 = vand.u32 %v7246, 4294901760
        %v7778 = vsub.f32 %v7246, %v7777
        %v7779 = vand.u32 %v7778, 4294901760
        %v7780 = vsub.f32 %v7778, %v7779
        %v7781 = vand.u32 %v7780, 4294901760
        %7782 = vmatpush2.msra.mxu0 %v7781
        %7783 = vmatprep.subr.mxu0 0.0
        %v7784 = vand.u32 %v7244, 4294901760
        %v7785 = vsub.f32 %v7244, %v7784
        %v7786 = vand.u32 %v7785, 4294901760
        %v7787 = vsub.f32 %v7785, %v7786
        %v7788 = vand.u32 %v7787, 4294901760
        %7789 = vmatpush2.msra.mxu0 %v7788
        %7790 = vmatprep.subr.mxu0 0.0
        %v7791 = vand.u32 %v7242, 4294901760
        %v7792 = vsub.f32 %v7242, %v7791
        %v7793 = vand.u32 %v7792, 4294901760
        %v7794 = vsub.f32 %v7792, %v7793
        %v7795 = vand.u32 %v7794, 4294901760
        %7796 = vmatpush2.msra.mxu0 %v7795
        %7797 = vmatprep.subr.mxu0 0.0
        %v7798 = vand.u32 %v7240, 4294901760
        %v7799 = vsub.f32 %v7240, %v7798
        %v7800 = vand.u32 %v7799, 4294901760
        %v7801 = vsub.f32 %v7799, %v7800
        %v7802 = vand.u32 %v7801, 4294901760
        %7803 = vmatpush2.msra.mxu0 %v7802
        %v7804 = vand.u32 %v7384, 4294901760
        %7805 = vmatprep.mubr.f32.mxu0 %v7804
        %v7806 = vand.u32 %v7383, 4294901760
        %7807 = vmatmul.mubr.f32.gmra.mxu0 %v7806
        %v7808 = vpop.f32.mrf.mxu0
        %v7809 = vadd.f32 %v7532, %v7808
        %v7810 = vpop.f32.mrf.mxu0
        %v7811 = vand.u32 %v7388, 4294901760
        %7812 = vmatprep.mubr.f32.mxu0 %v7811
        %v7813 = vand.u32 %v7387, 4294901760
        %7814 = vmatmul.mubr.f32.gmra.mxu0 %v7813
        %v7815 = vpop.f32.mrf.mxu0
        %v7816 = vadd.f32 %v7547, %v7815
        %v7817 = vpop.f32.mrf.mxu0
        %v7818 = vand.u32 %v7392, 4294901760
        %7819 = vmatprep.mubr.f32.mxu0 %v7818
        %v7820 = vand.u32 %v7391, 4294901760
        %7821 = vmatmul.mubr.f32.gmra.mxu0 %v7820
        %v7822 = vpop.f32.mrf.mxu0
        %v7823 = vadd.f32 %v7562, %v7822
        %v7824 = vpop.f32.mrf.mxu0
        %v7825 = vand.u32 %v7396, 4294901760
        %7826 = vmatprep.mubr.f32.mxu0 %v7825
        %v7827 = vand.u32 %v7395, 4294901760
        %7828 = vmatmul.mubr.f32.gmra.mxu0 %v7827
        %v7829 = vpop.f32.mrf.mxu0
        %v7830 = vadd.f32 %v7577, %v7829
        %v7831 = vpop.f32.mrf.mxu0
        %7832 = vdwg.mxu0
        %7833 = vmatprep.subr.mxu0 0.0
        %v7834 = vand.u32 %v7234, 4294901760
        %v7835 = vsub.f32 %v7234, %v7834
        %7836 = vmatpush1.msra.mxu0 %v7835
        %7837 = vmatprep.subr.mxu0 0.0
        %v7838 = vand.u32 %v7232, 4294901760
        %v7839 = vsub.f32 %v7232, %v7838
        %7840 = vmatpush1.msra.mxu0 %v7839
        %7841 = vmatprep.subr.mxu0 0.0
        %v7842 = vand.u32 %v7230, 4294901760
        %v7843 = vsub.f32 %v7230, %v7842
        %7844 = vmatpush1.msra.mxu0 %v7843
        %7845 = vmatprep.subr.mxu0 0.0
        %v7846 = vand.u32 %v7228, 4294901760
        %v7847 = vsub.f32 %v7228, %v7846
        %7848 = vmatpush1.msra.mxu0 %v7847
        %7849 = vmatprep.subr.mxu0 0.0
        %v7850 = vand.u32 %v7222, 4294901760
        %v7851 = vsub.f32 %v7222, %v7850
        %7852 = vmatpush1.msra.mxu0 %v7851
        %7853 = vmatprep.subr.mxu0 0.0
        %v7854 = vand.u32 %v7220, 4294901760
        %v7855 = vsub.f32 %v7220, %v7854
        %7856 = vmatpush1.msra.mxu0 %v7855
        %7857 = vmatprep.subr.mxu0 0.0
        %v7858 = vand.u32 %v7218, 4294901760
        %v7859 = vsub.f32 %v7218, %v7858
        %7860 = vmatpush1.msra.mxu0 %v7859
        %7861 = vmatprep.subr.mxu0 0.0
        %v7862 = vand.u32 %v7216, 4294901760
        %v7863 = vsub.f32 %v7216, %v7862
        %7864 = vmatpush1.msra.mxu0 %v7863
        %7865 = vmatprep.subr.mxu0 0.0
        %v7866 = vand.u32 %v7210, 4294901760
        %v7867 = vsub.f32 %v7210, %v7866
        %7868 = vmatpush1.msra.mxu0 %v7867
        %7869 = vmatprep.subr.mxu0 0.0
        %v7870 = vand.u32 %v7208, 4294901760
        %v7871 = vsub.f32 %v7208, %v7870
        %7872 = vmatpush1.msra.mxu0 %v7871
        %7873 = vmatprep.subr.mxu0 0.0
        %v7874 = vand.u32 %v7206, 4294901760
        %v7875 = vsub.f32 %v7206, %v7874
        %7876 = vmatpush1.msra.mxu0 %v7875
        %7877 = vmatprep.subr.mxu0 0.0
        %v7878 = vand.u32 %v7204, 4294901760
        %v7879 = vsub.f32 %v7204, %v7878
        %7880 = vmatpush1.msra.mxu0 %v7879
        %7881 = vmatprep.subr.mxu0 0.0
        %v7882 = vand.u32 %v7198, 4294901760
        %v7883 = vsub.f32 %v7198, %v7882
        %7884 = vmatpush1.msra.mxu0 %v7883
        %7885 = vmatprep.subr.mxu0 0.0
        %v7886 = vand.u32 %v7197, 4294901760
        %v7887 = vsub.f32 %v7197, %v7886
        %7888 = vmatpush1.msra.mxu0 %v7887
        %7889 = vmatprep.subr.mxu0 0.0
        %v7890 = vand.u32 %v7196, 4294901760
        %v7891 = vsub.f32 %v7196, %v7890
        %7892 = vmatpush1.msra.mxu0 %v7891
        %7893 = vmatprep.subr.mxu0 0.0
        %v7894 = vand.u32 %v7195, 4294901760
        %v7895 = vsub.f32 %v7195, %v7894
        %7896 = vmatpush1.msra.mxu0 %v7895
        %7897 = vmatprep.subr.mxu0 0.0
        %v7898 = vand.u32 %v7282, 4294901760
        %v7899 = vsub.f32 %v7282, %v7898
        %7900 = vmatpush2.msra.mxu0 %v7899
        %7901 = vmatprep.subr.mxu0 0.0
        %v7902 = vand.u32 %v7280, 4294901760
        %v7903 = vsub.f32 %v7280, %v7902
        %7904 = vmatpush2.msra.mxu0 %v7903
        %7905 = vmatprep.subr.mxu0 0.0
        %v7906 = vand.u32 %v7278, 4294901760
        %v7907 = vsub.f32 %v7278, %v7906
        %7908 = vmatpush2.msra.mxu0 %v7907
        %7909 = vmatprep.subr.mxu0 0.0
        %v7910 = vand.u32 %v7276, 4294901760
        %v7911 = vsub.f32 %v7276, %v7910
        %7912 = vmatpush2.msra.mxu0 %v7911
        %7913 = vmatprep.subr.mxu0 0.0
        %v7914 = vand.u32 %v7270, 4294901760
        %v7915 = vsub.f32 %v7270, %v7914
        %7916 = vmatpush2.msra.mxu0 %v7915
        %7917 = vmatprep.subr.mxu0 0.0
        %v7918 = vand.u32 %v7268, 4294901760
        %v7919 = vsub.f32 %v7268, %v7918
        %7920 = vmatpush2.msra.mxu0 %v7919
        %7921 = vmatprep.subr.mxu0 0.0
        %v7922 = vand.u32 %v7266, 4294901760
        %v7923 = vsub.f32 %v7266, %v7922
        %7924 = vmatpush2.msra.mxu0 %v7923
        %7925 = vmatprep.subr.mxu0 0.0
        %v7926 = vand.u32 %v7264, 4294901760
        %v7927 = vsub.f32 %v7264, %v7926
        %7928 = vmatpush2.msra.mxu0 %v7927
        %7929 = vmatprep.subr.mxu0 0.0
        %v7930 = vand.u32 %v7258, 4294901760
        %v7931 = vsub.f32 %v7258, %v7930
        %7932 = vmatpush2.msra.mxu0 %v7931
        %7933 = vmatprep.subr.mxu0 0.0
        %v7934 = vand.u32 %v7256, 4294901760
        %v7935 = vsub.f32 %v7256, %v7934
        %7936 = vmatpush2.msra.mxu0 %v7935
        %7937 = vmatprep.subr.mxu0 0.0
        %v7938 = vand.u32 %v7254, 4294901760
        %v7939 = vsub.f32 %v7254, %v7938
        %7940 = vmatpush2.msra.mxu0 %v7939
        %7941 = vmatprep.subr.mxu0 0.0
        %v7942 = vand.u32 %v7252, 4294901760
        %v7943 = vsub.f32 %v7252, %v7942
        %7944 = vmatpush2.msra.mxu0 %v7943
        %7945 = vmatprep.subr.mxu0 0.0
        %v7946 = vand.u32 %v7246, 4294901760
        %v7947 = vsub.f32 %v7246, %v7946
        %7948 = vmatpush2.msra.mxu0 %v7947
        %7949 = vmatprep.subr.mxu0 0.0
        %v7950 = vand.u32 %v7244, 4294901760
        %v7951 = vsub.f32 %v7244, %v7950
        %7952 = vmatpush2.msra.mxu0 %v7951
        %7953 = vmatprep.subr.mxu0 0.0
        %v7954 = vand.u32 %v7242, 4294901760
        %v7955 = vsub.f32 %v7242, %v7954
        %7956 = vmatpush2.msra.mxu0 %v7955
        %7957 = vmatprep.subr.mxu0 0.0
        %v7958 = vand.u32 %v7240, 4294901760
        %v7959 = vsub.f32 %v7240, %v7958
        %7960 = vmatpush2.msra.mxu0 %v7959
        %v7961 = vand.u32 %v7384, 4294901760
        %v7962 = vsub.f32 %v7384, %v7961
        %7963 = vmatprep.mubr.f32.mxu0 %v7962
        %v7964 = vand.u32 %v7383, 4294901760
        %v7965 = vsub.f32 %v7383, %v7964
        %7966 = vmatmul.mubr.f32.gmra.mxu0 %v7965
        %v7967 = vpop.f32.mrf.mxu0
        %v7968 = vadd.f32 %v7809, %v7967
        %v7969 = vpop.f32.mrf.mxu0
        %v7970 = vand.u32 %v7388, 4294901760
        %v7971 = vsub.f32 %v7388, %v7970
        %7972 = vmatprep.mubr.f32.mxu0 %v7971
        %v7973 = vand.u32 %v7387, 4294901760
        %v7974 = vsub.f32 %v7387, %v7973
        %7975 = vmatmul.mubr.f32.gmra.mxu0 %v7974
        %v7976 = vpop.f32.mrf.mxu0
        %v7977 = vadd.f32 %v7816, %v7976
        %v7978 = vpop.f32.mrf.mxu0
        %v7979 = vand.u32 %v7392, 4294901760
        %v7980 = vsub.f32 %v7392, %v7979
        %7981 = vmatprep.mubr.f32.mxu0 %v7980
        %v7982 = vand.u32 %v7391, 4294901760
        %v7983 = vsub.f32 %v7391, %v7982
        %7984 = vmatmul.mubr.f32.gmra.mxu0 %v7983
        %v7985 = vpop.f32.mrf.mxu0
        %v7986 = vadd.f32 %v7823, %v7985
        %v7987 = vpop.f32.mrf.mxu0
        %v7988 = vand.u32 %v7396, 4294901760
        %v7989 = vsub.f32 %v7396, %v7988
        %7990 = vmatprep.mubr.f32.mxu0 %v7989
        %v7991 = vand.u32 %v7395, 4294901760
        %v7992 = vsub.f32 %v7395, %v7991
        %7993 = vmatmul.mubr.f32.gmra.mxu0 %v7992
        %v7994 = vpop.f32.mrf.mxu0
        %v7995 = vadd.f32 %v7830, %v7994
        %v7996 = vpop.f32.mrf.mxu0
        %7997 = vdwg.mxu0
        %7998 = vmatprep.subr.mxu0 0.0
        %v7999 = vand.u32 %v7234, 4294901760
        %8000 = vmatpush1.msra.mxu0 %v7999
        %8001 = vmatprep.subr.mxu0 0.0
        %v8002 = vand.u32 %v7232, 4294901760
        %8003 = vmatpush1.msra.mxu0 %v8002
        %8004 = vmatprep.subr.mxu0 0.0
        %v8005 = vand.u32 %v7230, 4294901760
        %8006 = vmatpush1.msra.mxu0 %v8005
        %8007 = vmatprep.subr.mxu0 0.0
        %v8008 = vand.u32 %v7228, 4294901760
        %8009 = vmatpush1.msra.mxu0 %v8008
        %8010 = vmatprep.subr.mxu0 0.0
        %v8011 = vand.u32 %v7222, 4294901760
        %8012 = vmatpush1.msra.mxu0 %v8011
        %8013 = vmatprep.subr.mxu0 0.0
        %v8014 = vand.u32 %v7220, 4294901760
        %8015 = vmatpush1.msra.mxu0 %v8014
        %8016 = vmatprep.subr.mxu0 0.0
        %v8017 = vand.u32 %v7218, 4294901760
        %8018 = vmatpush1.msra.mxu0 %v8017
        %8019 = vmatprep.subr.mxu0 0.0
        %v8020 = vand.u32 %v7216, 4294901760
        %8021 = vmatpush1.msra.mxu0 %v8020
        %8022 = vmatprep.subr.mxu0 0.0
        %v8023 = vand.u32 %v7210, 4294901760
        %8024 = vmatpush1.msra.mxu0 %v8023
        %8025 = vmatprep.subr.mxu0 0.0
        %v8026 = vand.u32 %v7208, 4294901760
        %8027 = vmatpush1.msra.mxu0 %v8026
        %8028 = vmatprep.subr.mxu0 0.0
        %v8029 = vand.u32 %v7206, 4294901760
        %8030 = vmatpush1.msra.mxu0 %v8029
        %8031 = vmatprep.subr.mxu0 0.0
        %v8032 = vand.u32 %v7204, 4294901760
        %8033 = vmatpush1.msra.mxu0 %v8032
        %8034 = vmatprep.subr.mxu0 0.0
        %v8035 = vand.u32 %v7198, 4294901760
        %8036 = vmatpush1.msra.mxu0 %v8035
        %8037 = vmatprep.subr.mxu0 0.0
        %v8038 = vand.u32 %v7197, 4294901760
        %8039 = vmatpush1.msra.mxu0 %v8038
        %8040 = vmatprep.subr.mxu0 0.0
        %v8041 = vand.u32 %v7196, 4294901760
        %8042 = vmatpush1.msra.mxu0 %v8041
        %8043 = vmatprep.subr.mxu0 0.0
        %v8044 = vand.u32 %v7195, 4294901760
        %8045 = vmatpush1.msra.mxu0 %v8044
        %8046 = vmatprep.subr.mxu0 0.0
        %v8047 = vand.u32 %v7282, 4294901760
        %8048 = vmatpush2.msra.mxu0 %v8047
        %8049 = vmatprep.subr.mxu0 0.0
        %v8050 = vand.u32 %v7280, 4294901760
        %8051 = vmatpush2.msra.mxu0 %v8050
        %8052 = vmatprep.subr.mxu0 0.0
        %v8053 = vand.u32 %v7278, 4294901760
        %8054 = vmatpush2.msra.mxu0 %v8053
        %8055 = vmatprep.subr.mxu0 0.0
        %v8056 = vand.u32 %v7276, 4294901760
        %8057 = vmatpush2.msra.mxu0 %v8056
        %8058 = vmatprep.subr.mxu0 0.0
        %v8059 = vand.u32 %v7270, 4294901760
        %8060 = vmatpush2.msra.mxu0 %v8059
        %8061 = vmatprep.subr.mxu0 0.0
        %v8062 = vand.u32 %v7268, 4294901760
        %8063 = vmatpush2.msra.mxu0 %v8062
        %8064 = vmatprep.subr.mxu0 0.0
        %v8065 = vand.u32 %v7266, 4294901760
        %8066 = vmatpush2.msra.mxu0 %v8065
        %8067 = vmatprep.subr.mxu0 0.0
        %v8068 = vand.u32 %v7264, 4294901760
        %8069 = vmatpush2.msra.mxu0 %v8068
        %8070 = vmatprep.subr.mxu0 0.0
        %v8071 = vand.u32 %v7258, 4294901760
        %8072 = vmatpush2.msra.mxu0 %v8071
        %8073 = vmatprep.subr.mxu0 0.0
        %v8074 = vand.u32 %v7256, 4294901760
        %8075 = vmatpush2.msra.mxu0 %v8074
        %8076 = vmatprep.subr.mxu0 0.0
        %v8077 = vand.u32 %v7254, 4294901760
        %8078 = vmatpush2.msra.mxu0 %v8077
        %8079 = vmatprep.subr.mxu0 0.0
        %v8080 = vand.u32 %v7252, 4294901760
        %8081 = vmatpush2.msra.mxu0 %v8080
        %8082 = vmatprep.subr.mxu0 0.0
        %v8083 = vand.u32 %v7246, 4294901760
        %8084 = vmatpush2.msra.mxu0 %v8083
        %8085 = vmatprep.subr.mxu0 0.0
        %v8086 = vand.u32 %v7244, 4294901760
        %8087 = vmatpush2.msra.mxu0 %v8086
        %8088 = vmatprep.subr.mxu0 0.0
        %v8089 = vand.u32 %v7242, 4294901760
        %8090 = vmatpush2.msra.mxu0 %v8089
        %8091 = vmatprep.subr.mxu0 0.0
        %v8092 = vand.u32 %v7240, 4294901760
        %8093 = vmatpush2.msra.mxu0 %v8092
        %v8094 = vand.u32 %v7384, 4294901760
        %v8095 = vsub.f32 %v7384, %v8094
        %v8096 = vand.u32 %v8095, 4294901760
        %8097 = vmatprep.mubr.f32.mxu0 %v8096
        %v8098 = vand.u32 %v7383, 4294901760
        %v8099 = vsub.f32 %v7383, %v8098
        %v8100 = vand.u32 %v8099, 4294901760
        %8101 = vmatmul.mubr.f32.gmra.mxu0 %v8100
        %v8102 = vpop.f32.mrf.mxu0
        %v8103 = vadd.f32 %v7968, %v8102
        %v8104 = vpop.f32.mrf.mxu0
        %v8105 = vand.u32 %v7388, 4294901760
        %v8106 = vsub.f32 %v7388, %v8105
        %v8107 = vand.u32 %v8106, 4294901760
        %8108 = vmatprep.mubr.f32.mxu0 %v8107
        %v8109 = vand.u32 %v7387, 4294901760
        %v8110 = vsub.f32 %v7387, %v8109
        %v8111 = vand.u32 %v8110, 4294901760
        %8112 = vmatmul.mubr.f32.gmra.mxu0 %v8111
        %v8113 = vpop.f32.mrf.mxu0
        %v8114 = vadd.f32 %v7977, %v8113
        %v8115 = vpop.f32.mrf.mxu0
        %v8116 = vand.u32 %v7392, 4294901760
        %v8117 = vsub.f32 %v7392, %v8116
        %v8118 = vand.u32 %v8117, 4294901760
        %8119 = vmatprep.mubr.f32.mxu0 %v8118
        %v8120 = vand.u32 %v7391, 4294901760
        %v8121 = vsub.f32 %v7391, %v8120
        %v8122 = vand.u32 %v8121, 4294901760
        %8123 = vmatmul.mubr.f32.gmra.mxu0 %v8122
        %v8124 = vpop.f32.mrf.mxu0
        %v8125 = vadd.f32 %v7986, %v8124
        %v8126 = vpop.f32.mrf.mxu0
        %v8127 = vand.u32 %v7396, 4294901760
        %v8128 = vsub.f32 %v7396, %v8127
        %v8129 = vand.u32 %v8128, 4294901760
        %8130 = vmatprep.mubr.f32.mxu0 %v8129
        %v8131 = vand.u32 %v7395, 4294901760
        %v8132 = vsub.f32 %v7395, %v8131
        %v8133 = vand.u32 %v8132, 4294901760
        %8134 = vmatmul.mubr.f32.gmra.mxu0 %v8133
        %v8135 = vpop.f32.mrf.mxu0
        %v8136 = vadd.f32 %v7995, %v8135
        %v8137 = vpop.f32.mrf.mxu0
        %8138 = vdwg.mxu0
        %8139 = vmatprep.subr.mxu0 0.0
        %v8140 = vand.u32 %v7234, 4294901760
        %v8141 = vsub.f32 %v7234, %v8140
        %v8142 = vand.u32 %v8141, 4294901760
        %8143 = vmatpush1.msra.mxu0 %v8142
        %8144 = vmatprep.subr.mxu0 0.0
        %v8145 = vand.u32 %v7232, 4294901760
        %v8146 = vsub.f32 %v7232, %v8145
        %v8147 = vand.u32 %v8146, 4294901760
        %8148 = vmatpush1.msra.mxu0 %v8147
        %8149 = vmatprep.subr.mxu0 0.0
        %v8150 = vand.u32 %v7230, 4294901760
        %v8151 = vsub.f32 %v7230, %v8150
        %v8152 = vand.u32 %v8151, 4294901760
        %8153 = vmatpush1.msra.mxu0 %v8152
        %8154 = vmatprep.subr.mxu0 0.0
        %v8155 = vand.u32 %v7228, 4294901760
        %v8156 = vsub.f32 %v7228, %v8155
        %v8157 = vand.u32 %v8156, 4294901760
        %8158 = vmatpush1.msra.mxu0 %v8157
        %8159 = vmatprep.subr.mxu0 0.0
        %v8160 = vand.u32 %v7222, 4294901760
        %v8161 = vsub.f32 %v7222, %v8160
        %v8162 = vand.u32 %v8161, 4294901760
        %8163 = vmatpush1.msra.mxu0 %v8162
        %8164 = vmatprep.subr.mxu0 0.0
        %v8165 = vand.u32 %v7220, 4294901760
        %v8166 = vsub.f32 %v7220, %v8165
        %v8167 = vand.u32 %v8166, 4294901760
        %8168 = vmatpush1.msra.mxu0 %v8167
        %8169 = vmatprep.subr.mxu0 0.0
        %v8170 = vand.u32 %v7218, 4294901760
        %v8171 = vsub.f32 %v7218, %v8170
        %v8172 = vand.u32 %v8171, 4294901760
        %8173 = vmatpush1.msra.mxu0 %v8172
        %8174 = vmatprep.subr.mxu0 0.0
        %v8175 = vand.u32 %v7216, 4294901760
        %v8176 = vsub.f32 %v7216, %v8175
        %v8177 = vand.u32 %v8176, 4294901760
        %8178 = vmatpush1.msra.mxu0 %v8177
        %8179 = vmatprep.subr.mxu0 0.0
        %v8180 = vand.u32 %v7210, 4294901760
        %v8181 = vsub.f32 %v7210, %v8180
        %v8182 = vand.u32 %v8181, 4294901760
        %8183 = vmatpush1.msra.mxu0 %v8182
        %8184 = vmatprep.subr.mxu0 0.0
        %v8185 = vand.u32 %v7208, 4294901760
        %v8186 = vsub.f32 %v7208, %v8185
        %v8187 = vand.u32 %v8186, 4294901760
        %8188 = vmatpush1.msra.mxu0 %v8187
        %8189 = vmatprep.subr.mxu0 0.0
        %v8190 = vand.u32 %v7206, 4294901760
        %v8191 = vsub.f32 %v7206, %v8190
        %v8192 = vand.u32 %v8191, 4294901760
        %8193 = vmatpush1.msra.mxu0 %v8192
        %8194 = vmatprep.subr.mxu0 0.0
        %v8195 = vand.u32 %v7204, 4294901760
        %v8196 = vsub.f32 %v7204, %v8195
        %v8197 = vand.u32 %v8196, 4294901760
        %8198 = vmatpush1.msra.mxu0 %v8197
        %8199 = vmatprep.subr.mxu0 0.0
        %v8200 = vand.u32 %v7198, 4294901760
        %v8201 = vsub.f32 %v7198, %v8200
        %v8202 = vand.u32 %v8201, 4294901760
        %8203 = vmatpush1.msra.mxu0 %v8202
        %8204 = vmatprep.subr.mxu0 0.0
        %v8205 = vand.u32 %v7197, 4294901760
        %v8206 = vsub.f32 %v7197, %v8205
        %v8207 = vand.u32 %v8206, 4294901760
        %8208 = vmatpush1.msra.mxu0 %v8207
        %8209 = vmatprep.subr.mxu0 0.0
        %v8210 = vand.u32 %v7196, 4294901760
        %v8211 = vsub.f32 %v7196, %v8210
        %v8212 = vand.u32 %v8211, 4294901760
        %8213 = vmatpush1.msra.mxu0 %v8212
        %8214 = vmatprep.subr.mxu0 0.0
        %v8215 = vand.u32 %v7195, 4294901760
        %v8216 = vsub.f32 %v7195, %v8215
        %v8217 = vand.u32 %v8216, 4294901760
        %8218 = vmatpush1.msra.mxu0 %v8217
        %8219 = vmatprep.subr.mxu0 0.0
        %v8220 = vand.u32 %v7282, 4294901760
        %v8221 = vsub.f32 %v7282, %v8220
        %v8222 = vand.u32 %v8221, 4294901760
        %8223 = vmatpush2.msra.mxu0 %v8222
        %8224 = vmatprep.subr.mxu0 0.0
        %v8225 = vand.u32 %v7280, 4294901760
        %v8226 = vsub.f32 %v7280, %v8225
        %v8227 = vand.u32 %v8226, 4294901760
        %8228 = vmatpush2.msra.mxu0 %v8227
        %8229 = vmatprep.subr.mxu0 0.0
        %v8230 = vand.u32 %v7278, 4294901760
        %v8231 = vsub.f32 %v7278, %v8230
        %v8232 = vand.u32 %v8231, 4294901760
        %8233 = vmatpush2.msra.mxu0 %v8232
        %8234 = vmatprep.subr.mxu0 0.0
        %v8235 = vand.u32 %v7276, 4294901760
        %v8236 = vsub.f32 %v7276, %v8235
        %v8237 = vand.u32 %v8236, 4294901760
        %8238 = vmatpush2.msra.mxu0 %v8237
        %8239 = vmatprep.subr.mxu0 0.0
        %v8240 = vand.u32 %v7270, 4294901760
        %v8241 = vsub.f32 %v7270, %v8240
        %v8242 = vand.u32 %v8241, 4294901760
        %8243 = vmatpush2.msra.mxu0 %v8242
        %8244 = vmatprep.subr.mxu0 0.0
        %v8245 = vand.u32 %v7268, 4294901760
        %v8246 = vsub.f32 %v7268, %v8245
        %v8247 = vand.u32 %v8246, 4294901760
        %8248 = vmatpush2.msra.mxu0 %v8247
        %8249 = vmatprep.subr.mxu0 0.0
        %v8250 = vand.u32 %v7266, 4294901760
        %v8251 = vsub.f32 %v7266, %v8250
        %v8252 = vand.u32 %v8251, 4294901760
        %8253 = vmatpush2.msra.mxu0 %v8252
        %8254 = vmatprep.subr.mxu0 0.0
        %v8255 = vand.u32 %v7264, 4294901760
        %v8256 = vsub.f32 %v7264, %v8255
        %v8257 = vand.u32 %v8256, 4294901760
        %8258 = vmatpush2.msra.mxu0 %v8257
        %8259 = vmatprep.subr.mxu0 0.0
        %v8260 = vand.u32 %v7258, 4294901760
        %v8261 = vsub.f32 %v7258, %v8260
        %v8262 = vand.u32 %v8261, 4294901760
        %8263 = vmatpush2.msra.mxu0 %v8262
        %8264 = vmatprep.subr.mxu0 0.0
        %v8265 = vand.u32 %v7256, 4294901760
        %v8266 = vsub.f32 %v7256, %v8265
        %v8267 = vand.u32 %v8266, 4294901760
        %8268 = vmatpush2.msra.mxu0 %v8267
        %8269 = vmatprep.subr.mxu0 0.0
        %v8270 = vand.u32 %v7254, 4294901760
        %v8271 = vsub.f32 %v7254, %v8270
        %v8272 = vand.u32 %v8271, 4294901760
        %8273 = vmatpush2.msra.mxu0 %v8272
        %8274 = vmatprep.subr.mxu0 0.0
        %v8275 = vand.u32 %v7252, 4294901760
        %v8276 = vsub.f32 %v7252, %v8275
        %v8277 = vand.u32 %v8276, 4294901760
        %8278 = vmatpush2.msra.mxu0 %v8277
        %8279 = vmatprep.subr.mxu0 0.0
        %v8280 = vand.u32 %v7246, 4294901760
        %v8281 = vsub.f32 %v7246, %v8280
        %v8282 = vand.u32 %v8281, 4294901760
        %8283 = vmatpush2.msra.mxu0 %v8282
        %8284 = vmatprep.subr.mxu0 0.0
        %v8285 = vand.u32 %v7244, 4294901760
        %v8286 = vsub.f32 %v7244, %v8285
        %v8287 = vand.u32 %v8286, 4294901760
        %8288 = vmatpush2.msra.mxu0 %v8287
        %8289 = vmatprep.subr.mxu0 0.0
        %v8290 = vand.u32 %v7242, 4294901760
        %v8291 = vsub.f32 %v7242, %v8290
        %v8292 = vand.u32 %v8291, 4294901760
        %8293 = vmatpush2.msra.mxu0 %v8292
        %8294 = vmatprep.subr.mxu0 0.0
        %v8295 = vand.u32 %v7240, 4294901760
        %v8296 = vsub.f32 %v7240, %v8295
        %v8297 = vand.u32 %v8296, 4294901760
        %8298 = vmatpush2.msra.mxu0 %v8297
        %v8299 = vand.u32 %v7384, 4294901760
        %8300 = vmatprep.mubr.f32.mxu0 %v8299
        %v8301 = vand.u32 %v7383, 4294901760
        %8302 = vmatmul.mubr.f32.gmra.mxu0 %v8301
        %v8303 = vpop.f32.mrf.mxu0
        %v8304 = vadd.f32 %v8103, %v8303
        %v8305 = vpop.f32.mrf.mxu0
        %v8306 = vand.u32 %v7388, 4294901760
        %8307 = vmatprep.mubr.f32.mxu0 %v8306
        %v8308 = vand.u32 %v7387, 4294901760
        %8309 = vmatmul.mubr.f32.gmra.mxu0 %v8308
        %v8310 = vpop.f32.mrf.mxu0
        %v8311 = vadd.f32 %v8114, %v8310
        %v8312 = vpop.f32.mrf.mxu0
        %v8313 = vand.u32 %v7392, 4294901760
        %8314 = vmatprep.mubr.f32.mxu0 %v8313
        %v8315 = vand.u32 %v7391, 4294901760
        %8316 = vmatmul.mubr.f32.gmra.mxu0 %v8315
        %v8317 = vpop.f32.mrf.mxu0
        %v8318 = vadd.f32 %v8125, %v8317
        %v8319 = vpop.f32.mrf.mxu0
        %v8320 = vand.u32 %v7396, 4294901760
        %8321 = vmatprep.mubr.f32.mxu0 %v8320
        %v8322 = vand.u32 %v7395, 4294901760
        %8323 = vmatmul.mubr.f32.gmra.mxu0 %v8322
        %v8324 = vpop.f32.mrf.mxu0
        %v8325 = vadd.f32 %v8136, %v8324
        %v8326 = vpop.f32.mrf.mxu0
        %8327 = vdwg.mxu0
        %8328 = vmatprep.subr.mxu0 0.0
        %v8329 = vand.u32 %v7234, 4294901760
        %8330 = vmatpush1.msra.mxu0 %v8329
        %8331 = vmatprep.subr.mxu0 0.0
        %v8332 = vand.u32 %v7232, 4294901760
        %8333 = vmatpush1.msra.mxu0 %v8332
        %8334 = vmatprep.subr.mxu0 0.0
        %v8335 = vand.u32 %v7230, 4294901760
        %8336 = vmatpush1.msra.mxu0 %v8335
        %8337 = vmatprep.subr.mxu0 0.0
        %v8338 = vand.u32 %v7228, 4294901760
        %8339 = vmatpush1.msra.mxu0 %v8338
        %8340 = vmatprep.subr.mxu0 0.0
        %v8341 = vand.u32 %v7222, 4294901760
        %8342 = vmatpush1.msra.mxu0 %v8341
        %8343 = vmatprep.subr.mxu0 0.0
        %v8344 = vand.u32 %v7220, 4294901760
        %8345 = vmatpush1.msra.mxu0 %v8344
        %8346 = vmatprep.subr.mxu0 0.0
        %v8347 = vand.u32 %v7218, 4294901760
        %8348 = vmatpush1.msra.mxu0 %v8347
        %8349 = vmatprep.subr.mxu0 0.0
        %v8350 = vand.u32 %v7216, 4294901760
        %8351 = vmatpush1.msra.mxu0 %v8350
        %8352 = vmatprep.subr.mxu0 0.0
        %v8353 = vand.u32 %v7210, 4294901760
        %8354 = vmatpush1.msra.mxu0 %v8353
        %8355 = vmatprep.subr.mxu0 0.0
        %v8356 = vand.u32 %v7208, 4294901760
        %8357 = vmatpush1.msra.mxu0 %v8356
        %8358 = vmatprep.subr.mxu0 0.0
        %v8359 = vand.u32 %v7206, 4294901760
        %8360 = vmatpush1.msra.mxu0 %v8359
        %8361 = vmatprep.subr.mxu0 0.0
        %v8362 = vand.u32 %v7204, 4294901760
        %8363 = vmatpush1.msra.mxu0 %v8362
        %8364 = vmatprep.subr.mxu0 0.0
        %v8365 = vand.u32 %v7198, 4294901760
        %8366 = vmatpush1.msra.mxu0 %v8365
        %8367 = vmatprep.subr.mxu0 0.0
        %v8368 = vand.u32 %v7197, 4294901760
        %8369 = vmatpush1.msra.mxu0 %v8368
        %8370 = vmatprep.subr.mxu0 0.0
        %v8371 = vand.u32 %v7196, 4294901760
        %8372 = vmatpush1.msra.mxu0 %v8371
        %8373 = vmatprep.subr.mxu0 0.0
        %v8374 = vand.u32 %v7195, 4294901760
        %8375 = vmatpush1.msra.mxu0 %v8374
        %8376 = vmatprep.subr.mxu0 0.0
        %v8377 = vand.u32 %v7282, 4294901760
        %8378 = vmatpush2.msra.mxu0 %v8377
        %8379 = vmatprep.subr.mxu0 0.0
        %v8380 = vand.u32 %v7280, 4294901760
        %8381 = vmatpush2.msra.mxu0 %v8380
        %8382 = vmatprep.subr.mxu0 0.0
        %v8383 = vand.u32 %v7278, 4294901760
        %8384 = vmatpush2.msra.mxu0 %v8383
        %8385 = vmatprep.subr.mxu0 0.0
        %v8386 = vand.u32 %v7276, 4294901760
        %8387 = vmatpush2.msra.mxu0 %v8386
        %8388 = vmatprep.subr.mxu0 0.0
        %v8389 = vand.u32 %v7270, 4294901760
        %8390 = vmatpush2.msra.mxu0 %v8389
        %8391 = vmatprep.subr.mxu0 0.0
        %v8392 = vand.u32 %v7268, 4294901760
        %8393 = vmatpush2.msra.mxu0 %v8392
        %8394 = vmatprep.subr.mxu0 0.0
        %v8395 = vand.u32 %v7266, 4294901760
        %8396 = vmatpush2.msra.mxu0 %v8395
        %8397 = vmatprep.subr.mxu0 0.0
        %v8398 = vand.u32 %v7264, 4294901760
        %8399 = vmatpush2.msra.mxu0 %v8398
        %8400 = vmatprep.subr.mxu0 0.0
        %v8401 = vand.u32 %v7258, 4294901760
        %8402 = vmatpush2.msra.mxu0 %v8401
        %8403 = vmatprep.subr.mxu0 0.0
        %v8404 = vand.u32 %v7256, 4294901760
        %8405 = vmatpush2.msra.mxu0 %v8404
        %8406 = vmatprep.subr.mxu0 0.0
        %v8407 = vand.u32 %v7254, 4294901760
        %8408 = vmatpush2.msra.mxu0 %v8407
        %8409 = vmatprep.subr.mxu0 0.0
        %v8410 = vand.u32 %v7252, 4294901760
        %8411 = vmatpush2.msra.mxu0 %v8410
        %8412 = vmatprep.subr.mxu0 0.0
        %v8413 = vand.u32 %v7246, 4294901760
        %8414 = vmatpush2.msra.mxu0 %v8413
        %8415 = vmatprep.subr.mxu0 0.0
        %v8416 = vand.u32 %v7244, 4294901760
        %8417 = vmatpush2.msra.mxu0 %v8416
        %8418 = vmatprep.subr.mxu0 0.0
        %v8419 = vand.u32 %v7242, 4294901760
        %8420 = vmatpush2.msra.mxu0 %v8419
        %8421 = vmatprep.subr.mxu0 0.0
        %v8422 = vand.u32 %v7240, 4294901760
        %8423 = vmatpush2.msra.mxu0 %v8422
        %v8424 = vand.u32 %v7384, 4294901760
        %8425 = vmatprep.mubr.f32.mxu0 %v8424
        %v8426 = vand.u32 %v7383, 4294901760
        %8427 = vmatmul.mubr.f32.gmra.mxu0 %v8426
        %v8428 = vpop.f32.mrf.mxu0
        %v8429 = vadd.f32 %v8304, %v8428
        %v8430 = vpop.f32.mrf.mxu0
        %v8431 = vand.u32 %v7388, 4294901760
        %8432 = vmatprep.mubr.f32.mxu0 %v8431
        %v8433 = vand.u32 %v7387, 4294901760
        %8434 = vmatmul.mubr.f32.gmra.mxu0 %v8433
        %v8435 = vpop.f32.mrf.mxu0
        %v8436 = vadd.f32 %v8311, %v8435
        %v8437 = vpop.f32.mrf.mxu0
        %v8438 = vand.u32 %v7392, 4294901760
        %8439 = vmatprep.mubr.f32.mxu0 %v8438
        %v8440 = vand.u32 %v7391, 4294901760
        %8441 = vmatmul.mubr.f32.gmra.mxu0 %v8440
        %v8442 = vpop.f32.mrf.mxu0
        %v8443 = vadd.f32 %v8318, %v8442
        %v8444 = vpop.f32.mrf.mxu0
        %v8445 = vand.u32 %v7396, 4294901760
        %8446 = vmatprep.mubr.f32.mxu0 %v8445
        %v8447 = vand.u32 %v7395, 4294901760
        %8448 = vmatmul.mubr.f32.gmra.mxu0 %v8447
        %v8449 = vpop.f32.mrf.mxu0
        %v8450 = vadd.f32 %v8325, %v8449
        %v8451 = vpop.f32.mrf.mxu0
        %8452 = vdwg.mxu0
        %8453 = vmatprep.subr.mxu0 0.0
        %v8454 = vand.u32 %v7330, 4294901760
        %8455 = vmatpush1.msra.mxu0 %v8454
        %8456 = vmatprep.subr.mxu0 0.0
        %v8457 = vand.u32 %v7328, 4294901760
        %8458 = vmatpush1.msra.mxu0 %v8457
        %8459 = vmatprep.subr.mxu0 0.0
        %v8460 = vand.u32 %v7326, 4294901760
        %8461 = vmatpush1.msra.mxu0 %v8460
        %8462 = vmatprep.subr.mxu0 0.0
        %v8463 = vand.u32 %v7324, 4294901760
        %8464 = vmatpush1.msra.mxu0 %v8463
        %8465 = vmatprep.subr.mxu0 0.0
        %v8466 = vand.u32 %v7318, 4294901760
        %8467 = vmatpush1.msra.mxu0 %v8466
        %8468 = vmatprep.subr.mxu0 0.0
        %v8469 = vand.u32 %v7316, 4294901760
        %8470 = vmatpush1.msra.mxu0 %v8469
        %8471 = vmatprep.subr.mxu0 0.0
        %v8472 = vand.u32 %v7314, 4294901760
        %8473 = vmatpush1.msra.mxu0 %v8472
        %8474 = vmatprep.subr.mxu0 0.0
        %v8475 = vand.u32 %v7312, 4294901760
        %8476 = vmatpush1.msra.mxu0 %v8475
        %8477 = vmatprep.subr.mxu0 0.0
        %v8478 = vand.u32 %v7306, 4294901760
        %8479 = vmatpush1.msra.mxu0 %v8478
        %8480 = vmatprep.subr.mxu0 0.0
        %v8481 = vand.u32 %v7304, 4294901760
        %8482 = vmatpush1.msra.mxu0 %v8481
        %8483 = vmatprep.subr.mxu0 0.0
        %v8484 = vand.u32 %v7302, 4294901760
        %8485 = vmatpush1.msra.mxu0 %v8484
        %8486 = vmatprep.subr.mxu0 0.0
        %v8487 = vand.u32 %v7300, 4294901760
        %8488 = vmatpush1.msra.mxu0 %v8487
        %8489 = vmatprep.subr.mxu0 0.0
        %v8490 = vand.u32 %v7294, 4294901760
        %8491 = vmatpush1.msra.mxu0 %v8490
        %8492 = vmatprep.subr.mxu0 0.0
        %v8493 = vand.u32 %v7292, 4294901760
        %8494 = vmatpush1.msra.mxu0 %v8493
        %8495 = vmatprep.subr.mxu0 0.0
        %v8496 = vand.u32 %v7290, 4294901760
        %8497 = vmatpush1.msra.mxu0 %v8496
        %8498 = vmatprep.subr.mxu0 0.0
        %v8499 = vand.u32 %v7288, 4294901760
        %8500 = vmatpush1.msra.mxu0 %v8499
        %8501 = vmatprep.subr.mxu0 0.0
        %v8502 = vand.u32 %v7378, 4294901760
        %8503 = vmatpush2.msra.mxu0 %v8502
        %8504 = vmatprep.subr.mxu0 0.0
        %v8505 = vand.u32 %v7376, 4294901760
        %8506 = vmatpush2.msra.mxu0 %v8505
        %8507 = vmatprep.subr.mxu0 0.0
        %v8508 = vand.u32 %v7374, 4294901760
        %8509 = vmatpush2.msra.mxu0 %v8508
        %8510 = vmatprep.subr.mxu0 0.0
        %v8511 = vand.u32 %v7372, 4294901760
        %8512 = vmatpush2.msra.mxu0 %v8511
        %8513 = vmatprep.subr.mxu0 0.0
        %v8514 = vand.u32 %v7366, 4294901760
        %8515 = vmatpush2.msra.mxu0 %v8514
        %8516 = vmatprep.subr.mxu0 0.0
        %v8517 = vand.u32 %v7364, 4294901760
        %8518 = vmatpush2.msra.mxu0 %v8517
        %8519 = vmatprep.subr.mxu0 0.0
        %v8520 = vand.u32 %v7362, 4294901760
        %8521 = vmatpush2.msra.mxu0 %v8520
        %8522 = vmatprep.subr.mxu0 0.0
        %v8523 = vand.u32 %v7360, 4294901760
        %8524 = vmatpush2.msra.mxu0 %v8523
        %8525 = vmatprep.subr.mxu0 0.0
        %v8526 = vand.u32 %v7354, 4294901760
        %8527 = vmatpush2.msra.mxu0 %v8526
        %8528 = vmatprep.subr.mxu0 0.0
        %v8529 = vand.u32 %v7352, 4294901760
        %8530 = vmatpush2.msra.mxu0 %v8529
        %8531 = vmatprep.subr.mxu0 0.0
        %v8532 = vand.u32 %v7350, 4294901760
        %8533 = vmatpush2.msra.mxu0 %v8532
        %8534 = vmatprep.subr.mxu0 0.0
        %v8535 = vand.u32 %v7348, 4294901760
        %8536 = vmatpush2.msra.mxu0 %v8535
        %8537 = vmatprep.subr.mxu0 0.0
        %v8538 = vand.u32 %v7342, 4294901760
        %8539 = vmatpush2.msra.mxu0 %v8538
        %8540 = vmatprep.subr.mxu0 0.0
        %v8541 = vand.u32 %v7340, 4294901760
        %8542 = vmatpush2.msra.mxu0 %v8541
        %8543 = vmatprep.subr.mxu0 0.0
        %v8544 = vand.u32 %v7338, 4294901760
        %8545 = vmatpush2.msra.mxu0 %v8544
        %8546 = vmatprep.subr.mxu0 0.0
        %v8547 = vand.u32 %v7336, 4294901760
        %8548 = vmatpush2.msra.mxu0 %v8547
        %v8549 = vand.u32 %v7386, 4294901760
        %v8550 = vsub.f32 %v7386, %v8549
        %v8551 = vand.u32 %v8550, 4294901760
        %v8552 = vsub.f32 %v8550, %v8551
        %v8553 = vand.u32 %v8552, 4294901760
        %8554 = vmatprep.mubr.f32.mxu0 %v8553
        %v8555 = vand.u32 %v7385, 4294901760
        %v8556 = vsub.f32 %v7385, %v8555
        %v8557 = vand.u32 %v8556, 4294901760
        %v8558 = vsub.f32 %v8556, %v8557
        %v8559 = vand.u32 %v8558, 4294901760
        %8560 = vmatmul.mubr.f32.gmra.mxu0 %v8559
        %v8561 = vpop.f32.mrf.mxu0
        %v8562 = vadd.f32 %v8429, %v8561
        %v8563 = vpop.f32.mrf.mxu0
        %v8564 = vand.u32 %v7390, 4294901760
        %v8565 = vsub.f32 %v7390, %v8564
        %v8566 = vand.u32 %v8565, 4294901760
        %v8567 = vsub.f32 %v8565, %v8566
        %v8568 = vand.u32 %v8567, 4294901760
        %8569 = vmatprep.mubr.f32.mxu0 %v8568
        %v8570 = vand.u32 %v7389, 4294901760
        %v8571 = vsub.f32 %v7389, %v8570
        %v8572 = vand.u32 %v8571, 4294901760
        %v8573 = vsub.f32 %v8571, %v8572
        %v8574 = vand.u32 %v8573, 4294901760
        %8575 = vmatmul.mubr.f32.gmra.mxu0 %v8574
        %v8576 = vpop.f32.mrf.mxu0
        %v8577 = vadd.f32 %v8436, %v8576
        %v8578 = vpop.f32.mrf.mxu0
        %v8579 = vand.u32 %v7394, 4294901760
        %v8580 = vsub.f32 %v7394, %v8579
        %v8581 = vand.u32 %v8580, 4294901760
        %v8582 = vsub.f32 %v8580, %v8581
        %v8583 = vand.u32 %v8582, 4294901760
        %8584 = vmatprep.mubr.f32.mxu0 %v8583
        %v8585 = vand.u32 %v7393, 4294901760
        %v8586 = vsub.f32 %v7393, %v8585
        %v8587 = vand.u32 %v8586, 4294901760
        %v8588 = vsub.f32 %v8586, %v8587
        %v8589 = vand.u32 %v8588, 4294901760
        %8590 = vmatmul.mubr.f32.gmra.mxu0 %v8589
        %v8591 = vpop.f32.mrf.mxu0
        %v8592 = vadd.f32 %v8443, %v8591
        %v8593 = vpop.f32.mrf.mxu0
        %v8594 = vand.u32 %v7398, 4294901760
        %v8595 = vsub.f32 %v7398, %v8594
        %v8596 = vand.u32 %v8595, 4294901760
        %v8597 = vsub.f32 %v8595, %v8596
        %v8598 = vand.u32 %v8597, 4294901760
        %8599 = vmatprep.mubr.f32.mxu0 %v8598
        %v8600 = vand.u32 %v7397, 4294901760
        %v8601 = vsub.f32 %v7397, %v8600
        %v8602 = vand.u32 %v8601, 4294901760
        %v8603 = vsub.f32 %v8601, %v8602
        %v8604 = vand.u32 %v8603, 4294901760
        %8605 = vmatmul.mubr.f32.gmra.mxu0 %v8604
        %v8606 = vpop.f32.mrf.mxu0
        %v8607 = vadd.f32 %v8450, %v8606
        %v8608 = vpop.f32.mrf.mxu0
        %8609 = vdwg.mxu0
        %8610 = vmatprep.subr.mxu0 0.0
        %v8611 = vand.u32 %v7330, 4294901760
        %v8612 = vsub.f32 %v7330, %v8611
        %v8613 = vand.u32 %v8612, 4294901760
        %v8614 = vsub.f32 %v8612, %v8613
        %v8615 = vand.u32 %v8614, 4294901760
        %8616 = vmatpush1.msra.mxu0 %v8615
        %8617 = vmatprep.subr.mxu0 0.0
        %v8618 = vand.u32 %v7328, 4294901760
        %v8619 = vsub.f32 %v7328, %v8618
        %v8620 = vand.u32 %v8619, 4294901760
        %v8621 = vsub.f32 %v8619, %v8620
        %v8622 = vand.u32 %v8621, 4294901760
        %8623 = vmatpush1.msra.mxu0 %v8622
        %8624 = vmatprep.subr.mxu0 0.0
        %v8625 = vand.u32 %v7326, 4294901760
        %v8626 = vsub.f32 %v7326, %v8625
        %v8627 = vand.u32 %v8626, 4294901760
        %v8628 = vsub.f32 %v8626, %v8627
        %v8629 = vand.u32 %v8628, 4294901760
        %8630 = vmatpush1.msra.mxu0 %v8629
        %8631 = vmatprep.subr.mxu0 0.0
        %v8632 = vand.u32 %v7324, 4294901760
        %v8633 = vsub.f32 %v7324, %v8632
        %v8634 = vand.u32 %v8633, 4294901760
        %v8635 = vsub.f32 %v8633, %v8634
        %v8636 = vand.u32 %v8635, 4294901760
        %8637 = vmatpush1.msra.mxu0 %v8636
        %8638 = vmatprep.subr.mxu0 0.0
        %v8639 = vand.u32 %v7318, 4294901760
        %v8640 = vsub.f32 %v7318, %v8639
        %v8641 = vand.u32 %v8640, 4294901760
        %v8642 = vsub.f32 %v8640, %v8641
        %v8643 = vand.u32 %v8642, 4294901760
        %8644 = vmatpush1.msra.mxu0 %v8643
        %8645 = vmatprep.subr.mxu0 0.0
        %v8646 = vand.u32 %v7316, 4294901760
        %v8647 = vsub.f32 %v7316, %v8646
        %v8648 = vand.u32 %v8647, 4294901760
        %v8649 = vsub.f32 %v8647, %v8648
        %v8650 = vand.u32 %v8649, 4294901760
        %8651 = vmatpush1.msra.mxu0 %v8650
        %8652 = vmatprep.subr.mxu0 0.0
        %v8653 = vand.u32 %v7314, 4294901760
        %v8654 = vsub.f32 %v7314, %v8653
        %v8655 = vand.u32 %v8654, 4294901760
        %v8656 = vsub.f32 %v8654, %v8655
        %v8657 = vand.u32 %v8656, 4294901760
        %8658 = vmatpush1.msra.mxu0 %v8657
        %8659 = vmatprep.subr.mxu0 0.0
        %v8660 = vand.u32 %v7312, 4294901760
        %v8661 = vsub.f32 %v7312, %v8660
        %v8662 = vand.u32 %v8661, 4294901760
        %v8663 = vsub.f32 %v8661, %v8662
        %v8664 = vand.u32 %v8663, 4294901760
        %8665 = vmatpush1.msra.mxu0 %v8664
        %8666 = vmatprep.subr.mxu0 0.0
        %v8667 = vand.u32 %v7306, 4294901760
        %v8668 = vsub.f32 %v7306, %v8667
        %v8669 = vand.u32 %v8668, 4294901760
        %v8670 = vsub.f32 %v8668, %v8669
        %v8671 = vand.u32 %v8670, 4294901760
        %8672 = vmatpush1.msra.mxu0 %v8671
        %8673 = vmatprep.subr.mxu0 0.0
        %v8674 = vand.u32 %v7304, 4294901760
        %v8675 = vsub.f32 %v7304, %v8674
        %v8676 = vand.u32 %v8675, 4294901760
        %v8677 = vsub.f32 %v8675, %v8676
        %v8678 = vand.u32 %v8677, 4294901760
        %8679 = vmatpush1.msra.mxu0 %v8678
        %8680 = vmatprep.subr.mxu0 0.0
        %v8681 = vand.u32 %v7302, 4294901760
        %v8682 = vsub.f32 %v7302, %v8681
        %v8683 = vand.u32 %v8682, 4294901760
        %v8684 = vsub.f32 %v8682, %v8683
        %v8685 = vand.u32 %v8684, 4294901760
        %8686 = vmatpush1.msra.mxu0 %v8685
        %8687 = vmatprep.subr.mxu0 0.0
        %v8688 = vand.u32 %v7300, 4294901760
        %v8689 = vsub.f32 %v7300, %v8688
        %v8690 = vand.u32 %v8689, 4294901760
        %v8691 = vsub.f32 %v8689, %v8690
        %v8692 = vand.u32 %v8691, 4294901760
        %8693 = vmatpush1.msra.mxu0 %v8692
        %8694 = vmatprep.subr.mxu0 0.0
        %v8695 = vand.u32 %v7294, 4294901760
        %v8696 = vsub.f32 %v7294, %v8695
        %v8697 = vand.u32 %v8696, 4294901760
        %v8698 = vsub.f32 %v8696, %v8697
        %v8699 = vand.u32 %v8698, 4294901760
        %8700 = vmatpush1.msra.mxu0 %v8699
        %8701 = vmatprep.subr.mxu0 0.0
        %v8702 = vand.u32 %v7292, 4294901760
        %v8703 = vsub.f32 %v7292, %v8702
        %v8704 = vand.u32 %v8703, 4294901760
        %v8705 = vsub.f32 %v8703, %v8704
        %v8706 = vand.u32 %v8705, 4294901760
        %8707 = vmatpush1.msra.mxu0 %v8706
        %8708 = vmatprep.subr.mxu0 0.0
        %v8709 = vand.u32 %v7290, 4294901760
        %v8710 = vsub.f32 %v7290, %v8709
        %v8711 = vand.u32 %v8710, 4294901760
        %v8712 = vsub.f32 %v8710, %v8711
        %v8713 = vand.u32 %v8712, 4294901760
        %8714 = vmatpush1.msra.mxu0 %v8713
        %8715 = vmatprep.subr.mxu0 0.0
        %v8716 = vand.u32 %v7288, 4294901760
        %v8717 = vsub.f32 %v7288, %v8716
        %v8718 = vand.u32 %v8717, 4294901760
        %v8719 = vsub.f32 %v8717, %v8718
        %v8720 = vand.u32 %v8719, 4294901760
        %8721 = vmatpush1.msra.mxu0 %v8720
        %8722 = vmatprep.subr.mxu0 0.0
        %v8723 = vand.u32 %v7378, 4294901760
        %v8724 = vsub.f32 %v7378, %v8723
        %v8725 = vand.u32 %v8724, 4294901760
        %v8726 = vsub.f32 %v8724, %v8725
        %v8727 = vand.u32 %v8726, 4294901760
        %8728 = vmatpush2.msra.mxu0 %v8727
        %8729 = vmatprep.subr.mxu0 0.0
        %v8730 = vand.u32 %v7376, 4294901760
        %v8731 = vsub.f32 %v7376, %v8730
        %v8732 = vand.u32 %v8731, 4294901760
        %v8733 = vsub.f32 %v8731, %v8732
        %v8734 = vand.u32 %v8733, 4294901760
        %8735 = vmatpush2.msra.mxu0 %v8734
        %8736 = vmatprep.subr.mxu0 0.0
        %v8737 = vand.u32 %v7374, 4294901760
        %v8738 = vsub.f32 %v7374, %v8737
        %v8739 = vand.u32 %v8738, 4294901760
        %v8740 = vsub.f32 %v8738, %v8739
        %v8741 = vand.u32 %v8740, 4294901760
        %8742 = vmatpush2.msra.mxu0 %v8741
        %8743 = vmatprep.subr.mxu0 0.0
        %v8744 = vand.u32 %v7372, 4294901760
        %v8745 = vsub.f32 %v7372, %v8744
        %v8746 = vand.u32 %v8745, 4294901760
        %v8747 = vsub.f32 %v8745, %v8746
        %v8748 = vand.u32 %v8747, 4294901760
        %8749 = vmatpush2.msra.mxu0 %v8748
        %8750 = vmatprep.subr.mxu0 0.0
        %v8751 = vand.u32 %v7366, 4294901760
        %v8752 = vsub.f32 %v7366, %v8751
        %v8753 = vand.u32 %v8752, 4294901760
        %v8754 = vsub.f32 %v8752, %v8753
        %v8755 = vand.u32 %v8754, 4294901760
        %8756 = vmatpush2.msra.mxu0 %v8755
        %8757 = vmatprep.subr.mxu0 0.0
        %v8758 = vand.u32 %v7364, 4294901760
        %v8759 = vsub.f32 %v7364, %v8758
        %v8760 = vand.u32 %v8759, 4294901760
        %v8761 = vsub.f32 %v8759, %v8760
        %v8762 = vand.u32 %v8761, 4294901760
        %8763 = vmatpush2.msra.mxu0 %v8762
        %8764 = vmatprep.subr.mxu0 0.0
        %v8765 = vand.u32 %v7362, 4294901760
        %v8766 = vsub.f32 %v7362, %v8765
        %v8767 = vand.u32 %v8766, 4294901760
        %v8768 = vsub.f32 %v8766, %v8767
        %v8769 = vand.u32 %v8768, 4294901760
        %8770 = vmatpush2.msra.mxu0 %v8769
        %8771 = vmatprep.subr.mxu0 0.0
        %v8772 = vand.u32 %v7360, 4294901760
        %v8773 = vsub.f32 %v7360, %v8772
        %v8774 = vand.u32 %v8773, 4294901760
        %v8775 = vsub.f32 %v8773, %v8774
        %v8776 = vand.u32 %v8775, 4294901760
        %8777 = vmatpush2.msra.mxu0 %v8776
        %8778 = vmatprep.subr.mxu0 0.0
        %v8779 = vand.u32 %v7354, 4294901760
        %v8780 = vsub.f32 %v7354, %v8779
        %v8781 = vand.u32 %v8780, 4294901760
        %v8782 = vsub.f32 %v8780, %v8781
        %v8783 = vand.u32 %v8782, 4294901760
        %8784 = vmatpush2.msra.mxu0 %v8783
        %8785 = vmatprep.subr.mxu0 0.0
        %v8786 = vand.u32 %v7352, 4294901760
        %v8787 = vsub.f32 %v7352, %v8786
        %v8788 = vand.u32 %v8787, 4294901760
        %v8789 = vsub.f32 %v8787, %v8788
        %v8790 = vand.u32 %v8789, 4294901760
        %8791 = vmatpush2.msra.mxu0 %v8790
        %8792 = vmatprep.subr.mxu0 0.0
        %v8793 = vand.u32 %v7350, 4294901760
        %v8794 = vsub.f32 %v7350, %v8793
        %v8795 = vand.u32 %v8794, 4294901760
        %v8796 = vsub.f32 %v8794, %v8795
        %v8797 = vand.u32 %v8796, 4294901760
        %8798 = vmatpush2.msra.mxu0 %v8797
        %8799 = vmatprep.subr.mxu0 0.0
        %v8800 = vand.u32 %v7348, 4294901760
        %v8801 = vsub.f32 %v7348, %v8800
        %v8802 = vand.u32 %v8801, 4294901760
        %v8803 = vsub.f32 %v8801, %v8802
        %v8804 = vand.u32 %v8803, 4294901760
        %8805 = vmatpush2.msra.mxu0 %v8804
        %8806 = vmatprep.subr.mxu0 0.0
        %v8807 = vand.u32 %v7342, 4294901760
        %v8808 = vsub.f32 %v7342, %v8807
        %v8809 = vand.u32 %v8808, 4294901760
        %v8810 = vsub.f32 %v8808, %v8809
        %v8811 = vand.u32 %v8810, 4294901760
        %8812 = vmatpush2.msra.mxu0 %v8811
        %8813 = vmatprep.subr.mxu0 0.0
        %v8814 = vand.u32 %v7340, 4294901760
        %v8815 = vsub.f32 %v7340, %v8814
        %v8816 = vand.u32 %v8815, 4294901760
        %v8817 = vsub.f32 %v8815, %v8816
        %v8818 = vand.u32 %v8817, 4294901760
        %8819 = vmatpush2.msra.mxu0 %v8818
        %8820 = vmatprep.subr.mxu0 0.0
        %v8821 = vand.u32 %v7338, 4294901760
        %v8822 = vsub.f32 %v7338, %v8821
        %v8823 = vand.u32 %v8822, 4294901760
        %v8824 = vsub.f32 %v8822, %v8823
        %v8825 = vand.u32 %v8824, 4294901760
        %8826 = vmatpush2.msra.mxu0 %v8825
        %8827 = vmatprep.subr.mxu0 0.0
        %v8828 = vand.u32 %v7336, 4294901760
        %v8829 = vsub.f32 %v7336, %v8828
        %v8830 = vand.u32 %v8829, 4294901760
        %v8831 = vsub.f32 %v8829, %v8830
        %v8832 = vand.u32 %v8831, 4294901760
        %8833 = vmatpush2.msra.mxu0 %v8832
        %v8834 = vand.u32 %v7386, 4294901760
        %8835 = vmatprep.mubr.f32.mxu0 %v8834
        %v8836 = vand.u32 %v7385, 4294901760
        %8837 = vmatmul.mubr.f32.gmra.mxu0 %v8836
        %v8838 = vpop.f32.mrf.mxu0
        %v8839 = vadd.f32 %v8562, %v8838
        %v8840 = vpop.f32.mrf.mxu0
        %v8841 = vand.u32 %v7390, 4294901760
        %8842 = vmatprep.mubr.f32.mxu0 %v8841
        %v8843 = vand.u32 %v7389, 4294901760
        %8844 = vmatmul.mubr.f32.gmra.mxu0 %v8843
        %v8845 = vpop.f32.mrf.mxu0
        %v8846 = vadd.f32 %v8577, %v8845
        %v8847 = vpop.f32.mrf.mxu0
        %v8848 = vand.u32 %v7394, 4294901760
        %8849 = vmatprep.mubr.f32.mxu0 %v8848
        %v8850 = vand.u32 %v7393, 4294901760
        %8851 = vmatmul.mubr.f32.gmra.mxu0 %v8850
        %v8852 = vpop.f32.mrf.mxu0
        %v8853 = vadd.f32 %v8592, %v8852
        %v8854 = vpop.f32.mrf.mxu0
        %v8855 = vand.u32 %v7398, 4294901760
        %8856 = vmatprep.mubr.f32.mxu0 %v8855
        %v8857 = vand.u32 %v7397, 4294901760
        %8858 = vmatmul.mubr.f32.gmra.mxu0 %v8857
        %v8859 = vpop.f32.mrf.mxu0
        %v8860 = vadd.f32 %v8607, %v8859
        %v8861 = vpop.f32.mrf.mxu0
        %8862 = vdwg.mxu0
        %8863 = vmatprep.subr.mxu0 0.0
        %v8864 = vand.u32 %v7330, 4294901760
        %v8865 = vsub.f32 %v7330, %v8864
        %8866 = vmatpush1.msra.mxu0 %v8865
        %8867 = vmatprep.subr.mxu0 0.0
        %v8868 = vand.u32 %v7328, 4294901760
        %v8869 = vsub.f32 %v7328, %v8868
        %8870 = vmatpush1.msra.mxu0 %v8869
        %8871 = vmatprep.subr.mxu0 0.0
        %v8872 = vand.u32 %v7326, 4294901760
        %v8873 = vsub.f32 %v7326, %v8872
        %8874 = vmatpush1.msra.mxu0 %v8873
        %8875 = vmatprep.subr.mxu0 0.0
        %v8876 = vand.u32 %v7324, 4294901760
        %v8877 = vsub.f32 %v7324, %v8876
        %8878 = vmatpush1.msra.mxu0 %v8877
        %8879 = vmatprep.subr.mxu0 0.0
        %v8880 = vand.u32 %v7318, 4294901760
        %v8881 = vsub.f32 %v7318, %v8880
        %8882 = vmatpush1.msra.mxu0 %v8881
        %8883 = vmatprep.subr.mxu0 0.0
        %v8884 = vand.u32 %v7316, 4294901760
        %v8885 = vsub.f32 %v7316, %v8884
        %8886 = vmatpush1.msra.mxu0 %v8885
        %8887 = vmatprep.subr.mxu0 0.0
        %v8888 = vand.u32 %v7314, 4294901760
        %v8889 = vsub.f32 %v7314, %v8888
        %8890 = vmatpush1.msra.mxu0 %v8889
        %8891 = vmatprep.subr.mxu0 0.0
        %v8892 = vand.u32 %v7312, 4294901760
        %v8893 = vsub.f32 %v7312, %v8892
        %8894 = vmatpush1.msra.mxu0 %v8893
        %8895 = vmatprep.subr.mxu0 0.0
        %v8896 = vand.u32 %v7306, 4294901760
        %v8897 = vsub.f32 %v7306, %v8896
        %8898 = vmatpush1.msra.mxu0 %v8897
        %8899 = vmatprep.subr.mxu0 0.0
        %v8900 = vand.u32 %v7304, 4294901760
        %v8901 = vsub.f32 %v7304, %v8900
        %8902 = vmatpush1.msra.mxu0 %v8901
        %8903 = vmatprep.subr.mxu0 0.0
        %v8904 = vand.u32 %v7302, 4294901760
        %v8905 = vsub.f32 %v7302, %v8904
        %8906 = vmatpush1.msra.mxu0 %v8905
        %8907 = vmatprep.subr.mxu0 0.0
        %v8908 = vand.u32 %v7300, 4294901760
        %v8909 = vsub.f32 %v7300, %v8908
        %8910 = vmatpush1.msra.mxu0 %v8909
        %8911 = vmatprep.subr.mxu0 0.0
        %v8912 = vand.u32 %v7294, 4294901760
        %v8913 = vsub.f32 %v7294, %v8912
        %8914 = vmatpush1.msra.mxu0 %v8913
        %8915 = vmatprep.subr.mxu0 0.0
        %v8916 = vand.u32 %v7292, 4294901760
        %v8917 = vsub.f32 %v7292, %v8916
        %8918 = vmatpush1.msra.mxu0 %v8917
        %8919 = vmatprep.subr.mxu0 0.0
        %v8920 = vand.u32 %v7290, 4294901760
        %v8921 = vsub.f32 %v7290, %v8920
        %8922 = vmatpush1.msra.mxu0 %v8921
        %8923 = vmatprep.subr.mxu0 0.0
        %v8924 = vand.u32 %v7288, 4294901760
        %v8925 = vsub.f32 %v7288, %v8924
        %8926 = vmatpush1.msra.mxu0 %v8925
        %8927 = vmatprep.subr.mxu0 0.0
        %v8928 = vand.u32 %v7378, 4294901760
        %v8929 = vsub.f32 %v7378, %v8928
        %8930 = vmatpush2.msra.mxu0 %v8929
        %8931 = vmatprep.subr.mxu0 0.0
        %v8932 = vand.u32 %v7376, 4294901760
        %v8933 = vsub.f32 %v7376, %v8932
        %8934 = vmatpush2.msra.mxu0 %v8933
        %8935 = vmatprep.subr.mxu0 0.0
        %v8936 = vand.u32 %v7374, 4294901760
        %v8937 = vsub.f32 %v7374, %v8936
        %8938 = vmatpush2.msra.mxu0 %v8937
        %8939 = vmatprep.subr.mxu0 0.0
        %v8940 = vand.u32 %v7372, 4294901760
        %v8941 = vsub.f32 %v7372, %v8940
        %8942 = vmatpush2.msra.mxu0 %v8941
        %8943 = vmatprep.subr.mxu0 0.0
        %v8944 = vand.u32 %v7366, 4294901760
        %v8945 = vsub.f32 %v7366, %v8944
        %8946 = vmatpush2.msra.mxu0 %v8945
        %8947 = vmatprep.subr.mxu0 0.0
        %v8948 = vand.u32 %v7364, 4294901760
        %v8949 = vsub.f32 %v7364, %v8948
        %8950 = vmatpush2.msra.mxu0 %v8949
        %8951 = vmatprep.subr.mxu0 0.0
        %v8952 = vand.u32 %v7362, 4294901760
        %v8953 = vsub.f32 %v7362, %v8952
        %8954 = vmatpush2.msra.mxu0 %v8953
        %8955 = vmatprep.subr.mxu0 0.0
        %v8956 = vand.u32 %v7360, 4294901760
        %v8957 = vsub.f32 %v7360, %v8956
        %8958 = vmatpush2.msra.mxu0 %v8957
        %8959 = vmatprep.subr.mxu0 0.0
        %v8960 = vand.u32 %v7354, 4294901760
        %v8961 = vsub.f32 %v7354, %v8960
        %8962 = vmatpush2.msra.mxu0 %v8961
        %8963 = vmatprep.subr.mxu0 0.0
        %v8964 = vand.u32 %v7352, 4294901760
        %v8965 = vsub.f32 %v7352, %v8964
        %8966 = vmatpush2.msra.mxu0 %v8965
        %8967 = vmatprep.subr.mxu0 0.0
        %v8968 = vand.u32 %v7350, 4294901760
        %v8969 = vsub.f32 %v7350, %v8968
        %8970 = vmatpush2.msra.mxu0 %v8969
        %8971 = vmatprep.subr.mxu0 0.0
        %v8972 = vand.u32 %v7348, 4294901760
        %v8973 = vsub.f32 %v7348, %v8972
        %8974 = vmatpush2.msra.mxu0 %v8973
        %8975 = vmatprep.subr.mxu0 0.0
        %v8976 = vand.u32 %v7342, 4294901760
        %v8977 = vsub.f32 %v7342, %v8976
        %8978 = vmatpush2.msra.mxu0 %v8977
        %8979 = vmatprep.subr.mxu0 0.0
        %v8980 = vand.u32 %v7340, 4294901760
        %v8981 = vsub.f32 %v7340, %v8980
        %8982 = vmatpush2.msra.mxu0 %v8981
        %8983 = vmatprep.subr.mxu0 0.0
        %v8984 = vand.u32 %v7338, 4294901760
        %v8985 = vsub.f32 %v7338, %v8984
        %8986 = vmatpush2.msra.mxu0 %v8985
        %8987 = vmatprep.subr.mxu0 0.0
        %v8988 = vand.u32 %v7336, 4294901760
        %v8989 = vsub.f32 %v7336, %v8988
        %8990 = vmatpush2.msra.mxu0 %v8989
        %v8991 = vand.u32 %v7386, 4294901760
        %v8992 = vsub.f32 %v7386, %v8991
        %8993 = vmatprep.mubr.f32.mxu0 %v8992
        %v8994 = vand.u32 %v7385, 4294901760
        %v8995 = vsub.f32 %v7385, %v8994
        %8996 = vmatmul.mubr.f32.gmra.mxu0 %v8995
        %v8997 = vpop.f32.mrf.mxu0
        %v8998 = vadd.f32 %v8839, %v8997
        %v8999 = vpop.f32.mrf.mxu0
        %v9000 = vand.u32 %v7390, 4294901760
        %v9001 = vsub.f32 %v7390, %v9000
        %9002 = vmatprep.mubr.f32.mxu0 %v9001
        %v9003 = vand.u32 %v7389, 4294901760
        %v9004 = vsub.f32 %v7389, %v9003
        %9005 = vmatmul.mubr.f32.gmra.mxu0 %v9004
        %v9006 = vpop.f32.mrf.mxu0
        %v9007 = vadd.f32 %v8846, %v9006
        %v9008 = vpop.f32.mrf.mxu0
        %v9009 = vand.u32 %v7394, 4294901760
        %v9010 = vsub.f32 %v7394, %v9009
        %9011 = vmatprep.mubr.f32.mxu0 %v9010
        %v9012 = vand.u32 %v7393, 4294901760
        %v9013 = vsub.f32 %v7393, %v9012
        %9014 = vmatmul.mubr.f32.gmra.mxu0 %v9013
        %v9015 = vpop.f32.mrf.mxu0
        %v9016 = vadd.f32 %v8853, %v9015
        %v9017 = vpop.f32.mrf.mxu0
        %v9018 = vand.u32 %v7398, 4294901760
        %v9019 = vsub.f32 %v7398, %v9018
        %9020 = vmatprep.mubr.f32.mxu0 %v9019
        %v9021 = vand.u32 %v7397, 4294901760
        %v9022 = vsub.f32 %v7397, %v9021
        %9023 = vmatmul.mubr.f32.gmra.mxu0 %v9022
        %v9024 = vpop.f32.mrf.mxu0
        %v9025 = vadd.f32 %v8860, %v9024
        %v9026 = vpop.f32.mrf.mxu0
        %9027 = vdwg.mxu0
        %9028 = vmatprep.subr.mxu0 0.0
        %v9029 = vand.u32 %v7330, 4294901760
        %9030 = vmatpush1.msra.mxu0 %v9029
        %9031 = vmatprep.subr.mxu0 0.0
        %v9032 = vand.u32 %v7328, 4294901760
        %9033 = vmatpush1.msra.mxu0 %v9032
        %9034 = vmatprep.subr.mxu0 0.0
        %v9035 = vand.u32 %v7326, 4294901760
        %9036 = vmatpush1.msra.mxu0 %v9035
        %9037 = vmatprep.subr.mxu0 0.0
        %v9038 = vand.u32 %v7324, 4294901760
        %9039 = vmatpush1.msra.mxu0 %v9038
        %9040 = vmatprep.subr.mxu0 0.0
        %v9041 = vand.u32 %v7318, 4294901760
        %9042 = vmatpush1.msra.mxu0 %v9041
        %9043 = vmatprep.subr.mxu0 0.0
        %v9044 = vand.u32 %v7316, 4294901760
        %9045 = vmatpush1.msra.mxu0 %v9044
        %9046 = vmatprep.subr.mxu0 0.0
        %v9047 = vand.u32 %v7314, 4294901760
        %9048 = vmatpush1.msra.mxu0 %v9047
        %9049 = vmatprep.subr.mxu0 0.0
        %v9050 = vand.u32 %v7312, 4294901760
        %9051 = vmatpush1.msra.mxu0 %v9050
        %9052 = vmatprep.subr.mxu0 0.0
        %v9053 = vand.u32 %v7306, 4294901760
        %9054 = vmatpush1.msra.mxu0 %v9053
        %9055 = vmatprep.subr.mxu0 0.0
        %v9056 = vand.u32 %v7304, 4294901760
        %9057 = vmatpush1.msra.mxu0 %v9056
        %9058 = vmatprep.subr.mxu0 0.0
        %v9059 = vand.u32 %v7302, 4294901760
        %9060 = vmatpush1.msra.mxu0 %v9059
        %9061 = vmatprep.subr.mxu0 0.0
        %v9062 = vand.u32 %v7300, 4294901760
        %9063 = vmatpush1.msra.mxu0 %v9062
        %9064 = vmatprep.subr.mxu0 0.0
        %v9065 = vand.u32 %v7294, 4294901760
        %9066 = vmatpush1.msra.mxu0 %v9065
        %9067 = vmatprep.subr.mxu0 0.0
        %v9068 = vand.u32 %v7292, 4294901760
        %9069 = vmatpush1.msra.mxu0 %v9068
        %9070 = vmatprep.subr.mxu0 0.0
        %v9071 = vand.u32 %v7290, 4294901760
        %9072 = vmatpush1.msra.mxu0 %v9071
        %9073 = vmatprep.subr.mxu0 0.0
        %v9074 = vand.u32 %v7288, 4294901760
        %9075 = vmatpush1.msra.mxu0 %v9074
        %9076 = vmatprep.subr.mxu0 0.0
        %v9077 = vand.u32 %v7378, 4294901760
        %9078 = vmatpush2.msra.mxu0 %v9077
        %9079 = vmatprep.subr.mxu0 0.0
        %v9080 = vand.u32 %v7376, 4294901760
        %9081 = vmatpush2.msra.mxu0 %v9080
        %9082 = vmatprep.subr.mxu0 0.0
        %v9083 = vand.u32 %v7374, 4294901760
        %9084 = vmatpush2.msra.mxu0 %v9083
        %9085 = vmatprep.subr.mxu0 0.0
        %v9086 = vand.u32 %v7372, 4294901760
        %9087 = vmatpush2.msra.mxu0 %v9086
        %9088 = vmatprep.subr.mxu0 0.0
        %v9089 = vand.u32 %v7366, 4294901760
        %9090 = vmatpush2.msra.mxu0 %v9089
        %9091 = vmatprep.subr.mxu0 0.0
        %v9092 = vand.u32 %v7364, 4294901760
        %9093 = vmatpush2.msra.mxu0 %v9092
        %9094 = vmatprep.subr.mxu0 0.0
        %v9095 = vand.u32 %v7362, 4294901760
        %9096 = vmatpush2.msra.mxu0 %v9095
        %9097 = vmatprep.subr.mxu0 0.0
        %v9098 = vand.u32 %v7360, 4294901760
        %9099 = vmatpush2.msra.mxu0 %v9098
        %9100 = vmatprep.subr.mxu0 0.0
        %v9101 = vand.u32 %v7354, 4294901760
        %9102 = vmatpush2.msra.mxu0 %v9101
        %9103 = vmatprep.subr.mxu0 0.0
        %v9104 = vand.u32 %v7352, 4294901760
        %9105 = vmatpush2.msra.mxu0 %v9104
        %9106 = vmatprep.subr.mxu0 0.0
        %v9107 = vand.u32 %v7350, 4294901760
        %9108 = vmatpush2.msra.mxu0 %v9107
        %9109 = vmatprep.subr.mxu0 0.0
        %v9110 = vand.u32 %v7348, 4294901760
        %9111 = vmatpush2.msra.mxu0 %v9110
        %9112 = vmatprep.subr.mxu0 0.0
        %v9113 = vand.u32 %v7342, 4294901760
        %9114 = vmatpush2.msra.mxu0 %v9113
        %9115 = vmatprep.subr.mxu0 0.0
        %v9116 = vand.u32 %v7340, 4294901760
        %9117 = vmatpush2.msra.mxu0 %v9116
        %9118 = vmatprep.subr.mxu0 0.0
        %v9119 = vand.u32 %v7338, 4294901760
        %9120 = vmatpush2.msra.mxu0 %v9119
        %9121 = vmatprep.subr.mxu0 0.0
        %v9122 = vand.u32 %v7336, 4294901760
        %9123 = vmatpush2.msra.mxu0 %v9122
        %v9124 = vand.u32 %v7386, 4294901760
        %v9125 = vsub.f32 %v7386, %v9124
        %v9126 = vand.u32 %v9125, 4294901760
        %9127 = vmatprep.mubr.f32.mxu0 %v9126
        %v9128 = vand.u32 %v7385, 4294901760
        %v9129 = vsub.f32 %v7385, %v9128
        %v9130 = vand.u32 %v9129, 4294901760
        %9131 = vmatmul.mubr.f32.gmra.mxu0 %v9130
        %v9132 = vpop.f32.mrf.mxu0
        %v9133 = vadd.f32 %v8998, %v9132
        %v9134 = vpop.f32.mrf.mxu0
        %v9135 = vand.u32 %v7390, 4294901760
        %v9136 = vsub.f32 %v7390, %v9135
        %v9137 = vand.u32 %v9136, 4294901760
        %9138 = vmatprep.mubr.f32.mxu0 %v9137
        %v9139 = vand.u32 %v7389, 4294901760
        %v9140 = vsub.f32 %v7389, %v9139
        %v9141 = vand.u32 %v9140, 4294901760
        %9142 = vmatmul.mubr.f32.gmra.mxu0 %v9141
        %v9143 = vpop.f32.mrf.mxu0
        %v9144 = vadd.f32 %v9007, %v9143
        %v9145 = vpop.f32.mrf.mxu0
        %v9146 = vand.u32 %v7394, 4294901760
        %v9147 = vsub.f32 %v7394, %v9146
        %v9148 = vand.u32 %v9147, 4294901760
        %9149 = vmatprep.mubr.f32.mxu0 %v9148
        %v9150 = vand.u32 %v7393, 4294901760
        %v9151 = vsub.f32 %v7393, %v9150
        %v9152 = vand.u32 %v9151, 4294901760
        %9153 = vmatmul.mubr.f32.gmra.mxu0 %v9152
        %v9154 = vpop.f32.mrf.mxu0
        %v9155 = vadd.f32 %v9016, %v9154
        %v9156 = vpop.f32.mrf.mxu0
        %v9157 = vand.u32 %v7398, 4294901760
        %v9158 = vsub.f32 %v7398, %v9157
        %v9159 = vand.u32 %v9158, 4294901760
        %9160 = vmatprep.mubr.f32.mxu0 %v9159
        %v9161 = vand.u32 %v7397, 4294901760
        %v9162 = vsub.f32 %v7397, %v9161
        %v9163 = vand.u32 %v9162, 4294901760
        %9164 = vmatmul.mubr.f32.gmra.mxu0 %v9163
        %v9165 = vpop.f32.mrf.mxu0
        %v9166 = vadd.f32 %v9025, %v9165
        %v9167 = vpop.f32.mrf.mxu0
        %9168 = vdwg.mxu0
        %9169 = vmatprep.subr.mxu0 0.0
        %v9170 = vand.u32 %v7330, 4294901760
        %v9171 = vsub.f32 %v7330, %v9170
        %v9172 = vand.u32 %v9171, 4294901760
        %9173 = vmatpush1.msra.mxu0 %v9172
        %9174 = vmatprep.subr.mxu0 0.0
        %v9175 = vand.u32 %v7328, 4294901760
        %v9176 = vsub.f32 %v7328, %v9175
        %v9177 = vand.u32 %v9176, 4294901760
        %9178 = vmatpush1.msra.mxu0 %v9177
        %9179 = vmatprep.subr.mxu0 0.0
        %v9180 = vand.u32 %v7326, 4294901760
        %v9181 = vsub.f32 %v7326, %v9180
        %v9182 = vand.u32 %v9181, 4294901760
        %9183 = vmatpush1.msra.mxu0 %v9182
        %9184 = vmatprep.subr.mxu0 0.0
        %v9185 = vand.u32 %v7324, 4294901760
        %v9186 = vsub.f32 %v7324, %v9185
        %v9187 = vand.u32 %v9186, 4294901760
        %9188 = vmatpush1.msra.mxu0 %v9187
        %9189 = vmatprep.subr.mxu0 0.0
        %v9190 = vand.u32 %v7318, 4294901760
        %v9191 = vsub.f32 %v7318, %v9190
        %v9192 = vand.u32 %v9191, 4294901760
        %9193 = vmatpush1.msra.mxu0 %v9192
        %9194 = vmatprep.subr.mxu0 0.0
        %v9195 = vand.u32 %v7316, 4294901760
        %v9196 = vsub.f32 %v7316, %v9195
        %v9197 = vand.u32 %v9196, 4294901760
        %9198 = vmatpush1.msra.mxu0 %v9197
        %9199 = vmatprep.subr.mxu0 0.0
        %v9200 = vand.u32 %v7314, 4294901760
        %v9201 = vsub.f32 %v7314, %v9200
        %v9202 = vand.u32 %v9201, 4294901760
        %9203 = vmatpush1.msra.mxu0 %v9202
        %9204 = vmatprep.subr.mxu0 0.0
        %v9205 = vand.u32 %v7312, 4294901760
        %v9206 = vsub.f32 %v7312, %v9205
        %v9207 = vand.u32 %v9206, 4294901760
        %9208 = vmatpush1.msra.mxu0 %v9207
        %9209 = vmatprep.subr.mxu0 0.0
        %v9210 = vand.u32 %v7306, 4294901760
        %v9211 = vsub.f32 %v7306, %v9210
        %v9212 = vand.u32 %v9211, 4294901760
        %9213 = vmatpush1.msra.mxu0 %v9212
        %9214 = vmatprep.subr.mxu0 0.0
        %v9215 = vand.u32 %v7304, 4294901760
        %v9216 = vsub.f32 %v7304, %v9215
        %v9217 = vand.u32 %v9216, 4294901760
        %9218 = vmatpush1.msra.mxu0 %v9217
        %9219 = vmatprep.subr.mxu0 0.0
        %v9220 = vand.u32 %v7302, 4294901760
        %v9221 = vsub.f32 %v7302, %v9220
        %v9222 = vand.u32 %v9221, 4294901760
        %9223 = vmatpush1.msra.mxu0 %v9222
        %9224 = vmatprep.subr.mxu0 0.0
        %v9225 = vand.u32 %v7300, 4294901760
        %v9226 = vsub.f32 %v7300, %v9225
        %v9227 = vand.u32 %v9226, 4294901760
        %9228 = vmatpush1.msra.mxu0 %v9227
        %9229 = vmatprep.subr.mxu0 0.0
        %v9230 = vand.u32 %v7294, 4294901760
        %v9231 = vsub.f32 %v7294, %v9230
        %v9232 = vand.u32 %v9231, 4294901760
        %9233 = vmatpush1.msra.mxu0 %v9232
        %9234 = vmatprep.subr.mxu0 0.0
        %v9235 = vand.u32 %v7292, 4294901760
        %v9236 = vsub.f32 %v7292, %v9235
        %v9237 = vand.u32 %v9236, 4294901760
        %9238 = vmatpush1.msra.mxu0 %v9237
        %9239 = vmatprep.subr.mxu0 0.0
        %v9240 = vand.u32 %v7290, 4294901760
        %v9241 = vsub.f32 %v7290, %v9240
        %v9242 = vand.u32 %v9241, 4294901760
        %9243 = vmatpush1.msra.mxu0 %v9242
        %9244 = vmatprep.subr.mxu0 0.0
        %v9245 = vand.u32 %v7288, 4294901760
        %v9246 = vsub.f32 %v7288, %v9245
        %v9247 = vand.u32 %v9246, 4294901760
        %9248 = vmatpush1.msra.mxu0 %v9247
        %9249 = vmatprep.subr.mxu0 0.0
        %v9250 = vand.u32 %v7378, 4294901760
        %v9251 = vsub.f32 %v7378, %v9250
        %v9252 = vand.u32 %v9251, 4294901760
        %9253 = vmatpush2.msra.mxu0 %v9252
        %9254 = vmatprep.subr.mxu0 0.0
        %v9255 = vand.u32 %v7376, 4294901760
        %v9256 = vsub.f32 %v7376, %v9255
        %v9257 = vand.u32 %v9256, 4294901760
        %9258 = vmatpush2.msra.mxu0 %v9257
        %9259 = vmatprep.subr.mxu0 0.0
        %v9260 = vand.u32 %v7374, 4294901760
        %v9261 = vsub.f32 %v7374, %v9260
        %v9262 = vand.u32 %v9261, 4294901760
        %9263 = vmatpush2.msra.mxu0 %v9262
        %9264 = vmatprep.subr.mxu0 0.0
        %v9265 = vand.u32 %v7372, 4294901760
        %v9266 = vsub.f32 %v7372, %v9265
        %v9267 = vand.u32 %v9266, 4294901760
        %9268 = vmatpush2.msra.mxu0 %v9267
        %9269 = vmatprep.subr.mxu0 0.0
        %v9270 = vand.u32 %v7366, 4294901760
        %v9271 = vsub.f32 %v7366, %v9270
        %v9272 = vand.u32 %v9271, 4294901760
        %9273 = vmatpush2.msra.mxu0 %v9272
        %9274 = vmatprep.subr.mxu0 0.0
        %v9275 = vand.u32 %v7364, 4294901760
        %v9276 = vsub.f32 %v7364, %v9275
        %v9277 = vand.u32 %v9276, 4294901760
        %9278 = vmatpush2.msra.mxu0 %v9277
        %9279 = vmatprep.subr.mxu0 0.0
        %v9280 = vand.u32 %v7362, 4294901760
        %v9281 = vsub.f32 %v7362, %v9280
        %v9282 = vand.u32 %v9281, 4294901760
        %9283 = vmatpush2.msra.mxu0 %v9282
        %9284 = vmatprep.subr.mxu0 0.0
        %v9285 = vand.u32 %v7360, 4294901760
        %v9286 = vsub.f32 %v7360, %v9285
        %v9287 = vand.u32 %v9286, 4294901760
        %9288 = vmatpush2.msra.mxu0 %v9287
        %9289 = vmatprep.subr.mxu0 0.0
        %v9290 = vand.u32 %v7354, 4294901760
        %v9291 = vsub.f32 %v7354, %v9290
        %v9292 = vand.u32 %v9291, 4294901760
        %9293 = vmatpush2.msra.mxu0 %v9292
        %9294 = vmatprep.subr.mxu0 0.0
        %v9295 = vand.u32 %v7352, 4294901760
        %v9296 = vsub.f32 %v7352, %v9295
        %v9297 = vand.u32 %v9296, 4294901760
        %9298 = vmatpush2.msra.mxu0 %v9297
        %9299 = vmatprep.subr.mxu0 0.0
        %v9300 = vand.u32 %v7350, 4294901760
        %v9301 = vsub.f32 %v7350, %v9300
        %v9302 = vand.u32 %v9301, 4294901760
        %9303 = vmatpush2.msra.mxu0 %v9302
        %9304 = vmatprep.subr.mxu0 0.0
        %v9305 = vand.u32 %v7348, 4294901760
        %v9306 = vsub.f32 %v7348, %v9305
        %v9307 = vand.u32 %v9306, 4294901760
        %9308 = vmatpush2.msra.mxu0 %v9307
        %9309 = vmatprep.subr.mxu0 0.0
        %v9310 = vand.u32 %v7342, 4294901760
        %v9311 = vsub.f32 %v7342, %v9310
        %v9312 = vand.u32 %v9311, 4294901760
        %9313 = vmatpush2.msra.mxu0 %v9312
        %9314 = vmatprep.subr.mxu0 0.0
        %v9315 = vand.u32 %v7340, 4294901760
        %v9316 = vsub.f32 %v7340, %v9315
        %v9317 = vand.u32 %v9316, 4294901760
        %9318 = vmatpush2.msra.mxu0 %v9317
        %9319 = vmatprep.subr.mxu0 0.0
        %v9320 = vand.u32 %v7338, 4294901760
        %v9321 = vsub.f32 %v7338, %v9320
        %v9322 = vand.u32 %v9321, 4294901760
        %9323 = vmatpush2.msra.mxu0 %v9322
        %9324 = vmatprep.subr.mxu0 0.0
        %v9325 = vand.u32 %v7336, 4294901760
        %v9326 = vsub.f32 %v7336, %v9325
        %v9327 = vand.u32 %v9326, 4294901760
        %9328 = vmatpush2.msra.mxu0 %v9327
        %v9329 = vand.u32 %v7386, 4294901760
        %9330 = vmatprep.mubr.f32.mxu0 %v9329
        %v9331 = vand.u32 %v7385, 4294901760
        %9332 = vmatmul.mubr.f32.gmra.mxu0 %v9331
        %v9333 = vpop.f32.mrf.mxu0
        %v9334 = vadd.f32 %v9133, %v9333
        %v9335 = vpop.f32.mrf.mxu0
        %v9336 = vand.u32 %v7390, 4294901760
        %9337 = vmatprep.mubr.f32.mxu0 %v9336
        %v9338 = vand.u32 %v7389, 4294901760
        %9339 = vmatmul.mubr.f32.gmra.mxu0 %v9338
        %v9340 = vpop.f32.mrf.mxu0
        %v9341 = vadd.f32 %v9144, %v9340
        %v9342 = vpop.f32.mrf.mxu0
        %v9343 = vand.u32 %v7394, 4294901760
        %9344 = vmatprep.mubr.f32.mxu0 %v9343
        %v9345 = vand.u32 %v7393, 4294901760
        %9346 = vmatmul.mubr.f32.gmra.mxu0 %v9345
        %v9347 = vpop.f32.mrf.mxu0
        %v9348 = vadd.f32 %v9155, %v9347
        %v9349 = vpop.f32.mrf.mxu0
        %v9350 = vand.u32 %v7398, 4294901760
        %9351 = vmatprep.mubr.f32.mxu0 %v9350
        %v9352 = vand.u32 %v7397, 4294901760
        %9353 = vmatmul.mubr.f32.gmra.mxu0 %v9352
        %v9354 = vpop.f32.mrf.mxu0
        %v9355 = vadd.f32 %v9166, %v9354
        %v9356 = vpop.f32.mrf.mxu0
        %9357 = vdwg.mxu0
        %9358 = vmatprep.subr.mxu0 0.0
        %v9359 = vand.u32 %v7330, 4294901760
        %9360 = vmatpush1.msra.mxu0 %v9359
        %9361 = vmatprep.subr.mxu0 0.0
        %v9362 = vand.u32 %v7328, 4294901760
        %9363 = vmatpush1.msra.mxu0 %v9362
        %9364 = vmatprep.subr.mxu0 0.0
        %v9365 = vand.u32 %v7326, 4294901760
        %9366 = vmatpush1.msra.mxu0 %v9365
        %9367 = vmatprep.subr.mxu0 0.0
        %v9368 = vand.u32 %v7324, 4294901760
        %9369 = vmatpush1.msra.mxu0 %v9368
        %9370 = vmatprep.subr.mxu0 0.0
        %v9371 = vand.u32 %v7318, 4294901760
        %9372 = vmatpush1.msra.mxu0 %v9371
        %9373 = vmatprep.subr.mxu0 0.0
        %v9374 = vand.u32 %v7316, 4294901760
        %9375 = vmatpush1.msra.mxu0 %v9374
        %9376 = vmatprep.subr.mxu0 0.0
        %v9377 = vand.u32 %v7314, 4294901760
        %9378 = vmatpush1.msra.mxu0 %v9377
        %9379 = vmatprep.subr.mxu0 0.0
        %v9380 = vand.u32 %v7312, 4294901760
        %9381 = vmatpush1.msra.mxu0 %v9380
        %9382 = vmatprep.subr.mxu0 0.0
        %v9383 = vand.u32 %v7306, 4294901760
        %9384 = vmatpush1.msra.mxu0 %v9383
        %9385 = vmatprep.subr.mxu0 0.0
        %v9386 = vand.u32 %v7304, 4294901760
        %9387 = vmatpush1.msra.mxu0 %v9386
        %9388 = vmatprep.subr.mxu0 0.0
        %v9389 = vand.u32 %v7302, 4294901760
        %9390 = vmatpush1.msra.mxu0 %v9389
        %9391 = vmatprep.subr.mxu0 0.0
        %v9392 = vand.u32 %v7300, 4294901760
        %9393 = vmatpush1.msra.mxu0 %v9392
        %9394 = vmatprep.subr.mxu0 0.0
        %v9395 = vand.u32 %v7294, 4294901760
        %9396 = vmatpush1.msra.mxu0 %v9395
        %9397 = vmatprep.subr.mxu0 0.0
        %v9398 = vand.u32 %v7292, 4294901760
        %9399 = vmatpush1.msra.mxu0 %v9398
        %9400 = vmatprep.subr.mxu0 0.0
        %v9401 = vand.u32 %v7290, 4294901760
        %9402 = vmatpush1.msra.mxu0 %v9401
        %9403 = vmatprep.subr.mxu0 0.0
        %v9404 = vand.u32 %v7288, 4294901760
        %9405 = vmatpush1.msra.mxu0 %v9404
        %9406 = vmatprep.subr.mxu0 0.0
        %v9407 = vand.u32 %v7378, 4294901760
        %9408 = vmatpush2.msra.mxu0 %v9407
        %9409 = vmatprep.subr.mxu0 0.0
        %v9410 = vand.u32 %v7376, 4294901760
        %9411 = vmatpush2.msra.mxu0 %v9410
        %9412 = vmatprep.subr.mxu0 0.0
        %v9413 = vand.u32 %v7374, 4294901760
        %9414 = vmatpush2.msra.mxu0 %v9413
        %9415 = vmatprep.subr.mxu0 0.0
        %v9416 = vand.u32 %v7372, 4294901760
        %9417 = vmatpush2.msra.mxu0 %v9416
        %9418 = vmatprep.subr.mxu0 0.0
        %v9419 = vand.u32 %v7366, 4294901760
        %9420 = vmatpush2.msra.mxu0 %v9419
        %9421 = vmatprep.subr.mxu0 0.0
        %v9422 = vand.u32 %v7364, 4294901760
        %9423 = vmatpush2.msra.mxu0 %v9422
        %9424 = vmatprep.subr.mxu0 0.0
        %v9425 = vand.u32 %v7362, 4294901760
        %9426 = vmatpush2.msra.mxu0 %v9425
        %9427 = vmatprep.subr.mxu0 0.0
        %v9428 = vand.u32 %v7360, 4294901760
        %9429 = vmatpush2.msra.mxu0 %v9428
        %9430 = vmatprep.subr.mxu0 0.0
        %v9431 = vand.u32 %v7354, 4294901760
        %9432 = vmatpush2.msra.mxu0 %v9431
        %9433 = vmatprep.subr.mxu0 0.0
        %v9434 = vand.u32 %v7352, 4294901760
        %9435 = vmatpush2.msra.mxu0 %v9434
        %9436 = vmatprep.subr.mxu0 0.0
        %v9437 = vand.u32 %v7350, 4294901760
        %9438 = vmatpush2.msra.mxu0 %v9437
        %9439 = vmatprep.subr.mxu0 0.0
        %v9440 = vand.u32 %v7348, 4294901760
        %9441 = vmatpush2.msra.mxu0 %v9440
        %9442 = vmatprep.subr.mxu0 0.0
        %v9443 = vand.u32 %v7342, 4294901760
        %9444 = vmatpush2.msra.mxu0 %v9443
        %9445 = vmatprep.subr.mxu0 0.0
        %v9446 = vand.u32 %v7340, 4294901760
        %9447 = vmatpush2.msra.mxu0 %v9446
        %9448 = vmatprep.subr.mxu0 0.0
        %v9449 = vand.u32 %v7338, 4294901760
        %9450 = vmatpush2.msra.mxu0 %v9449
        %9451 = vmatprep.subr.mxu0 0.0
        %v9452 = vand.u32 %v7336, 4294901760
        %9453 = vmatpush2.msra.mxu0 %v9452
        %v9454 = vand.u32 %v7386, 4294901760
        %9455 = vmatprep.mubr.f32.mxu0 %v9454
        %v9456 = vand.u32 %v7385, 4294901760
        %9457 = vmatmul.mubr.f32.gmra.mxu0 %v9456
        %v9458 = vpop.f32.mrf.mxu0
        %v9459 = vadd.f32 %v9334, %v9458
        %v9460 = vpop.f32.mrf.mxu0
        %v9461 = vand.u32 %v7390, 4294901760
        %9462 = vmatprep.mubr.f32.mxu0 %v9461
        %v9463 = vand.u32 %v7389, 4294901760
        %9464 = vmatmul.mubr.f32.gmra.mxu0 %v9463
        %v9465 = vpop.f32.mrf.mxu0
        %v9466 = vadd.f32 %v9341, %v9465
        %v9467 = vpop.f32.mrf.mxu0
        %v9468 = vand.u32 %v7394, 4294901760
        %9469 = vmatprep.mubr.f32.mxu0 %v9468
        %v9470 = vand.u32 %v7393, 4294901760
        %9471 = vmatmul.mubr.f32.gmra.mxu0 %v9470
        %v9472 = vpop.f32.mrf.mxu0
        %v9473 = vadd.f32 %v9348, %v9472
        %v9474 = vpop.f32.mrf.mxu0
        %v9475 = vand.u32 %v7398, 4294901760
        %9476 = vmatprep.mubr.f32.mxu0 %v9475
        %v9477 = vand.u32 %v7397, 4294901760
        %9478 = vmatmul.mubr.f32.gmra.mxu0 %v9477
        %v9479 = vpop.f32.mrf.mxu0
        %v9480 = vadd.f32 %v9355, %v9479
        %v9481 = vpop.f32.mrf.mxu0
        %9482 = vdwg.mxu0
        %v9483 = vmul.f32 %v9459, %v9459
        %v9484 = vmul.f32 %v9466, %v9466
        %v9485 = vmul.f32 %v9473, %v9473
        %v9486 = vmul.f32 %v9480, %v9480
        %v9487 = vsel %vm2281, %v9483, 0.0
        %v9488 = vsel %vm2281, %v9484, 0.0
        %v9489 = vadd.f32 %v9487, %v9488
        %v9490 = vsel %vm2281, %v9485, 0.0
        %v9491 = vadd.f32 %v9489, %v9490
        %v9492 = vsel %vm2281, %v9486, 0.0
        %v9493 = vadd.f32 %v9491, %v9492
        %v9494 = vrot.slane %v9493, 4
        %v9495 = vadd.f32 %v9493, %v9494
        %v9496 = vrot.slane %v9495, 2
        %v9497 = vadd.f32 %v9495, %v9496
        %v9498 = vrot.slane %v9497, 1
        %v9499 = vadd.f32 %v9497, %v9498
        %v9500 = vmax.f32 %v9499, 1e-24
        %v9501 = vrsqrt.pop %v9500
        %v9502 = vmul.f32 %v9459, %v9501
        %v9503 = vmul.f32 %v9466, %v9501
        %v9504 = vmul.f32 %v9473, %v9501
        %v9505 = vmul.f32 %v9480, %v9501
        %9506 = vst.msk [vmem:[%s465] sm:$0xff] %vm2281, %v9502
        %9507 = vst.msk [vmem:[%s465 + $0x8] sm:$0xff] %vm2281, %v9503
        %9508 = vst.msk [vmem:[%s465 + $0x10] sm:$0xff] %vm2281, %v9504
        %9509 = vst.msk [vmem:[%s465 + $0x18] sm:$0xff] %vm2281, %v9505
        %p9510 = scmp.lt.s32.totalorder %s27, 1
        %s9511 = scalar_select %p9510, %s27, 1
        %s9512 = smul.addr %s9511, 4
        %s9513 = smul.addr %s9512, 8
        %s9514 = scalar_lea.vmem %s11, %s9513
        // Predicated region
        $region85: #{tpu_custom_call.1} parent=63 // pred_check
          %p9515 = pneg %p281
        $region86: #{tpu_custom_call.1} parent=63 // pred_check_branch
          %9517 = sbr.rel (%p9515) target = $region88
        $region87: #{tpu_custom_call.1} parent=63 // pred_region
          _
        $region88: #{tpu_custom_call.1} parent=63 // pred_fallthru
          _
      $region64: #{tpu_custom_call.1} parent=5 // pred_fallthru
        _
      %p9518 = scmp.le.s32.totalorder 2, %s22
      // Predicated region
      $region89: #{tpu_custom_call.1} parent=5 // pred_check
        %p9519 = pneg %p9518
      $region90: #{tpu_custom_call.1} parent=5 // pred_check_branch
        %9521 = sbr.rel (%p9519) target = $region92
      $region91: #{tpu_custom_call.1} parent=5 // pred_region
        %s9522 = ssub.s32 %s22, 2
        // Predicated region
        $region93: #{tpu_custom_call.1} parent=91 // pred_check
          %p9523 = pneg %p287
        $region94: #{tpu_custom_call.1} parent=91 // pred_check_branch
          %9525 = sbr.rel (%p9523) target = $region96
        $region95: #{tpu_custom_call.1} parent=91 // pred_region
          %p9526 = scmp.lt.s32.totalorder %s28, 1
          %s9527 = scalar_select %p9526, %s28, 1
          %s9528 = smul.addr %s9527, 4
          %s9529 = smul.addr %s9528, 8
          %s9530 = scalar_lea.vmem %s11, %s9529
        $region96: #{tpu_custom_call.1} parent=91 // pred_fallthru
          _
      $region92: #{tpu_custom_call.1} parent=5 // pred_fallthru
        _
    $region6: #{tpu_custom_call.1} parent=1 // loop_footer
      %s26 = sadd.s32 1, %s22
    $region7: #{tpu_custom_call.1} parent=1 // loop_footer_branch
      %21 = sbr.rel target = $region3
    $region8: #{tpu_custom_call.1} parent=1 // loop_exit
      _
    %9531 = vsyncpa [#allocation3], 1
    %s9532 = scalar_lea.sflag [#allocation3], 1
    %9533 = vsyncpa %s9532, 1
    %9534 = vsyncpa [#allocation5], 1
    %9535 = vsyncpa [#allocation8], 1

</llo_original>
